<compile_context>
chip_gen: v7x
topology: tpu7x:2x2x1
jax: 0.10.0
libtpu: 0.0.40
codegen_flags: <defaults>
</compile_context>

<pallas_src>
import functools

import jax
import jax.numpy as jnp
import numpy as np
from jax.experimental import pallas as pl
from jax.experimental.pallas import tpu as pltpu


LANE = 128  # TPU lane width; channel dims are zero-padded to multiples of this.


def _round_up(x, m):
    return ((x + m - 1) // m) * m


def _plan_from_config(config):
    """Static parse of the VGG config.

    Returns (lead_pools, plan) where plan is a list of
    (cin, cout, n_pools_after) for each conv layer.  Leading 'M's (pools on
    the raw image) are handled in the wrapper; every other 'M' is fused into
    the preceding conv.
    """
    i, lead_pools = 0, 0
    while i < len(config) and config[i] == 'M':
        lead_pools += 1
        i += 1
    plan, in_planes = [], 3
    while i < len(config):
        v = config[i]
        i += 1
        pools = 0
        while i < len(config) and config[i] == 'M':
            pools += 1
            i += 1
        plan.append((in_planes, int(v), pools))
        in_planes = int(v)
    return lead_pools, plan


# ----------------------------- fused kernel --------------------------------

def _pool2x2(y, n, h, w):
    """2x2 / stride-2 max pool on batch-flattened rows.  y: (n*h*w, c)."""
    c = y.shape[-1]
    ho, wo = h // 2, w // 2
    y = y.reshape(n * h * wo, 2, c)
    y = jnp.maximum(y[:, 0, :], y[:, 1, :])            # pool along W
    y = y.reshape(n * ho, 2, wo, c)
    y = jnp.maximum(y[:, 0, :, :], y[:, 1, :, :])      # pool along H
    return y.reshape(n * ho * wo, c)


def _make_fused_kernel(plan, dims, n):
    """Build the single fused kernel body.

    Ref order: x0_im2col, (w, b) per conv, (w, b) per fc, out,
    then one padded-activation VMEM scratch per conv after the first.
    """
    n_convs = len(plan)

    def kernel(*refs):
        it = iter(refs)
        x0_ref = next(it)
        conv_refs = [(next(it), next(it)) for _ in range(n_convs)]
        fc_refs = [(next(it), next(it)) for _ in range(3)]
        o_ref = next(it)
        pad_refs = list(it)                              # VMEM scratch buffers

        def write_padded(pad_ref, y, h, w):
            """Write y (n*h*w, c) into pad_ref's interior; zero the 1-px border.

            Interior is written exactly once; only the thin border gets the
            extra (VMEM-resident, negligible) zero stores.
            """
            _, hp, wp, c = pad_ref.shape
            pad_ref[:, 0:1, :, :] = jnp.zeros((n, 1, wp, c), pad_ref.dtype)
            pad_ref[:, hp - 1:hp, :, :] = jnp.zeros((n, 1, wp, c), pad_ref.dtype)
            pad_ref[:, :, 0:1, :] = jnp.zeros((n, hp, 1, c), pad_ref.dtype)
            pad_ref[:, :, wp - 1:wp, :] = jnp.zeros((n, hp, 1, c), pad_ref.dtype)
            pad_ref[:, 1:h + 1, 1:w + 1, :] = y.reshape(n, h, w, c)

        y = None
        for idx in range(n_convs):
            cin, cout, pools = plan[idx]
            h, w = dims[idx]
            w_ref, b_ref = conv_refs[idx]
            if idx == 0:
                # Dense-K first conv: wrapper packed 9 taps x cin real K
                # values into one 128-lane block -> a single MXU matmul with
                # M = N*H*W (batch folded into M).
                acc = jnp.dot(x0_ref[...], w_ref[...],
                              preferred_element_type=jnp.float32)
            else:
                cin_p = _round_up(cin, LANE)
                xpad = pad_refs[idx - 1][...]            # (n, h+2, w+2, cin_p)
                acc = None
                # Per-tap accumulating matmuls (K = cin_p per tap) instead of
                # a 9-tap lane concat; f32 accumulation, bf16 MXU operands.
                for kh in range(3):
                    for kw in range(3):
                        tap = kh * 3 + kw
                        xt = xpad[:, kh:kh + h, kw:kw + w, :]
                        xt = xt.reshape(n * h * w, cin_p).astype(jnp.bfloat16)
                        d = jnp.dot(xt, w_ref[tap],
                                    preferred_element_type=jnp.float32)
                        acc = d if acc is None else acc + d
            y = jnp.maximum(acc + b_ref[...], 0.0)       # bias + ReLU (f32, VPU)
            for _ in range(pools):
                y = _pool2x2(y, n, h, w)
                h, w = h // 2, w // 2
            if idx + 1 < n_convs:
                write_padded(pad_refs[idx], y, h, w)

        # Feature map is 1x1 spatial -> flatten order (NCHW) == channel order.
        feat = y                                          # (n, 512) f32
        (fw1, fb1), (fw2, fb2), (fw3, fb3) = fc_refs
        # Dropout(0.5) layers are identity in eval mode.
        hdd = jnp.dot(feat.astype(jnp.bfloat16), fw1[...],
                      preferred_element_type=jnp.float32)
        hdd = jnp.maximum(hdd + fb1[...], 0.0)
        hdd = jnp.dot(hdd.astype(jnp.bfloat16), fw2[...],
                      preferred_element_type=jnp.float32)
        hdd = jnp.maximum(hdd + fb2[...], 0.0)
        hdd = jnp.dot(hdd.astype(jnp.bfloat16), fw3[...],
                      preferred_element_type=jnp.float32)
        o_ref[...] = hdd + fb3[...]                       # (n, 128) lane-dense

    return kernel


# ----------------------------- param handling -------------------------------

def init_params(key, config):
    """Deterministic parameter init mirroring the module's shapes.

    Conv weights stored as (3, 3, Cin, Cout); linear weights as (in, out).
    Classifier is the cifar=True head: Dropout, Linear(512,512), ReLU,
    Dropout, Linear(512,512), ReLU, Linear(512,10).
    """
    keys = iter(jax.random.split(key, 64))
    features, in_planes = [], 3
    for v in config:
        if v == 'M':
            features.append(None)
        else:
            fan_in = in_planes * 9
            w = (jax.random.normal(next(keys), (3, 3, in_planes, v), jnp.float32)
                 / jnp.sqrt(float(fan_in)))
            b = jax.random.normal(next(keys), (v,), jnp.float32) * 0.01
            features.append({"w": w, "b": b})
            in_planes = v
    classifier = []
    for fin, fout in [(512, 512), (512, 512), (512, 10)]:
        w = (jax.random.normal(next(keys), (fin, fout), jnp.float32)
             / jnp.sqrt(float(fin)))
        b = jax.random.normal(next(keys), (fout,), jnp.float32) * 0.01
        classifier.append({"w": w, "b": b})
    return {"features": features, "classifier": classifier}


def pack_params(params, config):
    """One-time packing of weights into MXU-friendly layouts (hoisted out of
    the forward pass): zero-padded 128-lane channels, tap-major im2col layout,
    bf16 weights, f32 biases."""
    _, plan = _plan_from_config(config)
    convs = [l for l in params["features"] if l is not None]
    packed_convs = []
    for idx, ((cin, cout, _), layer) in enumerate(zip(plan, convs)):
        w, b = layer["w"], layer["b"]                   # (3,3,cin,cout), (cout,)
        cout_p = _round_up(cout, LANE)
        if idx == 0:
            # Dense-K packing: all 9 taps x cin real K rows in one lane block.
            k = 9 * cin
            kp = _round_up(k, LANE)
            wp = jnp.zeros((kp, cout_p), jnp.float32)
            wp = wp.at[:k, :cout].set(w.reshape(k, cout))
        else:
            cin_p = _round_up(cin, LANE)
            wp = jnp.zeros((3, 3, cin_p, cout_p), jnp.float32)
            wp = wp.at[:, :, :cin, :cout].set(w)
            wp = wp.reshape(9, cin_p, cout_p)           # tap-major
        bp = jnp.zeros((1, cout_p), jnp.float32).at[0, :cout].set(b)
        packed_convs.append((wp.astype(jnp.bfloat16), bp))
    packed_fcs = []
    for layer in params["classifier"]:
        w, b = layer["w"], layer["b"]
        fin, fout = w.shape
        fout_p = _round_up(fout, LANE)
        wp = jnp.zeros((fin, fout_p), jnp.float32).at[:, :fout].set(w)
        bp = jnp.zeros((1, fout_p), jnp.float32).at[0, :fout].set(b)
        packed_fcs.append((wp.astype(jnp.bfloat16), bp))
    return {"convs": packed_convs, "fcs": packed_fcs}


# ------------------------------ forward pass --------------------------------

def vgg_forward(packed, x_nchw, *, config, num_classes=10):
    lead_pools, plan = _plan_from_config(config)
    nb = x_nchw.shape[0]

    # NCHW (PyTorch) -> NHWC.
    x = jnp.transpose(x_nchw, (0, 2, 3, 1)).astype(jnp.float32)
    # Leading 'M's (if any) apply to the raw image; do them in plain XLA.
    for _ in range(lead_pools):
        n_, h_, w_, c_ = x.shape
        x = jnp.max(x.reshape(n_, h_ // 2, 2, w_ // 2, 2, c_), axis=(2, 4))

    _, h0, w0, cin0 = x.shape
    assert cin0 == plan[0][0]

    # First-conv im2col (dense K): pack 9 taps x cin0 (=27) real K values into
    # one 128-lane block; batch folded into M = N*H*W.
    k0 = 9 * cin0
    kp0 = _round_up(k0, LANE)
    xp = jnp.pad(x, ((0, 0), (1, 1), (1, 1), (0, 0)))
    taps = [xp[:, kh:kh + h0, kw:kw + w0, :]
            for kh in range(3) for kw in range(3)]
    x0 = jnp.stack(taps, axis=3).reshape(nb * h0 * w0, k0)
    x0 = jnp.pad(x0, ((0, 0), (0, kp0 - k0))).astype(jnp.bfloat16)

    # Per-conv input spatial sizes and the final feature-map size (static).
    dims, (h, w) = [], (h0, w0)
    for (_, _, pools) in plan:
        dims.append((h, w))
        for _ in range(pools):
            h, w = h // 2, w // 2
    hf, wf = h, w
    c_last = plan[-1][1]
    fc_in = packed["fcs"][0][0].shape[0]
    assert hf == 1 and wf == 1 and c_last == fc_in and c_last % LANE == 0, (
        "cifar classifier head expects a 1x1x512 feature map")

    ncls_p = packed["fcs"][-1][0].shape[-1]

    args = [x0]
    for wp, bp in packed["convs"]:
        args += [wp, bp]
    for wp, bp in packed["fcs"]:
        args += [wp, bp]

    def _full_spec(shape):
        nd = len(shape)
        return pl.BlockSpec(shape, lambda i, _nd=nd: (0,) * _nd)

    # One VMEM scratch buffer per conv after the first: its spatially padded
    # input activation (kept entirely on-chip; never touches HBM).
    scratch_shapes = [
        pltpu.VMEM((nb, dims[i][0] + 2, dims[i][1] + 2,
                    _round_up(plan[i][0], LANE)), jnp.float32)
        for i in range(1, len(plan))
    ]

    kernel = _make_fused_kernel(plan, dims, nb)
    out = pl.pallas_call(
        kernel,
        out_shape=jax.ShapeDtypeStruct((nb, ncls_p), jnp.float32),
        grid=(1,),
        in_specs=[_full_spec(a.shape) for a in args],
        out_specs=_full_spec((nb, ncls_p)),
        scratch_shapes=scratch_shapes,
        compiler_params=pltpu.CompilerParams(
            dimension_semantics=("arbitrary",),
            vmem_limit_bytes=32 * 1024 * 1024),
    )(*args)
    return out[:, :num_classes]


# ------------------------- pure-JAX reference (sanity) ----------------------

def vgg_reference(params, x_nchw, config):
    """Plain-XLA reference with the same bf16-operand / f32-accumulate recipe."""
    x = jnp.transpose(x_nchw, (0, 2, 3, 1)).astype(jnp.float32)
    convs = iter([l for l in params["features"] if l is not None])
    for v in config:
        if v == 'M':
            n_, h_, w_, c_ = x.shape
            x = jnp.max(x.reshape(n_, h_ // 2, 2, w_ // 2, 2, c_), axis=(2, 4))
        else:
            layer = next(convs)
            wgt, b = layer["w"], layer["b"]
            n_, h_, w_, c_ = x.shape
            xp = jnp.pad(x, ((0, 0), (1, 1), (1, 1), (0, 0)))
            taps = [xp[:, kh:kh + h_, kw:kw + w_, :]
                    for kh in range(3) for kw in range(3)]
            pat = jnp.stack(taps, axis=3).reshape(n_ * h_ * w_, 9 * c_)
            y = jnp.dot(pat.astype(jnp.bfloat16),
                        wgt.reshape(9 * c_, -1).astype(jnp.bfloat16),
                        preferred_element_type=jnp.float32)
            x = jnp.maximum(y + b, 0.0).reshape(n_, h_, w_, -1)
    x = jnp.transpose(x, (0, 3, 1, 2)).reshape(x.shape[0], -1)  # NCHW flatten
    for i, layer in enumerate(params["classifier"]):
        x = jnp.dot(x.astype(jnp.bfloat16), layer["w"].astype(jnp.bfloat16),
                    preferred_element_type=jnp.float32) + layer["b"]
        if i < 2:
            x = jnp.maximum(x, 0.0)
    return x


# --------------------------------- main --------------------------------------

if __name__ == "__main__":
    # Small VGG-style config with the cifar=True head: 4 convs + 4 pools bring
    # a 16x16 input down to a 1x1x512 feature map -> flatten == 512, matching
    # the classifier's expected input size.
    config = [16, 'M', 32, 'M', 64, 'M', 512, 'M']

    key = jax.random.PRNGKey(0)
    pkey, xkey = jax.random.split(key)
    params = init_params(pkey, config)
    packed = pack_params(params, config)       # one-time weight packing
    x = jax.random.normal(xkey, (2, 3, 16, 16), jnp.float32)   # NCHW input

    fwd = jax.jit(functools.partial(vgg_forward, config=config))
    out = jax.block_until_ready(fwd(packed, x))
    assert out.shape == (2, 10), out.shape
    assert out.dtype == jnp.float32

    # Loose sanity check against a pure-JAX reference using the same bf16
    # matmul recipe (catches layout / tap-ordering bugs).
    ref = vgg_reference(params, x, config)
    np.testing.assert_allclose(np.asarray(out), np.asarray(ref),
                               rtol=1e-2, atol=1e-2)
    print("KERNEL_OK")
</pallas_src>

<mosaic_0001>
module attributes {stable_mosaic.version = 11 : i64} {
  func.func @kernel(%arg0: i32, %arg1: memref<512x128xbf16, #tpu.memory_space<vmem>>, %arg2: memref<128x128xbf16, #tpu.memory_space<vmem>>, %arg3: memref<1x128xf32, #tpu.memory_space<vmem>>, %arg4: memref<9x128x128xbf16, #tpu.memory_space<vmem>>, %arg5: memref<1x128xf32, #tpu.memory_space<vmem>>, %arg6: memref<9x128x128xbf16, #tpu.memory_space<vmem>>, %arg7: memref<1x128xf32, #tpu.memory_space<vmem>>, %arg8: memref<9x128x512xbf16, #tpu.memory_space<vmem>>, %arg9: memref<1x512xf32, #tpu.memory_space<vmem>>, %arg10: memref<512x512xbf16, #tpu.memory_space<vmem>>, %arg11: memref<1x512xf32, #tpu.memory_space<vmem>>, %arg12: memref<512x512xbf16, #tpu.memory_space<vmem>>, %arg13: memref<1x512xf32, #tpu.memory_space<vmem>>, %arg14: memref<512x128xbf16, #tpu.memory_space<vmem>>, %arg15: memref<1x128xf32, #tpu.memory_space<vmem>>, %arg16: memref<2x128xf32, #tpu.memory_space<vmem>>, %arg17: memref<2x10x10x128xf32, #tpu.memory_space<vmem>>, %arg18: memref<2x6x6x128xf32, #tpu.memory_space<vmem>>, %arg19: memref<2x4x4x128xf32, #tpu.memory_space<vmem>>) attributes {dimension_semantics = [#tpu.dimension_semantics<arbitrary>], iteration_bounds = array<i64: 1>, scalar_prefetch = 0 : i64, scratch_operands = 3 : i64, tpu.core_type = #tpu.core_type<tc>, window_params = [{pipeline_mode = #tpu.pipeline_mode<synchronous>, transform_indices = @transform_0, window_bounds = array<i64: 512, 128>}, {pipeline_mode = #tpu.pipeline_mode<synchronous>, transform_indices = @transform_1, window_bounds = array<i64: 128, 128>}, {pipeline_mode = #tpu.pipeline_mode<synchronous>, transform_indices = @transform_2, window_bounds = array<i64: 1, 128>}, {pipeline_mode = #tpu.pipeline_mode<synchronous>, transform_indices = @transform_3, window_bounds = array<i64: 9, 128, 128>}, {pipeline_mode = #tpu.pipeline_mode<synchronous>, transform_indices = @transform_4, window_bounds = array<i64: 1, 128>}, {pipeline_mode = #tpu.pipeline_mode<synchronous>, transform_indices = @transform_5, window_bounds = array<i64: 9, 128, 128>}, {pipeline_mode = #tpu.pipeline_mode<synchronous>, transform_indices = @transform_6, window_bounds = array<i64: 1, 128>}, {pipeline_mode = #tpu.pipeline_mode<synchronous>, transform_indices = @transform_7, window_bounds = array<i64: 9, 128, 512>}, {pipeline_mode = #tpu.pipeline_mode<synchronous>, transform_indices = @transform_8, window_bounds = array<i64: 1, 512>}, {pipeline_mode = #tpu.pipeline_mode<synchronous>, transform_indices = @transform_9, window_bounds = array<i64: 512, 512>}, {pipeline_mode = #tpu.pipeline_mode<synchronous>, transform_indices = @transform_10, window_bounds = array<i64: 1, 512>}, {pipeline_mode = #tpu.pipeline_mode<synchronous>, transform_indices = @transform_11, window_bounds = array<i64: 512, 512>}, {pipeline_mode = #tpu.pipeline_mode<synchronous>, transform_indices = @transform_12, window_bounds = array<i64: 1, 512>}, {pipeline_mode = #tpu.pipeline_mode<synchronous>, transform_indices = @transform_13, window_bounds = array<i64: 512, 128>}, {pipeline_mode = #tpu.pipeline_mode<synchronous>, transform_indices = @transform_14, window_bounds = array<i64: 1, 128>}, {pipeline_mode = #tpu.pipeline_mode<synchronous>, transform_indices = @transform_15, window_bounds = array<i64: 2, 128>}]} {
    %c0 = arith.constant 0 : index
    %c0_0 = arith.constant 0 : index
    %0 = vector.load %arg1[%c0, %c0_0] : memref<512x128xbf16, #tpu.memory_space<vmem>>, vector<512x128xbf16>
    %c0_1 = arith.constant 0 : index
    %c0_2 = arith.constant 0 : index
    %1 = vector.load %arg2[%c0_1, %c0_2] : memref<128x128xbf16, #tpu.memory_space<vmem>>, vector<128x128xbf16>
    %cst = arith.constant dense<0.000000e+00> : vector<512x128xf32>
    %2 = tpu.matmul %0, %1, %cst {dimension_numbers = #tpu.dot_dimension_numbers<[1], [0], [0], [1], [0, 0, 1, 1], [], []>} : vector<512x128xbf16>, vector<128x128xbf16>, vector<512x128xf32> -> vector<512x128xf32>
    %c0_3 = arith.constant 0 : index
    %c0_4 = arith.constant 0 : index
    %3 = vector.load %arg3[%c0_3, %c0_4] : memref<1x128xf32, #tpu.memory_space<vmem>>, vector<1x128xf32>
    %4 = vector.broadcast %3 : vector<1x128xf32> to vector<512x128xf32>
    %5 = arith.addf %2, %4 : vector<512x128xf32>
    %cst_5 = arith.constant 0.000000e+00 : f32
    %6 = vector.broadcast %cst_5 : f32 to vector<512x128xf32>
    %7 = arith.maximumf %5, %6 : vector<512x128xf32>
    %8 = vector.shape_cast %7 : vector<512x128xf32> to vector<256x2x128xf32>
    %9 = vector.extract_strided_slice %8 {offsets = [0, 0, 0], sizes = [256, 1, 128], strides = [1, 1, 1]} : vector<256x2x128xf32> to vector<256x1x128xf32>
    %10 = vector.shape_cast %9 : vector<256x1x128xf32> to vector<256x128xf32>
    %11 = vector.extract_strided_slice %8 {offsets = [0, 1, 0], sizes = [256, 1, 128], strides = [1, 1, 1]} : vector<256x2x128xf32> to vector<256x1x128xf32>
    %12 = vector.shape_cast %11 : vector<256x1x128xf32> to vector<256x128xf32>
    %13 = arith.maximumf %10, %12 : vector<256x128xf32>
    %14 = vector.shape_cast %13 : vector<256x128xf32> to vector<16x2x8x128xf32>
    %15 = vector.extract_strided_slice %14 {offsets = [0, 0, 0, 0], sizes = [16, 1, 8, 128], strides = [1, 1, 1, 1]} : vector<16x2x8x128xf32> to vector<16x1x8x128xf32>
    %16 = vector.shape_cast %15 : vector<16x1x8x128xf32> to vector<16x8x128xf32>
    %17 = vector.extract_strided_slice %14 {offsets = [0, 1, 0, 0], sizes = [16, 1, 8, 128], strides = [1, 1, 1, 1]} : vector<16x2x8x128xf32> to vector<16x1x8x128xf32>
    %18 = vector.shape_cast %17 : vector<16x1x8x128xf32> to vector<16x8x128xf32>
    %19 = arith.maximumf %16, %18 : vector<16x8x128xf32>
    %20 = vector.shape_cast %19 : vector<16x8x128xf32> to vector<128x128xf32>
    %cst_6 = arith.constant 0.000000e+00 : f32
    %21 = vector.broadcast %cst_6 : f32 to vector<2x1x10x128xf32>
    %c0_7 = arith.constant 0 : index
    %c0_8 = arith.constant 0 : index
    %c0_9 = arith.constant 0 : index
    %c0_10 = arith.constant 0 : index
    %22 = vector.load %arg17[%c0_7, %c0_8, %c0_9, %c0_10] : memref<2x10x10x128xf32, #tpu.memory_space<vmem>>, vector<2x1x10x128xf32>
    tpu.vector_store %arg17[%c0_7, %c0_8, %c0_9, %c0_10], %21 {strides = array<i32>} : memref<2x10x10x128xf32, #tpu.memory_space<vmem>>, vector<2x1x10x128xf32>,
    %cst_11 = arith.constant 0.000000e+00 : f32
    %23 = vector.broadcast %cst_11 : f32 to vector<2x1x10x128xf32>
    %c0_12 = arith.constant 0 : index
    %c9 = arith.constant 9 : index
    %c0_13 = arith.constant 0 : index
    %c0_14 = arith.constant 0 : index
    %24 = vector.load %arg17[%c0_12, %c9, %c0_13, %c0_14] : memref<2x10x10x128xf32, #tpu.memory_space<vmem>>, vector<2x1x10x128xf32>
    tpu.vector_store %arg17[%c0_12, %c9, %c0_13, %c0_14], %23 {strides = array<i32>} : memref<2x10x10x128xf32, #tpu.memory_space<vmem>>, vector<2x1x10x128xf32>,
    %cst_15 = arith.constant 0.000000e+00 : f32
    %25 = vector.broadcast %cst_15 : f32 to vector<2x10x1x128xf32>
    %c0_16 = arith.constant 0 : index
    %c0_17 = arith.constant 0 : index
    %c0_18 = arith.constant 0 : index
    %c0_19 = arith.constant 0 : index
    %26 = vector.load %arg17[%c0_16, %c0_17, %c0_18, %c0_19] : memref<2x10x10x128xf32, #tpu.memory_space<vmem>>, vector<2x10x1x128xf32>
    tpu.vector_store %arg17[%c0_16, %c0_17, %c0_18, %c0_19], %25 {strides = array<i32>} : memref<2x10x10x128xf32, #tpu.memory_space<vmem>>, vector<2x10x1x128xf32>,
    %cst_20 = arith.constant 0.000000e+00 : f32
    %27 = vector.broadcast %cst_20 : f32 to vector<2x10x1x128xf32>
    %c0_21 = arith.constant 0 : index
    %c0_22 = arith.constant 0 : index
    %c9_23 = arith.constant 9 : index
    %c0_24 = arith.constant 0 : index
    %28 = vector.load %arg17[%c0_21, %c0_22, %c9_23, %c0_24] : memref<2x10x10x128xf32, #tpu.memory_space<vmem>>, vector<2x10x1x128xf32>
    tpu.vector_store %arg17[%c0_21, %c0_22, %c9_23, %c0_24], %27 {strides = array<i32>} : memref<2x10x10x128xf32, #tpu.memory_space<vmem>>, vector<2x10x1x128xf32>,
    %29 = vector.shape_cast %20 : vector<128x128xf32> to vector<2x8x8x128xf32>
    %c0_25 = arith.constant 0 : index
    %c1 = arith.constant 1 : index
    %c1_26 = arith.constant 1 : index
    %c0_27 = arith.constant 0 : index
    %30 = vector.load %arg17[%c0_25, %c1, %c1_26, %c0_27] : memref<2x10x10x128xf32, #tpu.memory_space<vmem>>, vector<2x8x8x128xf32>
    tpu.vector_store %arg17[%c0_25, %c1, %c1_26, %c0_27], %29 {strides = array<i32>} : memref<2x10x10x128xf32, #tpu.memory_space<vmem>>, vector<2x8x8x128xf32>,
    %c0_28 = arith.constant 0 : index
    %c0_29 = arith.constant 0 : index
    %c0_30 = arith.constant 0 : index
    %c0_31 = arith.constant 0 : index
    %31 = vector.load %arg17[%c0_28, %c0_29, %c0_30, %c0_31] : memref<2x10x10x128xf32, #tpu.memory_space<vmem>>, vector<2x10x10x128xf32>
    %32 = vector.extract_strided_slice %31 {offsets = [0, 0, 0, 0], sizes = [2, 8, 8, 128], strides = [1, 1, 1, 1]} : vector<2x10x10x128xf32> to vector<2x8x8x128xf32>
    %33 = vector.shape_cast %32 : vector<2x8x8x128xf32> to vector<128x128xf32>
    %34 = arith.truncf %33 : vector<128x128xf32> to vector<128x128xbf16>
    %c0_32 = arith.constant 0 : index
    %c0_33 = arith.constant 0 : index
    %c0_34 = arith.constant 0 : index
    %35 = vector.load %arg4[%c0_32, %c0_33, %c0_34] : memref<9x128x128xbf16, #tpu.memory_space<vmem>>, vector<1x128x128xbf16>
    %36 = vector.shape_cast %35 : vector<1x128x128xbf16> to vector<128x128xbf16>
    %cst_35 = arith.constant dense<0.000000e+00> : vector<128x128xf32>
    %37 = tpu.matmul %34, %36, %cst_35 {dimension_numbers = #tpu.dot_dimension_numbers<[1], [0], [0], [1], [0, 0, 1, 1], [], []>} : vector<128x128xbf16>, vector<128x128xbf16>, vector<128x128xf32> -> vector<128x128xf32>
    %38 = vector.extract_strided_slice %31 {offsets = [0, 0, 1, 0], sizes = [2, 8, 8, 128], strides = [1, 1, 1, 1]} : vector<2x10x10x128xf32> to vector<2x8x8x128xf32>
    %39 = vector.shape_cast %38 : vector<2x8x8x128xf32> to vector<128x128xf32>
    %40 = arith.truncf %39 : vector<128x128xf32> to vector<128x128xbf16>
    %c1_36 = arith.constant 1 : index
    %c0_37 = arith.constant 0 : index
    %c0_38 = arith.constant 0 : index
    %41 = vector.load %arg4[%c1_36, %c0_37, %c0_38] : memref<9x128x128xbf16, #tpu.memory_space<vmem>>, vector<1x128x128xbf16>
    %42 = vector.shape_cast %41 : vector<1x128x128xbf16> to vector<128x128xbf16>
    %cst_39 = arith.constant dense<0.000000e+00> : vector<128x128xf32>
    %43 = tpu.matmul %40, %42, %cst_39 {dimension_numbers = #tpu.dot_dimension_numbers<[1], [0], [0], [1], [0, 0, 1, 1], [], []>} : vector<128x128xbf16>, vector<128x128xbf16>, vector<128x128xf32> -> vector<128x128xf32>
    %44 = arith.addf %37, %43 : vector<128x128xf32>
    %45 = vector.extract_strided_slice %31 {offsets = [0, 0, 2, 0], sizes = [2, 8, 8, 128], strides = [1, 1, 1, 1]} : vector<2x10x10x128xf32> to vector<2x8x8x128xf32>
    %46 = vector.shape_cast %45 : vector<2x8x8x128xf32> to vector<128x128xf32>
    %47 = arith.truncf %46 : vector<128x128xf32> to vector<128x128xbf16>
    %c2 = arith.constant 2 : index
    %c0_40 = arith.constant 0 : index
    %c0_41 = arith.constant 0 : index
    %48 = vector.load %arg4[%c2, %c0_40, %c0_41] : memref<9x128x128xbf16, #tpu.memory_space<vmem>>, vector<1x128x128xbf16>
    %49 = vector.shape_cast %48 : vector<1x128x128xbf16> to vector<128x128xbf16>
    %cst_42 = arith.constant dense<0.000000e+00> : vector<128x128xf32>
    %50 = tpu.matmul %47, %49, %cst_42 {dimension_numbers = #tpu.dot_dimension_numbers<[1], [0], [0], [1], [0, 0, 1, 1], [], []>} : vector<128x128xbf16>, vector<128x128xbf16>, vector<128x128xf32> -> vector<128x128xf32>
    %51 = arith.addf %44, %50 : vector<128x128xf32>
    %52 = vector.extract_strided_slice %31 {offsets = [0, 1, 0, 0], sizes = [2, 8, 8, 128], strides = [1, 1, 1, 1]} : vector<2x10x10x128xf32> to vector<2x8x8x128xf32>
    %53 = vector.shape_cast %52 : vector<2x8x8x128xf32> to vector<128x128xf32>
    %54 = arith.truncf %53 : vector<128x128xf32> to vector<128x128xbf16>
    %c3 = arith.constant 3 : index
    %c0_43 = arith.constant 0 : index
    %c0_44 = arith.constant 0 : index
    %55 = vector.load %arg4[%c3, %c0_43, %c0_44] : memref<9x128x128xbf16, #tpu.memory_space<vmem>>, vector<1x128x128xbf16>
    %56 = vector.shape_cast %55 : vector<1x128x128xbf16> to vector<128x128xbf16>
    %cst_45 = arith.constant dense<0.000000e+00> : vector<128x128xf32>
    %57 = tpu.matmul %54, %56, %cst_45 {dimension_numbers = #tpu.dot_dimension_numbers<[1], [0], [0], [1], [0, 0, 1, 1], [], []>} : vector<128x128xbf16>, vector<128x128xbf16>, vector<128x128xf32> -> vector<128x128xf32>
    %58 = arith.addf %51, %57 : vector<128x128xf32>
    %59 = vector.extract_strided_slice %31 {offsets = [0, 1, 1, 0], sizes = [2, 8, 8, 128], strides = [1, 1, 1, 1]} : vector<2x10x10x128xf32> to vector<2x8x8x128xf32>
    %60 = vector.shape_cast %59 : vector<2x8x8x128xf32> to vector<128x128xf32>
    %61 = arith.truncf %60 : vector<128x128xf32> to vector<128x128xbf16>
    %c4 = arith.constant 4 : index
    %c0_46 = arith.constant 0 : index
    %c0_47 = arith.constant 0 : index
    %62 = vector.load %arg4[%c4, %c0_46, %c0_47] : memref<9x128x128xbf16, #tpu.memory_space<vmem>>, vector<1x128x128xbf16>
    %63 = vector.shape_cast %62 : vector<1x128x128xbf16> to vector<128x128xbf16>
    %cst_48 = arith.constant dense<0.000000e+00> : vector<128x128xf32>
    %64 = tpu.matmul %61, %63, %cst_48 {dimension_numbers = #tpu.dot_dimension_numbers<[1], [0], [0], [1], [0, 0, 1, 1], [], []>} : vector<128x128xbf16>, vector<128x128xbf16>, vector<128x128xf32> -> vector<128x128xf32>
    %65 = arith.addf %58, %64 : vector<128x128xf32>
    %66 = vector.extract_strided_slice %31 {offsets = [0, 1, 2, 0], sizes = [2, 8, 8, 128], strides = [1, 1, 1, 1]} : vector<2x10x10x128xf32> to vector<2x8x8x128xf32>
    %67 = vector.shape_cast %66 : vector<2x8x8x128xf32> to vector<128x128xf32>
    %68 = arith.truncf %67 : vector<128x128xf32> to vector<128x128xbf16>
    %c5 = arith.constant 5 : index
    %c0_49 = arith.constant 0 : index
    %c0_50 = arith.constant 0 : index
    %69 = vector.load %arg4[%c5, %c0_49, %c0_50] : memref<9x128x128xbf16, #tpu.memory_space<vmem>>, vector<1x128x128xbf16>
    %70 = vector.shape_cast %69 : vector<1x128x128xbf16> to vector<128x128xbf16>
    %cst_51 = arith.constant dense<0.000000e+00> : vector<128x128xf32>
    %71 = tpu.matmul %68, %70, %cst_51 {dimension_numbers = #tpu.dot_dimension_numbers<[1], [0], [0], [1], [0, 0, 1, 1], [], []>} : vector<128x128xbf16>, vector<128x128xbf16>, vector<128x128xf32> -> vector<128x128xf32>
    %72 = arith.addf %65, %71 : vector<128x128xf32>
    %73 = vector.extract_strided_slice %31 {offsets = [0, 2, 0, 0], sizes = [2, 8, 8, 128], strides = [1, 1, 1, 1]} : vector<2x10x10x128xf32> to vector<2x8x8x128xf32>
    %74 = vector.shape_cast %73 : vector<2x8x8x128xf32> to vector<128x128xf32>
    %75 = arith.truncf %74 : vector<128x128xf32> to vector<128x128xbf16>
    %c6 = arith.constant 6 : index
    %c0_52 = arith.constant 0 : index
    %c0_53 = arith.constant 0 : index
    %76 = vector.load %arg4[%c6, %c0_52, %c0_53] : memref<9x128x128xbf16, #tpu.memory_space<vmem>>, vector<1x128x128xbf16>
    %77 = vector.shape_cast %76 : vector<1x128x128xbf16> to vector<128x128xbf16>
    %cst_54 = arith.constant dense<0.000000e+00> : vector<128x128xf32>
    %78 = tpu.matmul %75, %77, %cst_54 {dimension_numbers = #tpu.dot_dimension_numbers<[1], [0], [0], [1], [0, 0, 1, 1], [], []>} : vector<128x128xbf16>, vector<128x128xbf16>, vector<128x128xf32> -> vector<128x128xf32>
    %79 = arith.addf %72, %78 : vector<128x128xf32>
    %80 = vector.extract_strided_slice %31 {offsets = [0, 2, 1, 0], sizes = [2, 8, 8, 128], strides = [1, 1, 1, 1]} : vector<2x10x10x128xf32> to vector<2x8x8x128xf32>
    %81 = vector.shape_cast %80 : vector<2x8x8x128xf32> to vector<128x128xf32>
    %82 = arith.truncf %81 : vector<128x128xf32> to vector<128x128xbf16>
    %c7 = arith.constant 7 : index
    %c0_55 = arith.constant 0 : index
    %c0_56 = arith.constant 0 : index
    %83 = vector.load %arg4[%c7, %c0_55, %c0_56] : memref<9x128x128xbf16, #tpu.memory_space<vmem>>, vector<1x128x128xbf16>
    %84 = vector.shape_cast %83 : vector<1x128x128xbf16> to vector<128x128xbf16>
    %cst_57 = arith.constant dense<0.000000e+00> : vector<128x128xf32>
    %85 = tpu.matmul %82, %84, %cst_57 {dimension_numbers = #tpu.dot_dimension_numbers<[1], [0], [0], [1], [0, 0, 1, 1], [], []>} : vector<128x128xbf16>, vector<128x128xbf16>, vector<128x128xf32> -> vector<128x128xf32>
    %86 = arith.addf %79, %85 : vector<128x128xf32>
    %87 = vector.extract_strided_slice %31 {offsets = [0, 2, 2, 0], sizes = [2, 8, 8, 128], strides = [1, 1, 1, 1]} : vector<2x10x10x128xf32> to vector<2x8x8x128xf32>
    %88 = vector.shape_cast %87 : vector<2x8x8x128xf32> to vector<128x128xf32>
    %89 = arith.truncf %88 : vector<128x128xf32> to vector<128x128xbf16>
    %c8 = arith.constant 8 : index
    %c0_58 = arith.constant 0 : index
    %c0_59 = arith.constant 0 : index
    %90 = vector.load %arg4[%c8, %c0_58, %c0_59] : memref<9x128x128xbf16, #tpu.memory_space<vmem>>, vector<1x128x128xbf16>
    %91 = vector.shape_cast %90 : vector<1x128x128xbf16> to vector<128x128xbf16>
    %cst_60 = arith.constant dense<0.000000e+00> : vector<128x128xf32>
    %92 = tpu.matmul %89, %91, %cst_60 {dimension_numbers = #tpu.dot_dimension_numbers<[1], [0], [0], [1], [0, 0, 1, 1], [], []>} : vector<128x128xbf16>, vector<128x128xbf16>, vector<128x128xf32> -> vector<128x128xf32>
    %93 = arith.addf %86, %92 : vector<128x128xf32>
    %c0_61 = arith.constant 0 : index
    %c0_62 = arith.constant 0 : index
    %94 = vector.load %arg5[%c0_61, %c0_62] : memref<1x128xf32, #tpu.memory_space<vmem>>, vector<1x128xf32>
    %95 = vector.broadcast %94 : vector<1x128xf32> to vector<128x128xf32>
    %96 = arith.addf %93, %95 : vector<128x128xf32>
    %cst_63 = arith.constant 0.000000e+00 : f32
    %97 = vector.broadcast %cst_63 : f32 to vector<128x128xf32>
    %98 = arith.maximumf %96, %97 : vector<128x128xf32>
    %99 = vector.shape_cast %98 : vector<128x128xf32> to vector<64x2x128xf32>
    %100 = vector.extract_strided_slice %99 {offsets = [0, 0, 0], sizes = [64, 1, 128], strides = [1, 1, 1]} : vector<64x2x128xf32> to vector<64x1x128xf32>
    %101 = vector.shape_cast %100 : vector<64x1x128xf32> to vector<64x128xf32>
    %102 = vector.extract_strided_slice %99 {offsets = [0, 1, 0], sizes = [64, 1, 128], strides = [1, 1, 1]} : vector<64x2x128xf32> to vector<64x1x128xf32>
    %103 = vector.shape_cast %102 : vector<64x1x128xf32> to vector<64x128xf32>
    %104 = arith.maximumf %101, %103 : vector<64x128xf32>
    %105 = vector.shape_cast %104 : vector<64x128xf32> to vector<8x2x4x128xf32>
    %106 = vector.extract_strided_slice %105 {offsets = [0, 0, 0, 0], sizes = [8, 1, 4, 128], strides = [1, 1, 1, 1]} : vector<8x2x4x128xf32> to vector<8x1x4x128xf32>
    %107 = vector.shape_cast %106 : vector<8x1x4x128xf32> to vector<8x4x128xf32>
    %108 = vector.extract_strided_slice %105 {offsets = [0, 1, 0, 0], sizes = [8, 1, 4, 128], strides = [1, 1, 1, 1]} : vector<8x2x4x128xf32> to vector<8x1x4x128xf32>
    %109 = vector.shape_cast %108 : vector<8x1x4x128xf32> to vector<8x4x128xf32>
    %110 = arith.maximumf %107, %109 : vector<8x4x128xf32>
    %111 = vector.shape_cast %110 : vector<8x4x128xf32> to vector<32x128xf32>
    %cst_64 = arith.constant 0.000000e+00 : f32
    %112 = vector.broadcast %cst_64 : f32 to vector<2x1x6x128xf32>
    %c0_65 = arith.constant 0 : index
    %c0_66 = arith.constant 0 : index
    %c0_67 = arith.constant 0 : index
    %c0_68 = arith.constant 0 : index
    %113 = vector.load %arg18[%c0_65, %c0_66, %c0_67, %c0_68] : memref<2x6x6x128xf32, #tpu.memory_space<vmem>>, vector<2x1x6x128xf32>
    tpu.vector_store %arg18[%c0_65, %c0_66, %c0_67, %c0_68], %112 {strides = array<i32>} : memref<2x6x6x128xf32, #tpu.memory_space<vmem>>, vector<2x1x6x128xf32>,
    %cst_69 = arith.constant 0.000000e+00 : f32
    %114 = vector.broadcast %cst_69 : f32 to vector<2x1x6x128xf32>
    %c0_70 = arith.constant 0 : index
    %c5_71 = arith.constant 5 : index
    %c0_72 = arith.constant 0 : index
    %c0_73 = arith.constant 0 : index
    %115 = vector.load %arg18[%c0_70, %c5_71, %c0_72, %c0_73] : memref<2x6x6x128xf32, #tpu.memory_space<vmem>>, vector<2x1x6x128xf32>
    tpu.vector_store %arg18[%c0_70, %c5_71, %c0_72, %c0_73], %114 {strides = array<i32>} : memref<2x6x6x128xf32, #tpu.memory_space<vmem>>, vector<2x1x6x128xf32>,
    %cst_74 = arith.constant 0.000000e+00 : f32
    %116 = vector.broadcast %cst_74 : f32 to vector<2x6x1x128xf32>
    %c0_75 = arith.constant 0 : index
    %c0_76 = arith.constant 0 : index
    %c0_77 = arith.constant 0 : index
    %c0_78 = arith.constant 0 : index
    %117 = vector.load %arg18[%c0_75, %c0_76, %c0_77, %c0_78] : memref<2x6x6x128xf32, #tpu.memory_space<vmem>>, vector<2x6x1x128xf32>
    tpu.vector_store %arg18[%c0_75, %c0_76, %c0_77, %c0_78], %116 {strides = array<i32>} : memref<2x6x6x128xf32, #tpu.memory_space<vmem>>, vector<2x6x1x128xf32>,
    %cst_79 = arith.constant 0.000000e+00 : f32
    %118 = vector.broadcast %cst_79 : f32 to vector<2x6x1x128xf32>
    %c0_80 = arith.constant 0 : index
    %c0_81 = arith.constant 0 : index
    %c5_82 = arith.constant 5 : index
    %c0_83 = arith.constant 0 : index
    %119 = vector.load %arg18[%c0_80, %c0_81, %c5_82, %c0_83] : memref<2x6x6x128xf32, #tpu.memory_space<vmem>>, vector<2x6x1x128xf32>
    tpu.vector_store %arg18[%c0_80, %c0_81, %c5_82, %c0_83], %118 {strides = array<i32>} : memref<2x6x6x128xf32, #tpu.memory_space<vmem>>, vector<2x6x1x128xf32>,
    %120 = vector.shape_cast %111 : vector<32x128xf32> to vector<2x4x4x128xf32>
    %c0_84 = arith.constant 0 : index
    %c1_85 = arith.constant 1 : index
    %c1_86 = arith.constant 1 : index
    %c0_87 = arith.constant 0 : index
    %121 = vector.load %arg18[%c0_84, %c1_85, %c1_86, %c0_87] : memref<2x6x6x128xf32, #tpu.memory_space<vmem>>, vector<2x4x4x128xf32>
    tpu.vector_store %arg18[%c0_84, %c1_85, %c1_86, %c0_87], %120 {strides = array<i32>} : memref<2x6x6x128xf32, #tpu.memory_space<vmem>>, vector<2x4x4x128xf32>,
    %c0_88 = arith.constant 0 : index
    %c0_89 = arith.constant 0 : index
    %c0_90 = arith.constant 0 : index
    %c0_91 = arith.constant 0 : index
    %122 = vector.load %arg18[%c0_88, %c0_89, %c0_90, %c0_91] : memref<2x6x6x128xf32, #tpu.memory_space<vmem>>, vector<2x6x6x128xf32>
    %123 = vector.extract_strided_slice %122 {offsets = [0, 0, 0, 0], sizes = [2, 4, 4, 128], strides = [1, 1, 1, 1]} : vector<2x6x6x128xf32> to vector<2x4x4x128xf32>
    %124 = vector.shape_cast %123 : vector<2x4x4x128xf32> to vector<32x128xf32>
    %125 = arith.truncf %124 : vector<32x128xf32> to vector<32x128xbf16>
    %c0_92 = arith.constant 0 : index
    %c0_93 = arith.constant 0 : index
    %c0_94 = arith.constant 0 : index
    %126 = vector.load %arg6[%c0_92, %c0_93, %c0_94] : memref<9x128x128xbf16, #tpu.memory_space<vmem>>, vector<1x128x128xbf16>
    %127 = vector.shape_cast %126 : vector<1x128x128xbf16> to vector<128x128xbf16>
    %cst_95 = arith.constant dense<0.000000e+00> : vector<32x128xf32>
    %128 = tpu.matmul %125, %127, %cst_95 {dimension_numbers = #tpu.dot_dimension_numbers<[1], [0], [0], [1], [0, 0, 1, 1], [], []>} : vector<32x128xbf16>, vector<128x128xbf16>, vector<32x128xf32> -> vector<32x128xf32>
    %129 = vector.extract_strided_slice %122 {offsets = [0, 0, 1, 0], sizes = [2, 4, 4, 128], strides = [1, 1, 1, 1]} : vector<2x6x6x128xf32> to vector<2x4x4x128xf32>
    %130 = vector.shape_cast %129 : vector<2x4x4x128xf32> to vector<32x128xf32>
    %131 = arith.truncf %130 : vector<32x128xf32> to vector<32x128xbf16>
    %c1_96 = arith.constant 1 : index
    %c0_97 = arith.constant 0 : index
    %c0_98 = arith.constant 0 : index
    %132 = vector.load %arg6[%c1_96, %c0_97, %c0_98] : memref<9x128x128xbf16, #tpu.memory_space<vmem>>, vector<1x128x128xbf16>
    %133 = vector.shape_cast %132 : vector<1x128x128xbf16> to vector<128x128xbf16>
    %cst_99 = arith.constant dense<0.000000e+00> : vector<32x128xf32>
    %134 = tpu.matmul %131, %133, %cst_99 {dimension_numbers = #tpu.dot_dimension_numbers<[1], [0], [0], [1], [0, 0, 1, 1], [], []>} : vector<32x128xbf16>, vector<128x128xbf16>, vector<32x128xf32> -> vector<32x128xf32>
    %135 = arith.addf %128, %134 : vector<32x128xf32>
    %136 = vector.extract_strided_slice %122 {offsets = [0, 0, 2, 0], sizes = [2, 4, 4, 128], strides = [1, 1, 1, 1]} : vector<2x6x6x128xf32> to vector<2x4x4x128xf32>
    %137 = vector.shape_cast %136 : vector<2x4x4x128xf32> to vector<32x128xf32>
    %138 = arith.truncf %137 : vector<32x128xf32> to vector<32x128xbf16>
    %c2_100 = arith.constant 2 : index
    %c0_101 = arith.constant 0 : index
    %c0_102 = arith.constant 0 : index
    %139 = vector.load %arg6[%c2_100, %c0_101, %c0_102] : memref<9x128x128xbf16, #tpu.memory_space<vmem>>, vector<1x128x128xbf16>
    %140 = vector.shape_cast %139 : vector<1x128x128xbf16> to vector<128x128xbf16>
    %cst_103 = arith.constant dense<0.000000e+00> : vector<32x128xf32>
    %141 = tpu.matmul %138, %140, %cst_103 {dimension_numbers = #tpu.dot_dimension_numbers<[1], [0], [0], [1], [0, 0, 1, 1], [], []>} : vector<32x128xbf16>, vector<128x128xbf16>, vector<32x128xf32> -> vector<32x128xf32>
    %142 = arith.addf %135, %141 : vector<32x128xf32>
    %143 = vector.extract_strided_slice %122 {offsets = [0, 1, 0, 0], sizes = [2, 4, 4, 128], strides = [1, 1, 1, 1]} : vector<2x6x6x128xf32> to vector<2x4x4x128xf32>
    %144 = vector.shape_cast %143 : vector<2x4x4x128xf32> to vector<32x128xf32>
    %145 = arith.truncf %144 : vector<32x128xf32> to vector<32x128xbf16>
    %c3_104 = arith.constant 3 : index
    %c0_105 = arith.constant 0 : index
    %c0_106 = arith.constant 0 : index
    %146 = vector.load %arg6[%c3_104, %c0_105, %c0_106] : memref<9x128x128xbf16, #tpu.memory_space<vmem>>, vector<1x128x128xbf16>
    %147 = vector.shape_cast %146 : vector<1x128x128xbf16> to vector<128x128xbf16>
    %cst_107 = arith.constant dense<0.000000e+00> : vector<32x128xf32>
    %148 = tpu.matmul %145, %147, %cst_107 {dimension_numbers = #tpu.dot_dimension_numbers<[1], [0], [0], [1], [0, 0, 1, 1], [], []>} : vector<32x128xbf16>, vector<128x128xbf16>, vector<32x128xf32> -> vector<32x128xf32>
    %149 = arith.addf %142, %148 : vector<32x128xf32>
    %150 = vector.extract_strided_slice %122 {offsets = [0, 1, 1, 0], sizes = [2, 4, 4, 128], strides = [1, 1, 1, 1]} : vector<2x6x6x128xf32> to vector<2x4x4x128xf32>
    %151 = vector.shape_cast %150 : vector<2x4x4x128xf32> to vector<32x128xf32>
    %152 = arith.truncf %151 : vector<32x128xf32> to vector<32x128xbf16>
    %c4_108 = arith.constant 4 : index
    %c0_109 = arith.constant 0 : index
    %c0_110 = arith.constant 0 : index
    %153 = vector.load %arg6[%c4_108, %c0_109, %c0_110] : memref<9x128x128xbf16, #tpu.memory_space<vmem>>, vector<1x128x128xbf16>
    %154 = vector.shape_cast %153 : vector<1x128x128xbf16> to vector<128x128xbf16>
    %cst_111 = arith.constant dense<0.000000e+00> : vector<32x128xf32>
    %155 = tpu.matmul %152, %154, %cst_111 {dimension_numbers = #tpu.dot_dimension_numbers<[1], [0], [0], [1], [0, 0, 1, 1], [], []>} : vector<32x128xbf16>, vector<128x128xbf16>, vector<32x128xf32> -> vector<32x128xf32>
    %156 = arith.addf %149, %155 : vector<32x128xf32>
    %157 = vector.extract_strided_slice %122 {offsets = [0, 1, 2, 0], sizes = [2, 4, 4, 128], strides = [1, 1, 1, 1]} : vector<2x6x6x128xf32> to vector<2x4x4x128xf32>
    %158 = vector.shape_cast %157 : vector<2x4x4x128xf32> to vector<32x128xf32>
    %159 = arith.truncf %158 : vector<32x128xf32> to vector<32x128xbf16>
    %c5_112 = arith.constant 5 : index
    %c0_113 = arith.constant 0 : index
    %c0_114 = arith.constant 0 : index
    %160 = vector.load %arg6[%c5_112, %c0_113, %c0_114] : memref<9x128x128xbf16, #tpu.memory_space<vmem>>, vector<1x128x128xbf16>
    %161 = vector.shape_cast %160 : vector<1x128x128xbf16> to vector<128x128xbf16>
    %cst_115 = arith.constant dense<0.000000e+00> : vector<32x128xf32>
    %162 = tpu.matmul %159, %161, %cst_115 {dimension_numbers = #tpu.dot_dimension_numbers<[1], [0], [0], [1], [0, 0, 1, 1], [], []>} : vector<32x128xbf16>, vector<128x128xbf16>, vector<32x128xf32> -> vector<32x128xf32>
    %163 = arith.addf %156, %162 : vector<32x128xf32>
    %164 = vector.extract_strided_slice %122 {offsets = [0, 2, 0, 0], sizes = [2, 4, 4, 128], strides = [1, 1, 1, 1]} : vector<2x6x6x128xf32> to vector<2x4x4x128xf32>
    %165 = vector.shape_cast %164 : vector<2x4x4x128xf32> to vector<32x128xf32>
    %166 = arith.truncf %165 : vector<32x128xf32> to vector<32x128xbf16>
    %c6_116 = arith.constant 6 : index
    %c0_117 = arith.constant 0 : index
    %c0_118 = arith.constant 0 : index
    %167 = vector.load %arg6[%c6_116, %c0_117, %c0_118] : memref<9x128x128xbf16, #tpu.memory_space<vmem>>, vector<1x128x128xbf16>
    %168 = vector.shape_cast %167 : vector<1x128x128xbf16> to vector<128x128xbf16>
    %cst_119 = arith.constant dense<0.000000e+00> : vector<32x128xf32>
    %169 = tpu.matmul %166, %168, %cst_119 {dimension_numbers = #tpu.dot_dimension_numbers<[1], [0], [0], [1], [0, 0, 1, 1], [], []>} : vector<32x128xbf16>, vector<128x128xbf16>, vector<32x128xf32> -> vector<32x128xf32>
    %170 = arith.addf %163, %169 : vector<32x128xf32>
    %171 = vector.extract_strided_slice %122 {offsets = [0, 2, 1, 0], sizes = [2, 4, 4, 128], strides = [1, 1, 1, 1]} : vector<2x6x6x128xf32> to vector<2x4x4x128xf32>
    %172 = vector.shape_cast %171 : vector<2x4x4x128xf32> to vector<32x128xf32>
    %173 = arith.truncf %172 : vector<32x128xf32> to vector<32x128xbf16>
    %c7_120 = arith.constant 7 : index
    %c0_121 = arith.constant 0 : index
    %c0_122 = arith.constant 0 : index
    %174 = vector.load %arg6[%c7_120, %c0_121, %c0_122] : memref<9x128x128xbf16, #tpu.memory_space<vmem>>, vector<1x128x128xbf16>
    %175 = vector.shape_cast %174 : vector<1x128x128xbf16> to vector<128x128xbf16>
    %cst_123 = arith.constant dense<0.000000e+00> : vector<32x128xf32>
    %176 = tpu.matmul %173, %175, %cst_123 {dimension_numbers = #tpu.dot_dimension_numbers<[1], [0], [0], [1], [0, 0, 1, 1], [], []>} : vector<32x128xbf16>, vector<128x128xbf16>, vector<32x128xf32> -> vector<32x128xf32>
    %177 = arith.addf %170, %176 : vector<32x128xf32>
    %178 = vector.extract_strided_slice %122 {offsets = [0, 2, 2, 0], sizes = [2, 4, 4, 128], strides = [1, 1, 1, 1]} : vector<2x6x6x128xf32> to vector<2x4x4x128xf32>
    %179 = vector.shape_cast %178 : vector<2x4x4x128xf32> to vector<32x128xf32>
    %180 = arith.truncf %179 : vector<32x128xf32> to vector<32x128xbf16>
    %c8_124 = arith.constant 8 : index
    %c0_125 = arith.constant 0 : index
    %c0_126 = arith.constant 0 : index
    %181 = vector.load %arg6[%c8_124, %c0_125, %c0_126] : memref<9x128x128xbf16, #tpu.memory_space<vmem>>, vector<1x128x128xbf16>
    %182 = vector.shape_cast %181 : vector<1x128x128xbf16> to vector<128x128xbf16>
    %cst_127 = arith.constant dense<0.000000e+00> : vector<32x128xf32>
    %183 = tpu.matmul %180, %182, %cst_127 {dimension_numbers = #tpu.dot_dimension_numbers<[1], [0], [0], [1], [0, 0, 1, 1], [], []>} : vector<32x128xbf16>, vector<128x128xbf16>, vector<32x128xf32> -> vector<32x128xf32>
    %184 = arith.addf %177, %183 : vector<32x128xf32>
    %c0_128 = arith.constant 0 : index
    %c0_129 = arith.constant 0 : index
    %185 = vector.load %arg7[%c0_128, %c0_129] : memref<1x128xf32, #tpu.memory_space<vmem>>, vector<1x128xf32>
    %186 = vector.broadcast %185 : vector<1x128xf32> to vector<32x128xf32>
    %187 = arith.addf %184, %186 : vector<32x128xf32>
    %cst_130 = arith.constant 0.000000e+00 : f32
    %188 = vector.broadcast %cst_130 : f32 to vector<32x128xf32>
    %189 = arith.maximumf %187, %188 : vector<32x128xf32>
    %190 = vector.shape_cast %189 : vector<32x128xf32> to vector<16x2x128xf32>
    %191 = vector.extract_strided_slice %190 {offsets = [0, 0, 0], sizes = [16, 1, 128], strides = [1, 1, 1]} : vector<16x2x128xf32> to vector<16x1x128xf32>
    %192 = vector.shape_cast %191 : vector<16x1x128xf32> to vector<16x128xf32>
    %193 = vector.extract_strided_slice %190 {offsets = [0, 1, 0], sizes = [16, 1, 128], strides = [1, 1, 1]} : vector<16x2x128xf32> to vector<16x1x128xf32>
    %194 = vector.shape_cast %193 : vector<16x1x128xf32> to vector<16x128xf32>
    %195 = arith.maximumf %192, %194 : vector<16x128xf32>
    %196 = vector.shape_cast %195 : vector<16x128xf32> to vector<4x2x2x128xf32>
    %197 = vector.extract_strided_slice %196 {offsets = [0, 0, 0, 0], sizes = [4, 1, 2, 128], strides = [1, 1, 1, 1]} : vector<4x2x2x128xf32> to vector<4x1x2x128xf32>
    %198 = vector.shape_cast %197 : vector<4x1x2x128xf32> to vector<4x2x128xf32>
    %199 = vector.extract_strided_slice %196 {offsets = [0, 1, 0, 0], sizes = [4, 1, 2, 128], strides = [1, 1, 1, 1]} : vector<4x2x2x128xf32> to vector<4x1x2x128xf32>
    %200 = vector.shape_cast %199 : vector<4x1x2x128xf32> to vector<4x2x128xf32>
    %201 = arith.maximumf %198, %200 : vector<4x2x128xf32>
    %202 = vector.shape_cast %201 : vector<4x2x128xf32> to vector<8x128xf32>
    %cst_131 = arith.constant 0.000000e+00 : f32
    %203 = vector.broadcast %cst_131 : f32 to vector<2x1x4x128xf32>
    %c0_132 = arith.constant 0 : index
    %c0_133 = arith.constant 0 : index
    %c0_134 = arith.constant 0 : index
    %c0_135 = arith.constant 0 : index
    %204 = vector.load %arg19[%c0_132, %c0_133, %c0_134, %c0_135] : memref<2x4x4x128xf32, #tpu.memory_space<vmem>>, vector<2x1x4x128xf32>
    tpu.vector_store %arg19[%c0_132, %c0_133, %c0_134, %c0_135], %203 {strides = array<i32>} : memref<2x4x4x128xf32, #tpu.memory_space<vmem>>, vector<2x1x4x128xf32>,
    %cst_136 = arith.constant 0.000000e+00 : f32
    %205 = vector.broadcast %cst_136 : f32 to vector<2x1x4x128xf32>
    %c0_137 = arith.constant 0 : index
    %c3_138 = arith.constant 3 : index
    %c0_139 = arith.constant 0 : index
    %c0_140 = arith.constant 0 : index
    %206 = vector.load %arg19[%c0_137, %c3_138, %c0_139, %c0_140] : memref<2x4x4x128xf32, #tpu.memory_space<vmem>>, vector<2x1x4x128xf32>
    tpu.vector_store %arg19[%c0_137, %c3_138, %c0_139, %c0_140], %205 {strides = array<i32>} : memref<2x4x4x128xf32, #tpu.memory_space<vmem>>, vector<2x1x4x128xf32>,
    %cst_141 = arith.constant 0.000000e+00 : f32
    %207 = vector.broadcast %cst_141 : f32 to vector<2x4x1x128xf32>
    %c0_142 = arith.constant 0 : index
    %c0_143 = arith.constant 0 : index
    %c0_144 = arith.constant 0 : index
    %c0_145 = arith.constant 0 : index
    %208 = vector.load %arg19[%c0_142, %c0_143, %c0_144, %c0_145] : memref<2x4x4x128xf32, #tpu.memory_space<vmem>>, vector<2x4x1x128xf32>
    tpu.vector_store %arg19[%c0_142, %c0_143, %c0_144, %c0_145], %207 {strides = array<i32>} : memref<2x4x4x128xf32, #tpu.memory_space<vmem>>, vector<2x4x1x128xf32>,
    %cst_146 = arith.constant 0.000000e+00 : f32
    %209 = vector.broadcast %cst_146 : f32 to vector<2x4x1x128xf32>
    %c0_147 = arith.constant 0 : index
    %c0_148 = arith.constant 0 : index
    %c3_149 = arith.constant 3 : index
    %c0_150 = arith.constant 0 : index
    %210 = vector.load %arg19[%c0_147, %c0_148, %c3_149, %c0_150] : memref<2x4x4x128xf32, #tpu.memory_space<vmem>>, vector<2x4x1x128xf32>
    tpu.vector_store %arg19[%c0_147, %c0_148, %c3_149, %c0_150], %209 {strides = array<i32>} : memref<2x4x4x128xf32, #tpu.memory_space<vmem>>, vector<2x4x1x128xf32>,
    %211 = vector.shape_cast %202 : vector<8x128xf32> to vector<2x2x2x128xf32>
    %c0_151 = arith.constant 0 : index
    %c1_152 = arith.constant 1 : index
    %c1_153 = arith.constant 1 : index
    %c0_154 = arith.constant 0 : index
    %212 = vector.load %arg19[%c0_151, %c1_152, %c1_153, %c0_154] : memref<2x4x4x128xf32, #tpu.memory_space<vmem>>, vector<2x2x2x128xf32>
    tpu.vector_store %arg19[%c0_151, %c1_152, %c1_153, %c0_154], %211 {strides = array<i32>} : memref<2x4x4x128xf32, #tpu.memory_space<vmem>>, vector<2x2x2x128xf32>,
    %c0_155 = arith.constant 0 : index
    %c0_156 = arith.constant 0 : index
    %c0_157 = arith.constant 0 : index
    %c0_158 = arith.constant 0 : index
    %213 = vector.load %arg19[%c0_155, %c0_156, %c0_157, %c0_158] : memref<2x4x4x128xf32, #tpu.memory_space<vmem>>, vector<2x4x4x128xf32>
    %214 = vector.extract_strided_slice %213 {offsets = [0, 0, 0, 0], sizes = [2, 2, 2, 128], strides = [1, 1, 1, 1]} : vector<2x4x4x128xf32> to vector<2x2x2x128xf32>
    %215 = vector.shape_cast %214 : vector<2x2x2x128xf32> to vector<8x128xf32>
    %216 = arith.truncf %215 : vector<8x128xf32> to vector<8x128xbf16>
    %c0_159 = arith.constant 0 : index
    %c0_160 = arith.constant 0 : index
    %c0_161 = arith.constant 0 : index
    %217 = vector.load %arg8[%c0_159, %c0_160, %c0_161] : memref<9x128x512xbf16, #tpu.memory_space<vmem>>, vector<1x128x512xbf16>
    %218 = vector.shape_cast %217 : vector<1x128x512xbf16> to vector<128x512xbf16>
    %cst_162 = arith.constant dense<0.000000e+00> : vector<8x512xf32>
    %219 = tpu.matmul %216, %218, %cst_162 {dimension_numbers = #tpu.dot_dimension_numbers<[1], [0], [0], [1], [0, 0, 1, 1], [], []>} : vector<8x128xbf16>, vector<128x512xbf16>, vector<8x512xf32> -> vector<8x512xf32>
    %220 = vector.extract_strided_slice %213 {offsets = [0, 0, 1, 0], sizes = [2, 2, 2, 128], strides = [1, 1, 1, 1]} : vector<2x4x4x128xf32> to vector<2x2x2x128xf32>
    %221 = vector.shape_cast %220 : vector<2x2x2x128xf32> to vector<8x128xf32>
    %222 = arith.truncf %221 : vector<8x128xf32> to vector<8x128xbf16>
    %c1_163 = arith.constant 1 : index
    %c0_164 = arith.constant 0 : index
    %c0_165 = arith.constant 0 : index
    %223 = vector.load %arg8[%c1_163, %c0_164, %c0_165] : memref<9x128x512xbf16, #tpu.memory_space<vmem>>, vector<1x128x512xbf16>
    %224 = vector.shape_cast %223 : vector<1x128x512xbf16> to vector<128x512xbf16>
    %cst_166 = arith.constant dense<0.000000e+00> : vector<8x512xf32>
    %225 = tpu.matmul %222, %224, %cst_166 {dimension_numbers = #tpu.dot_dimension_numbers<[1], [0], [0], [1], [0, 0, 1, 1], [], []>} : vector<8x128xbf16>, vector<128x512xbf16>, vector<8x512xf32> -> vector<8x512xf32>
    %226 = arith.addf %219, %225 : vector<8x512xf32>
    %227 = vector.extract_strided_slice %213 {offsets = [0, 0, 2, 0], sizes = [2, 2, 2, 128], strides = [1, 1, 1, 1]} : vector<2x4x4x128xf32> to vector<2x2x2x128xf32>
    %228 = vector.shape_cast %227 : vector<2x2x2x128xf32> to vector<8x128xf32>
    %229 = arith.truncf %228 : vector<8x128xf32> to vector<8x128xbf16>
    %c2_167 = arith.constant 2 : index
    %c0_168 = arith.constant 0 : index
    %c0_169 = arith.constant 0 : index
    %230 = vector.load %arg8[%c2_167, %c0_168, %c0_169] : memref<9x128x512xbf16, #tpu.memory_space<vmem>>, vector<1x128x512xbf16>
    %231 = vector.shape_cast %230 : vector<1x128x512xbf16> to vector<128x512xbf16>
    %cst_170 = arith.constant dense<0.000000e+00> : vector<8x512xf32>
    %232 = tpu.matmul %229, %231, %cst_170 {dimension_numbers = #tpu.dot_dimension_numbers<[1], [0], [0], [1], [0, 0, 1, 1], [], []>} : vector<8x128xbf16>, vector<128x512xbf16>, vector<8x512xf32> -> vector<8x512xf32>
    %233 = arith.addf %226, %232 : vector<8x512xf32>
    %234 = vector.extract_strided_slice %213 {offsets = [0, 1, 0, 0], sizes = [2, 2, 2, 128], strides = [1, 1, 1, 1]} : vector<2x4x4x128xf32> to vector<2x2x2x128xf32>
    %235 = vector.shape_cast %234 : vector<2x2x2x128xf32> to vector<8x128xf32>
    %236 = arith.truncf %235 : vector<8x128xf32> to vector<8x128xbf16>
    %c3_171 = arith.constant 3 : index
    %c0_172 = arith.constant 0 : index
    %c0_173 = arith.constant 0 : index
    %237 = vector.load %arg8[%c3_171, %c0_172, %c0_173] : memref<9x128x512xbf16, #tpu.memory_space<vmem>>, vector<1x128x512xbf16>
    %238 = vector.shape_cast %237 : vector<1x128x512xbf16> to vector<128x512xbf16>
    %cst_174 = arith.constant dense<0.000000e+00> : vector<8x512xf32>
    %239 = tpu.matmul %236, %238, %cst_174 {dimension_numbers = #tpu.dot_dimension_numbers<[1], [0], [0], [1], [0, 0, 1, 1], [], []>} : vector<8x128xbf16>, vector<128x512xbf16>, vector<8x512xf32> -> vector<8x512xf32>
    %240 = arith.addf %233, %239 : vector<8x512xf32>
    %241 = vector.extract_strided_slice %213 {offsets = [0, 1, 1, 0], sizes = [2, 2, 2, 128], strides = [1, 1, 1, 1]} : vector<2x4x4x128xf32> to vector<2x2x2x128xf32>
    %242 = vector.shape_cast %241 : vector<2x2x2x128xf32> to vector<8x128xf32>
    %243 = arith.truncf %242 : vector<8x128xf32> to vector<8x128xbf16>
    %c4_175 = arith.constant 4 : index
    %c0_176 = arith.constant 0 : index
    %c0_177 = arith.constant 0 : index
    %244 = vector.load %arg8[%c4_175, %c0_176, %c0_177] : memref<9x128x512xbf16, #tpu.memory_space<vmem>>, vector<1x128x512xbf16>
    %245 = vector.shape_cast %244 : vector<1x128x512xbf16> to vector<128x512xbf16>
    %cst_178 = arith.constant dense<0.000000e+00> : vector<8x512xf32>
    %246 = tpu.matmul %243, %245, %cst_178 {dimension_numbers = #tpu.dot_dimension_numbers<[1], [0], [0], [1], [0, 0, 1, 1], [], []>} : vector<8x128xbf16>, vector<128x512xbf16>, vector<8x512xf32> -> vector<8x512xf32>
    %247 = arith.addf %240, %246 : vector<8x512xf32>
    %248 = vector.extract_strided_slice %213 {offsets = [0, 1, 2, 0], sizes = [2, 2, 2, 128], strides = [1, 1, 1, 1]} : vector<2x4x4x128xf32> to vector<2x2x2x128xf32>
    %249 = vector.shape_cast %248 : vector<2x2x2x128xf32> to vector<8x128xf32>
    %250 = arith.truncf %249 : vector<8x128xf32> to vector<8x128xbf16>
    %c5_179 = arith.constant 5 : index
    %c0_180 = arith.constant 0 : index
    %c0_181 = arith.constant 0 : index
    %251 = vector.load %arg8[%c5_179, %c0_180, %c0_181] : memref<9x128x512xbf16, #tpu.memory_space<vmem>>, vector<1x128x512xbf16>
    %252 = vector.shape_cast %251 : vector<1x128x512xbf16> to vector<128x512xbf16>
    %cst_182 = arith.constant dense<0.000000e+00> : vector<8x512xf32>
    %253 = tpu.matmul %250, %252, %cst_182 {dimension_numbers = #tpu.dot_dimension_numbers<[1], [0], [0], [1], [0, 0, 1, 1], [], []>} : vector<8x128xbf16>, vector<128x512xbf16>, vector<8x512xf32> -> vector<8x512xf32>
    %254 = arith.addf %247, %253 : vector<8x512xf32>
    %255 = vector.extract_strided_slice %213 {offsets = [0, 2, 0, 0], sizes = [2, 2, 2, 128], strides = [1, 1, 1, 1]} : vector<2x4x4x128xf32> to vector<2x2x2x128xf32>
    %256 = vector.shape_cast %255 : vector<2x2x2x128xf32> to vector<8x128xf32>
    %257 = arith.truncf %256 : vector<8x128xf32> to vector<8x128xbf16>
    %c6_183 = arith.constant 6 : index
    %c0_184 = arith.constant 0 : index
    %c0_185 = arith.constant 0 : index
    %258 = vector.load %arg8[%c6_183, %c0_184, %c0_185] : memref<9x128x512xbf16, #tpu.memory_space<vmem>>, vector<1x128x512xbf16>
    %259 = vector.shape_cast %258 : vector<1x128x512xbf16> to vector<128x512xbf16>
    %cst_186 = arith.constant dense<0.000000e+00> : vector<8x512xf32>
    %260 = tpu.matmul %257, %259, %cst_186 {dimension_numbers = #tpu.dot_dimension_numbers<[1], [0], [0], [1], [0, 0, 1, 1], [], []>} : vector<8x128xbf16>, vector<128x512xbf16>, vector<8x512xf32> -> vector<8x512xf32>
    %261 = arith.addf %254, %260 : vector<8x512xf32>
    %262 = vector.extract_strided_slice %213 {offsets = [0, 2, 1, 0], sizes = [2, 2, 2, 128], strides = [1, 1, 1, 1]} : vector<2x4x4x128xf32> to vector<2x2x2x128xf32>
    %263 = vector.shape_cast %262 : vector<2x2x2x128xf32> to vector<8x128xf32>
    %264 = arith.truncf %263 : vector<8x128xf32> to vector<8x128xbf16>
    %c7_187 = arith.constant 7 : index
    %c0_188 = arith.constant 0 : index
    %c0_189 = arith.constant 0 : index
    %265 = vector.load %arg8[%c7_187, %c0_188, %c0_189] : memref<9x128x512xbf16, #tpu.memory_space<vmem>>, vector<1x128x512xbf16>
    %266 = vector.shape_cast %265 : vector<1x128x512xbf16> to vector<128x512xbf16>
    %cst_190 = arith.constant dense<0.000000e+00> : vector<8x512xf32>
    %267 = tpu.matmul %264, %266, %cst_190 {dimension_numbers = #tpu.dot_dimension_numbers<[1], [0], [0], [1], [0, 0, 1, 1], [], []>} : vector<8x128xbf16>, vector<128x512xbf16>, vector<8x512xf32> -> vector<8x512xf32>
    %268 = arith.addf %261, %267 : vector<8x512xf32>
    %269 = vector.extract_strided_slice %213 {offsets = [0, 2, 2, 0], sizes = [2, 2, 2, 128], strides = [1, 1, 1, 1]} : vector<2x4x4x128xf32> to vector<2x2x2x128xf32>
    %270 = vector.shape_cast %269 : vector<2x2x2x128xf32> to vector<8x128xf32>
    %271 = arith.truncf %270 : vector<8x128xf32> to vector<8x128xbf16>
    %c8_191 = arith.constant 8 : index
    %c0_192 = arith.constant 0 : index
    %c0_193 = arith.constant 0 : index
    %272 = vector.load %arg8[%c8_191, %c0_192, %c0_193] : memref<9x128x512xbf16, #tpu.memory_space<vmem>>, vector<1x128x512xbf16>
    %273 = vector.shape_cast %272 : vector<1x128x512xbf16> to vector<128x512xbf16>
    %cst_194 = arith.constant dense<0.000000e+00> : vector<8x512xf32>
    %274 = tpu.matmul %271, %273, %cst_194 {dimension_numbers = #tpu.dot_dimension_numbers<[1], [0], [0], [1], [0, 0, 1, 1], [], []>} : vector<8x128xbf16>, vector<128x512xbf16>, vector<8x512xf32> -> vector<8x512xf32>
    %275 = arith.addf %268, %274 : vector<8x512xf32>
    %c0_195 = arith.constant 0 : index
    %c0_196 = arith.constant 0 : index
    %276 = vector.load %arg9[%c0_195, %c0_196] : memref<1x512xf32, #tpu.memory_space<vmem>>, vector<1x512xf32>
    %277 = vector.broadcast %276 : vector<1x512xf32> to vector<8x512xf32>
    %278 = arith.addf %275, %277 : vector<8x512xf32>
    %cst_197 = arith.constant 0.000000e+00 : f32
    %279 = vector.broadcast %cst_197 : f32 to vector<8x512xf32>
    %280 = arith.maximumf %278, %279 : vector<8x512xf32>
    %281 = vector.shape_cast %280 : vector<8x512xf32> to vector<4x2x512xf32>
    %282 = vector.extract_strided_slice %281 {offsets = [0, 0, 0], sizes = [4, 1, 512], strides = [1, 1, 1]} : vector<4x2x512xf32> to vector<4x1x512xf32>
    %283 = vector.shape_cast %282 : vector<4x1x512xf32> to vector<4x512xf32>
    %284 = vector.extract_strided_slice %281 {offsets = [0, 1, 0], sizes = [4, 1, 512], strides = [1, 1, 1]} : vector<4x2x512xf32> to vector<4x1x512xf32>
    %285 = vector.shape_cast %284 : vector<4x1x512xf32> to vector<4x512xf32>
    %286 = arith.maximumf %283, %285 : vector<4x512xf32>
    %287 = vector.shape_cast %286 : vector<4x512xf32> to vector<2x2x1x512xf32>
    %288 = vector.extract_strided_slice %287 {offsets = [0, 0, 0, 0], sizes = [2, 1, 1, 512], strides = [1, 1, 1, 1]} : vector<2x2x1x512xf32> to vector<2x1x1x512xf32>
    %289 = vector.shape_cast %288 : vector<2x1x1x512xf32> to vector<2x1x512xf32>
    %290 = vector.extract_strided_slice %287 {offsets = [0, 1, 0, 0], sizes = [2, 1, 1, 512], strides = [1, 1, 1, 1]} : vector<2x2x1x512xf32> to vector<2x1x1x512xf32>
    %291 = vector.shape_cast %290 : vector<2x1x1x512xf32> to vector<2x1x512xf32>
    %292 = arith.maximumf %289, %291 : vector<2x1x512xf32>
    %293 = vector.shape_cast %292 : vector<2x1x512xf32> to vector<2x512xf32>
    %294 = arith.truncf %293 : vector<2x512xf32> to vector<2x512xbf16>
    %c0_198 = arith.constant 0 : index
    %c0_199 = arith.constant 0 : index
    %295 = vector.load %arg10[%c0_198, %c0_199] : memref<512x512xbf16, #tpu.memory_space<vmem>>, vector<512x512xbf16>
    %cst_200 = arith.constant dense<0.000000e+00> : vector<2x512xf32>
    %296 = tpu.matmul %294, %295, %cst_200 {dimension_numbers = #tpu.dot_dimension_numbers<[1], [0], [0], [1], [0, 0, 1, 1], [], []>} : vector<2x512xbf16>, vector<512x512xbf16>, vector<2x512xf32> -> vector<2x512xf32>
    %c0_201 = arith.constant 0 : index
    %c0_202 = arith.constant 0 : index
    %297 = vector.load %arg11[%c0_201, %c0_202] : memref<1x512xf32, #tpu.memory_space<vmem>>, vector<1x512xf32>
    %298 = vector.broadcast %297 : vector<1x512xf32> to vector<2x512xf32>
    %299 = arith.addf %296, %298 : vector<2x512xf32>
    %cst_203 = arith.constant 0.000000e+00 : f32
    %300 = vector.broadcast %cst_203 : f32 to vector<2x512xf32>
    %301 = arith.maximumf %299, %300 : vector<2x512xf32>
    %302 = arith.truncf %301 : vector<2x512xf32> to vector<2x512xbf16>
    %c0_204 = arith.constant 0 : index
    %c0_205 = arith.constant 0 : index
    %303 = vector.load %arg12[%c0_204, %c0_205] : memref<512x512xbf16, #tpu.memory_space<vmem>>, vector<512x512xbf16>
    %cst_206 = arith.constant dense<0.000000e+00> : vector<2x512xf32>
    %304 = tpu.matmul %302, %303, %cst_206 {dimension_numbers = #tpu.dot_dimension_numbers<[1], [0], [0], [1], [0, 0, 1, 1], [], []>} : vector<2x512xbf16>, vector<512x512xbf16>, vector<2x512xf32> -> vector<2x512xf32>
    %c0_207 = arith.constant 0 : index
    %c0_208 = arith.constant 0 : index
    %305 = vector.load %arg13[%c0_207, %c0_208] : memref<1x512xf32, #tpu.memory_space<vmem>>, vector<1x512xf32>
    %306 = vector.broadcast %305 : vector<1x512xf32> to vector<2x512xf32>
    %307 = arith.addf %304, %306 : vector<2x512xf32>
    %cst_209 = arith.constant 0.000000e+00 : f32
    %308 = vector.broadcast %cst_209 : f32 to vector<2x512xf32>
    %309 = arith.maximumf %307, %308 : vector<2x512xf32>
    %310 = arith.truncf %309 : vector<2x512xf32> to vector<2x512xbf16>
    %c0_210 = arith.constant 0 : index
    %c0_211 = arith.constant 0 : index
    %311 = vector.load %arg14[%c0_210, %c0_211] : memref<512x128xbf16, #tpu.memory_space<vmem>>, vector<512x128xbf16>
    %cst_212 = arith.constant dense<0.000000e+00> : vector<2x128xf32>
    %312 = tpu.matmul %310, %311, %cst_212 {dimension_numbers = #tpu.dot_dimension_numbers<[1], [0], [0], [1], [0, 0, 1, 1], [], []>} : vector<2x512xbf16>, vector<512x128xbf16>, vector<2x128xf32> -> vector<2x128xf32>
    %c0_213 = arith.constant 0 : index
    %c0_214 = arith.constant 0 : index
    %313 = vector.load %arg15[%c0_213, %c0_214] : memref<1x128xf32, #tpu.memory_space<vmem>>, vector<1x128xf32>
    %314 = vector.broadcast %313 : vector<1x128xf32> to vector<2x128xf32>
    %315 = arith.addf %312, %314 : vector<2x128xf32>
    %c0_215 = arith.constant 0 : index
    %c0_216 = arith.constant 0 : index
    %316 = vector.load %arg16[%c0_215, %c0_216] : memref<2x128xf32, #tpu.memory_space<vmem>>, vector<2x128xf32>
    tpu.vector_store %arg16[%c0_215, %c0_216], %315 {strides = array<i32>} : memref<2x128xf32, #tpu.memory_space<vmem>>, vector<2x128xf32>,
    return
  }
  func.func @transform_0(%arg0: i32) -> (i32, i32) {
    %c0_i32 = arith.constant 0 : i32
    %c0_i32_0 = arith.constant 0 : i32
    %c0_i32_1 = arith.constant 0 : i32
    return %c0_i32, %c0_i32_0 : i32, i32
  }
  func.func @transform_1(%arg0: i32) -> (i32, i32) {
    %c0_i32 = arith.constant 0 : i32
    %c0_i32_0 = arith.constant 0 : i32
    %c0_i32_1 = arith.constant 0 : i32
    return %c0_i32, %c0_i32_0 : i32, i32
  }
  func.func @transform_2(%arg0: i32) -> (i32, i32) {
    %c0_i32 = arith.constant 0 : i32
    %c0_i32_0 = arith.constant 0 : i32
    %c0_i32_1 = arith.constant 0 : i32
    return %c0_i32, %c0_i32_0 : i32, i32
  }
  func.func @transform_3(%arg0: i32) -> (i32, i32, i32) {
    %c0_i32 = arith.constant 0 : i32
    %c0_i32_0 = arith.constant 0 : i32
    %c0_i32_1 = arith.constant 0 : i32
    %c0_i32_2 = arith.constant 0 : i32
    return %c0_i32, %c0_i32_0, %c0_i32_1 : i32, i32, i32
  }
  func.func @transform_4(%arg0: i32) -> (i32, i32) {
    %c0_i32 = arith.constant 0 : i32
    %c0_i32_0 = arith.constant 0 : i32
    %c0_i32_1 = arith.constant 0 : i32
    return %c0_i32, %c0_i32_0 : i32, i32
  }
  func.func @transform_5(%arg0: i32) -> (i32, i32, i32) {
    %c0_i32 = arith.constant 0 : i32
    %c0_i32_0 = arith.constant 0 : i32
    %c0_i32_1 = arith.constant 0 : i32
    %c0_i32_2 = arith.constant 0 : i32
    return %c0_i32, %c0_i32_0, %c0_i32_1 : i32, i32, i32
  }
  func.func @transform_6(%arg0: i32) -> (i32, i32) {
    %c0_i32 = arith.constant 0 : i32
    %c0_i32_0 = arith.constant 0 : i32
    %c0_i32_1 = arith.constant 0 : i32
    return %c0_i32, %c0_i32_0 : i32, i32
  }
  func.func @transform_7(%arg0: i32) -> (i32, i32, i32) {
    %c0_i32 = arith.constant 0 : i32
    %c0_i32_0 = arith.constant 0 : i32
    %c0_i32_1 = arith.constant 0 : i32
    %c0_i32_2 = arith.constant 0 : i32
    return %c0_i32, %c0_i32_0, %c0_i32_1 : i32, i32, i32
  }
  func.func @transform_8(%arg0: i32) -> (i32, i32) {
    %c0_i32 = arith.constant 0 : i32
    %c0_i32_0 = arith.constant 0 : i32
    %c0_i32_1 = arith.constant 0 : i32
    return %c0_i32, %c0_i32_0 : i32, i32
  }
  func.func @transform_9(%arg0: i32) -> (i32, i32) {
    %c0_i32 = arith.constant 0 : i32
    %c0_i32_0 = arith.constant 0 : i32
    %c0_i32_1 = arith.constant 0 : i32
    return %c0_i32, %c0_i32_0 : i32, i32
  }
  func.func @transform_10(%arg0: i32) -> (i32, i32) {
    %c0_i32 = arith.constant 0 : i32
    %c0_i32_0 = arith.constant 0 : i32
    %c0_i32_1 = arith.constant 0 : i32
    return %c0_i32, %c0_i32_0 : i32, i32
  }
  func.func @transform_11(%arg0: i32) -> (i32, i32) {
    %c0_i32 = arith.constant 0 : i32
    %c0_i32_0 = arith.constant 0 : i32
    %c0_i32_1 = arith.constant 0 : i32
    return %c0_i32, %c0_i32_0 : i32, i32
  }
  func.func @transform_12(%arg0: i32) -> (i32, i32) {
    %c0_i32 = arith.constant 0 : i32
    %c0_i32_0 = arith.constant 0 : i32
    %c0_i32_1 = arith.constant 0 : i32
    return %c0_i32, %c0_i32_0 : i32, i32
  }
  func.func @transform_13(%arg0: i32) -> (i32, i32) {
    %c0_i32 = arith.constant 0 : i32
    %c0_i32_0 = arith.constant 0 : i32
    %c0_i32_1 = arith.constant 0 : i32
    return %c0_i32, %c0_i32_0 : i32, i32
  }
  func.func @transform_14(%arg0: i32) -> (i32, i32) {
    %c0_i32 = arith.constant 0 : i32
    %c0_i32_0 = arith.constant 0 : i32
    %c0_i32_1 = arith.constant 0 : i32
    return %c0_i32, %c0_i32_0 : i32, i32
  }
  func.func @transform_15(%arg0: i32) -> (i32, i32) {
    %c0_i32 = arith.constant 0 : i32
    %c0_i32_0 = arith.constant 0 : i32
    %c0_i32_1 = arith.constant 0 : i32
    return %c0_i32, %c0_i32_0 : i32, i32
  }
}

</mosaic_0001>

<llo_original>
// kernel: vgg_forward.1
$region0: #{vgg_forward.1}
  #allocation0 [shape = 'u32[]', space=smem, size = 0x4, offset = 0x4, fixed_abs, tag = 'smem constant byte address 0x4 - core index']
  #allocation1 [shape = 'u32[144,128]{1,0:T(1,128)}', space=vmem, size = 0x12000, scoped, tag = 'internal scratch']
  #allocation2 [shape = 'f32[2,10,10,128]{3,2,1,0:T(8,128)}', space=vmem, size = 0x28000, scoped, tag = 'scratch operand']
  #allocation3 [shape = 'f32[2,6,6,128]{3,2,1,0:T(8,128)}', space=vmem, size = 0xc000, scoped, tag = 'scratch operand']
  #allocation4 [shape = 'f32[2,4,4,128]{3,2,1,0:T(4,128)}', space=vmem, size = 0x4000, scoped, tag = 'scratch operand']
  %s0 = inlined_call_operand.vmem [shape: bf16[512,128], index: 0, kind: input, shape index: {}]
  %s1 = inlined_call_operand.vmem [shape: bf16[128,128], index: 1, kind: input, shape index: {}]
  %s2 = inlined_call_operand.vmem [shape: f32[1,128], index: 2, kind: input, shape index: {}]
  %s3 = inlined_call_operand.vmem [shape: bf16[9,128,128], index: 3, kind: input, shape index: {}]
  %s4 = inlined_call_operand.vmem [shape: f32[1,128], index: 4, kind: input, shape index: {}]
  %s5 = inlined_call_operand.hbm [shape: bf16[9,128,128], index: 5, kind: input, shape index: {}]
  %s6 = inlined_call_operand.vmem [shape: f32[1,128], index: 6, kind: input, shape index: {}]
  %s7 = inlined_call_operand.vmem [shape: bf16[9,128,512], index: 7, kind: input, shape index: {}]
  %s8 = inlined_call_operand.vmem [shape: f32[1,512], index: 8, kind: input, shape index: {}]
  %s9 = inlined_call_operand.hbm [shape: bf16[512,512], index: 9, kind: input, shape index: {}]
  %s10 = inlined_call_operand.vmem [shape: f32[1,512], index: 10, kind: input, shape index: {}]
  %s11 = inlined_call_operand.hbm [shape: bf16[512,512], index: 11, kind: input, shape index: {}]
  %s12 = inlined_call_operand.vmem [shape: f32[1,512], index: 12, kind: input, shape index: {}]
  %s13 = inlined_call_operand.vmem [shape: bf16[512,128], index: 13, kind: input, shape index: {}]
  %s14 = inlined_call_operand.vmem [shape: f32[1,128], index: 14, kind: input, shape index: {}]
  %s15 = inlined_call_operand.hbm [shape: f32[2,128], index: 15, kind: output, shape index: {}]
  %s16 = sld [smem:[#allocation0]]
  $region82: #{vgg_forward.1} parent=0
    _
  %s18 = ssub.s32 1, %s16
  %s19 = scalar_select 0, %s18, %s16
  $region1: #{vgg_forward.1} parent=0
    #allocation5 [shape = 'u8[294912]{0}', space=vmem, size = 0x48000, scoped, tag = 'input window, operand 5, single buffered']
    #allocation6 [shape = 's32[1]{0}', space=sflag, size = 0x4, scoped, tag = 'scoped memory for vgg_forward.1']
    #allocation7 [shape = 's32[1]{0}', space=sflag, size = 0x4, scoped, tag = 'scoped memory for vgg_forward.1']
    #allocation8 [shape = 'u8[524288]{0}', space=vmem, size = 0x80000, scoped, tag = 'input window, operand 9, single buffered']
    #allocation9 [shape = 's32[1]{0}', space=sflag, size = 0x4, scoped, tag = 'scoped memory for vgg_forward.1']
    #allocation10 [shape = 'u8[524288]{0}', space=vmem, size = 0x80000, scoped, tag = 'input window, operand 11, single buffered']
    #allocation11 [shape = 'u8[1024]{0}', space=vmem, size = 0x400, scoped, tag = 'output window, operand 0, single buffered']
    %20 = vsyncpa [#allocation6], 0
    %21 = vsyncpa [#allocation9], 0
    %22 = vsyncpa [#allocation7], 0
    // Predicated region
    $region2: #{vgg_forward.1} parent=1 // pred_check
      _
    $region3: #{vgg_forward.1} parent=1 // pred_check_branch
      %24 = sbr.rel (0) target = $region5
    $region4: #{vgg_forward.1} parent=1 // pred_region
      _
    $region5: #{vgg_forward.1} parent=1 // pred_fallthru
      _
    // Predicated region
    $region6: #{vgg_forward.1} parent=1 // pred_check
      _
    $region7: #{vgg_forward.1} parent=1 // pred_check_branch
      %26 = sbr.rel (0) target = $region9
    $region8: #{vgg_forward.1} parent=1 // pred_region
      _
    $region9: #{vgg_forward.1} parent=1 // pred_fallthru
      _
    // Predicated region
    $region10: #{vgg_forward.1} parent=1 // pred_check
      _
    $region11: #{vgg_forward.1} parent=1 // pred_check_branch
      %28 = sbr.rel (0) target = $region13
    $region12: #{vgg_forward.1} parent=1 // pred_region
      _
    $region13: #{vgg_forward.1} parent=1 // pred_fallthru
      _
    // Predicated region
    $region14: #{vgg_forward.1} parent=1 // pred_check
      _
    $region15: #{vgg_forward.1} parent=1 // pred_check_branch
      %30 = sbr.rel (0) target = $region17
    $region16: #{vgg_forward.1} parent=1 // pred_region
      _
    $region17: #{vgg_forward.1} parent=1 // pred_fallthru
      _
    // Predicated region
    $region18: #{vgg_forward.1} parent=1 // pred_check
      _
    $region19: #{vgg_forward.1} parent=1 // pred_check_branch
      %32 = sbr.rel (0) target = $region21
    $region20: #{vgg_forward.1} parent=1 // pred_region
      _
    $region21: #{vgg_forward.1} parent=1 // pred_fallthru
      _
    // Predicated region
    $region22: #{vgg_forward.1} parent=1 // pred_check
      _
    $region23: #{vgg_forward.1} parent=1 // pred_check_branch
      %34 = sbr.rel (0) target = $region25
    $region24: #{vgg_forward.1} parent=1 // pred_region
      %s36 = ssub.s32 9216, 9216
      %37 = vsyncadd [#allocation6], %s36
      %s38 = sshll.u32 [#allocation5], 4
      %s39 = int_to_ptr.vmem [resolvable:$true] %s38
      %44 = dma.hbm_to_vmem [thread:$0]  %s5, 9216, %s39, [#allocation6], 64, 64, 4
    $region25: #{vgg_forward.1} parent=1 // pred_fallthru
      _
    // Predicated region
    $region26: #{vgg_forward.1} parent=1 // pred_check
      _
    $region27: #{vgg_forward.1} parent=1 // pred_check_branch
      %46 = sbr.rel (0) target = $region29
    $region28: #{vgg_forward.1} parent=1 // pred_region
      _
    $region29: #{vgg_forward.1} parent=1 // pred_fallthru
      _
    // Predicated region
    $region30: #{vgg_forward.1} parent=1 // pred_check
      _
    $region31: #{vgg_forward.1} parent=1 // pred_check_branch
      %48 = sbr.rel (0) target = $region33
    $region32: #{vgg_forward.1} parent=1 // pred_region
      _
    $region33: #{vgg_forward.1} parent=1 // pred_fallthru
      _
    // Predicated region
    $region34: #{vgg_forward.1} parent=1 // pred_check
      _
    $region35: #{vgg_forward.1} parent=1 // pred_check_branch
      %50 = sbr.rel (0) target = $region37
    $region36: #{vgg_forward.1} parent=1 // pred_region
      _
    $region37: #{vgg_forward.1} parent=1 // pred_fallthru
      _
    // Predicated region
    $region38: #{vgg_forward.1} parent=1 // pred_check
      _
    $region39: #{vgg_forward.1} parent=1 // pred_check_branch
      %52 = sbr.rel (0) target = $region41
    $region40: #{vgg_forward.1} parent=1 // pred_region
      %s54 = ssub.s32 16384, 16384
      %55 = vsyncadd [#allocation9], %s54
      %s56 = sshll.u32 [#allocation8], 4
      %s57 = int_to_ptr.vmem [resolvable:$true] %s56
      %62 = dma.hbm_to_vmem [thread:$0]  %s9, 16384, %s57, [#allocation9], 256, 256, 16
    $region41: #{vgg_forward.1} parent=1 // pred_fallthru
      _
    // Predicated region
    $region42: #{vgg_forward.1} parent=1 // pred_check
      _
    $region43: #{vgg_forward.1} parent=1 // pred_check_branch
      %64 = sbr.rel (0) target = $region45
    $region44: #{vgg_forward.1} parent=1 // pred_region
      _
    $region45: #{vgg_forward.1} parent=1 // pred_fallthru
      _
    // Predicated region
    $region46: #{vgg_forward.1} parent=1 // pred_check
      _
    $region47: #{vgg_forward.1} parent=1 // pred_check_branch
      %66 = sbr.rel (0) target = $region49
    $region48: #{vgg_forward.1} parent=1 // pred_region
      %s68 = ssub.s32 16384, 16384
      %69 = vsyncadd [#allocation9], %s68
      %s70 = sshll.u32 [#allocation10], 4
      %s71 = int_to_ptr.vmem [resolvable:$true] %s70
      %76 = dma.hbm_to_vmem [thread:$0]  %s11, 16384, %s71, [#allocation9], 256, 256, 16
    $region49: #{vgg_forward.1} parent=1 // pred_fallthru
      _
    // Predicated region
    $region50: #{vgg_forward.1} parent=1 // pred_check
      _
    $region51: #{vgg_forward.1} parent=1 // pred_check_branch
      %78 = sbr.rel (0) target = $region53
    $region52: #{vgg_forward.1} parent=1 // pred_region
      _
    $region53: #{vgg_forward.1} parent=1 // pred_fallthru
      _
    // Predicated region
    $region54: #{vgg_forward.1} parent=1 // pred_check
      _
    $region55: #{vgg_forward.1} parent=1 // pred_check_branch
      %80 = sbr.rel (0) target = $region57
    $region56: #{vgg_forward.1} parent=1 // pred_region
      _
    $region57: #{vgg_forward.1} parent=1 // pred_fallthru
      _
    // Predicated region
    $region58: #{vgg_forward.1} parent=1 // pred_check
      _
    $region59: #{vgg_forward.1} parent=1 // pred_check_branch
      %82 = sbr.rel (0) target = $region61
    $region60: #{vgg_forward.1} parent=1 // pred_region
      _
    $region61: #{vgg_forward.1} parent=1 // pred_fallthru
      _
    // Predicated region
    $region62: #{vgg_forward.1} parent=1 // pred_check
      _
    $region63: #{vgg_forward.1} parent=1 // pred_check_branch
      %84 = sbr.rel (0) target = $region65
    $region64: #{vgg_forward.1} parent=1 // pred_region
      %85 = dma.done [#allocation6], 9216
    $region65: #{vgg_forward.1} parent=1 // pred_fallthru
      _
    // Predicated region
    $region66: #{vgg_forward.1} parent=1 // pred_check
      _
    $region67: #{vgg_forward.1} parent=1 // pred_check_branch
      %87 = sbr.rel (0) target = $region69
    $region68: #{vgg_forward.1} parent=1 // pred_region
      %88 = dma.done [#allocation9], 16384
    $region69: #{vgg_forward.1} parent=1 // pred_fallthru
      _
    // Predicated region
    $region70: #{vgg_forward.1} parent=1 // pred_check
      _
    $region71: #{vgg_forward.1} parent=1 // pred_check_branch
      %90 = sbr.rel (0) target = $region73
    $region72: #{vgg_forward.1} parent=1 // pred_region
      %91 = dma.done [#allocation9], 16384
    $region73: #{vgg_forward.1} parent=1 // pred_fallthru
      _
    %v93 = vld [vmem:[%s0] sm:$0xf]
    %v94 = vld [vmem:[%s0 + $0x4] sm:$0xf]
    %v95 = vld [vmem:[%s0 + $0x8] sm:$0xf]
    %v96 = vld [vmem:[%s0 + $0xc] sm:$0xf]
    %v97 = vld [vmem:[%s0 + $0x10] sm:$0xf]
    %v98 = vld [vmem:[%s0 + $0x14] sm:$0xf]
    %v99 = vld [vmem:[%s0 + $0x18] sm:$0xf]
    %v100 = vld [vmem:[%s0 + $0x1c] sm:$0xf]
    %v101 = vld [vmem:[%s0 + $0x20] sm:$0xf]
    %v102 = vld [vmem:[%s0 + $0x24] sm:$0xf]
    %v103 = vld [vmem:[%s0 + $0x28] sm:$0xf]
    %v104 = vld [vmem:[%s0 + $0x2c] sm:$0xf]
    %v105 = vld [vmem:[%s0 + $0x30] sm:$0xf]
    %v106 = vld [vmem:[%s0 + $0x34] sm:$0xf]
    %v107 = vld [vmem:[%s0 + $0x38] sm:$0xf]
    %v108 = vld [vmem:[%s0 + $0x3c] sm:$0xf]
    %v109 = vld [vmem:[%s0 + $0x40] sm:$0xf]
    %v110 = vld [vmem:[%s0 + $0x44] sm:$0xf]
    %v111 = vld [vmem:[%s0 + $0x48] sm:$0xf]
    %v112 = vld [vmem:[%s0 + $0x4c] sm:$0xf]
    %v113 = vld [vmem:[%s0 + $0x50] sm:$0xf]
    %v114 = vld [vmem:[%s0 + $0x54] sm:$0xf]
    %v115 = vld [vmem:[%s0 + $0x58] sm:$0xf]
    %v116 = vld [vmem:[%s0 + $0x5c] sm:$0xf]
    %v117 = vld [vmem:[%s0 + $0x60] sm:$0xf]
    %v118 = vld [vmem:[%s0 + $0x64] sm:$0xf]
    %v119 = vld [vmem:[%s0 + $0x68] sm:$0xf]
    %v120 = vld [vmem:[%s0 + $0x6c] sm:$0xf]
    %v121 = vld [vmem:[%s0 + $0x70] sm:$0xf]
    %v122 = vld [vmem:[%s0 + $0x74] sm:$0xf]
    %v123 = vld [vmem:[%s0 + $0x78] sm:$0xf]
    %v124 = vld [vmem:[%s0 + $0x7c] sm:$0xf]
    %v125 = vld [vmem:[%s0 + $0x80] sm:$0xf]
    %v126 = vld [vmem:[%s0 + $0x84] sm:$0xf]
    %v127 = vld [vmem:[%s0 + $0x88] sm:$0xf]
    %v128 = vld [vmem:[%s0 + $0x8c] sm:$0xf]
    %v129 = vld [vmem:[%s0 + $0x90] sm:$0xf]
    %v130 = vld [vmem:[%s0 + $0x94] sm:$0xf]
    %v131 = vld [vmem:[%s0 + $0x98] sm:$0xf]
    %v132 = vld [vmem:[%s0 + $0x9c] sm:$0xf]
    %v133 = vld [vmem:[%s0 + $0xa0] sm:$0xf]
    %v134 = vld [vmem:[%s0 + $0xa4] sm:$0xf]
    %v135 = vld [vmem:[%s0 + $0xa8] sm:$0xf]
    %v136 = vld [vmem:[%s0 + $0xac] sm:$0xf]
    %v137 = vld [vmem:[%s0 + $0xb0] sm:$0xf]
    %v138 = vld [vmem:[%s0 + $0xb4] sm:$0xf]
    %v139 = vld [vmem:[%s0 + $0xb8] sm:$0xf]
    %v140 = vld [vmem:[%s0 + $0xbc] sm:$0xf]
    %v141 = vld [vmem:[%s0 + $0xc0] sm:$0xf]
    %v142 = vld [vmem:[%s0 + $0xc4] sm:$0xf]
    %v143 = vld [vmem:[%s0 + $0xc8] sm:$0xf]
    %v144 = vld [vmem:[%s0 + $0xcc] sm:$0xf]
    %v145 = vld [vmem:[%s0 + $0xd0] sm:$0xf]
    %v146 = vld [vmem:[%s0 + $0xd4] sm:$0xf]
    %v147 = vld [vmem:[%s0 + $0xd8] sm:$0xf]
    %v148 = vld [vmem:[%s0 + $0xdc] sm:$0xf]
    %v149 = vld [vmem:[%s0 + $0xe0] sm:$0xf]
    %v150 = vld [vmem:[%s0 + $0xe4] sm:$0xf]
    %v151 = vld [vmem:[%s0 + $0xe8] sm:$0xf]
    %v152 = vld [vmem:[%s0 + $0xec] sm:$0xf]
    %v153 = vld [vmem:[%s0 + $0xf0] sm:$0xf]
    %v154 = vld [vmem:[%s0 + $0xf4] sm:$0xf]
    %v155 = vld [vmem:[%s0 + $0xf8] sm:$0xf]
    %v156 = vld [vmem:[%s0 + $0xfc] sm:$0xf]
    %v157 = vld [vmem:[%s1] sm:$0xf]
    %v158 = vld [vmem:[%s1 + $0x4] sm:$0xf]
    %v159 = vld [vmem:[%s1 + $0x8] sm:$0xf]
    %v160 = vld [vmem:[%s1 + $0xc] sm:$0xf]
    %v161 = vld [vmem:[%s1 + $0x10] sm:$0xf]
    %v162 = vld [vmem:[%s1 + $0x14] sm:$0xf]
    %v163 = vld [vmem:[%s1 + $0x18] sm:$0xf]
    %v164 = vld [vmem:[%s1 + $0x1c] sm:$0xf]
    %v165 = vld [vmem:[%s1 + $0x20] sm:$0xf]
    %v166 = vld [vmem:[%s1 + $0x24] sm:$0xf]
    %v167 = vld [vmem:[%s1 + $0x28] sm:$0xf]
    %v168 = vld [vmem:[%s1 + $0x2c] sm:$0xf]
    %v169 = vld [vmem:[%s1 + $0x30] sm:$0xf]
    %v170 = vld [vmem:[%s1 + $0x34] sm:$0xf]
    %v171 = vld [vmem:[%s1 + $0x38] sm:$0xf]
    %v172 = vld [vmem:[%s1 + $0x3c] sm:$0xf]
    %v173 = vld [vmem:[%s2] sm:$0x1]
    %v175 = vlaneseq
    %v176 = vshrl.u32 %v175, 7
    %v177 = vsub.s32 0, %v176
    %v178 = vrot.slane %v173, %v177
    %v244 = vunpack.c.l.b16 %v93
    %v245 = vunpack.c.l.b16 %v94
    %v246 = vunpack.c.l.b16 %v95
    %v247 = vunpack.c.l.b16 %v96
    %v248 = vunpack.c.l.b16 %v97
    %v249 = vunpack.c.l.b16 %v98
    %v250 = vunpack.c.l.b16 %v99
    %v251 = vunpack.c.l.b16 %v100
    %v252 = vunpack.c.l.b16 %v101
    %v253 = vunpack.c.l.b16 %v102
    %v254 = vunpack.c.l.b16 %v103
    %v255 = vunpack.c.l.b16 %v104
    %v256 = vunpack.c.l.b16 %v105
    %v257 = vunpack.c.l.b16 %v106
    %v258 = vunpack.c.l.b16 %v107
    %v259 = vunpack.c.l.b16 %v108
    %v260 = vunpack.c.l.b16 %v109
    %v261 = vunpack.c.l.b16 %v110
    %v262 = vunpack.c.l.b16 %v111
    %v263 = vunpack.c.l.b16 %v112
    %v264 = vunpack.c.l.b16 %v113
    %v265 = vunpack.c.l.b16 %v114
    %v266 = vunpack.c.l.b16 %v115
    %v267 = vunpack.c.l.b16 %v116
    %v268 = vunpack.c.l.b16 %v117
    %v269 = vunpack.c.l.b16 %v118
    %v270 = vunpack.c.l.b16 %v119
    %v271 = vunpack.c.l.b16 %v120
    %v272 = vunpack.c.l.b16 %v121
    %v273 = vunpack.c.l.b16 %v122
    %v274 = vunpack.c.l.b16 %v123
    %v275 = vunpack.c.l.b16 %v124
    %v276 = vunpack.c.l.b16 %v125
    %v277 = vunpack.c.l.b16 %v126
    %v278 = vunpack.c.l.b16 %v127
    %v279 = vunpack.c.l.b16 %v128
    %v280 = vunpack.c.l.b16 %v129
    %v281 = vunpack.c.l.b16 %v130
    %v282 = vunpack.c.l.b16 %v131
    %v283 = vunpack.c.l.b16 %v132
    %v284 = vunpack.c.l.b16 %v133
    %v285 = vunpack.c.l.b16 %v134
    %v286 = vunpack.c.l.b16 %v135
    %v287 = vunpack.c.l.b16 %v136
    %v288 = vunpack.c.l.b16 %v137
    %v289 = vunpack.c.l.b16 %v138
    %v290 = vunpack.c.l.b16 %v139
    %v291 = vunpack.c.l.b16 %v140
    %v292 = vunpack.c.l.b16 %v141
    %v293 = vunpack.c.l.b16 %v142
    %v294 = vunpack.c.l.b16 %v143
    %v295 = vunpack.c.l.b16 %v144
    %v296 = vunpack.c.l.b16 %v145
    %v297 = vunpack.c.l.b16 %v146
    %v298 = vunpack.c.l.b16 %v147
    %v299 = vunpack.c.l.b16 %v148
    %v300 = vunpack.c.l.b16 %v149
    %v301 = vunpack.c.l.b16 %v150
    %v302 = vunpack.c.l.b16 %v151
    %v303 = vunpack.c.l.b16 %v152
    %v304 = vunpack.c.l.b16 %v153
    %v305 = vunpack.c.l.b16 %v154
    %v306 = vunpack.c.l.b16 %v155
    %v307 = vunpack.c.l.b16 %v156
    %v308 = vpack.c.b16 %v245, %v244
    %v309 = vpack.c.b16 %v247, %v246
    %v310 = vpack.c.b16 %v249, %v248
    %v311 = vpack.c.b16 %v251, %v250
    %v312 = vpack.c.b16 %v253, %v252
    %v313 = vpack.c.b16 %v255, %v254
    %v314 = vpack.c.b16 %v257, %v256
    %v315 = vpack.c.b16 %v259, %v258
    %v316 = vpack.c.b16 %v261, %v260
    %v317 = vpack.c.b16 %v263, %v262
    %v318 = vpack.c.b16 %v265, %v264
    %v319 = vpack.c.b16 %v267, %v266
    %v320 = vpack.c.b16 %v269, %v268
    %v321 = vpack.c.b16 %v271, %v270
    %v322 = vpack.c.b16 %v273, %v272
    %v323 = vpack.c.b16 %v275, %v274
    %v324 = vpack.c.b16 %v277, %v276
    %v325 = vpack.c.b16 %v279, %v278
    %v326 = vpack.c.b16 %v281, %v280
    %v327 = vpack.c.b16 %v283, %v282
    %v328 = vpack.c.b16 %v285, %v284
    %v329 = vpack.c.b16 %v287, %v286
    %v330 = vpack.c.b16 %v289, %v288
    %v331 = vpack.c.b16 %v291, %v290
    %v332 = vpack.c.b16 %v293, %v292
    %v333 = vpack.c.b16 %v295, %v294
    %v334 = vpack.c.b16 %v297, %v296
    %v335 = vpack.c.b16 %v299, %v298
    %v336 = vpack.c.b16 %v301, %v300
    %v337 = vpack.c.b16 %v303, %v302
    %v338 = vpack.c.b16 %v305, %v304
    %v339 = vpack.c.b16 %v307, %v306
    %v388 = vunpack.c.l.b16 %v157
    %v389 = vunpack.c.l.b16 %v158
    %v390 = vunpack.c.l.b16 %v159
    %v391 = vunpack.c.l.b16 %v160
    %v392 = vunpack.c.l.b16 %v161
    %v393 = vunpack.c.l.b16 %v162
    %v394 = vunpack.c.l.b16 %v163
    %v395 = vunpack.c.l.b16 %v164
    %v396 = vunpack.c.l.b16 %v165
    %v397 = vunpack.c.l.b16 %v166
    %v398 = vunpack.c.l.b16 %v167
    %v399 = vunpack.c.l.b16 %v168
    %v400 = vunpack.c.l.b16 %v169
    %v401 = vunpack.c.l.b16 %v170
    %v402 = vunpack.c.l.b16 %v171
    %v403 = vunpack.c.l.b16 %v172
    %v404 = vpack.c.b16 %v389, %v388
    %v405 = vpack.c.b16 %v391, %v390
    %v406 = vpack.c.b16 %v393, %v392
    %v407 = vpack.c.b16 %v395, %v394
    %v408 = vpack.c.b16 %v397, %v396
    %v409 = vpack.c.b16 %v399, %v398
    %v410 = vpack.c.b16 %v401, %v400
    %v411 = vpack.c.b16 %v403, %v402
    %420 = vmatprep.subr.bf16.mxu0 0
    %421 = vmatpush1.bf16.msra.mxu0 %v404
    %422 = vmatprep.subr.bf16.mxu0 0
    %423 = vmatpush1.bf16.msra.mxu0 %v405
    %424 = vmatprep.subr.bf16.mxu0 0
    %425 = vmatpush1.bf16.msra.mxu0 %v406
    %426 = vmatprep.subr.bf16.mxu0 0
    %427 = vmatpush1.bf16.msra.mxu0 %v407
    %428 = vmatprep.subr.bf16.mxu0 0
    %429 = vmatpush1.bf16.msra.mxu0 %v408
    %430 = vmatprep.subr.bf16.mxu0 0
    %431 = vmatpush1.bf16.msra.mxu0 %v409
    %432 = vmatprep.subr.bf16.mxu0 0
    %433 = vmatpush1.bf16.msra.mxu0 %v410
    %434 = vmatprep.subr.bf16.mxu0 0
    %435 = vmatpush1.bf16.msra.mxu0 %v411
    %436 = vmatprep.subr.bf16.mxu0 0
    %437 = vmatpush1.bf16.msra.mxu0 0
    %438 = vmatprep.subr.bf16.mxu0 0
    %439 = vmatpush1.bf16.msra.mxu0 0
    %440 = vmatprep.subr.bf16.mxu0 0
    %441 = vmatpush1.bf16.msra.mxu0 0
    %442 = vmatprep.subr.bf16.mxu0 0
    %443 = vmatpush1.bf16.msra.mxu0 0
    %444 = vmatprep.subr.bf16.mxu0 0
    %445 = vmatpush1.bf16.msra.mxu0 0
    %446 = vmatprep.subr.bf16.mxu0 0
    %447 = vmatpush1.bf16.msra.mxu0 0
    %448 = vmatprep.subr.bf16.mxu0 0
    %449 = vmatpush1.bf16.msra.mxu0 0
    %450 = vmatprep.subr.bf16.mxu0 0
    %451 = vmatpush1.bf16.msra.mxu0 0
    %452 = vmatprep.mubr.bf16.mxu0 0
    %453 = vmatmul.mubr.bf16.gmra.mrb[0].mxu0 %v308
    %v454 = vpop.f32.mrb[0].mxu0
    %v455 = vadd.f32 %v178, %v454
    %v456 = vpop.f32.mrb[0].mxu0
    %v457 = vpop.f32.mrb[0].mxu0
    %v458 = vadd.f32 %v178, %v457
    %v459 = vpop.f32.mrb[0].mxu0
    %460 = vmatprep.mubr.bf16.mxu0 0
    %461 = vmatmul.mubr.bf16.gmra.mrb[0].mxu0 %v309
    %v462 = vpop.f32.mrb[0].mxu0
    %v463 = vadd.f32 %v178, %v462
    %v464 = vpop.f32.mrb[0].mxu0
    %v465 = vpop.f32.mrb[0].mxu0
    %v466 = vadd.f32 %v178, %v465
    %v467 = vpop.f32.mrb[0].mxu0
    %468 = vmatprep.mubr.bf16.mxu0 0
    %469 = vmatmul.mubr.bf16.gmra.mrb[0].mxu0 %v310
    %v470 = vpop.f32.mrb[0].mxu0
    %v471 = vadd.f32 %v178, %v470
    %v472 = vpop.f32.mrb[0].mxu0
    %v473 = vpop.f32.mrb[0].mxu0
    %v474 = vadd.f32 %v178, %v473
    %v475 = vpop.f32.mrb[0].mxu0
    %476 = vmatprep.mubr.bf16.mxu0 0
    %477 = vmatmul.mubr.bf16.gmra.mrb[0].mxu0 %v311
    %v478 = vpop.f32.mrb[0].mxu0
    %v479 = vadd.f32 %v178, %v478
    %v480 = vpop.f32.mrb[0].mxu0
    %v481 = vpop.f32.mrb[0].mxu0
    %v482 = vadd.f32 %v178, %v481
    %v483 = vpop.f32.mrb[0].mxu0
    %484 = vmatprep.mubr.bf16.mxu0 0
    %485 = vmatmul.mubr.bf16.gmra.mrb[0].mxu0 %v312
    %v486 = vpop.f32.mrb[0].mxu0
    %v487 = vadd.f32 %v178, %v486
    %v488 = vpop.f32.mrb[0].mxu0
    %v489 = vpop.f32.mrb[0].mxu0
    %v490 = vadd.f32 %v178, %v489
    %v491 = vpop.f32.mrb[0].mxu0
    %492 = vmatprep.mubr.bf16.mxu0 0
    %493 = vmatmul.mubr.bf16.gmra.mrb[0].mxu0 %v313
    %v494 = vpop.f32.mrb[0].mxu0
    %v495 = vadd.f32 %v178, %v494
    %v496 = vpop.f32.mrb[0].mxu0
    %v497 = vpop.f32.mrb[0].mxu0
    %v498 = vadd.f32 %v178, %v497
    %v499 = vpop.f32.mrb[0].mxu0
    %500 = vmatprep.mubr.bf16.mxu0 0
    %501 = vmatmul.mubr.bf16.gmra.mrb[0].mxu0 %v314
    %v502 = vpop.f32.mrb[0].mxu0
    %v503 = vadd.f32 %v178, %v502
    %v504 = vpop.f32.mrb[0].mxu0
    %v505 = vpop.f32.mrb[0].mxu0
    %v506 = vadd.f32 %v178, %v505
    %v507 = vpop.f32.mrb[0].mxu0
    %508 = vmatprep.mubr.bf16.mxu0 0
    %509 = vmatmul.mubr.bf16.gmra.mrb[0].mxu0 %v315
    %v510 = vpop.f32.mrb[0].mxu0
    %v511 = vadd.f32 %v178, %v510
    %v512 = vpop.f32.mrb[0].mxu0
    %v513 = vpop.f32.mrb[0].mxu0
    %v514 = vadd.f32 %v178, %v513
    %v515 = vpop.f32.mrb[0].mxu0
    %516 = vmatprep.mubr.bf16.mxu0 0
    %517 = vmatmul.mubr.bf16.gmra.mrb[0].mxu0 %v316
    %v518 = vpop.f32.mrb[0].mxu0
    %v519 = vadd.f32 %v178, %v518
    %v520 = vpop.f32.mrb[0].mxu0
    %v521 = vpop.f32.mrb[0].mxu0
    %v522 = vadd.f32 %v178, %v521
    %v523 = vpop.f32.mrb[0].mxu0
    %524 = vmatprep.mubr.bf16.mxu0 0
    %525 = vmatmul.mubr.bf16.gmra.mrb[0].mxu0 %v317
    %v526 = vpop.f32.mrb[0].mxu0
    %v527 = vadd.f32 %v178, %v526
    %v528 = vpop.f32.mrb[0].mxu0
    %v529 = vpop.f32.mrb[0].mxu0
    %v530 = vadd.f32 %v178, %v529
    %v531 = vpop.f32.mrb[0].mxu0
    %532 = vmatprep.mubr.bf16.mxu0 0
    %533 = vmatmul.mubr.bf16.gmra.mrb[0].mxu0 %v318
    %v534 = vpop.f32.mrb[0].mxu0
    %v535 = vadd.f32 %v178, %v534
    %v536 = vpop.f32.mrb[0].mxu0
    %v537 = vpop.f32.mrb[0].mxu0
    %v538 = vadd.f32 %v178, %v537
    %v539 = vpop.f32.mrb[0].mxu0
    %540 = vmatprep.mubr.bf16.mxu0 0
    %541 = vmatmul.mubr.bf16.gmra.mrb[0].mxu0 %v319
    %v542 = vpop.f32.mrb[0].mxu0
    %v543 = vadd.f32 %v178, %v542
    %v544 = vpop.f32.mrb[0].mxu0
    %v545 = vpop.f32.mrb[0].mxu0
    %v546 = vadd.f32 %v178, %v545
    %v547 = vpop.f32.mrb[0].mxu0
    %548 = vmatprep.mubr.bf16.mxu0 0
    %549 = vmatmul.mubr.bf16.gmra.mrb[0].mxu0 %v320
    %v550 = vpop.f32.mrb[0].mxu0
    %v551 = vadd.f32 %v178, %v550
    %v552 = vpop.f32.mrb[0].mxu0
    %v553 = vpop.f32.mrb[0].mxu0
    %v554 = vadd.f32 %v178, %v553
    %v555 = vpop.f32.mrb[0].mxu0
    %556 = vmatprep.mubr.bf16.mxu0 0
    %557 = vmatmul.mubr.bf16.gmra.mrb[0].mxu0 %v321
    %v558 = vpop.f32.mrb[0].mxu0
    %v559 = vadd.f32 %v178, %v558
    %v560 = vpop.f32.mrb[0].mxu0
    %v561 = vpop.f32.mrb[0].mxu0
    %v562 = vadd.f32 %v178, %v561
    %v563 = vpop.f32.mrb[0].mxu0
    %564 = vmatprep.mubr.bf16.mxu0 0
    %565 = vmatmul.mubr.bf16.gmra.mrb[0].mxu0 %v322
    %v566 = vpop.f32.mrb[0].mxu0
    %v567 = vadd.f32 %v178, %v566
    %v568 = vpop.f32.mrb[0].mxu0
    %v569 = vpop.f32.mrb[0].mxu0
    %v570 = vadd.f32 %v178, %v569
    %v571 = vpop.f32.mrb[0].mxu0
    %572 = vmatprep.mubr.bf16.mxu0 0
    %573 = vmatmul.mubr.bf16.gmra.mrb[0].mxu0 %v323
    %v574 = vpop.f32.mrb[0].mxu0
    %v575 = vadd.f32 %v178, %v574
    %v576 = vpop.f32.mrb[0].mxu0
    %v577 = vpop.f32.mrb[0].mxu0
    %v578 = vadd.f32 %v178, %v577
    %v579 = vpop.f32.mrb[0].mxu0
    %580 = vmatprep.mubr.bf16.mxu0 0
    %581 = vmatmul.mubr.bf16.gmra.mrb[0].mxu0 %v324
    %v582 = vpop.f32.mrb[0].mxu0
    %v583 = vadd.f32 %v178, %v582
    %v584 = vpop.f32.mrb[0].mxu0
    %v585 = vpop.f32.mrb[0].mxu0
    %v586 = vadd.f32 %v178, %v585
    %v587 = vpop.f32.mrb[0].mxu0
    %588 = vmatprep.mubr.bf16.mxu0 0
    %589 = vmatmul.mubr.bf16.gmra.mrb[0].mxu0 %v325
    %v590 = vpop.f32.mrb[0].mxu0
    %v591 = vadd.f32 %v178, %v590
    %v592 = vpop.f32.mrb[0].mxu0
    %v593 = vpop.f32.mrb[0].mxu0
    %v594 = vadd.f32 %v178, %v593
    %v595 = vpop.f32.mrb[0].mxu0
    %596 = vmatprep.mubr.bf16.mxu0 0
    %597 = vmatmul.mubr.bf16.gmra.mrb[0].mxu0 %v326
    %v598 = vpop.f32.mrb[0].mxu0
    %v599 = vadd.f32 %v178, %v598
    %v600 = vpop.f32.mrb[0].mxu0
    %v601 = vpop.f32.mrb[0].mxu0
    %v602 = vadd.f32 %v178, %v601
    %v603 = vpop.f32.mrb[0].mxu0
    %604 = vmatprep.mubr.bf16.mxu0 0
    %605 = vmatmul.mubr.bf16.gmra.mrb[0].mxu0 %v327
    %v606 = vpop.f32.mrb[0].mxu0
    %v607 = vadd.f32 %v178, %v606
    %v608 = vpop.f32.mrb[0].mxu0
    %v609 = vpop.f32.mrb[0].mxu0
    %v610 = vadd.f32 %v178, %v609
    %v611 = vpop.f32.mrb[0].mxu0
    %612 = vmatprep.mubr.bf16.mxu0 0
    %613 = vmatmul.mubr.bf16.gmra.mrb[0].mxu0 %v328
    %v614 = vpop.f32.mrb[0].mxu0
    %v615 = vadd.f32 %v178, %v614
    %v616 = vpop.f32.mrb[0].mxu0
    %v617 = vpop.f32.mrb[0].mxu0
    %v618 = vadd.f32 %v178, %v617
    %v619 = vpop.f32.mrb[0].mxu0
    %620 = vmatprep.mubr.bf16.mxu0 0
    %621 = vmatmul.mubr.bf16.gmra.mrb[0].mxu0 %v329
    %v622 = vpop.f32.mrb[0].mxu0
    %v623 = vadd.f32 %v178, %v622
    %v624 = vpop.f32.mrb[0].mxu0
    %v625 = vpop.f32.mrb[0].mxu0
    %v626 = vadd.f32 %v178, %v625
    %v627 = vpop.f32.mrb[0].mxu0
    %628 = vmatprep.mubr.bf16.mxu0 0
    %629 = vmatmul.mubr.bf16.gmra.mrb[0].mxu0 %v330
    %v630 = vpop.f32.mrb[0].mxu0
    %v631 = vadd.f32 %v178, %v630
    %v632 = vpop.f32.mrb[0].mxu0
    %v633 = vpop.f32.mrb[0].mxu0
    %v634 = vadd.f32 %v178, %v633
    %v635 = vpop.f32.mrb[0].mxu0
    %636 = vmatprep.mubr.bf16.mxu0 0
    %637 = vmatmul.mubr.bf16.gmra.mrb[0].mxu0 %v331
    %v638 = vpop.f32.mrb[0].mxu0
    %v639 = vadd.f32 %v178, %v638
    %v640 = vpop.f32.mrb[0].mxu0
    %v641 = vpop.f32.mrb[0].mxu0
    %v642 = vadd.f32 %v178, %v641
    %v643 = vpop.f32.mrb[0].mxu0
    %644 = vmatprep.mubr.bf16.mxu0 0
    %645 = vmatmul.mubr.bf16.gmra.mrb[0].mxu0 %v332
    %v646 = vpop.f32.mrb[0].mxu0
    %v647 = vadd.f32 %v178, %v646
    %v648 = vpop.f32.mrb[0].mxu0
    %v649 = vpop.f32.mrb[0].mxu0
    %v650 = vadd.f32 %v178, %v649
    %v651 = vpop.f32.mrb[0].mxu0
    %652 = vmatprep.mubr.bf16.mxu0 0
    %653 = vmatmul.mubr.bf16.gmra.mrb[0].mxu0 %v333
    %v654 = vpop.f32.mrb[0].mxu0
    %v655 = vadd.f32 %v178, %v654
    %v656 = vpop.f32.mrb[0].mxu0
    %v657 = vpop.f32.mrb[0].mxu0
    %v658 = vadd.f32 %v178, %v657
    %v659 = vpop.f32.mrb[0].mxu0
    %660 = vmatprep.mubr.bf16.mxu0 0
    %661 = vmatmul.mubr.bf16.gmra.mrb[0].mxu0 %v334
    %v662 = vpop.f32.mrb[0].mxu0
    %v663 = vadd.f32 %v178, %v662
    %v664 = vpop.f32.mrb[0].mxu0
    %v665 = vpop.f32.mrb[0].mxu0
    %v666 = vadd.f32 %v178, %v665
    %v667 = vpop.f32.mrb[0].mxu0
    %668 = vmatprep.mubr.bf16.mxu0 0
    %669 = vmatmul.mubr.bf16.gmra.mrb[0].mxu0 %v335
    %v670 = vpop.f32.mrb[0].mxu0
    %v671 = vadd.f32 %v178, %v670
    %v672 = vpop.f32.mrb[0].mxu0
    %v673 = vpop.f32.mrb[0].mxu0
    %v674 = vadd.f32 %v178, %v673
    %v675 = vpop.f32.mrb[0].mxu0
    %676 = vmatprep.mubr.bf16.mxu0 0
    %677 = vmatmul.mubr.bf16.gmra.mrb[0].mxu0 %v336
    %v678 = vpop.f32.mrb[0].mxu0
    %v679 = vadd.f32 %v178, %v678
    %v680 = vpop.f32.mrb[0].mxu0
    %v681 = vpop.f32.mrb[0].mxu0
    %v682 = vadd.f32 %v178, %v681
    %v683 = vpop.f32.mrb[0].mxu0
    %684 = vmatprep.mubr.bf16.mxu0 0
    %685 = vmatmul.mubr.bf16.gmra.mrb[0].mxu0 %v337
    %v686 = vpop.f32.mrb[0].mxu0
    %v687 = vadd.f32 %v178, %v686
    %v688 = vpop.f32.mrb[0].mxu0
    %v689 = vpop.f32.mrb[0].mxu0
    %v690 = vadd.f32 %v178, %v689
    %v691 = vpop.f32.mrb[0].mxu0
    %692 = vmatprep.mubr.bf16.mxu0 0
    %693 = vmatmul.mubr.bf16.gmra.mrb[0].mxu0 %v338
    %v694 = vpop.f32.mrb[0].mxu0
    %v695 = vadd.f32 %v178, %v694
    %v696 = vpop.f32.mrb[0].mxu0
    %v697 = vpop.f32.mrb[0].mxu0
    %v698 = vadd.f32 %v178, %v697
    %v699 = vpop.f32.mrb[0].mxu0
    %700 = vmatprep.mubr.bf16.mxu0 0
    %701 = vmatmul.mubr.bf16.gmra.mrb[0].mxu0 %v339
    %v702 = vpop.f32.mrb[0].mxu0
    %v703 = vadd.f32 %v178, %v702
    %v704 = vpop.f32.mrb[0].mxu0
    %v705 = vpop.f32.mrb[0].mxu0
    %v706 = vadd.f32 %v178, %v705
    %v707 = vpop.f32.mrb[0].mxu0
    %708 = vdwg.mxu0
    %v709 = vmax.f32 %v455, 0.0
    %v710 = vmax.f32 %v458, 0.0
    %v711 = vmax.f32 %v463, 0.0
    %v712 = vmax.f32 %v466, 0.0
    %v713 = vmax.f32 %v471, 0.0
    %v714 = vmax.f32 %v474, 0.0
    %v715 = vmax.f32 %v479, 0.0
    %v716 = vmax.f32 %v482, 0.0
    %v717 = vmax.f32 %v487, 0.0
    %v718 = vmax.f32 %v490, 0.0
    %v719 = vmax.f32 %v495, 0.0
    %v720 = vmax.f32 %v498, 0.0
    %v721 = vmax.f32 %v503, 0.0
    %v722 = vmax.f32 %v506, 0.0
    %v723 = vmax.f32 %v511, 0.0
    %v724 = vmax.f32 %v514, 0.0
    %v725 = vmax.f32 %v519, 0.0
    %v726 = vmax.f32 %v522, 0.0
    %v727 = vmax.f32 %v527, 0.0
    %v728 = vmax.f32 %v530, 0.0
    %v729 = vmax.f32 %v535, 0.0
    %v730 = vmax.f32 %v538, 0.0
    %v731 = vmax.f32 %v543, 0.0
    %v732 = vmax.f32 %v546, 0.0
    %v733 = vmax.f32 %v551, 0.0
    %v734 = vmax.f32 %v554, 0.0
    %v735 = vmax.f32 %v559, 0.0
    %v736 = vmax.f32 %v562, 0.0
    %v737 = vmax.f32 %v567, 0.0
    %v738 = vmax.f32 %v570, 0.0
    %v739 = vmax.f32 %v575, 0.0
    %v740 = vmax.f32 %v578, 0.0
    %v741 = vmax.f32 %v583, 0.0
    %v742 = vmax.f32 %v586, 0.0
    %v743 = vmax.f32 %v591, 0.0
    %v744 = vmax.f32 %v594, 0.0
    %v745 = vmax.f32 %v599, 0.0
    %v746 = vmax.f32 %v602, 0.0
    %v747 = vmax.f32 %v607, 0.0
    %v748 = vmax.f32 %v610, 0.0
    %v749 = vmax.f32 %v615, 0.0
    %v750 = vmax.f32 %v618, 0.0
    %v751 = vmax.f32 %v623, 0.0
    %v752 = vmax.f32 %v626, 0.0
    %v753 = vmax.f32 %v631, 0.0
    %v754 = vmax.f32 %v634, 0.0
    %v755 = vmax.f32 %v639, 0.0
    %v756 = vmax.f32 %v642, 0.0
    %v757 = vmax.f32 %v647, 0.0
    %v758 = vmax.f32 %v650, 0.0
    %v759 = vmax.f32 %v655, 0.0
    %v760 = vmax.f32 %v658, 0.0
    %v761 = vmax.f32 %v663, 0.0
    %v762 = vmax.f32 %v666, 0.0
    %v763 = vmax.f32 %v671, 0.0
    %v764 = vmax.f32 %v674, 0.0
    %v765 = vmax.f32 %v679, 0.0
    %v766 = vmax.f32 %v682, 0.0
    %v767 = vmax.f32 %v687, 0.0
    %v768 = vmax.f32 %v690, 0.0
    %v769 = vmax.f32 %v695, 0.0
    %v770 = vmax.f32 %v698, 0.0
    %v771 = vmax.f32 %v703, 0.0
    %v772 = vmax.f32 %v706, 0.0
    %v837 = vcombine.high %v709, %v709
    %v839 = vunpack.c.l.s4 1983009808
    %v840 = vunpack.c.0.s8 %v839
    %v841 = vlaneseq
    %v842 = vshrl.u32 %v841, 7
    %v843 = vsub.s32 %v840, %v842
    %v844 = vrot.slane %v709, %v843
    %v846 = vunpack.c.l.s4 1983009808
    %v847 = vunpack.c.0.s8 %v846
    %v848 = vlaneseq
    %v849 = vshrl.u32 %v848, 7
    %v850 = vsub.s32 %v847, %v849
    %v851 = vrot.slane %v837, %v850
    %v852 = vcombine.high %v844, %v844
    %v853 = vcombine.high %v851, %v851
    %v854 = vcombine.high %v710, %v710
    %v856 = vunpack.c.l.s4 1983009808
    %v857 = vunpack.c.0.s8 %v856
    %v858 = vlaneseq
    %v859 = vshrl.u32 %v858, 7
    %v860 = vsub.s32 %v857, %v859
    %v861 = vrot.slane %v710, %v860
    %v863 = vunpack.c.l.s4 1983009808
    %v864 = vunpack.c.0.s8 %v863
    %v865 = vlaneseq
    %v866 = vshrl.u32 %v865, 7
    %v867 = vsub.s32 %v864, %v866
    %v868 = vrot.slane %v854, %v867
    %v869 = vcombine.high %v861, %v861
    %v870 = vcombine.high %v868, %v868
    %v871 = vcombine.high %v711, %v711
    %v873 = vunpack.c.l.s4 1983009808
    %v874 = vunpack.c.0.s8 %v873
    %v875 = vlaneseq
    %v876 = vshrl.u32 %v875, 7
    %v877 = vsub.s32 %v874, %v876
    %v878 = vrot.slane %v711, %v877
    %v880 = vunpack.c.l.s4 1983009808
    %v881 = vunpack.c.0.s8 %v880
    %v882 = vlaneseq
    %v883 = vshrl.u32 %v882, 7
    %v884 = vsub.s32 %v881, %v883
    %v885 = vrot.slane %v871, %v884
    %v886 = vcombine.high %v878, %v878
    %v887 = vcombine.high %v885, %v885
    %v888 = vcombine.high %v712, %v712
    %v890 = vunpack.c.l.s4 1983009808
    %v891 = vunpack.c.0.s8 %v890
    %v892 = vlaneseq
    %v893 = vshrl.u32 %v892, 7
    %v894 = vsub.s32 %v891, %v893
    %v895 = vrot.slane %v712, %v894
    %v897 = vunpack.c.l.s4 1983009808
    %v898 = vunpack.c.0.s8 %v897
    %v899 = vlaneseq
    %v900 = vshrl.u32 %v899, 7
    %v901 = vsub.s32 %v898, %v900
    %v902 = vrot.slane %v888, %v901
    %v903 = vcombine.high %v895, %v895
    %v904 = vcombine.high %v902, %v902
    %v905 = vcombine.high %v713, %v713
    %v907 = vunpack.c.l.s4 1983009808
    %v908 = vunpack.c.0.s8 %v907
    %v909 = vlaneseq
    %v910 = vshrl.u32 %v909, 7
    %v911 = vsub.s32 %v908, %v910
    %v912 = vrot.slane %v713, %v911
    %v914 = vunpack.c.l.s4 1983009808
    %v915 = vunpack.c.0.s8 %v914
    %v916 = vlaneseq
    %v917 = vshrl.u32 %v916, 7
    %v918 = vsub.s32 %v915, %v917
    %v919 = vrot.slane %v905, %v918
    %v920 = vcombine.high %v912, %v912
    %v921 = vcombine.high %v919, %v919
    %v922 = vcombine.high %v714, %v714
    %v924 = vunpack.c.l.s4 1983009808
    %v925 = vunpack.c.0.s8 %v924
    %v926 = vlaneseq
    %v927 = vshrl.u32 %v926, 7
    %v928 = vsub.s32 %v925, %v927
    %v929 = vrot.slane %v714, %v928
    %v931 = vunpack.c.l.s4 1983009808
    %v932 = vunpack.c.0.s8 %v931
    %v933 = vlaneseq
    %v934 = vshrl.u32 %v933, 7
    %v935 = vsub.s32 %v932, %v934
    %v936 = vrot.slane %v922, %v935
    %v937 = vcombine.high %v929, %v929
    %v938 = vcombine.high %v936, %v936
    %v939 = vcombine.high %v715, %v715
    %v941 = vunpack.c.l.s4 1983009808
    %v942 = vunpack.c.0.s8 %v941
    %v943 = vlaneseq
    %v944 = vshrl.u32 %v943, 7
    %v945 = vsub.s32 %v942, %v944
    %v946 = vrot.slane %v715, %v945
    %v948 = vunpack.c.l.s4 1983009808
    %v949 = vunpack.c.0.s8 %v948
    %v950 = vlaneseq
    %v951 = vshrl.u32 %v950, 7
    %v952 = vsub.s32 %v949, %v951
    %v953 = vrot.slane %v939, %v952
    %v954 = vcombine.high %v946, %v946
    %v955 = vcombine.high %v953, %v953
    %v956 = vcombine.high %v716, %v716
    %v958 = vunpack.c.l.s4 1983009808
    %v959 = vunpack.c.0.s8 %v958
    %v960 = vlaneseq
    %v961 = vshrl.u32 %v960, 7
    %v962 = vsub.s32 %v959, %v961
    %v963 = vrot.slane %v716, %v962
    %v965 = vunpack.c.l.s4 1983009808
    %v966 = vunpack.c.0.s8 %v965
    %v967 = vlaneseq
    %v968 = vshrl.u32 %v967, 7
    %v969 = vsub.s32 %v966, %v968
    %v970 = vrot.slane %v956, %v969
    %v971 = vcombine.high %v963, %v963
    %v972 = vcombine.high %v970, %v970
    %v973 = vcombine.high %v717, %v717
    %v975 = vunpack.c.l.s4 1983009808
    %v976 = vunpack.c.0.s8 %v975
    %v977 = vlaneseq
    %v978 = vshrl.u32 %v977, 7
    %v979 = vsub.s32 %v976, %v978
    %v980 = vrot.slane %v717, %v979
    %v982 = vunpack.c.l.s4 1983009808
    %v983 = vunpack.c.0.s8 %v982
    %v984 = vlaneseq
    %v985 = vshrl.u32 %v984, 7
    %v986 = vsub.s32 %v983, %v985
    %v987 = vrot.slane %v973, %v986
    %v988 = vcombine.high %v980, %v980
    %v989 = vcombine.high %v987, %v987
    %v990 = vcombine.high %v718, %v718
    %v992 = vunpack.c.l.s4 1983009808
    %v993 = vunpack.c.0.s8 %v992
    %v994 = vlaneseq
    %v995 = vshrl.u32 %v994, 7
    %v996 = vsub.s32 %v993, %v995
    %v997 = vrot.slane %v718, %v996
    %v999 = vunpack.c.l.s4 1983009808
    %v1000 = vunpack.c.0.s8 %v999
    %v1001 = vlaneseq
    %v1002 = vshrl.u32 %v1001, 7
    %v1003 = vsub.s32 %v1000, %v1002
    %v1004 = vrot.slane %v990, %v1003
    %v1005 = vcombine.high %v997, %v997
    %v1006 = vcombine.high %v1004, %v1004
    %v1007 = vcombine.high %v719, %v719
    %v1009 = vunpack.c.l.s4 1983009808
    %v1010 = vunpack.c.0.s8 %v1009
    %v1011 = vlaneseq
    %v1012 = vshrl.u32 %v1011, 7
    %v1013 = vsub.s32 %v1010, %v1012
    %v1014 = vrot.slane %v719, %v1013
    %v1016 = vunpack.c.l.s4 1983009808
    %v1017 = vunpack.c.0.s8 %v1016
    %v1018 = vlaneseq
    %v1019 = vshrl.u32 %v1018, 7
    %v1020 = vsub.s32 %v1017, %v1019
    %v1021 = vrot.slane %v1007, %v1020
    %v1022 = vcombine.high %v1014, %v1014
    %v1023 = vcombine.high %v1021, %v1021
    %v1024 = vcombine.high %v720, %v720
    %v1026 = vunpack.c.l.s4 1983009808
    %v1027 = vunpack.c.0.s8 %v1026
    %v1028 = vlaneseq
    %v1029 = vshrl.u32 %v1028, 7
    %v1030 = vsub.s32 %v1027, %v1029
    %v1031 = vrot.slane %v720, %v1030
    %v1033 = vunpack.c.l.s4 1983009808
    %v1034 = vunpack.c.0.s8 %v1033
    %v1035 = vlaneseq
    %v1036 = vshrl.u32 %v1035, 7
    %v1037 = vsub.s32 %v1034, %v1036
    %v1038 = vrot.slane %v1024, %v1037
    %v1039 = vcombine.high %v1031, %v1031
    %v1040 = vcombine.high %v1038, %v1038
    %v1041 = vcombine.high %v721, %v721
    %v1043 = vunpack.c.l.s4 1983009808
    %v1044 = vunpack.c.0.s8 %v1043
    %v1045 = vlaneseq
    %v1046 = vshrl.u32 %v1045, 7
    %v1047 = vsub.s32 %v1044, %v1046
    %v1048 = vrot.slane %v721, %v1047
    %v1050 = vunpack.c.l.s4 1983009808
    %v1051 = vunpack.c.0.s8 %v1050
    %v1052 = vlaneseq
    %v1053 = vshrl.u32 %v1052, 7
    %v1054 = vsub.s32 %v1051, %v1053
    %v1055 = vrot.slane %v1041, %v1054
    %v1056 = vcombine.high %v1048, %v1048
    %v1057 = vcombine.high %v1055, %v1055
    %v1058 = vcombine.high %v722, %v722
    %v1060 = vunpack.c.l.s4 1983009808
    %v1061 = vunpack.c.0.s8 %v1060
    %v1062 = vlaneseq
    %v1063 = vshrl.u32 %v1062, 7
    %v1064 = vsub.s32 %v1061, %v1063
    %v1065 = vrot.slane %v722, %v1064
    %v1067 = vunpack.c.l.s4 1983009808
    %v1068 = vunpack.c.0.s8 %v1067
    %v1069 = vlaneseq
    %v1070 = vshrl.u32 %v1069, 7
    %v1071 = vsub.s32 %v1068, %v1070
    %v1072 = vrot.slane %v1058, %v1071
    %v1073 = vcombine.high %v1065, %v1065
    %v1074 = vcombine.high %v1072, %v1072
    %v1075 = vcombine.high %v723, %v723
    %v1077 = vunpack.c.l.s4 1983009808
    %v1078 = vunpack.c.0.s8 %v1077
    %v1079 = vlaneseq
    %v1080 = vshrl.u32 %v1079, 7
    %v1081 = vsub.s32 %v1078, %v1080
    %v1082 = vrot.slane %v723, %v1081
    %v1084 = vunpack.c.l.s4 1983009808
    %v1085 = vunpack.c.0.s8 %v1084
    %v1086 = vlaneseq
    %v1087 = vshrl.u32 %v1086, 7
    %v1088 = vsub.s32 %v1085, %v1087
    %v1089 = vrot.slane %v1075, %v1088
    %v1090 = vcombine.high %v1082, %v1082
    %v1091 = vcombine.high %v1089, %v1089
    %v1092 = vcombine.high %v724, %v724
    %v1094 = vunpack.c.l.s4 1983009808
    %v1095 = vunpack.c.0.s8 %v1094
    %v1096 = vlaneseq
    %v1097 = vshrl.u32 %v1096, 7
    %v1098 = vsub.s32 %v1095, %v1097
    %v1099 = vrot.slane %v724, %v1098
    %v1101 = vunpack.c.l.s4 1983009808
    %v1102 = vunpack.c.0.s8 %v1101
    %v1103 = vlaneseq
    %v1104 = vshrl.u32 %v1103, 7
    %v1105 = vsub.s32 %v1102, %v1104
    %v1106 = vrot.slane %v1092, %v1105
    %v1107 = vcombine.high %v1099, %v1099
    %v1108 = vcombine.high %v1106, %v1106
    %v1109 = vcombine.high %v725, %v725
    %v1111 = vunpack.c.l.s4 1983009808
    %v1112 = vunpack.c.0.s8 %v1111
    %v1113 = vlaneseq
    %v1114 = vshrl.u32 %v1113, 7
    %v1115 = vsub.s32 %v1112, %v1114
    %v1116 = vrot.slane %v725, %v1115
    %v1118 = vunpack.c.l.s4 1983009808
    %v1119 = vunpack.c.0.s8 %v1118
    %v1120 = vlaneseq
    %v1121 = vshrl.u32 %v1120, 7
    %v1122 = vsub.s32 %v1119, %v1121
    %v1123 = vrot.slane %v1109, %v1122
    %v1124 = vcombine.high %v1116, %v1116
    %v1125 = vcombine.high %v1123, %v1123
    %v1126 = vcombine.high %v726, %v726
    %v1128 = vunpack.c.l.s4 1983009808
    %v1129 = vunpack.c.0.s8 %v1128
    %v1130 = vlaneseq
    %v1131 = vshrl.u32 %v1130, 7
    %v1132 = vsub.s32 %v1129, %v1131
    %v1133 = vrot.slane %v726, %v1132
    %v1135 = vunpack.c.l.s4 1983009808
    %v1136 = vunpack.c.0.s8 %v1135
    %v1137 = vlaneseq
    %v1138 = vshrl.u32 %v1137, 7
    %v1139 = vsub.s32 %v1136, %v1138
    %v1140 = vrot.slane %v1126, %v1139
    %v1141 = vcombine.high %v1133, %v1133
    %v1142 = vcombine.high %v1140, %v1140
    %v1143 = vcombine.high %v727, %v727
    %v1145 = vunpack.c.l.s4 1983009808
    %v1146 = vunpack.c.0.s8 %v1145
    %v1147 = vlaneseq
    %v1148 = vshrl.u32 %v1147, 7
    %v1149 = vsub.s32 %v1146, %v1148
    %v1150 = vrot.slane %v727, %v1149
    %v1152 = vunpack.c.l.s4 1983009808
    %v1153 = vunpack.c.0.s8 %v1152
    %v1154 = vlaneseq
    %v1155 = vshrl.u32 %v1154, 7
    %v1156 = vsub.s32 %v1153, %v1155
    %v1157 = vrot.slane %v1143, %v1156
    %v1158 = vcombine.high %v1150, %v1150
    %v1159 = vcombine.high %v1157, %v1157
    %v1160 = vcombine.high %v728, %v728
    %v1162 = vunpack.c.l.s4 1983009808
    %v1163 = vunpack.c.0.s8 %v1162
    %v1164 = vlaneseq
    %v1165 = vshrl.u32 %v1164, 7
    %v1166 = vsub.s32 %v1163, %v1165
    %v1167 = vrot.slane %v728, %v1166
    %v1169 = vunpack.c.l.s4 1983009808
    %v1170 = vunpack.c.0.s8 %v1169
    %v1171 = vlaneseq
    %v1172 = vshrl.u32 %v1171, 7
    %v1173 = vsub.s32 %v1170, %v1172
    %v1174 = vrot.slane %v1160, %v1173
    %v1175 = vcombine.high %v1167, %v1167
    %v1176 = vcombine.high %v1174, %v1174
    %v1177 = vcombine.high %v729, %v729
    %v1179 = vunpack.c.l.s4 1983009808
    %v1180 = vunpack.c.0.s8 %v1179
    %v1181 = vlaneseq
    %v1182 = vshrl.u32 %v1181, 7
    %v1183 = vsub.s32 %v1180, %v1182
    %v1184 = vrot.slane %v729, %v1183
    %v1186 = vunpack.c.l.s4 1983009808
    %v1187 = vunpack.c.0.s8 %v1186
    %v1188 = vlaneseq
    %v1189 = vshrl.u32 %v1188, 7
    %v1190 = vsub.s32 %v1187, %v1189
    %v1191 = vrot.slane %v1177, %v1190
    %v1192 = vcombine.high %v1184, %v1184
    %v1193 = vcombine.high %v1191, %v1191
    %v1194 = vcombine.high %v730, %v730
    %v1196 = vunpack.c.l.s4 1983009808
    %v1197 = vunpack.c.0.s8 %v1196
    %v1198 = vlaneseq
    %v1199 = vshrl.u32 %v1198, 7
    %v1200 = vsub.s32 %v1197, %v1199
    %v1201 = vrot.slane %v730, %v1200
    %v1203 = vunpack.c.l.s4 1983009808
    %v1204 = vunpack.c.0.s8 %v1203
    %v1205 = vlaneseq
    %v1206 = vshrl.u32 %v1205, 7
    %v1207 = vsub.s32 %v1204, %v1206
    %v1208 = vrot.slane %v1194, %v1207
    %v1209 = vcombine.high %v1201, %v1201
    %v1210 = vcombine.high %v1208, %v1208
    %v1211 = vcombine.high %v731, %v731
    %v1213 = vunpack.c.l.s4 1983009808
    %v1214 = vunpack.c.0.s8 %v1213
    %v1215 = vlaneseq
    %v1216 = vshrl.u32 %v1215, 7
    %v1217 = vsub.s32 %v1214, %v1216
    %v1218 = vrot.slane %v731, %v1217
    %v1220 = vunpack.c.l.s4 1983009808
    %v1221 = vunpack.c.0.s8 %v1220
    %v1222 = vlaneseq
    %v1223 = vshrl.u32 %v1222, 7
    %v1224 = vsub.s32 %v1221, %v1223
    %v1225 = vrot.slane %v1211, %v1224
    %v1226 = vcombine.high %v1218, %v1218
    %v1227 = vcombine.high %v1225, %v1225
    %v1228 = vcombine.high %v732, %v732
    %v1230 = vunpack.c.l.s4 1983009808
    %v1231 = vunpack.c.0.s8 %v1230
    %v1232 = vlaneseq
    %v1233 = vshrl.u32 %v1232, 7
    %v1234 = vsub.s32 %v1231, %v1233
    %v1235 = vrot.slane %v732, %v1234
    %v1237 = vunpack.c.l.s4 1983009808
    %v1238 = vunpack.c.0.s8 %v1237
    %v1239 = vlaneseq
    %v1240 = vshrl.u32 %v1239, 7
    %v1241 = vsub.s32 %v1238, %v1240
    %v1242 = vrot.slane %v1228, %v1241
    %v1243 = vcombine.high %v1235, %v1235
    %v1244 = vcombine.high %v1242, %v1242
    %v1245 = vcombine.high %v733, %v733
    %v1247 = vunpack.c.l.s4 1983009808
    %v1248 = vunpack.c.0.s8 %v1247
    %v1249 = vlaneseq
    %v1250 = vshrl.u32 %v1249, 7
    %v1251 = vsub.s32 %v1248, %v1250
    %v1252 = vrot.slane %v733, %v1251
    %v1254 = vunpack.c.l.s4 1983009808
    %v1255 = vunpack.c.0.s8 %v1254
    %v1256 = vlaneseq
    %v1257 = vshrl.u32 %v1256, 7
    %v1258 = vsub.s32 %v1255, %v1257
    %v1259 = vrot.slane %v1245, %v1258
    %v1260 = vcombine.high %v1252, %v1252
    %v1261 = vcombine.high %v1259, %v1259
    %v1262 = vcombine.high %v734, %v734
    %v1264 = vunpack.c.l.s4 1983009808
    %v1265 = vunpack.c.0.s8 %v1264
    %v1266 = vlaneseq
    %v1267 = vshrl.u32 %v1266, 7
    %v1268 = vsub.s32 %v1265, %v1267
    %v1269 = vrot.slane %v734, %v1268
    %v1271 = vunpack.c.l.s4 1983009808
    %v1272 = vunpack.c.0.s8 %v1271
    %v1273 = vlaneseq
    %v1274 = vshrl.u32 %v1273, 7
    %v1275 = vsub.s32 %v1272, %v1274
    %v1276 = vrot.slane %v1262, %v1275
    %v1277 = vcombine.high %v1269, %v1269
    %v1278 = vcombine.high %v1276, %v1276
    %v1279 = vcombine.high %v735, %v735
    %v1281 = vunpack.c.l.s4 1983009808
    %v1282 = vunpack.c.0.s8 %v1281
    %v1283 = vlaneseq
    %v1284 = vshrl.u32 %v1283, 7
    %v1285 = vsub.s32 %v1282, %v1284
    %v1286 = vrot.slane %v735, %v1285
    %v1288 = vunpack.c.l.s4 1983009808
    %v1289 = vunpack.c.0.s8 %v1288
    %v1290 = vlaneseq
    %v1291 = vshrl.u32 %v1290, 7
    %v1292 = vsub.s32 %v1289, %v1291
    %v1293 = vrot.slane %v1279, %v1292
    %v1294 = vcombine.high %v1286, %v1286
    %v1295 = vcombine.high %v1293, %v1293
    %v1296 = vcombine.high %v736, %v736
    %v1298 = vunpack.c.l.s4 1983009808
    %v1299 = vunpack.c.0.s8 %v1298
    %v1300 = vlaneseq
    %v1301 = vshrl.u32 %v1300, 7
    %v1302 = vsub.s32 %v1299, %v1301
    %v1303 = vrot.slane %v736, %v1302
    %v1305 = vunpack.c.l.s4 1983009808
    %v1306 = vunpack.c.0.s8 %v1305
    %v1307 = vlaneseq
    %v1308 = vshrl.u32 %v1307, 7
    %v1309 = vsub.s32 %v1306, %v1308
    %v1310 = vrot.slane %v1296, %v1309
    %v1311 = vcombine.high %v1303, %v1303
    %v1312 = vcombine.high %v1310, %v1310
    %v1313 = vcombine.high %v737, %v737
    %v1315 = vunpack.c.l.s4 1983009808
    %v1316 = vunpack.c.0.s8 %v1315
    %v1317 = vlaneseq
    %v1318 = vshrl.u32 %v1317, 7
    %v1319 = vsub.s32 %v1316, %v1318
    %v1320 = vrot.slane %v737, %v1319
    %v1322 = vunpack.c.l.s4 1983009808
    %v1323 = vunpack.c.0.s8 %v1322
    %v1324 = vlaneseq
    %v1325 = vshrl.u32 %v1324, 7
    %v1326 = vsub.s32 %v1323, %v1325
    %v1327 = vrot.slane %v1313, %v1326
    %v1328 = vcombine.high %v1320, %v1320
    %v1329 = vcombine.high %v1327, %v1327
    %v1330 = vcombine.high %v738, %v738
    %v1332 = vunpack.c.l.s4 1983009808
    %v1333 = vunpack.c.0.s8 %v1332
    %v1334 = vlaneseq
    %v1335 = vshrl.u32 %v1334, 7
    %v1336 = vsub.s32 %v1333, %v1335
    %v1337 = vrot.slane %v738, %v1336
    %v1339 = vunpack.c.l.s4 1983009808
    %v1340 = vunpack.c.0.s8 %v1339
    %v1341 = vlaneseq
    %v1342 = vshrl.u32 %v1341, 7
    %v1343 = vsub.s32 %v1340, %v1342
    %v1344 = vrot.slane %v1330, %v1343
    %v1345 = vcombine.high %v1337, %v1337
    %v1346 = vcombine.high %v1344, %v1344
    %v1347 = vcombine.high %v739, %v739
    %v1349 = vunpack.c.l.s4 1983009808
    %v1350 = vunpack.c.0.s8 %v1349
    %v1351 = vlaneseq
    %v1352 = vshrl.u32 %v1351, 7
    %v1353 = vsub.s32 %v1350, %v1352
    %v1354 = vrot.slane %v739, %v1353
    %v1356 = vunpack.c.l.s4 1983009808
    %v1357 = vunpack.c.0.s8 %v1356
    %v1358 = vlaneseq
    %v1359 = vshrl.u32 %v1358, 7
    %v1360 = vsub.s32 %v1357, %v1359
    %v1361 = vrot.slane %v1347, %v1360
    %v1362 = vcombine.high %v1354, %v1354
    %v1363 = vcombine.high %v1361, %v1361
    %v1364 = vcombine.high %v740, %v740
    %v1366 = vunpack.c.l.s4 1983009808
    %v1367 = vunpack.c.0.s8 %v1366
    %v1368 = vlaneseq
    %v1369 = vshrl.u32 %v1368, 7
    %v1370 = vsub.s32 %v1367, %v1369
    %v1371 = vrot.slane %v740, %v1370
    %v1373 = vunpack.c.l.s4 1983009808
    %v1374 = vunpack.c.0.s8 %v1373
    %v1375 = vlaneseq
    %v1376 = vshrl.u32 %v1375, 7
    %v1377 = vsub.s32 %v1374, %v1376
    %v1378 = vrot.slane %v1364, %v1377
    %v1379 = vcombine.high %v1371, %v1371
    %v1380 = vcombine.high %v1378, %v1378
    %v1381 = vcombine.high %v741, %v741
    %v1383 = vunpack.c.l.s4 1983009808
    %v1384 = vunpack.c.0.s8 %v1383
    %v1385 = vlaneseq
    %v1386 = vshrl.u32 %v1385, 7
    %v1387 = vsub.s32 %v1384, %v1386
    %v1388 = vrot.slane %v741, %v1387
    %v1390 = vunpack.c.l.s4 1983009808
    %v1391 = vunpack.c.0.s8 %v1390
    %v1392 = vlaneseq
    %v1393 = vshrl.u32 %v1392, 7
    %v1394 = vsub.s32 %v1391, %v1393
    %v1395 = vrot.slane %v1381, %v1394
    %v1396 = vcombine.high %v1388, %v1388
    %v1397 = vcombine.high %v1395, %v1395
    %v1398 = vcombine.high %v742, %v742
    %v1400 = vunpack.c.l.s4 1983009808
    %v1401 = vunpack.c.0.s8 %v1400
    %v1402 = vlaneseq
    %v1403 = vshrl.u32 %v1402, 7
    %v1404 = vsub.s32 %v1401, %v1403
    %v1405 = vrot.slane %v742, %v1404
    %v1407 = vunpack.c.l.s4 1983009808
    %v1408 = vunpack.c.0.s8 %v1407
    %v1409 = vlaneseq
    %v1410 = vshrl.u32 %v1409, 7
    %v1411 = vsub.s32 %v1408, %v1410
    %v1412 = vrot.slane %v1398, %v1411
    %v1413 = vcombine.high %v1405, %v1405
    %v1414 = vcombine.high %v1412, %v1412
    %v1415 = vcombine.high %v743, %v743
    %v1417 = vunpack.c.l.s4 1983009808
    %v1418 = vunpack.c.0.s8 %v1417
    %v1419 = vlaneseq
    %v1420 = vshrl.u32 %v1419, 7
    %v1421 = vsub.s32 %v1418, %v1420
    %v1422 = vrot.slane %v743, %v1421
    %v1424 = vunpack.c.l.s4 1983009808
    %v1425 = vunpack.c.0.s8 %v1424
    %v1426 = vlaneseq
    %v1427 = vshrl.u32 %v1426, 7
    %v1428 = vsub.s32 %v1425, %v1427
    %v1429 = vrot.slane %v1415, %v1428
    %v1430 = vcombine.high %v1422, %v1422
    %v1431 = vcombine.high %v1429, %v1429
    %v1432 = vcombine.high %v744, %v744
    %v1434 = vunpack.c.l.s4 1983009808
    %v1435 = vunpack.c.0.s8 %v1434
    %v1436 = vlaneseq
    %v1437 = vshrl.u32 %v1436, 7
    %v1438 = vsub.s32 %v1435, %v1437
    %v1439 = vrot.slane %v744, %v1438
    %v1441 = vunpack.c.l.s4 1983009808
    %v1442 = vunpack.c.0.s8 %v1441
    %v1443 = vlaneseq
    %v1444 = vshrl.u32 %v1443, 7
    %v1445 = vsub.s32 %v1442, %v1444
    %v1446 = vrot.slane %v1432, %v1445
    %v1447 = vcombine.high %v1439, %v1439
    %v1448 = vcombine.high %v1446, %v1446
    %v1449 = vcombine.high %v745, %v745
    %v1451 = vunpack.c.l.s4 1983009808
    %v1452 = vunpack.c.0.s8 %v1451
    %v1453 = vlaneseq
    %v1454 = vshrl.u32 %v1453, 7
    %v1455 = vsub.s32 %v1452, %v1454
    %v1456 = vrot.slane %v745, %v1455
    %v1458 = vunpack.c.l.s4 1983009808
    %v1459 = vunpack.c.0.s8 %v1458
    %v1460 = vlaneseq
    %v1461 = vshrl.u32 %v1460, 7
    %v1462 = vsub.s32 %v1459, %v1461
    %v1463 = vrot.slane %v1449, %v1462
    %v1464 = vcombine.high %v1456, %v1456
    %v1465 = vcombine.high %v1463, %v1463
    %v1466 = vcombine.high %v746, %v746
    %v1468 = vunpack.c.l.s4 1983009808
    %v1469 = vunpack.c.0.s8 %v1468
    %v1470 = vlaneseq
    %v1471 = vshrl.u32 %v1470, 7
    %v1472 = vsub.s32 %v1469, %v1471
    %v1473 = vrot.slane %v746, %v1472
    %v1475 = vunpack.c.l.s4 1983009808
    %v1476 = vunpack.c.0.s8 %v1475
    %v1477 = vlaneseq
    %v1478 = vshrl.u32 %v1477, 7
    %v1479 = vsub.s32 %v1476, %v1478
    %v1480 = vrot.slane %v1466, %v1479
    %v1481 = vcombine.high %v1473, %v1473
    %v1482 = vcombine.high %v1480, %v1480
    %v1483 = vcombine.high %v747, %v747
    %v1485 = vunpack.c.l.s4 1983009808
    %v1486 = vunpack.c.0.s8 %v1485
    %v1487 = vlaneseq
    %v1488 = vshrl.u32 %v1487, 7
    %v1489 = vsub.s32 %v1486, %v1488
    %v1490 = vrot.slane %v747, %v1489
    %v1492 = vunpack.c.l.s4 1983009808
    %v1493 = vunpack.c.0.s8 %v1492
    %v1494 = vlaneseq
    %v1495 = vshrl.u32 %v1494, 7
    %v1496 = vsub.s32 %v1493, %v1495
    %v1497 = vrot.slane %v1483, %v1496
    %v1498 = vcombine.high %v1490, %v1490
    %v1499 = vcombine.high %v1497, %v1497
    %v1500 = vcombine.high %v748, %v748
    %v1502 = vunpack.c.l.s4 1983009808
    %v1503 = vunpack.c.0.s8 %v1502
    %v1504 = vlaneseq
    %v1505 = vshrl.u32 %v1504, 7
    %v1506 = vsub.s32 %v1503, %v1505
    %v1507 = vrot.slane %v748, %v1506
    %v1509 = vunpack.c.l.s4 1983009808
    %v1510 = vunpack.c.0.s8 %v1509
    %v1511 = vlaneseq
    %v1512 = vshrl.u32 %v1511, 7
    %v1513 = vsub.s32 %v1510, %v1512
    %v1514 = vrot.slane %v1500, %v1513
    %v1515 = vcombine.high %v1507, %v1507
    %v1516 = vcombine.high %v1514, %v1514
    %v1517 = vcombine.high %v749, %v749
    %v1519 = vunpack.c.l.s4 1983009808
    %v1520 = vunpack.c.0.s8 %v1519
    %v1521 = vlaneseq
    %v1522 = vshrl.u32 %v1521, 7
    %v1523 = vsub.s32 %v1520, %v1522
    %v1524 = vrot.slane %v749, %v1523
    %v1526 = vunpack.c.l.s4 1983009808
    %v1527 = vunpack.c.0.s8 %v1526
    %v1528 = vlaneseq
    %v1529 = vshrl.u32 %v1528, 7
    %v1530 = vsub.s32 %v1527, %v1529
    %v1531 = vrot.slane %v1517, %v1530
    %v1532 = vcombine.high %v1524, %v1524
    %v1533 = vcombine.high %v1531, %v1531
    %v1534 = vcombine.high %v750, %v750
    %v1536 = vunpack.c.l.s4 1983009808
    %v1537 = vunpack.c.0.s8 %v1536
    %v1538 = vlaneseq
    %v1539 = vshrl.u32 %v1538, 7
    %v1540 = vsub.s32 %v1537, %v1539
    %v1541 = vrot.slane %v750, %v1540
    %v1543 = vunpack.c.l.s4 1983009808
    %v1544 = vunpack.c.0.s8 %v1543
    %v1545 = vlaneseq
    %v1546 = vshrl.u32 %v1545, 7
    %v1547 = vsub.s32 %v1544, %v1546
    %v1548 = vrot.slane %v1534, %v1547
    %v1549 = vcombine.high %v1541, %v1541
    %v1550 = vcombine.high %v1548, %v1548
    %v1551 = vcombine.high %v751, %v751
    %v1553 = vunpack.c.l.s4 1983009808
    %v1554 = vunpack.c.0.s8 %v1553
    %v1555 = vlaneseq
    %v1556 = vshrl.u32 %v1555, 7
    %v1557 = vsub.s32 %v1554, %v1556
    %v1558 = vrot.slane %v751, %v1557
    %v1560 = vunpack.c.l.s4 1983009808
    %v1561 = vunpack.c.0.s8 %v1560
    %v1562 = vlaneseq
    %v1563 = vshrl.u32 %v1562, 7
    %v1564 = vsub.s32 %v1561, %v1563
    %v1565 = vrot.slane %v1551, %v1564
    %v1566 = vcombine.high %v1558, %v1558
    %v1567 = vcombine.high %v1565, %v1565
    %v1568 = vcombine.high %v752, %v752
    %v1570 = vunpack.c.l.s4 1983009808
    %v1571 = vunpack.c.0.s8 %v1570
    %v1572 = vlaneseq
    %v1573 = vshrl.u32 %v1572, 7
    %v1574 = vsub.s32 %v1571, %v1573
    %v1575 = vrot.slane %v752, %v1574
    %v1577 = vunpack.c.l.s4 1983009808
    %v1578 = vunpack.c.0.s8 %v1577
    %v1579 = vlaneseq
    %v1580 = vshrl.u32 %v1579, 7
    %v1581 = vsub.s32 %v1578, %v1580
    %v1582 = vrot.slane %v1568, %v1581
    %v1583 = vcombine.high %v1575, %v1575
    %v1584 = vcombine.high %v1582, %v1582
    %v1585 = vcombine.high %v753, %v753
    %v1587 = vunpack.c.l.s4 1983009808
    %v1588 = vunpack.c.0.s8 %v1587
    %v1589 = vlaneseq
    %v1590 = vshrl.u32 %v1589, 7
    %v1591 = vsub.s32 %v1588, %v1590
    %v1592 = vrot.slane %v753, %v1591
    %v1594 = vunpack.c.l.s4 1983009808
    %v1595 = vunpack.c.0.s8 %v1594
    %v1596 = vlaneseq
    %v1597 = vshrl.u32 %v1596, 7
    %v1598 = vsub.s32 %v1595, %v1597
    %v1599 = vrot.slane %v1585, %v1598
    %v1600 = vcombine.high %v1592, %v1592
    %v1601 = vcombine.high %v1599, %v1599
    %v1602 = vcombine.high %v754, %v754
    %v1604 = vunpack.c.l.s4 1983009808
    %v1605 = vunpack.c.0.s8 %v1604
    %v1606 = vlaneseq
    %v1607 = vshrl.u32 %v1606, 7
    %v1608 = vsub.s32 %v1605, %v1607
    %v1609 = vrot.slane %v754, %v1608
    %v1611 = vunpack.c.l.s4 1983009808
    %v1612 = vunpack.c.0.s8 %v1611
    %v1613 = vlaneseq
    %v1614 = vshrl.u32 %v1613, 7
    %v1615 = vsub.s32 %v1612, %v1614
    %v1616 = vrot.slane %v1602, %v1615
    %v1617 = vcombine.high %v1609, %v1609
    %v1618 = vcombine.high %v1616, %v1616
    %v1619 = vcombine.high %v755, %v755
    %v1621 = vunpack.c.l.s4 1983009808
    %v1622 = vunpack.c.0.s8 %v1621
    %v1623 = vlaneseq
    %v1624 = vshrl.u32 %v1623, 7
    %v1625 = vsub.s32 %v1622, %v1624
    %v1626 = vrot.slane %v755, %v1625
    %v1628 = vunpack.c.l.s4 1983009808
    %v1629 = vunpack.c.0.s8 %v1628
    %v1630 = vlaneseq
    %v1631 = vshrl.u32 %v1630, 7
    %v1632 = vsub.s32 %v1629, %v1631
    %v1633 = vrot.slane %v1619, %v1632
    %v1634 = vcombine.high %v1626, %v1626
    %v1635 = vcombine.high %v1633, %v1633
    %v1636 = vcombine.high %v756, %v756
    %v1638 = vunpack.c.l.s4 1983009808
    %v1639 = vunpack.c.0.s8 %v1638
    %v1640 = vlaneseq
    %v1641 = vshrl.u32 %v1640, 7
    %v1642 = vsub.s32 %v1639, %v1641
    %v1643 = vrot.slane %v756, %v1642
    %v1645 = vunpack.c.l.s4 1983009808
    %v1646 = vunpack.c.0.s8 %v1645
    %v1647 = vlaneseq
    %v1648 = vshrl.u32 %v1647, 7
    %v1649 = vsub.s32 %v1646, %v1648
    %v1650 = vrot.slane %v1636, %v1649
    %v1651 = vcombine.high %v1643, %v1643
    %v1652 = vcombine.high %v1650, %v1650
    %v1653 = vcombine.high %v757, %v757
    %v1655 = vunpack.c.l.s4 1983009808
    %v1656 = vunpack.c.0.s8 %v1655
    %v1657 = vlaneseq
    %v1658 = vshrl.u32 %v1657, 7
    %v1659 = vsub.s32 %v1656, %v1658
    %v1660 = vrot.slane %v757, %v1659
    %v1662 = vunpack.c.l.s4 1983009808
    %v1663 = vunpack.c.0.s8 %v1662
    %v1664 = vlaneseq
    %v1665 = vshrl.u32 %v1664, 7
    %v1666 = vsub.s32 %v1663, %v1665
    %v1667 = vrot.slane %v1653, %v1666
    %v1668 = vcombine.high %v1660, %v1660
    %v1669 = vcombine.high %v1667, %v1667
    %v1670 = vcombine.high %v758, %v758
    %v1672 = vunpack.c.l.s4 1983009808
    %v1673 = vunpack.c.0.s8 %v1672
    %v1674 = vlaneseq
    %v1675 = vshrl.u32 %v1674, 7
    %v1676 = vsub.s32 %v1673, %v1675
    %v1677 = vrot.slane %v758, %v1676
    %v1679 = vunpack.c.l.s4 1983009808
    %v1680 = vunpack.c.0.s8 %v1679
    %v1681 = vlaneseq
    %v1682 = vshrl.u32 %v1681, 7
    %v1683 = vsub.s32 %v1680, %v1682
    %v1684 = vrot.slane %v1670, %v1683
    %v1685 = vcombine.high %v1677, %v1677
    %v1686 = vcombine.high %v1684, %v1684
    %v1687 = vcombine.high %v759, %v759
    %v1689 = vunpack.c.l.s4 1983009808
    %v1690 = vunpack.c.0.s8 %v1689
    %v1691 = vlaneseq
    %v1692 = vshrl.u32 %v1691, 7
    %v1693 = vsub.s32 %v1690, %v1692
    %v1694 = vrot.slane %v759, %v1693
    %v1696 = vunpack.c.l.s4 1983009808
    %v1697 = vunpack.c.0.s8 %v1696
    %v1698 = vlaneseq
    %v1699 = vshrl.u32 %v1698, 7
    %v1700 = vsub.s32 %v1697, %v1699
    %v1701 = vrot.slane %v1687, %v1700
    %v1702 = vcombine.high %v1694, %v1694
    %v1703 = vcombine.high %v1701, %v1701
    %v1704 = vcombine.high %v760, %v760
    %v1706 = vunpack.c.l.s4 1983009808
    %v1707 = vunpack.c.0.s8 %v1706
    %v1708 = vlaneseq
    %v1709 = vshrl.u32 %v1708, 7
    %v1710 = vsub.s32 %v1707, %v1709
    %v1711 = vrot.slane %v760, %v1710
    %v1713 = vunpack.c.l.s4 1983009808
    %v1714 = vunpack.c.0.s8 %v1713
    %v1715 = vlaneseq
    %v1716 = vshrl.u32 %v1715, 7
    %v1717 = vsub.s32 %v1714, %v1716
    %v1718 = vrot.slane %v1704, %v1717
    %v1719 = vcombine.high %v1711, %v1711
    %v1720 = vcombine.high %v1718, %v1718
    %v1721 = vcombine.high %v761, %v761
    %v1723 = vunpack.c.l.s4 1983009808
    %v1724 = vunpack.c.0.s8 %v1723
    %v1725 = vlaneseq
    %v1726 = vshrl.u32 %v1725, 7
    %v1727 = vsub.s32 %v1724, %v1726
    %v1728 = vrot.slane %v761, %v1727
    %v1730 = vunpack.c.l.s4 1983009808
    %v1731 = vunpack.c.0.s8 %v1730
    %v1732 = vlaneseq
    %v1733 = vshrl.u32 %v1732, 7
    %v1734 = vsub.s32 %v1731, %v1733
    %v1735 = vrot.slane %v1721, %v1734
    %v1736 = vcombine.high %v1728, %v1728
    %v1737 = vcombine.high %v1735, %v1735
    %v1738 = vcombine.high %v762, %v762
    %v1740 = vunpack.c.l.s4 1983009808
    %v1741 = vunpack.c.0.s8 %v1740
    %v1742 = vlaneseq
    %v1743 = vshrl.u32 %v1742, 7
    %v1744 = vsub.s32 %v1741, %v1743
    %v1745 = vrot.slane %v762, %v1744
    %v1747 = vunpack.c.l.s4 1983009808
    %v1748 = vunpack.c.0.s8 %v1747
    %v1749 = vlaneseq
    %v1750 = vshrl.u32 %v1749, 7
    %v1751 = vsub.s32 %v1748, %v1750
    %v1752 = vrot.slane %v1738, %v1751
    %v1753 = vcombine.high %v1745, %v1745
    %v1754 = vcombine.high %v1752, %v1752
    %v1755 = vcombine.high %v763, %v763
    %v1757 = vunpack.c.l.s4 1983009808
    %v1758 = vunpack.c.0.s8 %v1757
    %v1759 = vlaneseq
    %v1760 = vshrl.u32 %v1759, 7
    %v1761 = vsub.s32 %v1758, %v1760
    %v1762 = vrot.slane %v763, %v1761
    %v1764 = vunpack.c.l.s4 1983009808
    %v1765 = vunpack.c.0.s8 %v1764
    %v1766 = vlaneseq
    %v1767 = vshrl.u32 %v1766, 7
    %v1768 = vsub.s32 %v1765, %v1767
    %v1769 = vrot.slane %v1755, %v1768
    %v1770 = vcombine.high %v1762, %v1762
    %v1771 = vcombine.high %v1769, %v1769
    %v1772 = vcombine.high %v764, %v764
    %v1774 = vunpack.c.l.s4 1983009808
    %v1775 = vunpack.c.0.s8 %v1774
    %v1776 = vlaneseq
    %v1777 = vshrl.u32 %v1776, 7
    %v1778 = vsub.s32 %v1775, %v1777
    %v1779 = vrot.slane %v764, %v1778
    %v1781 = vunpack.c.l.s4 1983009808
    %v1782 = vunpack.c.0.s8 %v1781
    %v1783 = vlaneseq
    %v1784 = vshrl.u32 %v1783, 7
    %v1785 = vsub.s32 %v1782, %v1784
    %v1786 = vrot.slane %v1772, %v1785
    %v1787 = vcombine.high %v1779, %v1779
    %v1788 = vcombine.high %v1786, %v1786
    %v1789 = vcombine.high %v765, %v765
    %v1791 = vunpack.c.l.s4 1983009808
    %v1792 = vunpack.c.0.s8 %v1791
    %v1793 = vlaneseq
    %v1794 = vshrl.u32 %v1793, 7
    %v1795 = vsub.s32 %v1792, %v1794
    %v1796 = vrot.slane %v765, %v1795
    %v1798 = vunpack.c.l.s4 1983009808
    %v1799 = vunpack.c.0.s8 %v1798
    %v1800 = vlaneseq
    %v1801 = vshrl.u32 %v1800, 7
    %v1802 = vsub.s32 %v1799, %v1801
    %v1803 = vrot.slane %v1789, %v1802
    %v1804 = vcombine.high %v1796, %v1796
    %v1805 = vcombine.high %v1803, %v1803
    %v1806 = vcombine.high %v766, %v766
    %v1808 = vunpack.c.l.s4 1983009808
    %v1809 = vunpack.c.0.s8 %v1808
    %v1810 = vlaneseq
    %v1811 = vshrl.u32 %v1810, 7
    %v1812 = vsub.s32 %v1809, %v1811
    %v1813 = vrot.slane %v766, %v1812
    %v1815 = vunpack.c.l.s4 1983009808
    %v1816 = vunpack.c.0.s8 %v1815
    %v1817 = vlaneseq
    %v1818 = vshrl.u32 %v1817, 7
    %v1819 = vsub.s32 %v1816, %v1818
    %v1820 = vrot.slane %v1806, %v1819
    %v1821 = vcombine.high %v1813, %v1813
    %v1822 = vcombine.high %v1820, %v1820
    %v1823 = vcombine.high %v767, %v767
    %v1825 = vunpack.c.l.s4 1983009808
    %v1826 = vunpack.c.0.s8 %v1825
    %v1827 = vlaneseq
    %v1828 = vshrl.u32 %v1827, 7
    %v1829 = vsub.s32 %v1826, %v1828
    %v1830 = vrot.slane %v767, %v1829
    %v1832 = vunpack.c.l.s4 1983009808
    %v1833 = vunpack.c.0.s8 %v1832
    %v1834 = vlaneseq
    %v1835 = vshrl.u32 %v1834, 7
    %v1836 = vsub.s32 %v1833, %v1835
    %v1837 = vrot.slane %v1823, %v1836
    %v1838 = vcombine.high %v1830, %v1830
    %v1839 = vcombine.high %v1837, %v1837
    %v1840 = vcombine.high %v768, %v768
    %v1842 = vunpack.c.l.s4 1983009808
    %v1843 = vunpack.c.0.s8 %v1842
    %v1844 = vlaneseq
    %v1845 = vshrl.u32 %v1844, 7
    %v1846 = vsub.s32 %v1843, %v1845
    %v1847 = vrot.slane %v768, %v1846
    %v1849 = vunpack.c.l.s4 1983009808
    %v1850 = vunpack.c.0.s8 %v1849
    %v1851 = vlaneseq
    %v1852 = vshrl.u32 %v1851, 7
    %v1853 = vsub.s32 %v1850, %v1852
    %v1854 = vrot.slane %v1840, %v1853
    %v1855 = vcombine.high %v1847, %v1847
    %v1856 = vcombine.high %v1854, %v1854
    %v1857 = vcombine.high %v769, %v769
    %v1859 = vunpack.c.l.s4 1983009808
    %v1860 = vunpack.c.0.s8 %v1859
    %v1861 = vlaneseq
    %v1862 = vshrl.u32 %v1861, 7
    %v1863 = vsub.s32 %v1860, %v1862
    %v1864 = vrot.slane %v769, %v1863
    %v1866 = vunpack.c.l.s4 1983009808
    %v1867 = vunpack.c.0.s8 %v1866
    %v1868 = vlaneseq
    %v1869 = vshrl.u32 %v1868, 7
    %v1870 = vsub.s32 %v1867, %v1869
    %v1871 = vrot.slane %v1857, %v1870
    %v1872 = vcombine.high %v1864, %v1864
    %v1873 = vcombine.high %v1871, %v1871
    %v1874 = vcombine.high %v770, %v770
    %v1876 = vunpack.c.l.s4 1983009808
    %v1877 = vunpack.c.0.s8 %v1876
    %v1878 = vlaneseq
    %v1879 = vshrl.u32 %v1878, 7
    %v1880 = vsub.s32 %v1877, %v1879
    %v1881 = vrot.slane %v770, %v1880
    %v1883 = vunpack.c.l.s4 1983009808
    %v1884 = vunpack.c.0.s8 %v1883
    %v1885 = vlaneseq
    %v1886 = vshrl.u32 %v1885, 7
    %v1887 = vsub.s32 %v1884, %v1886
    %v1888 = vrot.slane %v1874, %v1887
    %v1889 = vcombine.high %v1881, %v1881
    %v1890 = vcombine.high %v1888, %v1888
    %v1891 = vcombine.high %v771, %v771
    %v1893 = vunpack.c.l.s4 1983009808
    %v1894 = vunpack.c.0.s8 %v1893
    %v1895 = vlaneseq
    %v1896 = vshrl.u32 %v1895, 7
    %v1897 = vsub.s32 %v1894, %v1896
    %v1898 = vrot.slane %v771, %v1897
    %v1900 = vunpack.c.l.s4 1983009808
    %v1901 = vunpack.c.0.s8 %v1900
    %v1902 = vlaneseq
    %v1903 = vshrl.u32 %v1902, 7
    %v1904 = vsub.s32 %v1901, %v1903
    %v1905 = vrot.slane %v1891, %v1904
    %v1906 = vcombine.high %v1898, %v1898
    %v1907 = vcombine.high %v1905, %v1905
    %v1908 = vcombine.high %v772, %v772
    %v1910 = vunpack.c.l.s4 1983009808
    %v1911 = vunpack.c.0.s8 %v1910
    %v1912 = vlaneseq
    %v1913 = vshrl.u32 %v1912, 7
    %v1914 = vsub.s32 %v1911, %v1913
    %v1915 = vrot.slane %v772, %v1914
    %v1917 = vunpack.c.l.s4 1983009808
    %v1918 = vunpack.c.0.s8 %v1917
    %v1919 = vlaneseq
    %v1920 = vshrl.u32 %v1919, 7
    %v1921 = vsub.s32 %v1918, %v1920
    %v1922 = vrot.slane %v1908, %v1921
    %v1923 = vcombine.high %v1915, %v1915
    %v1924 = vcombine.high %v1922, %v1922
    %v2181 = vrot.slane %v844, 7
    %v2182 = vrot.slane %v2181, 2
    %v2183 = vrot.slane %v852, 7
    %v2184 = vrot.slane %v2183, 2
    %v2185 = vrot.slane %v851, 7
    %v2186 = vrot.slane %v2185, 2
    %v2187 = vrot.slane %v853, 7
    %v2188 = vrot.slane %v2187, 2
    %v2189 = vrot.slane %v861, 7
    %v2190 = vrot.slane %v2189, 2
    %v2191 = vrot.slane %v869, 7
    %v2192 = vrot.slane %v2191, 2
    %v2193 = vrot.slane %v868, 7
    %v2194 = vrot.slane %v2193, 2
    %v2195 = vrot.slane %v870, 7
    %v2196 = vrot.slane %v2195, 2
    %v2197 = vrot.slane %v878, 7
    %v2198 = vrot.slane %v2197, 2
    %v2199 = vrot.slane %v886, 7
    %v2200 = vrot.slane %v2199, 2
    %v2201 = vrot.slane %v885, 7
    %v2202 = vrot.slane %v2201, 2
    %v2203 = vrot.slane %v887, 7
    %v2204 = vrot.slane %v2203, 2
    %v2205 = vrot.slane %v895, 7
    %v2206 = vrot.slane %v2205, 2
    %v2207 = vrot.slane %v903, 7
    %v2208 = vrot.slane %v2207, 2
    %v2209 = vrot.slane %v902, 7
    %v2210 = vrot.slane %v2209, 2
    %v2211 = vrot.slane %v904, 7
    %v2212 = vrot.slane %v2211, 2
    %v2213 = vrot.slane %v912, 7
    %v2214 = vrot.slane %v2213, 2
    %v2215 = vrot.slane %v920, 7
    %v2216 = vrot.slane %v2215, 2
    %v2217 = vrot.slane %v919, 7
    %v2218 = vrot.slane %v2217, 2
    %v2219 = vrot.slane %v921, 7
    %v2220 = vrot.slane %v2219, 2
    %v2221 = vrot.slane %v929, 7
    %v2222 = vrot.slane %v2221, 2
    %v2223 = vrot.slane %v937, 7
    %v2224 = vrot.slane %v2223, 2
    %v2225 = vrot.slane %v936, 7
    %v2226 = vrot.slane %v2225, 2
    %v2227 = vrot.slane %v938, 7
    %v2228 = vrot.slane %v2227, 2
    %v2229 = vrot.slane %v946, 7
    %v2230 = vrot.slane %v2229, 2
    %v2231 = vrot.slane %v954, 7
    %v2232 = vrot.slane %v2231, 2
    %v2233 = vrot.slane %v953, 7
    %v2234 = vrot.slane %v2233, 2
    %v2235 = vrot.slane %v955, 7
    %v2236 = vrot.slane %v2235, 2
    %v2237 = vrot.slane %v963, 7
    %v2238 = vrot.slane %v2237, 2
    %v2239 = vrot.slane %v971, 7
    %v2240 = vrot.slane %v2239, 2
    %v2241 = vrot.slane %v970, 7
    %v2242 = vrot.slane %v2241, 2
    %v2243 = vrot.slane %v972, 7
    %v2244 = vrot.slane %v2243, 2
    %v2245 = vrot.slane %v980, 7
    %v2246 = vrot.slane %v2245, 2
    %v2247 = vrot.slane %v988, 7
    %v2248 = vrot.slane %v2247, 2
    %v2249 = vrot.slane %v987, 7
    %v2250 = vrot.slane %v2249, 2
    %v2251 = vrot.slane %v989, 7
    %v2252 = vrot.slane %v2251, 2
    %v2253 = vrot.slane %v997, 7
    %v2254 = vrot.slane %v2253, 2
    %v2255 = vrot.slane %v1005, 7
    %v2256 = vrot.slane %v2255, 2
    %v2257 = vrot.slane %v1004, 7
    %v2258 = vrot.slane %v2257, 2
    %v2259 = vrot.slane %v1006, 7
    %v2260 = vrot.slane %v2259, 2
    %v2261 = vrot.slane %v1014, 7
    %v2262 = vrot.slane %v2261, 2
    %v2263 = vrot.slane %v1022, 7
    %v2264 = vrot.slane %v2263, 2
    %v2265 = vrot.slane %v1021, 7
    %v2266 = vrot.slane %v2265, 2
    %v2267 = vrot.slane %v1023, 7
    %v2268 = vrot.slane %v2267, 2
    %v2269 = vrot.slane %v1031, 7
    %v2270 = vrot.slane %v2269, 2
    %v2271 = vrot.slane %v1039, 7
    %v2272 = vrot.slane %v2271, 2
    %v2273 = vrot.slane %v1038, 7
    %v2274 = vrot.slane %v2273, 2
    %v2275 = vrot.slane %v1040, 7
    %v2276 = vrot.slane %v2275, 2
    %v2277 = vrot.slane %v1048, 7
    %v2278 = vrot.slane %v2277, 2
    %v2279 = vrot.slane %v1056, 7
    %v2280 = vrot.slane %v2279, 2
    %v2281 = vrot.slane %v1055, 7
    %v2282 = vrot.slane %v2281, 2
    %v2283 = vrot.slane %v1057, 7
    %v2284 = vrot.slane %v2283, 2
    %v2285 = vrot.slane %v1065, 7
    %v2286 = vrot.slane %v2285, 2
    %v2287 = vrot.slane %v1073, 7
    %v2288 = vrot.slane %v2287, 2
    %v2289 = vrot.slane %v1072, 7
    %v2290 = vrot.slane %v2289, 2
    %v2291 = vrot.slane %v1074, 7
    %v2292 = vrot.slane %v2291, 2
    %v2293 = vrot.slane %v1082, 7
    %v2294 = vrot.slane %v2293, 2
    %v2295 = vrot.slane %v1090, 7
    %v2296 = vrot.slane %v2295, 2
    %v2297 = vrot.slane %v1089, 7
    %v2298 = vrot.slane %v2297, 2
    %v2299 = vrot.slane %v1091, 7
    %v2300 = vrot.slane %v2299, 2
    %v2301 = vrot.slane %v1099, 7
    %v2302 = vrot.slane %v2301, 2
    %v2303 = vrot.slane %v1107, 7
    %v2304 = vrot.slane %v2303, 2
    %v2305 = vrot.slane %v1106, 7
    %v2306 = vrot.slane %v2305, 2
    %v2307 = vrot.slane %v1108, 7
    %v2308 = vrot.slane %v2307, 2
    %v2309 = vrot.slane %v1116, 7
    %v2310 = vrot.slane %v2309, 2
    %v2311 = vrot.slane %v1124, 7
    %v2312 = vrot.slane %v2311, 2
    %v2313 = vrot.slane %v1123, 7
    %v2314 = vrot.slane %v2313, 2
    %v2315 = vrot.slane %v1125, 7
    %v2316 = vrot.slane %v2315, 2
    %v2317 = vrot.slane %v1133, 7
    %v2318 = vrot.slane %v2317, 2
    %v2319 = vrot.slane %v1141, 7
    %v2320 = vrot.slane %v2319, 2
    %v2321 = vrot.slane %v1140, 7
    %v2322 = vrot.slane %v2321, 2
    %v2323 = vrot.slane %v1142, 7
    %v2324 = vrot.slane %v2323, 2
    %v2325 = vrot.slane %v1150, 7
    %v2326 = vrot.slane %v2325, 2
    %v2327 = vrot.slane %v1158, 7
    %v2328 = vrot.slane %v2327, 2
    %v2329 = vrot.slane %v1157, 7
    %v2330 = vrot.slane %v2329, 2
    %v2331 = vrot.slane %v1159, 7
    %v2332 = vrot.slane %v2331, 2
    %v2333 = vrot.slane %v1167, 7
    %v2334 = vrot.slane %v2333, 2
    %v2335 = vrot.slane %v1175, 7
    %v2336 = vrot.slane %v2335, 2
    %v2337 = vrot.slane %v1174, 7
    %v2338 = vrot.slane %v2337, 2
    %v2339 = vrot.slane %v1176, 7
    %v2340 = vrot.slane %v2339, 2
    %v2341 = vrot.slane %v1184, 7
    %v2342 = vrot.slane %v2341, 2
    %v2343 = vrot.slane %v1192, 7
    %v2344 = vrot.slane %v2343, 2
    %v2345 = vrot.slane %v1191, 7
    %v2346 = vrot.slane %v2345, 2
    %v2347 = vrot.slane %v1193, 7
    %v2348 = vrot.slane %v2347, 2
    %v2349 = vrot.slane %v1201, 7
    %v2350 = vrot.slane %v2349, 2
    %v2351 = vrot.slane %v1209, 7
    %v2352 = vrot.slane %v2351, 2
    %v2353 = vrot.slane %v1208, 7
    %v2354 = vrot.slane %v2353, 2
    %v2355 = vrot.slane %v1210, 7
    %v2356 = vrot.slane %v2355, 2
    %v2357 = vrot.slane %v1218, 7
    %v2358 = vrot.slane %v2357, 2
    %v2359 = vrot.slane %v1226, 7
    %v2360 = vrot.slane %v2359, 2
    %v2361 = vrot.slane %v1225, 7
    %v2362 = vrot.slane %v2361, 2
    %v2363 = vrot.slane %v1227, 7
    %v2364 = vrot.slane %v2363, 2
    %v2365 = vrot.slane %v1235, 7
    %v2366 = vrot.slane %v2365, 2
    %v2367 = vrot.slane %v1243, 7
    %v2368 = vrot.slane %v2367, 2
    %v2369 = vrot.slane %v1242, 7
    %v2370 = vrot.slane %v2369, 2
    %v2371 = vrot.slane %v1244, 7
    %v2372 = vrot.slane %v2371, 2
    %v2373 = vrot.slane %v1252, 7
    %v2374 = vrot.slane %v2373, 2
    %v2375 = vrot.slane %v1260, 7
    %v2376 = vrot.slane %v2375, 2
    %v2377 = vrot.slane %v1259, 7
    %v2378 = vrot.slane %v2377, 2
    %v2379 = vrot.slane %v1261, 7
    %v2380 = vrot.slane %v2379, 2
    %v2381 = vrot.slane %v1269, 7
    %v2382 = vrot.slane %v2381, 2
    %v2383 = vrot.slane %v1277, 7
    %v2384 = vrot.slane %v2383, 2
    %v2385 = vrot.slane %v1276, 7
    %v2386 = vrot.slane %v2385, 2
    %v2387 = vrot.slane %v1278, 7
    %v2388 = vrot.slane %v2387, 2
    %v2389 = vrot.slane %v1286, 7
    %v2390 = vrot.slane %v2389, 2
    %v2391 = vrot.slane %v1294, 7
    %v2392 = vrot.slane %v2391, 2
    %v2393 = vrot.slane %v1293, 7
    %v2394 = vrot.slane %v2393, 2
    %v2395 = vrot.slane %v1295, 7
    %v2396 = vrot.slane %v2395, 2
    %v2397 = vrot.slane %v1303, 7
    %v2398 = vrot.slane %v2397, 2
    %v2399 = vrot.slane %v1311, 7
    %v2400 = vrot.slane %v2399, 2
    %v2401 = vrot.slane %v1310, 7
    %v2402 = vrot.slane %v2401, 2
    %v2403 = vrot.slane %v1312, 7
    %v2404 = vrot.slane %v2403, 2
    %v2405 = vrot.slane %v1320, 7
    %v2406 = vrot.slane %v2405, 2
    %v2407 = vrot.slane %v1328, 7
    %v2408 = vrot.slane %v2407, 2
    %v2409 = vrot.slane %v1327, 7
    %v2410 = vrot.slane %v2409, 2
    %v2411 = vrot.slane %v1329, 7
    %v2412 = vrot.slane %v2411, 2
    %v2413 = vrot.slane %v1337, 7
    %v2414 = vrot.slane %v2413, 2
    %v2415 = vrot.slane %v1345, 7
    %v2416 = vrot.slane %v2415, 2
    %v2417 = vrot.slane %v1344, 7
    %v2418 = vrot.slane %v2417, 2
    %v2419 = vrot.slane %v1346, 7
    %v2420 = vrot.slane %v2419, 2
    %v2421 = vrot.slane %v1354, 7
    %v2422 = vrot.slane %v2421, 2
    %v2423 = vrot.slane %v1362, 7
    %v2424 = vrot.slane %v2423, 2
    %v2425 = vrot.slane %v1361, 7
    %v2426 = vrot.slane %v2425, 2
    %v2427 = vrot.slane %v1363, 7
    %v2428 = vrot.slane %v2427, 2
    %v2429 = vrot.slane %v1371, 7
    %v2430 = vrot.slane %v2429, 2
    %v2431 = vrot.slane %v1379, 7
    %v2432 = vrot.slane %v2431, 2
    %v2433 = vrot.slane %v1378, 7
    %v2434 = vrot.slane %v2433, 2
    %v2435 = vrot.slane %v1380, 7
    %v2436 = vrot.slane %v2435, 2
    %v2437 = vrot.slane %v1388, 7
    %v2438 = vrot.slane %v2437, 2
    %v2439 = vrot.slane %v1396, 7
    %v2440 = vrot.slane %v2439, 2
    %v2441 = vrot.slane %v1395, 7
    %v2442 = vrot.slane %v2441, 2
    %v2443 = vrot.slane %v1397, 7
    %v2444 = vrot.slane %v2443, 2
    %v2445 = vrot.slane %v1405, 7
    %v2446 = vrot.slane %v2445, 2
    %v2447 = vrot.slane %v1413, 7
    %v2448 = vrot.slane %v2447, 2
    %v2449 = vrot.slane %v1412, 7
    %v2450 = vrot.slane %v2449, 2
    %v2451 = vrot.slane %v1414, 7
    %v2452 = vrot.slane %v2451, 2
    %v2453 = vrot.slane %v1422, 7
    %v2454 = vrot.slane %v2453, 2
    %v2455 = vrot.slane %v1430, 7
    %v2456 = vrot.slane %v2455, 2
    %v2457 = vrot.slane %v1429, 7
    %v2458 = vrot.slane %v2457, 2
    %v2459 = vrot.slane %v1431, 7
    %v2460 = vrot.slane %v2459, 2
    %v2461 = vrot.slane %v1439, 7
    %v2462 = vrot.slane %v2461, 2
    %v2463 = vrot.slane %v1447, 7
    %v2464 = vrot.slane %v2463, 2
    %v2465 = vrot.slane %v1446, 7
    %v2466 = vrot.slane %v2465, 2
    %v2467 = vrot.slane %v1448, 7
    %v2468 = vrot.slane %v2467, 2
    %v2469 = vrot.slane %v1456, 7
    %v2470 = vrot.slane %v2469, 2
    %v2471 = vrot.slane %v1464, 7
    %v2472 = vrot.slane %v2471, 2
    %v2473 = vrot.slane %v1463, 7
    %v2474 = vrot.slane %v2473, 2
    %v2475 = vrot.slane %v1465, 7
    %v2476 = vrot.slane %v2475, 2
    %v2477 = vrot.slane %v1473, 7
    %v2478 = vrot.slane %v2477, 2
    %v2479 = vrot.slane %v1481, 7
    %v2480 = vrot.slane %v2479, 2
    %v2481 = vrot.slane %v1480, 7
    %v2482 = vrot.slane %v2481, 2
    %v2483 = vrot.slane %v1482, 7
    %v2484 = vrot.slane %v2483, 2
    %v2485 = vrot.slane %v1490, 7
    %v2486 = vrot.slane %v2485, 2
    %v2487 = vrot.slane %v1498, 7
    %v2488 = vrot.slane %v2487, 2
    %v2489 = vrot.slane %v1497, 7
    %v2490 = vrot.slane %v2489, 2
    %v2491 = vrot.slane %v1499, 7
    %v2492 = vrot.slane %v2491, 2
    %v2493 = vrot.slane %v1507, 7
    %v2494 = vrot.slane %v2493, 2
    %v2495 = vrot.slane %v1515, 7
    %v2496 = vrot.slane %v2495, 2
    %v2497 = vrot.slane %v1514, 7
    %v2498 = vrot.slane %v2497, 2
    %v2499 = vrot.slane %v1516, 7
    %v2500 = vrot.slane %v2499, 2
    %v2501 = vrot.slane %v1524, 7
    %v2502 = vrot.slane %v2501, 2
    %v2503 = vrot.slane %v1532, 7
    %v2504 = vrot.slane %v2503, 2
    %v2505 = vrot.slane %v1531, 7
    %v2506 = vrot.slane %v2505, 2
    %v2507 = vrot.slane %v1533, 7
    %v2508 = vrot.slane %v2507, 2
    %v2509 = vrot.slane %v1541, 7
    %v2510 = vrot.slane %v2509, 2
    %v2511 = vrot.slane %v1549, 7
    %v2512 = vrot.slane %v2511, 2
    %v2513 = vrot.slane %v1548, 7
    %v2514 = vrot.slane %v2513, 2
    %v2515 = vrot.slane %v1550, 7
    %v2516 = vrot.slane %v2515, 2
    %v2517 = vrot.slane %v1558, 7
    %v2518 = vrot.slane %v2517, 2
    %v2519 = vrot.slane %v1566, 7
    %v2520 = vrot.slane %v2519, 2
    %v2521 = vrot.slane %v1565, 7
    %v2522 = vrot.slane %v2521, 2
    %v2523 = vrot.slane %v1567, 7
    %v2524 = vrot.slane %v2523, 2
    %v2525 = vrot.slane %v1575, 7
    %v2526 = vrot.slane %v2525, 2
    %v2527 = vrot.slane %v1583, 7
    %v2528 = vrot.slane %v2527, 2
    %v2529 = vrot.slane %v1582, 7
    %v2530 = vrot.slane %v2529, 2
    %v2531 = vrot.slane %v1584, 7
    %v2532 = vrot.slane %v2531, 2
    %v2533 = vrot.slane %v1592, 7
    %v2534 = vrot.slane %v2533, 2
    %v2535 = vrot.slane %v1600, 7
    %v2536 = vrot.slane %v2535, 2
    %v2537 = vrot.slane %v1599, 7
    %v2538 = vrot.slane %v2537, 2
    %v2539 = vrot.slane %v1601, 7
    %v2540 = vrot.slane %v2539, 2
    %v2541 = vrot.slane %v1609, 7
    %v2542 = vrot.slane %v2541, 2
    %v2543 = vrot.slane %v1617, 7
    %v2544 = vrot.slane %v2543, 2
    %v2545 = vrot.slane %v1616, 7
    %v2546 = vrot.slane %v2545, 2
    %v2547 = vrot.slane %v1618, 7
    %v2548 = vrot.slane %v2547, 2
    %v2549 = vrot.slane %v1626, 7
    %v2550 = vrot.slane %v2549, 2
    %v2551 = vrot.slane %v1634, 7
    %v2552 = vrot.slane %v2551, 2
    %v2553 = vrot.slane %v1633, 7
    %v2554 = vrot.slane %v2553, 2
    %v2555 = vrot.slane %v1635, 7
    %v2556 = vrot.slane %v2555, 2
    %v2557 = vrot.slane %v1643, 7
    %v2558 = vrot.slane %v2557, 2
    %v2559 = vrot.slane %v1651, 7
    %v2560 = vrot.slane %v2559, 2
    %v2561 = vrot.slane %v1650, 7
    %v2562 = vrot.slane %v2561, 2
    %v2563 = vrot.slane %v1652, 7
    %v2564 = vrot.slane %v2563, 2
    %v2565 = vrot.slane %v1660, 7
    %v2566 = vrot.slane %v2565, 2
    %v2567 = vrot.slane %v1668, 7
    %v2568 = vrot.slane %v2567, 2
    %v2569 = vrot.slane %v1667, 7
    %v2570 = vrot.slane %v2569, 2
    %v2571 = vrot.slane %v1669, 7
    %v2572 = vrot.slane %v2571, 2
    %v2573 = vrot.slane %v1677, 7
    %v2574 = vrot.slane %v2573, 2
    %v2575 = vrot.slane %v1685, 7
    %v2576 = vrot.slane %v2575, 2
    %v2577 = vrot.slane %v1684, 7
    %v2578 = vrot.slane %v2577, 2
    %v2579 = vrot.slane %v1686, 7
    %v2580 = vrot.slane %v2579, 2
    %v2581 = vrot.slane %v1694, 7
    %v2582 = vrot.slane %v2581, 2
    %v2583 = vrot.slane %v1702, 7
    %v2584 = vrot.slane %v2583, 2
    %v2585 = vrot.slane %v1701, 7
    %v2586 = vrot.slane %v2585, 2
    %v2587 = vrot.slane %v1703, 7
    %v2588 = vrot.slane %v2587, 2
    %v2589 = vrot.slane %v1711, 7
    %v2590 = vrot.slane %v2589, 2
    %v2591 = vrot.slane %v1719, 7
    %v2592 = vrot.slane %v2591, 2
    %v2593 = vrot.slane %v1718, 7
    %v2594 = vrot.slane %v2593, 2
    %v2595 = vrot.slane %v1720, 7
    %v2596 = vrot.slane %v2595, 2
    %v2597 = vrot.slane %v1728, 7
    %v2598 = vrot.slane %v2597, 2
    %v2599 = vrot.slane %v1736, 7
    %v2600 = vrot.slane %v2599, 2
    %v2601 = vrot.slane %v1735, 7
    %v2602 = vrot.slane %v2601, 2
    %v2603 = vrot.slane %v1737, 7
    %v2604 = vrot.slane %v2603, 2
    %v2605 = vrot.slane %v1745, 7
    %v2606 = vrot.slane %v2605, 2
    %v2607 = vrot.slane %v1753, 7
    %v2608 = vrot.slane %v2607, 2
    %v2609 = vrot.slane %v1752, 7
    %v2610 = vrot.slane %v2609, 2
    %v2611 = vrot.slane %v1754, 7
    %v2612 = vrot.slane %v2611, 2
    %v2613 = vrot.slane %v1762, 7
    %v2614 = vrot.slane %v2613, 2
    %v2615 = vrot.slane %v1770, 7
    %v2616 = vrot.slane %v2615, 2
    %v2617 = vrot.slane %v1769, 7
    %v2618 = vrot.slane %v2617, 2
    %v2619 = vrot.slane %v1771, 7
    %v2620 = vrot.slane %v2619, 2
    %v2621 = vrot.slane %v1779, 7
    %v2622 = vrot.slane %v2621, 2
    %v2623 = vrot.slane %v1787, 7
    %v2624 = vrot.slane %v2623, 2
    %v2625 = vrot.slane %v1786, 7
    %v2626 = vrot.slane %v2625, 2
    %v2627 = vrot.slane %v1788, 7
    %v2628 = vrot.slane %v2627, 2
    %v2629 = vrot.slane %v1796, 7
    %v2630 = vrot.slane %v2629, 2
    %v2631 = vrot.slane %v1804, 7
    %v2632 = vrot.slane %v2631, 2
    %v2633 = vrot.slane %v1803, 7
    %v2634 = vrot.slane %v2633, 2
    %v2635 = vrot.slane %v1805, 7
    %v2636 = vrot.slane %v2635, 2
    %v2637 = vrot.slane %v1813, 7
    %v2638 = vrot.slane %v2637, 2
    %v2639 = vrot.slane %v1821, 7
    %v2640 = vrot.slane %v2639, 2
    %v2641 = vrot.slane %v1820, 7
    %v2642 = vrot.slane %v2641, 2
    %v2643 = vrot.slane %v1822, 7
    %v2644 = vrot.slane %v2643, 2
    %v2645 = vrot.slane %v1830, 7
    %v2646 = vrot.slane %v2645, 2
    %v2647 = vrot.slane %v1838, 7
    %v2648 = vrot.slane %v2647, 2
    %v2649 = vrot.slane %v1837, 7
    %v2650 = vrot.slane %v2649, 2
    %v2651 = vrot.slane %v1839, 7
    %v2652 = vrot.slane %v2651, 2
    %v2653 = vrot.slane %v1847, 7
    %v2654 = vrot.slane %v2653, 2
    %v2655 = vrot.slane %v1855, 7
    %v2656 = vrot.slane %v2655, 2
    %v2657 = vrot.slane %v1854, 7
    %v2658 = vrot.slane %v2657, 2
    %v2659 = vrot.slane %v1856, 7
    %v2660 = vrot.slane %v2659, 2
    %v2661 = vrot.slane %v1864, 7
    %v2662 = vrot.slane %v2661, 2
    %v2663 = vrot.slane %v1872, 7
    %v2664 = vrot.slane %v2663, 2
    %v2665 = vrot.slane %v1871, 7
    %v2666 = vrot.slane %v2665, 2
    %v2667 = vrot.slane %v1873, 7
    %v2668 = vrot.slane %v2667, 2
    %v2669 = vrot.slane %v1881, 7
    %v2670 = vrot.slane %v2669, 2
    %v2671 = vrot.slane %v1889, 7
    %v2672 = vrot.slane %v2671, 2
    %v2673 = vrot.slane %v1888, 7
    %v2674 = vrot.slane %v2673, 2
    %v2675 = vrot.slane %v1890, 7
    %v2676 = vrot.slane %v2675, 2
    %v2677 = vrot.slane %v1898, 7
    %v2678 = vrot.slane %v2677, 2
    %v2679 = vrot.slane %v1906, 7
    %v2680 = vrot.slane %v2679, 2
    %v2681 = vrot.slane %v1905, 7
    %v2682 = vrot.slane %v2681, 2
    %v2683 = vrot.slane %v1907, 7
    %v2684 = vrot.slane %v2683, 2
    %v2685 = vrot.slane %v1915, 7
    %v2686 = vrot.slane %v2685, 2
    %v2687 = vrot.slane %v1923, 7
    %v2688 = vrot.slane %v2687, 2
    %v2689 = vrot.slane %v1922, 7
    %v2690 = vrot.slane %v2689, 2
    %v2691 = vrot.slane %v1924, 7
    %v2692 = vrot.slane %v2691, 2
    %v2949 = vmax.f32 %v844, %v2182
    %v2950 = vmax.f32 %v852, %v2184
    %v2951 = vmax.f32 %v851, %v2186
    %v2952 = vmax.f32 %v853, %v2188
    %v2953 = vmax.f32 %v861, %v2190
    %v2954 = vmax.f32 %v869, %v2192
    %v2955 = vmax.f32 %v868, %v2194
    %v2956 = vmax.f32 %v870, %v2196
    %v2957 = vmax.f32 %v878, %v2198
    %v2958 = vmax.f32 %v886, %v2200
    %v2959 = vmax.f32 %v885, %v2202
    %v2960 = vmax.f32 %v887, %v2204
    %v2961 = vmax.f32 %v895, %v2206
    %v2962 = vmax.f32 %v903, %v2208
    %v2963 = vmax.f32 %v902, %v2210
    %v2964 = vmax.f32 %v904, %v2212
    %v2965 = vmax.f32 %v912, %v2214
    %v2966 = vmax.f32 %v920, %v2216
    %v2967 = vmax.f32 %v919, %v2218
    %v2968 = vmax.f32 %v921, %v2220
    %v2969 = vmax.f32 %v929, %v2222
    %v2970 = vmax.f32 %v937, %v2224
    %v2971 = vmax.f32 %v936, %v2226
    %v2972 = vmax.f32 %v938, %v2228
    %v2973 = vmax.f32 %v946, %v2230
    %v2974 = vmax.f32 %v954, %v2232
    %v2975 = vmax.f32 %v953, %v2234
    %v2976 = vmax.f32 %v955, %v2236
    %v2977 = vmax.f32 %v963, %v2238
    %v2978 = vmax.f32 %v971, %v2240
    %v2979 = vmax.f32 %v970, %v2242
    %v2980 = vmax.f32 %v972, %v2244
    %v2981 = vmax.f32 %v980, %v2246
    %v2982 = vmax.f32 %v988, %v2248
    %v2983 = vmax.f32 %v987, %v2250
    %v2984 = vmax.f32 %v989, %v2252
    %v2985 = vmax.f32 %v997, %v2254
    %v2986 = vmax.f32 %v1005, %v2256
    %v2987 = vmax.f32 %v1004, %v2258
    %v2988 = vmax.f32 %v1006, %v2260
    %v2989 = vmax.f32 %v1014, %v2262
    %v2990 = vmax.f32 %v1022, %v2264
    %v2991 = vmax.f32 %v1021, %v2266
    %v2992 = vmax.f32 %v1023, %v2268
    %v2993 = vmax.f32 %v1031, %v2270
    %v2994 = vmax.f32 %v1039, %v2272
    %v2995 = vmax.f32 %v1038, %v2274
    %v2996 = vmax.f32 %v1040, %v2276
    %v2997 = vmax.f32 %v1048, %v2278
    %v2998 = vmax.f32 %v1056, %v2280
    %v2999 = vmax.f32 %v1055, %v2282
    %v3000 = vmax.f32 %v1057, %v2284
    %v3001 = vmax.f32 %v1065, %v2286
    %v3002 = vmax.f32 %v1073, %v2288
    %v3003 = vmax.f32 %v1072, %v2290
    %v3004 = vmax.f32 %v1074, %v2292
    %v3005 = vmax.f32 %v1082, %v2294
    %v3006 = vmax.f32 %v1090, %v2296
    %v3007 = vmax.f32 %v1089, %v2298
    %v3008 = vmax.f32 %v1091, %v2300
    %v3009 = vmax.f32 %v1099, %v2302
    %v3010 = vmax.f32 %v1107, %v2304
    %v3011 = vmax.f32 %v1106, %v2306
    %v3012 = vmax.f32 %v1108, %v2308
    %v3013 = vmax.f32 %v1116, %v2310
    %v3014 = vmax.f32 %v1124, %v2312
    %v3015 = vmax.f32 %v1123, %v2314
    %v3016 = vmax.f32 %v1125, %v2316
    %v3017 = vmax.f32 %v1133, %v2318
    %v3018 = vmax.f32 %v1141, %v2320
    %v3019 = vmax.f32 %v1140, %v2322
    %v3020 = vmax.f32 %v1142, %v2324
    %v3021 = vmax.f32 %v1150, %v2326
    %v3022 = vmax.f32 %v1158, %v2328
    %v3023 = vmax.f32 %v1157, %v2330
    %v3024 = vmax.f32 %v1159, %v2332
    %v3025 = vmax.f32 %v1167, %v2334
    %v3026 = vmax.f32 %v1175, %v2336
    %v3027 = vmax.f32 %v1174, %v2338
    %v3028 = vmax.f32 %v1176, %v2340
    %v3029 = vmax.f32 %v1184, %v2342
    %v3030 = vmax.f32 %v1192, %v2344
    %v3031 = vmax.f32 %v1191, %v2346
    %v3032 = vmax.f32 %v1193, %v2348
    %v3033 = vmax.f32 %v1201, %v2350
    %v3034 = vmax.f32 %v1209, %v2352
    %v3035 = vmax.f32 %v1208, %v2354
    %v3036 = vmax.f32 %v1210, %v2356
    %v3037 = vmax.f32 %v1218, %v2358
    %v3038 = vmax.f32 %v1226, %v2360
    %v3039 = vmax.f32 %v1225, %v2362
    %v3040 = vmax.f32 %v1227, %v2364
    %v3041 = vmax.f32 %v1235, %v2366
    %v3042 = vmax.f32 %v1243, %v2368
    %v3043 = vmax.f32 %v1242, %v2370
    %v3044 = vmax.f32 %v1244, %v2372
    %v3045 = vmax.f32 %v1252, %v2374
    %v3046 = vmax.f32 %v1260, %v2376
    %v3047 = vmax.f32 %v1259, %v2378
    %v3048 = vmax.f32 %v1261, %v2380
    %v3049 = vmax.f32 %v1269, %v2382
    %v3050 = vmax.f32 %v1277, %v2384
    %v3051 = vmax.f32 %v1276, %v2386
    %v3052 = vmax.f32 %v1278, %v2388
    %v3053 = vmax.f32 %v1286, %v2390
    %v3054 = vmax.f32 %v1294, %v2392
    %v3055 = vmax.f32 %v1293, %v2394
    %v3056 = vmax.f32 %v1295, %v2396
    %v3057 = vmax.f32 %v1303, %v2398
    %v3058 = vmax.f32 %v1311, %v2400
    %v3059 = vmax.f32 %v1310, %v2402
    %v3060 = vmax.f32 %v1312, %v2404
    %v3061 = vmax.f32 %v1320, %v2406
    %v3062 = vmax.f32 %v1328, %v2408
    %v3063 = vmax.f32 %v1327, %v2410
    %v3064 = vmax.f32 %v1329, %v2412
    %v3065 = vmax.f32 %v1337, %v2414
    %v3066 = vmax.f32 %v1345, %v2416
    %v3067 = vmax.f32 %v1344, %v2418
    %v3068 = vmax.f32 %v1346, %v2420
    %v3069 = vmax.f32 %v1354, %v2422
    %v3070 = vmax.f32 %v1362, %v2424
    %v3071 = vmax.f32 %v1361, %v2426
    %v3072 = vmax.f32 %v1363, %v2428
    %v3073 = vmax.f32 %v1371, %v2430
    %v3074 = vmax.f32 %v1379, %v2432
    %v3075 = vmax.f32 %v1378, %v2434
    %v3076 = vmax.f32 %v1380, %v2436
    %v3077 = vmax.f32 %v1388, %v2438
    %v3078 = vmax.f32 %v1396, %v2440
    %v3079 = vmax.f32 %v1395, %v2442
    %v3080 = vmax.f32 %v1397, %v2444
    %v3081 = vmax.f32 %v1405, %v2446
    %v3082 = vmax.f32 %v1413, %v2448
    %v3083 = vmax.f32 %v1412, %v2450
    %v3084 = vmax.f32 %v1414, %v2452
    %v3085 = vmax.f32 %v1422, %v2454
    %v3086 = vmax.f32 %v1430, %v2456
    %v3087 = vmax.f32 %v1429, %v2458
    %v3088 = vmax.f32 %v1431, %v2460
    %v3089 = vmax.f32 %v1439, %v2462
    %v3090 = vmax.f32 %v1447, %v2464
    %v3091 = vmax.f32 %v1446, %v2466
    %v3092 = vmax.f32 %v1448, %v2468
    %v3093 = vmax.f32 %v1456, %v2470
    %v3094 = vmax.f32 %v1464, %v2472
    %v3095 = vmax.f32 %v1463, %v2474
    %v3096 = vmax.f32 %v1465, %v2476
    %v3097 = vmax.f32 %v1473, %v2478
    %v3098 = vmax.f32 %v1481, %v2480
    %v3099 = vmax.f32 %v1480, %v2482
    %v3100 = vmax.f32 %v1482, %v2484
    %v3101 = vmax.f32 %v1490, %v2486
    %v3102 = vmax.f32 %v1498, %v2488
    %v3103 = vmax.f32 %v1497, %v2490
    %v3104 = vmax.f32 %v1499, %v2492
    %v3105 = vmax.f32 %v1507, %v2494
    %v3106 = vmax.f32 %v1515, %v2496
    %v3107 = vmax.f32 %v1514, %v2498
    %v3108 = vmax.f32 %v1516, %v2500
    %v3109 = vmax.f32 %v1524, %v2502
    %v3110 = vmax.f32 %v1532, %v2504
    %v3111 = vmax.f32 %v1531, %v2506
    %v3112 = vmax.f32 %v1533, %v2508
    %v3113 = vmax.f32 %v1541, %v2510
    %v3114 = vmax.f32 %v1549, %v2512
    %v3115 = vmax.f32 %v1548, %v2514
    %v3116 = vmax.f32 %v1550, %v2516
    %v3117 = vmax.f32 %v1558, %v2518
    %v3118 = vmax.f32 %v1566, %v2520
    %v3119 = vmax.f32 %v1565, %v2522
    %v3120 = vmax.f32 %v1567, %v2524
    %v3121 = vmax.f32 %v1575, %v2526
    %v3122 = vmax.f32 %v1583, %v2528
    %v3123 = vmax.f32 %v1582, %v2530
    %v3124 = vmax.f32 %v1584, %v2532
    %v3125 = vmax.f32 %v1592, %v2534
    %v3126 = vmax.f32 %v1600, %v2536
    %v3127 = vmax.f32 %v1599, %v2538
    %v3128 = vmax.f32 %v1601, %v2540
    %v3129 = vmax.f32 %v1609, %v2542
    %v3130 = vmax.f32 %v1617, %v2544
    %v3131 = vmax.f32 %v1616, %v2546
    %v3132 = vmax.f32 %v1618, %v2548
    %v3133 = vmax.f32 %v1626, %v2550
    %v3134 = vmax.f32 %v1634, %v2552
    %v3135 = vmax.f32 %v1633, %v2554
    %v3136 = vmax.f32 %v1635, %v2556
    %v3137 = vmax.f32 %v1643, %v2558
    %v3138 = vmax.f32 %v1651, %v2560
    %v3139 = vmax.f32 %v1650, %v2562
    %v3140 = vmax.f32 %v1652, %v2564
    %v3141 = vmax.f32 %v1660, %v2566
    %v3142 = vmax.f32 %v1668, %v2568
    %v3143 = vmax.f32 %v1667, %v2570
    %v3144 = vmax.f32 %v1669, %v2572
    %v3145 = vmax.f32 %v1677, %v2574
    %v3146 = vmax.f32 %v1685, %v2576
    %v3147 = vmax.f32 %v1684, %v2578
    %v3148 = vmax.f32 %v1686, %v2580
    %v3149 = vmax.f32 %v1694, %v2582
    %v3150 = vmax.f32 %v1702, %v2584
    %v3151 = vmax.f32 %v1701, %v2586
    %v3152 = vmax.f32 %v1703, %v2588
    %v3153 = vmax.f32 %v1711, %v2590
    %v3154 = vmax.f32 %v1719, %v2592
    %v3155 = vmax.f32 %v1718, %v2594
    %v3156 = vmax.f32 %v1720, %v2596
    %v3157 = vmax.f32 %v1728, %v2598
    %v3158 = vmax.f32 %v1736, %v2600
    %v3159 = vmax.f32 %v1735, %v2602
    %v3160 = vmax.f32 %v1737, %v2604
    %v3161 = vmax.f32 %v1745, %v2606
    %v3162 = vmax.f32 %v1753, %v2608
    %v3163 = vmax.f32 %v1752, %v2610
    %v3164 = vmax.f32 %v1754, %v2612
    %v3165 = vmax.f32 %v1762, %v2614
    %v3166 = vmax.f32 %v1770, %v2616
    %v3167 = vmax.f32 %v1769, %v2618
    %v3168 = vmax.f32 %v1771, %v2620
    %v3169 = vmax.f32 %v1779, %v2622
    %v3170 = vmax.f32 %v1787, %v2624
    %v3171 = vmax.f32 %v1786, %v2626
    %v3172 = vmax.f32 %v1788, %v2628
    %v3173 = vmax.f32 %v1796, %v2630
    %v3174 = vmax.f32 %v1804, %v2632
    %v3175 = vmax.f32 %v1803, %v2634
    %v3176 = vmax.f32 %v1805, %v2636
    %v3177 = vmax.f32 %v1813, %v2638
    %v3178 = vmax.f32 %v1821, %v2640
    %v3179 = vmax.f32 %v1820, %v2642
    %v3180 = vmax.f32 %v1822, %v2644
    %v3181 = vmax.f32 %v1830, %v2646
    %v3182 = vmax.f32 %v1838, %v2648
    %v3183 = vmax.f32 %v1837, %v2650
    %v3184 = vmax.f32 %v1839, %v2652
    %v3185 = vmax.f32 %v1847, %v2654
    %v3186 = vmax.f32 %v1855, %v2656
    %v3187 = vmax.f32 %v1854, %v2658
    %v3188 = vmax.f32 %v1856, %v2660
    %v3189 = vmax.f32 %v1864, %v2662
    %v3190 = vmax.f32 %v1872, %v2664
    %v3191 = vmax.f32 %v1871, %v2666
    %v3192 = vmax.f32 %v1873, %v2668
    %v3193 = vmax.f32 %v1881, %v2670
    %v3194 = vmax.f32 %v1889, %v2672
    %v3195 = vmax.f32 %v1888, %v2674
    %v3196 = vmax.f32 %v1890, %v2676
    %v3197 = vmax.f32 %v1898, %v2678
    %v3198 = vmax.f32 %v1906, %v2680
    %v3199 = vmax.f32 %v1905, %v2682
    %v3200 = vmax.f32 %v1907, %v2684
    %v3201 = vmax.f32 %v1915, %v2686
    %v3202 = vmax.f32 %v1923, %v2688
    %v3203 = vmax.f32 %v1922, %v2690
    %v3204 = vmax.f32 %v1924, %v2692
    %v3205 = vmax.f32 %v2949, %v2957
    %v3206 = vmax.f32 %v2950, %v2958
    %v3207 = vmax.f32 %v2951, %v2959
    %v3208 = vmax.f32 %v2952, %v2960
    %v3209 = vmax.f32 %v2953, %v2961
    %v3210 = vmax.f32 %v2954, %v2962
    %v3211 = vmax.f32 %v2955, %v2963
    %v3212 = vmax.f32 %v2956, %v2964
    %v3213 = vmax.f32 %v2965, %v2973
    %v3214 = vmax.f32 %v2966, %v2974
    %v3215 = vmax.f32 %v2967, %v2975
    %v3216 = vmax.f32 %v2968, %v2976
    %v3217 = vmax.f32 %v2969, %v2977
    %v3218 = vmax.f32 %v2970, %v2978
    %v3219 = vmax.f32 %v2971, %v2979
    %v3220 = vmax.f32 %v2972, %v2980
    %v3221 = vmax.f32 %v2981, %v2989
    %v3222 = vmax.f32 %v2982, %v2990
    %v3223 = vmax.f32 %v2983, %v2991
    %v3224 = vmax.f32 %v2984, %v2992
    %v3225 = vmax.f32 %v2985, %v2993
    %v3226 = vmax.f32 %v2986, %v2994
    %v3227 = vmax.f32 %v2987, %v2995
    %v3228 = vmax.f32 %v2988, %v2996
    %v3229 = vmax.f32 %v2997, %v3005
    %v3230 = vmax.f32 %v2998, %v3006
    %v3231 = vmax.f32 %v2999, %v3007
    %v3232 = vmax.f32 %v3000, %v3008
    %v3233 = vmax.f32 %v3001, %v3009
    %v3234 = vmax.f32 %v3002, %v3010
    %v3235 = vmax.f32 %v3003, %v3011
    %v3236 = vmax.f32 %v3004, %v3012
    %v3237 = vmax.f32 %v3013, %v3021
    %v3238 = vmax.f32 %v3014, %v3022
    %v3239 = vmax.f32 %v3015, %v3023
    %v3240 = vmax.f32 %v3016, %v3024
    %v3241 = vmax.f32 %v3017, %v3025
    %v3242 = vmax.f32 %v3018, %v3026
    %v3243 = vmax.f32 %v3019, %v3027
    %v3244 = vmax.f32 %v3020, %v3028
    %v3245 = vmax.f32 %v3029, %v3037
    %v3246 = vmax.f32 %v3030, %v3038
    %v3247 = vmax.f32 %v3031, %v3039
    %v3248 = vmax.f32 %v3032, %v3040
    %v3249 = vmax.f32 %v3033, %v3041
    %v3250 = vmax.f32 %v3034, %v3042
    %v3251 = vmax.f32 %v3035, %v3043
    %v3252 = vmax.f32 %v3036, %v3044
    %v3253 = vmax.f32 %v3045, %v3053
    %v3254 = vmax.f32 %v3046, %v3054
    %v3255 = vmax.f32 %v3047, %v3055
    %v3256 = vmax.f32 %v3048, %v3056
    %v3257 = vmax.f32 %v3049, %v3057
    %v3258 = vmax.f32 %v3050, %v3058
    %v3259 = vmax.f32 %v3051, %v3059
    %v3260 = vmax.f32 %v3052, %v3060
    %v3261 = vmax.f32 %v3061, %v3069
    %v3262 = vmax.f32 %v3062, %v3070
    %v3263 = vmax.f32 %v3063, %v3071
    %v3264 = vmax.f32 %v3064, %v3072
    %v3265 = vmax.f32 %v3065, %v3073
    %v3266 = vmax.f32 %v3066, %v3074
    %v3267 = vmax.f32 %v3067, %v3075
    %v3268 = vmax.f32 %v3068, %v3076
    %v3269 = vmax.f32 %v3077, %v3085
    %v3270 = vmax.f32 %v3078, %v3086
    %v3271 = vmax.f32 %v3079, %v3087
    %v3272 = vmax.f32 %v3080, %v3088
    %v3273 = vmax.f32 %v3081, %v3089
    %v3274 = vmax.f32 %v3082, %v3090
    %v3275 = vmax.f32 %v3083, %v3091
    %v3276 = vmax.f32 %v3084, %v3092
    %v3277 = vmax.f32 %v3093, %v3101
    %v3278 = vmax.f32 %v3094, %v3102
    %v3279 = vmax.f32 %v3095, %v3103
    %v3280 = vmax.f32 %v3096, %v3104
    %v3281 = vmax.f32 %v3097, %v3105
    %v3282 = vmax.f32 %v3098, %v3106
    %v3283 = vmax.f32 %v3099, %v3107
    %v3284 = vmax.f32 %v3100, %v3108
    %v3285 = vmax.f32 %v3109, %v3117
    %v3286 = vmax.f32 %v3110, %v3118
    %v3287 = vmax.f32 %v3111, %v3119
    %v3288 = vmax.f32 %v3112, %v3120
    %v3289 = vmax.f32 %v3113, %v3121
    %v3290 = vmax.f32 %v3114, %v3122
    %v3291 = vmax.f32 %v3115, %v3123
    %v3292 = vmax.f32 %v3116, %v3124
    %v3293 = vmax.f32 %v3125, %v3133
    %v3294 = vmax.f32 %v3126, %v3134
    %v3295 = vmax.f32 %v3127, %v3135
    %v3296 = vmax.f32 %v3128, %v3136
    %v3297 = vmax.f32 %v3129, %v3137
    %v3298 = vmax.f32 %v3130, %v3138
    %v3299 = vmax.f32 %v3131, %v3139
    %v3300 = vmax.f32 %v3132, %v3140
    %v3301 = vmax.f32 %v3141, %v3149
    %v3302 = vmax.f32 %v3142, %v3150
    %v3303 = vmax.f32 %v3143, %v3151
    %v3304 = vmax.f32 %v3144, %v3152
    %v3305 = vmax.f32 %v3145, %v3153
    %v3306 = vmax.f32 %v3146, %v3154
    %v3307 = vmax.f32 %v3147, %v3155
    %v3308 = vmax.f32 %v3148, %v3156
    %v3309 = vmax.f32 %v3157, %v3165
    %v3310 = vmax.f32 %v3158, %v3166
    %v3311 = vmax.f32 %v3159, %v3167
    %v3312 = vmax.f32 %v3160, %v3168
    %v3313 = vmax.f32 %v3161, %v3169
    %v3314 = vmax.f32 %v3162, %v3170
    %v3315 = vmax.f32 %v3163, %v3171
    %v3316 = vmax.f32 %v3164, %v3172
    %v3317 = vmax.f32 %v3173, %v3181
    %v3318 = vmax.f32 %v3174, %v3182
    %v3319 = vmax.f32 %v3175, %v3183
    %v3320 = vmax.f32 %v3176, %v3184
    %v3321 = vmax.f32 %v3177, %v3185
    %v3322 = vmax.f32 %v3178, %v3186
    %v3323 = vmax.f32 %v3179, %v3187
    %v3324 = vmax.f32 %v3180, %v3188
    %v3325 = vmax.f32 %v3189, %v3197
    %v3326 = vmax.f32 %v3190, %v3198
    %v3327 = vmax.f32 %v3191, %v3199
    %v3328 = vmax.f32 %v3192, %v3200
    %v3329 = vmax.f32 %v3193, %v3201
    %v3330 = vmax.f32 %v3194, %v3202
    %v3331 = vmax.f32 %v3195, %v3203
    %v3332 = vmax.f32 %v3196, %v3204
    %3333 = vst [vmem:[#allocation2] sm:$0xff] 0.0
    %3334 = vst [vmem:[#allocation2 + $0x8] sm:$0x3] 0.0
    %3335 = vst [vmem:[#allocation2 + $0xa0] sm:$0xff] 0.0
    %3336 = vst [vmem:[#allocation2 + $0xa8] sm:$0x3] 0.0
    %s3337 = scalar_lea.vmem [#allocation2], 144
    %3338 = vst [vmem:[%s3337] sm:$0xff] 0.0
    %3339 = vst [vmem:[%s3337 + $0x8] sm:$0x3] 0.0
    %3340 = vst [vmem:[%s3337 + $0xa0] sm:$0xff] 0.0
    %3341 = vst [vmem:[%s3337 + $0xa8] sm:$0x3] 0.0
    %3342 = vst [vmem:[#allocation2] sm:$0x1] 0.0
    %3343 = vst [vmem:[#allocation2 + $0x10] sm:$0x1] 0.0
    %3344 = vst [vmem:[#allocation2 + $0x20] sm:$0x1] 0.0
    %3345 = vst [vmem:[#allocation2 + $0x30] sm:$0x1] 0.0
    %3346 = vst [vmem:[#allocation2 + $0x40] sm:$0x1] 0.0
    %3347 = vst [vmem:[#allocation2 + $0x50] sm:$0x1] 0.0
    %3348 = vst [vmem:[#allocation2 + $0x60] sm:$0x1] 0.0
    %3349 = vst [vmem:[#allocation2 + $0x70] sm:$0x1] 0.0
    %3350 = vst [vmem:[#allocation2 + $0x80] sm:$0x1] 0.0
    %3351 = vst [vmem:[#allocation2 + $0x90] sm:$0x1] 0.0
    %3352 = vst [vmem:[#allocation2 + $0xa0] sm:$0x1] 0.0
    %3353 = vst [vmem:[#allocation2 + $0xb0] sm:$0x1] 0.0
    %3354 = vst [vmem:[#allocation2 + $0xc0] sm:$0x1] 0.0
    %3355 = vst [vmem:[#allocation2 + $0xd0] sm:$0x1] 0.0
    %3356 = vst [vmem:[#allocation2 + $0xe0] sm:$0x1] 0.0
    %3357 = vst [vmem:[#allocation2 + $0xf0] sm:$0x1] 0.0
    %3358 = vst [vmem:[#allocation2 + $0x100] sm:$0x1] 0.0
    %3359 = vst [vmem:[#allocation2 + $0x110] sm:$0x1] 0.0
    %3360 = vst [vmem:[#allocation2 + $0x120] sm:$0x1] 0.0
    %3361 = vst [vmem:[#allocation2 + $0x130] sm:$0x1] 0.0
    %3362 = vst [vmem:[#allocation2 + $0x9] sm:$0x1] 0.0
    %3363 = vst [vmem:[#allocation2 + $0x19] sm:$0x1] 0.0
    %3364 = vst [vmem:[#allocation2 + $0x29] sm:$0x1] 0.0
    %3365 = vst [vmem:[#allocation2 + $0x39] sm:$0x1] 0.0
    %3366 = vst [vmem:[#allocation2 + $0x49] sm:$0x1] 0.0
    %3367 = vst [vmem:[#allocation2 + $0x59] sm:$0x1] 0.0
    %3368 = vst [vmem:[#allocation2 + $0x69] sm:$0x1] 0.0
    %3369 = vst [vmem:[#allocation2 + $0x79] sm:$0x1] 0.0
    %3370 = vst [vmem:[#allocation2 + $0x89] sm:$0x1] 0.0
    %3371 = vst [vmem:[#allocation2 + $0x99] sm:$0x1] 0.0
    %3372 = vst [vmem:[#allocation2 + $0xa9] sm:$0x1] 0.0
    %3373 = vst [vmem:[#allocation2 + $0xb9] sm:$0x1] 0.0
    %3374 = vst [vmem:[#allocation2 + $0xc9] sm:$0x1] 0.0
    %3375 = vst [vmem:[#allocation2 + $0xd9] sm:$0x1] 0.0
    %3376 = vst [vmem:[#allocation2 + $0xe9] sm:$0x1] 0.0
    %3377 = vst [vmem:[#allocation2 + $0xf9] sm:$0x1] 0.0
    %3378 = vst [vmem:[#allocation2 + $0x109] sm:$0x1] 0.0
    %3379 = vst [vmem:[#allocation2 + $0x119] sm:$0x1] 0.0
    %3380 = vst [vmem:[#allocation2 + $0x129] sm:$0x1] 0.0
    %3381 = vst [vmem:[#allocation2 + $0x139] sm:$0x1] 0.0
    %v3510 = vlaneseq
    %v3511 = vshrl.u32 %v3510, 7
    %v3512 = vsub.s32 0, %v3511
    %v3513 = vrot.slane %v3205, %v3512
    %v3514 = vlaneseq
    %v3515 = vshrl.u32 %v3514, 7
    %v3516 = vsub.s32 0, %v3515
    %v3517 = vrot.slane %v3206, %v3516
    %v3518 = vlaneseq
    %v3519 = vshrl.u32 %v3518, 7
    %v3520 = vsub.s32 0, %v3519
    %v3521 = vrot.slane %v3207, %v3520
    %v3522 = vlaneseq
    %v3523 = vshrl.u32 %v3522, 7
    %v3524 = vsub.s32 0, %v3523
    %v3525 = vrot.slane %v3208, %v3524
    %v3526 = vlaneseq
    %v3527 = vshrl.u32 %v3526, 7
    %v3528 = vsub.s32 0, %v3527
    %v3529 = vrot.slane %v3209, %v3528
    %v3530 = vlaneseq
    %v3531 = vshrl.u32 %v3530, 7
    %v3532 = vsub.s32 0, %v3531
    %v3533 = vrot.slane %v3210, %v3532
    %v3534 = vlaneseq
    %v3535 = vshrl.u32 %v3534, 7
    %v3536 = vsub.s32 0, %v3535
    %v3537 = vrot.slane %v3211, %v3536
    %v3538 = vlaneseq
    %v3539 = vshrl.u32 %v3538, 7
    %v3540 = vsub.s32 0, %v3539
    %v3541 = vrot.slane %v3212, %v3540
    %v3542 = vlaneseq
    %v3543 = vshrl.u32 %v3542, 7
    %v3544 = vsub.s32 0, %v3543
    %v3545 = vrot.slane %v3213, %v3544
    %v3546 = vlaneseq
    %v3547 = vshrl.u32 %v3546, 7
    %v3548 = vsub.s32 0, %v3547
    %v3549 = vrot.slane %v3214, %v3548
    %v3550 = vlaneseq
    %v3551 = vshrl.u32 %v3550, 7
    %v3552 = vsub.s32 0, %v3551
    %v3553 = vrot.slane %v3215, %v3552
    %v3554 = vlaneseq
    %v3555 = vshrl.u32 %v3554, 7
    %v3556 = vsub.s32 0, %v3555
    %v3557 = vrot.slane %v3216, %v3556
    %v3558 = vlaneseq
    %v3559 = vshrl.u32 %v3558, 7
    %v3560 = vsub.s32 0, %v3559
    %v3561 = vrot.slane %v3217, %v3560
    %v3562 = vlaneseq
    %v3563 = vshrl.u32 %v3562, 7
    %v3564 = vsub.s32 0, %v3563
    %v3565 = vrot.slane %v3218, %v3564
    %v3566 = vlaneseq
    %v3567 = vshrl.u32 %v3566, 7
    %v3568 = vsub.s32 0, %v3567
    %v3569 = vrot.slane %v3219, %v3568
    %v3570 = vlaneseq
    %v3571 = vshrl.u32 %v3570, 7
    %v3572 = vsub.s32 0, %v3571
    %v3573 = vrot.slane %v3220, %v3572
    %v3574 = vlaneseq
    %v3575 = vshrl.u32 %v3574, 7
    %v3576 = vsub.s32 0, %v3575
    %v3577 = vrot.slane %v3221, %v3576
    %v3578 = vlaneseq
    %v3579 = vshrl.u32 %v3578, 7
    %v3580 = vsub.s32 0, %v3579
    %v3581 = vrot.slane %v3222, %v3580
    %v3582 = vlaneseq
    %v3583 = vshrl.u32 %v3582, 7
    %v3584 = vsub.s32 0, %v3583
    %v3585 = vrot.slane %v3223, %v3584
    %v3586 = vlaneseq
    %v3587 = vshrl.u32 %v3586, 7
    %v3588 = vsub.s32 0, %v3587
    %v3589 = vrot.slane %v3224, %v3588
    %v3590 = vlaneseq
    %v3591 = vshrl.u32 %v3590, 7
    %v3592 = vsub.s32 0, %v3591
    %v3593 = vrot.slane %v3225, %v3592
    %v3594 = vlaneseq
    %v3595 = vshrl.u32 %v3594, 7
    %v3596 = vsub.s32 0, %v3595
    %v3597 = vrot.slane %v3226, %v3596
    %v3598 = vlaneseq
    %v3599 = vshrl.u32 %v3598, 7
    %v3600 = vsub.s32 0, %v3599
    %v3601 = vrot.slane %v3227, %v3600
    %v3602 = vlaneseq
    %v3603 = vshrl.u32 %v3602, 7
    %v3604 = vsub.s32 0, %v3603
    %v3605 = vrot.slane %v3228, %v3604
    %v3606 = vlaneseq
    %v3607 = vshrl.u32 %v3606, 7
    %v3608 = vsub.s32 0, %v3607
    %v3609 = vrot.slane %v3229, %v3608
    %v3610 = vlaneseq
    %v3611 = vshrl.u32 %v3610, 7
    %v3612 = vsub.s32 0, %v3611
    %v3613 = vrot.slane %v3230, %v3612
    %v3614 = vlaneseq
    %v3615 = vshrl.u32 %v3614, 7
    %v3616 = vsub.s32 0, %v3615
    %v3617 = vrot.slane %v3231, %v3616
    %v3618 = vlaneseq
    %v3619 = vshrl.u32 %v3618, 7
    %v3620 = vsub.s32 0, %v3619
    %v3621 = vrot.slane %v3232, %v3620
    %v3622 = vlaneseq
    %v3623 = vshrl.u32 %v3622, 7
    %v3624 = vsub.s32 0, %v3623
    %v3625 = vrot.slane %v3233, %v3624
    %v3626 = vlaneseq
    %v3627 = vshrl.u32 %v3626, 7
    %v3628 = vsub.s32 0, %v3627
    %v3629 = vrot.slane %v3234, %v3628
    %v3630 = vlaneseq
    %v3631 = vshrl.u32 %v3630, 7
    %v3632 = vsub.s32 0, %v3631
    %v3633 = vrot.slane %v3235, %v3632
    %v3634 = vlaneseq
    %v3635 = vshrl.u32 %v3634, 7
    %v3636 = vsub.s32 0, %v3635
    %v3637 = vrot.slane %v3236, %v3636
    %v3638 = vlaneseq
    %v3639 = vshrl.u32 %v3638, 7
    %v3640 = vsub.s32 0, %v3639
    %v3641 = vrot.slane %v3237, %v3640
    %v3642 = vlaneseq
    %v3643 = vshrl.u32 %v3642, 7
    %v3644 = vsub.s32 0, %v3643
    %v3645 = vrot.slane %v3238, %v3644
    %v3646 = vlaneseq
    %v3647 = vshrl.u32 %v3646, 7
    %v3648 = vsub.s32 0, %v3647
    %v3649 = vrot.slane %v3239, %v3648
    %v3650 = vlaneseq
    %v3651 = vshrl.u32 %v3650, 7
    %v3652 = vsub.s32 0, %v3651
    %v3653 = vrot.slane %v3240, %v3652
    %v3654 = vlaneseq
    %v3655 = vshrl.u32 %v3654, 7
    %v3656 = vsub.s32 0, %v3655
    %v3657 = vrot.slane %v3241, %v3656
    %v3658 = vlaneseq
    %v3659 = vshrl.u32 %v3658, 7
    %v3660 = vsub.s32 0, %v3659
    %v3661 = vrot.slane %v3242, %v3660
    %v3662 = vlaneseq
    %v3663 = vshrl.u32 %v3662, 7
    %v3664 = vsub.s32 0, %v3663
    %v3665 = vrot.slane %v3243, %v3664
    %v3666 = vlaneseq
    %v3667 = vshrl.u32 %v3666, 7
    %v3668 = vsub.s32 0, %v3667
    %v3669 = vrot.slane %v3244, %v3668
    %v3670 = vlaneseq
    %v3671 = vshrl.u32 %v3670, 7
    %v3672 = vsub.s32 0, %v3671
    %v3673 = vrot.slane %v3245, %v3672
    %v3674 = vlaneseq
    %v3675 = vshrl.u32 %v3674, 7
    %v3676 = vsub.s32 0, %v3675
    %v3677 = vrot.slane %v3246, %v3676
    %v3678 = vlaneseq
    %v3679 = vshrl.u32 %v3678, 7
    %v3680 = vsub.s32 0, %v3679
    %v3681 = vrot.slane %v3247, %v3680
    %v3682 = vlaneseq
    %v3683 = vshrl.u32 %v3682, 7
    %v3684 = vsub.s32 0, %v3683
    %v3685 = vrot.slane %v3248, %v3684
    %v3686 = vlaneseq
    %v3687 = vshrl.u32 %v3686, 7
    %v3688 = vsub.s32 0, %v3687
    %v3689 = vrot.slane %v3249, %v3688
    %v3690 = vlaneseq
    %v3691 = vshrl.u32 %v3690, 7
    %v3692 = vsub.s32 0, %v3691
    %v3693 = vrot.slane %v3250, %v3692
    %v3694 = vlaneseq
    %v3695 = vshrl.u32 %v3694, 7
    %v3696 = vsub.s32 0, %v3695
    %v3697 = vrot.slane %v3251, %v3696
    %v3698 = vlaneseq
    %v3699 = vshrl.u32 %v3698, 7
    %v3700 = vsub.s32 0, %v3699
    %v3701 = vrot.slane %v3252, %v3700
    %v3702 = vlaneseq
    %v3703 = vshrl.u32 %v3702, 7
    %v3704 = vsub.s32 0, %v3703
    %v3705 = vrot.slane %v3253, %v3704
    %v3706 = vlaneseq
    %v3707 = vshrl.u32 %v3706, 7
    %v3708 = vsub.s32 0, %v3707
    %v3709 = vrot.slane %v3254, %v3708
    %v3710 = vlaneseq
    %v3711 = vshrl.u32 %v3710, 7
    %v3712 = vsub.s32 0, %v3711
    %v3713 = vrot.slane %v3255, %v3712
    %v3714 = vlaneseq
    %v3715 = vshrl.u32 %v3714, 7
    %v3716 = vsub.s32 0, %v3715
    %v3717 = vrot.slane %v3256, %v3716
    %v3718 = vlaneseq
    %v3719 = vshrl.u32 %v3718, 7
    %v3720 = vsub.s32 0, %v3719
    %v3721 = vrot.slane %v3257, %v3720
    %v3722 = vlaneseq
    %v3723 = vshrl.u32 %v3722, 7
    %v3724 = vsub.s32 0, %v3723
    %v3725 = vrot.slane %v3258, %v3724
    %v3726 = vlaneseq
    %v3727 = vshrl.u32 %v3726, 7
    %v3728 = vsub.s32 0, %v3727
    %v3729 = vrot.slane %v3259, %v3728
    %v3730 = vlaneseq
    %v3731 = vshrl.u32 %v3730, 7
    %v3732 = vsub.s32 0, %v3731
    %v3733 = vrot.slane %v3260, %v3732
    %v3734 = vlaneseq
    %v3735 = vshrl.u32 %v3734, 7
    %v3736 = vsub.s32 0, %v3735
    %v3737 = vrot.slane %v3261, %v3736
    %v3738 = vlaneseq
    %v3739 = vshrl.u32 %v3738, 7
    %v3740 = vsub.s32 0, %v3739
    %v3741 = vrot.slane %v3262, %v3740
    %v3742 = vlaneseq
    %v3743 = vshrl.u32 %v3742, 7
    %v3744 = vsub.s32 0, %v3743
    %v3745 = vrot.slane %v3263, %v3744
    %v3746 = vlaneseq
    %v3747 = vshrl.u32 %v3746, 7
    %v3748 = vsub.s32 0, %v3747
    %v3749 = vrot.slane %v3264, %v3748
    %v3750 = vlaneseq
    %v3751 = vshrl.u32 %v3750, 7
    %v3752 = vsub.s32 0, %v3751
    %v3753 = vrot.slane %v3265, %v3752
    %v3754 = vlaneseq
    %v3755 = vshrl.u32 %v3754, 7
    %v3756 = vsub.s32 0, %v3755
    %v3757 = vrot.slane %v3266, %v3756
    %v3758 = vlaneseq
    %v3759 = vshrl.u32 %v3758, 7
    %v3760 = vsub.s32 0, %v3759
    %v3761 = vrot.slane %v3267, %v3760
    %v3762 = vlaneseq
    %v3763 = vshrl.u32 %v3762, 7
    %v3764 = vsub.s32 0, %v3763
    %v3765 = vrot.slane %v3268, %v3764
    %v3766 = vlaneseq
    %v3767 = vshrl.u32 %v3766, 7
    %v3768 = vsub.s32 0, %v3767
    %v3769 = vrot.slane %v3269, %v3768
    %v3770 = vlaneseq
    %v3771 = vshrl.u32 %v3770, 7
    %v3772 = vsub.s32 0, %v3771
    %v3773 = vrot.slane %v3270, %v3772
    %v3774 = vlaneseq
    %v3775 = vshrl.u32 %v3774, 7
    %v3776 = vsub.s32 0, %v3775
    %v3777 = vrot.slane %v3271, %v3776
    %v3778 = vlaneseq
    %v3779 = vshrl.u32 %v3778, 7
    %v3780 = vsub.s32 0, %v3779
    %v3781 = vrot.slane %v3272, %v3780
    %v3782 = vlaneseq
    %v3783 = vshrl.u32 %v3782, 7
    %v3784 = vsub.s32 0, %v3783
    %v3785 = vrot.slane %v3273, %v3784
    %v3786 = vlaneseq
    %v3787 = vshrl.u32 %v3786, 7
    %v3788 = vsub.s32 0, %v3787
    %v3789 = vrot.slane %v3274, %v3788
    %v3790 = vlaneseq
    %v3791 = vshrl.u32 %v3790, 7
    %v3792 = vsub.s32 0, %v3791
    %v3793 = vrot.slane %v3275, %v3792
    %v3794 = vlaneseq
    %v3795 = vshrl.u32 %v3794, 7
    %v3796 = vsub.s32 0, %v3795
    %v3797 = vrot.slane %v3276, %v3796
    %v3798 = vlaneseq
    %v3799 = vshrl.u32 %v3798, 7
    %v3800 = vsub.s32 0, %v3799
    %v3801 = vrot.slane %v3277, %v3800
    %v3802 = vlaneseq
    %v3803 = vshrl.u32 %v3802, 7
    %v3804 = vsub.s32 0, %v3803
    %v3805 = vrot.slane %v3278, %v3804
    %v3806 = vlaneseq
    %v3807 = vshrl.u32 %v3806, 7
    %v3808 = vsub.s32 0, %v3807
    %v3809 = vrot.slane %v3279, %v3808
    %v3810 = vlaneseq
    %v3811 = vshrl.u32 %v3810, 7
    %v3812 = vsub.s32 0, %v3811
    %v3813 = vrot.slane %v3280, %v3812
    %v3814 = vlaneseq
    %v3815 = vshrl.u32 %v3814, 7
    %v3816 = vsub.s32 0, %v3815
    %v3817 = vrot.slane %v3281, %v3816
    %v3818 = vlaneseq
    %v3819 = vshrl.u32 %v3818, 7
    %v3820 = vsub.s32 0, %v3819
    %v3821 = vrot.slane %v3282, %v3820
    %v3822 = vlaneseq
    %v3823 = vshrl.u32 %v3822, 7
    %v3824 = vsub.s32 0, %v3823
    %v3825 = vrot.slane %v3283, %v3824
    %v3826 = vlaneseq
    %v3827 = vshrl.u32 %v3826, 7
    %v3828 = vsub.s32 0, %v3827
    %v3829 = vrot.slane %v3284, %v3828
    %v3830 = vlaneseq
    %v3831 = vshrl.u32 %v3830, 7
    %v3832 = vsub.s32 0, %v3831
    %v3833 = vrot.slane %v3285, %v3832
    %v3834 = vlaneseq
    %v3835 = vshrl.u32 %v3834, 7
    %v3836 = vsub.s32 0, %v3835
    %v3837 = vrot.slane %v3286, %v3836
    %v3838 = vlaneseq
    %v3839 = vshrl.u32 %v3838, 7
    %v3840 = vsub.s32 0, %v3839
    %v3841 = vrot.slane %v3287, %v3840
    %v3842 = vlaneseq
    %v3843 = vshrl.u32 %v3842, 7
    %v3844 = vsub.s32 0, %v3843
    %v3845 = vrot.slane %v3288, %v3844
    %v3846 = vlaneseq
    %v3847 = vshrl.u32 %v3846, 7
    %v3848 = vsub.s32 0, %v3847
    %v3849 = vrot.slane %v3289, %v3848
    %v3850 = vlaneseq
    %v3851 = vshrl.u32 %v3850, 7
    %v3852 = vsub.s32 0, %v3851
    %v3853 = vrot.slane %v3290, %v3852
    %v3854 = vlaneseq
    %v3855 = vshrl.u32 %v3854, 7
    %v3856 = vsub.s32 0, %v3855
    %v3857 = vrot.slane %v3291, %v3856
    %v3858 = vlaneseq
    %v3859 = vshrl.u32 %v3858, 7
    %v3860 = vsub.s32 0, %v3859
    %v3861 = vrot.slane %v3292, %v3860
    %v3862 = vlaneseq
    %v3863 = vshrl.u32 %v3862, 7
    %v3864 = vsub.s32 0, %v3863
    %v3865 = vrot.slane %v3293, %v3864
    %v3866 = vlaneseq
    %v3867 = vshrl.u32 %v3866, 7
    %v3868 = vsub.s32 0, %v3867
    %v3869 = vrot.slane %v3294, %v3868
    %v3870 = vlaneseq
    %v3871 = vshrl.u32 %v3870, 7
    %v3872 = vsub.s32 0, %v3871
    %v3873 = vrot.slane %v3295, %v3872
    %v3874 = vlaneseq
    %v3875 = vshrl.u32 %v3874, 7
    %v3876 = vsub.s32 0, %v3875
    %v3877 = vrot.slane %v3296, %v3876
    %v3878 = vlaneseq
    %v3879 = vshrl.u32 %v3878, 7
    %v3880 = vsub.s32 0, %v3879
    %v3881 = vrot.slane %v3297, %v3880
    %v3882 = vlaneseq
    %v3883 = vshrl.u32 %v3882, 7
    %v3884 = vsub.s32 0, %v3883
    %v3885 = vrot.slane %v3298, %v3884
    %v3886 = vlaneseq
    %v3887 = vshrl.u32 %v3886, 7
    %v3888 = vsub.s32 0, %v3887
    %v3889 = vrot.slane %v3299, %v3888
    %v3890 = vlaneseq
    %v3891 = vshrl.u32 %v3890, 7
    %v3892 = vsub.s32 0, %v3891
    %v3893 = vrot.slane %v3300, %v3892
    %v3894 = vlaneseq
    %v3895 = vshrl.u32 %v3894, 7
    %v3896 = vsub.s32 0, %v3895
    %v3897 = vrot.slane %v3301, %v3896
    %v3898 = vlaneseq
    %v3899 = vshrl.u32 %v3898, 7
    %v3900 = vsub.s32 0, %v3899
    %v3901 = vrot.slane %v3302, %v3900
    %v3902 = vlaneseq
    %v3903 = vshrl.u32 %v3902, 7
    %v3904 = vsub.s32 0, %v3903
    %v3905 = vrot.slane %v3303, %v3904
    %v3906 = vlaneseq
    %v3907 = vshrl.u32 %v3906, 7
    %v3908 = vsub.s32 0, %v3907
    %v3909 = vrot.slane %v3304, %v3908
    %v3910 = vlaneseq
    %v3911 = vshrl.u32 %v3910, 7
    %v3912 = vsub.s32 0, %v3911
    %v3913 = vrot.slane %v3305, %v3912
    %v3914 = vlaneseq
    %v3915 = vshrl.u32 %v3914, 7
    %v3916 = vsub.s32 0, %v3915
    %v3917 = vrot.slane %v3306, %v3916
    %v3918 = vlaneseq
    %v3919 = vshrl.u32 %v3918, 7
    %v3920 = vsub.s32 0, %v3919
    %v3921 = vrot.slane %v3307, %v3920
    %v3922 = vlaneseq
    %v3923 = vshrl.u32 %v3922, 7
    %v3924 = vsub.s32 0, %v3923
    %v3925 = vrot.slane %v3308, %v3924
    %v3926 = vlaneseq
    %v3927 = vshrl.u32 %v3926, 7
    %v3928 = vsub.s32 0, %v3927
    %v3929 = vrot.slane %v3309, %v3928
    %v3930 = vlaneseq
    %v3931 = vshrl.u32 %v3930, 7
    %v3932 = vsub.s32 0, %v3931
    %v3933 = vrot.slane %v3310, %v3932
    %v3934 = vlaneseq
    %v3935 = vshrl.u32 %v3934, 7
    %v3936 = vsub.s32 0, %v3935
    %v3937 = vrot.slane %v3311, %v3936
    %v3938 = vlaneseq
    %v3939 = vshrl.u32 %v3938, 7
    %v3940 = vsub.s32 0, %v3939
    %v3941 = vrot.slane %v3312, %v3940
    %v3942 = vlaneseq
    %v3943 = vshrl.u32 %v3942, 7
    %v3944 = vsub.s32 0, %v3943
    %v3945 = vrot.slane %v3313, %v3944
    %v3946 = vlaneseq
    %v3947 = vshrl.u32 %v3946, 7
    %v3948 = vsub.s32 0, %v3947
    %v3949 = vrot.slane %v3314, %v3948
    %v3950 = vlaneseq
    %v3951 = vshrl.u32 %v3950, 7
    %v3952 = vsub.s32 0, %v3951
    %v3953 = vrot.slane %v3315, %v3952
    %v3954 = vlaneseq
    %v3955 = vshrl.u32 %v3954, 7
    %v3956 = vsub.s32 0, %v3955
    %v3957 = vrot.slane %v3316, %v3956
    %v3958 = vlaneseq
    %v3959 = vshrl.u32 %v3958, 7
    %v3960 = vsub.s32 0, %v3959
    %v3961 = vrot.slane %v3317, %v3960
    %v3962 = vlaneseq
    %v3963 = vshrl.u32 %v3962, 7
    %v3964 = vsub.s32 0, %v3963
    %v3965 = vrot.slane %v3318, %v3964
    %v3966 = vlaneseq
    %v3967 = vshrl.u32 %v3966, 7
    %v3968 = vsub.s32 0, %v3967
    %v3969 = vrot.slane %v3319, %v3968
    %v3970 = vlaneseq
    %v3971 = vshrl.u32 %v3970, 7
    %v3972 = vsub.s32 0, %v3971
    %v3973 = vrot.slane %v3320, %v3972
    %v3974 = vlaneseq
    %v3975 = vshrl.u32 %v3974, 7
    %v3976 = vsub.s32 0, %v3975
    %v3977 = vrot.slane %v3321, %v3976
    %v3978 = vlaneseq
    %v3979 = vshrl.u32 %v3978, 7
    %v3980 = vsub.s32 0, %v3979
    %v3981 = vrot.slane %v3322, %v3980
    %v3982 = vlaneseq
    %v3983 = vshrl.u32 %v3982, 7
    %v3984 = vsub.s32 0, %v3983
    %v3985 = vrot.slane %v3323, %v3984
    %v3986 = vlaneseq
    %v3987 = vshrl.u32 %v3986, 7
    %v3988 = vsub.s32 0, %v3987
    %v3989 = vrot.slane %v3324, %v3988
    %v3990 = vlaneseq
    %v3991 = vshrl.u32 %v3990, 7
    %v3992 = vsub.s32 0, %v3991
    %v3993 = vrot.slane %v3325, %v3992
    %v3994 = vlaneseq
    %v3995 = vshrl.u32 %v3994, 7
    %v3996 = vsub.s32 0, %v3995
    %v3997 = vrot.slane %v3326, %v3996
    %v3998 = vlaneseq
    %v3999 = vshrl.u32 %v3998, 7
    %v4000 = vsub.s32 0, %v3999
    %v4001 = vrot.slane %v3327, %v4000
    %v4002 = vlaneseq
    %v4003 = vshrl.u32 %v4002, 7
    %v4004 = vsub.s32 0, %v4003
    %v4005 = vrot.slane %v3328, %v4004
    %v4006 = vlaneseq
    %v4007 = vshrl.u32 %v4006, 7
    %v4008 = vsub.s32 0, %v4007
    %v4009 = vrot.slane %v3329, %v4008
    %v4010 = vlaneseq
    %v4011 = vshrl.u32 %v4010, 7
    %v4012 = vsub.s32 0, %v4011
    %v4013 = vrot.slane %v3330, %v4012
    %v4014 = vlaneseq
    %v4015 = vshrl.u32 %v4014, 7
    %v4016 = vsub.s32 0, %v4015
    %v4017 = vrot.slane %v3331, %v4016
    %v4018 = vlaneseq
    %v4019 = vshrl.u32 %v4018, 7
    %v4020 = vsub.s32 0, %v4019
    %v4021 = vrot.slane %v3332, %v4020
    %vm4022 = vcmask 1041409
    %v4023 = vsel %vm4022, %v3517, %v3513
    %vm4024 = vcmask 1042434
    %v4025 = vsel %vm4024, %v3521, %v4023
    %vm4026 = vcmask 1043459
    %v4027 = vsel %vm4026, %v3525, %v4025
    %vm4028 = vcmask 1044484
    %v4029 = vsel %vm4028, %v3529, %v4027
    %vm4030 = vcmask 1045509
    %v4031 = vsel %vm4030, %v3533, %v4029
    %vm4032 = vcmask 1046534
    %v4033 = vsel %vm4032, %v3537, %v4031
    %vm4034 = vcmask 1047559
    %v4035 = vsel %vm4034, %v3541, %v4033
    %v4036 = vsel %vm4022, %v3549, %v3545
    %v4037 = vsel %vm4024, %v3553, %v4036
    %v4038 = vsel %vm4026, %v3557, %v4037
    %v4039 = vsel %vm4028, %v3561, %v4038
    %v4040 = vsel %vm4030, %v3565, %v4039
    %v4041 = vsel %vm4032, %v3569, %v4040
    %v4042 = vsel %vm4034, %v3573, %v4041
    %v4043 = vsel %vm4022, %v3581, %v3577
    %v4044 = vsel %vm4024, %v3585, %v4043
    %v4045 = vsel %vm4026, %v3589, %v4044
    %v4046 = vsel %vm4028, %v3593, %v4045
    %v4047 = vsel %vm4030, %v3597, %v4046
    %v4048 = vsel %vm4032, %v3601, %v4047
    %v4049 = vsel %vm4034, %v3605, %v4048
    %v4050 = vsel %vm4022, %v3613, %v3609
    %v4051 = vsel %vm4024, %v3617, %v4050
    %v4052 = vsel %vm4026, %v3621, %v4051
    %v4053 = vsel %vm4028, %v3625, %v4052
    %v4054 = vsel %vm4030, %v3629, %v4053
    %v4055 = vsel %vm4032, %v3633, %v4054
    %v4056 = vsel %vm4034, %v3637, %v4055
    %v4057 = vsel %vm4022, %v3645, %v3641
    %v4058 = vsel %vm4024, %v3649, %v4057
    %v4059 = vsel %vm4026, %v3653, %v4058
    %v4060 = vsel %vm4028, %v3657, %v4059
    %v4061 = vsel %vm4030, %v3661, %v4060
    %v4062 = vsel %vm4032, %v3665, %v4061
    %v4063 = vsel %vm4034, %v3669, %v4062
    %v4064 = vsel %vm4022, %v3677, %v3673
    %v4065 = vsel %vm4024, %v3681, %v4064
    %v4066 = vsel %vm4026, %v3685, %v4065
    %v4067 = vsel %vm4028, %v3689, %v4066
    %v4068 = vsel %vm4030, %v3693, %v4067
    %v4069 = vsel %vm4032, %v3697, %v4068
    %v4070 = vsel %vm4034, %v3701, %v4069
    %v4071 = vsel %vm4022, %v3709, %v3705
    %v4072 = vsel %vm4024, %v3713, %v4071
    %v4073 = vsel %vm4026, %v3717, %v4072
    %v4074 = vsel %vm4028, %v3721, %v4073
    %v4075 = vsel %vm4030, %v3725, %v4074
    %v4076 = vsel %vm4032, %v3729, %v4075
    %v4077 = vsel %vm4034, %v3733, %v4076
    %v4078 = vsel %vm4022, %v3741, %v3737
    %v4079 = vsel %vm4024, %v3745, %v4078
    %v4080 = vsel %vm4026, %v3749, %v4079
    %v4081 = vsel %vm4028, %v3753, %v4080
    %v4082 = vsel %vm4030, %v3757, %v4081
    %v4083 = vsel %vm4032, %v3761, %v4082
    %v4084 = vsel %vm4034, %v3765, %v4083
    %v4085 = vsel %vm4022, %v3773, %v3769
    %v4086 = vsel %vm4024, %v3777, %v4085
    %v4087 = vsel %vm4026, %v3781, %v4086
    %v4088 = vsel %vm4028, %v3785, %v4087
    %v4089 = vsel %vm4030, %v3789, %v4088
    %v4090 = vsel %vm4032, %v3793, %v4089
    %v4091 = vsel %vm4034, %v3797, %v4090
    %v4092 = vsel %vm4022, %v3805, %v3801
    %v4093 = vsel %vm4024, %v3809, %v4092
    %v4094 = vsel %vm4026, %v3813, %v4093
    %v4095 = vsel %vm4028, %v3817, %v4094
    %v4096 = vsel %vm4030, %v3821, %v4095
    %v4097 = vsel %vm4032, %v3825, %v4096
    %v4098 = vsel %vm4034, %v3829, %v4097
    %v4099 = vsel %vm4022, %v3837, %v3833
    %v4100 = vsel %vm4024, %v3841, %v4099
    %v4101 = vsel %vm4026, %v3845, %v4100
    %v4102 = vsel %vm4028, %v3849, %v4101
    %v4103 = vsel %vm4030, %v3853, %v4102
    %v4104 = vsel %vm4032, %v3857, %v4103
    %v4105 = vsel %vm4034, %v3861, %v4104
    %v4106 = vsel %vm4022, %v3869, %v3865
    %v4107 = vsel %vm4024, %v3873, %v4106
    %v4108 = vsel %vm4026, %v3877, %v4107
    %v4109 = vsel %vm4028, %v3881, %v4108
    %v4110 = vsel %vm4030, %v3885, %v4109
    %v4111 = vsel %vm4032, %v3889, %v4110
    %v4112 = vsel %vm4034, %v3893, %v4111
    %v4113 = vsel %vm4022, %v3901, %v3897
    %v4114 = vsel %vm4024, %v3905, %v4113
    %v4115 = vsel %vm4026, %v3909, %v4114
    %v4116 = vsel %vm4028, %v3913, %v4115
    %v4117 = vsel %vm4030, %v3917, %v4116
    %v4118 = vsel %vm4032, %v3921, %v4117
    %v4119 = vsel %vm4034, %v3925, %v4118
    %v4120 = vsel %vm4022, %v3933, %v3929
    %v4121 = vsel %vm4024, %v3937, %v4120
    %v4122 = vsel %vm4026, %v3941, %v4121
    %v4123 = vsel %vm4028, %v3945, %v4122
    %v4124 = vsel %vm4030, %v3949, %v4123
    %v4125 = vsel %vm4032, %v3953, %v4124
    %v4126 = vsel %vm4034, %v3957, %v4125
    %v4127 = vsel %vm4022, %v3965, %v3961
    %v4128 = vsel %vm4024, %v3969, %v4127
    %v4129 = vsel %vm4026, %v3973, %v4128
    %v4130 = vsel %vm4028, %v3977, %v4129
    %v4131 = vsel %vm4030, %v3981, %v4130
    %v4132 = vsel %vm4032, %v3985, %v4131
    %v4133 = vsel %vm4034, %v3989, %v4132
    %v4134 = vsel %vm4022, %v3997, %v3993
    %v4135 = vsel %vm4024, %v4001, %v4134
    %v4136 = vsel %vm4026, %v4005, %v4135
    %v4137 = vsel %vm4028, %v4009, %v4136
    %v4138 = vsel %vm4030, %v4013, %v4137
    %v4139 = vsel %vm4032, %v4017, %v4138
    %v4140 = vsel %vm4034, %v4021, %v4139
    %s4157 = scalar_lea.vmem [#allocation2], 16
    %4158 = vst [vmem:[%s4157 + $0x1] sm:$0xff] %v4035
    %4159 = vst [vmem:[%s4157 + $0x11] sm:$0xff] %v4042
    %4160 = vst [vmem:[%s4157 + $0x21] sm:$0xff] %v4049
    %4161 = vst [vmem:[%s4157 + $0x31] sm:$0xff] %v4056
    %4162 = vst [vmem:[%s4157 + $0x41] sm:$0xff] %v4063
    %4163 = vst [vmem:[%s4157 + $0x51] sm:$0xff] %v4070
    %4164 = vst [vmem:[%s4157 + $0x61] sm:$0xff] %v4077
    %4165 = vst [vmem:[%s4157 + $0x71] sm:$0xff] %v4084
    %4166 = vst [vmem:[%s4157 + $0xa1] sm:$0xff] %v4091
    %4167 = vst [vmem:[%s4157 + $0xb1] sm:$0xff] %v4098
    %4168 = vst [vmem:[%s4157 + $0xc1] sm:$0xff] %v4105
    %4169 = vst [vmem:[%s4157 + $0xd1] sm:$0xff] %v4112
    %4170 = vst [vmem:[%s4157 + $0xe1] sm:$0xff] %v4119
    %4171 = vst [vmem:[%s4157 + $0xf1] sm:$0xff] %v4126
    %4172 = vst [vmem:[%s4157 + $0x101] sm:$0xff] %v4133
    %4173 = vst [vmem:[%s4157 + $0x111] sm:$0xff] %v4140
    %v4174 = vld [vmem:[#allocation2] sm:$0xff]
    %v4175 = vld [vmem:[#allocation2 + $0x8] sm:$0x3]
    %v4176 = vld [vmem:[#allocation2 + $0x10] sm:$0xff]
    %v4177 = vld [vmem:[#allocation2 + $0x18] sm:$0x3]
    %v4178 = vld [vmem:[#allocation2 + $0x20] sm:$0xff]
    %v4179 = vld [vmem:[#allocation2 + $0x28] sm:$0x3]
    %v4180 = vld [vmem:[#allocation2 + $0x30] sm:$0xff]
    %v4181 = vld [vmem:[#allocation2 + $0x38] sm:$0x3]
    %v4182 = vld [vmem:[#allocation2 + $0x40] sm:$0xff]
    %v4183 = vld [vmem:[#allocation2 + $0x48] sm:$0x3]
    %v4184 = vld [vmem:[#allocation2 + $0x50] sm:$0xff]
    %v4185 = vld [vmem:[#allocation2 + $0x58] sm:$0x3]
    %v4186 = vld [vmem:[#allocation2 + $0x60] sm:$0xff]
    %v4187 = vld [vmem:[#allocation2 + $0x68] sm:$0x3]
    %v4188 = vld [vmem:[#allocation2 + $0x70] sm:$0xff]
    %v4189 = vld [vmem:[#allocation2 + $0x78] sm:$0x3]
    %v4190 = vld [vmem:[#allocation2 + $0x80] sm:$0xff]
    %v4191 = vld [vmem:[#allocation2 + $0x88] sm:$0x3]
    %v4192 = vld [vmem:[#allocation2 + $0x90] sm:$0xff]
    %v4193 = vld [vmem:[#allocation2 + $0x98] sm:$0x3]
    %v4194 = vld [vmem:[#allocation2 + $0xa0] sm:$0xff]
    %v4195 = vld [vmem:[#allocation2 + $0xa8] sm:$0x3]
    %v4196 = vld [vmem:[#allocation2 + $0xb0] sm:$0xff]
    %v4197 = vld [vmem:[#allocation2 + $0xb8] sm:$0x3]
    %v4198 = vld [vmem:[#allocation2 + $0xc0] sm:$0xff]
    %v4199 = vld [vmem:[#allocation2 + $0xc8] sm:$0x3]
    %v4200 = vld [vmem:[#allocation2 + $0xd0] sm:$0xff]
    %v4201 = vld [vmem:[#allocation2 + $0xd8] sm:$0x3]
    %v4202 = vld [vmem:[#allocation2 + $0xe0] sm:$0xff]
    %v4203 = vld [vmem:[#allocation2 + $0xe8] sm:$0x3]
    %v4204 = vld [vmem:[#allocation2 + $0xf0] sm:$0xff]
    %v4205 = vld [vmem:[#allocation2 + $0xf8] sm:$0x3]
    %v4206 = vld [vmem:[#allocation2 + $0x100] sm:$0xff]
    %v4207 = vld [vmem:[#allocation2 + $0x108] sm:$0x3]
    %v4208 = vld [vmem:[#allocation2 + $0x110] sm:$0xff]
    %v4209 = vld [vmem:[#allocation2 + $0x118] sm:$0x3]
    %v4210 = vld [vmem:[#allocation2 + $0x120] sm:$0xff]
    %v4211 = vld [vmem:[#allocation2 + $0x128] sm:$0x3]
    %v4212 = vld [vmem:[#allocation2 + $0x130] sm:$0xff]
    %v4213 = vld [vmem:[#allocation2 + $0x138] sm:$0x3]
    %v4214 = vpack.c.bf16 %v4176, %v4174
    %v4215 = vpack.c.bf16 %v4180, %v4178
    %v4216 = vpack.c.bf16 %v4184, %v4182
    %v4217 = vpack.c.bf16 %v4188, %v4186
    %v4218 = vpack.c.bf16 %v4196, %v4194
    %v4219 = vpack.c.bf16 %v4200, %v4198
    %v4220 = vpack.c.bf16 %v4204, %v4202
    %v4221 = vpack.c.bf16 %v4208, %v4206
    %v4222 = vld [vmem:[%s3] sm:$0xf]
    %v4223 = vld [vmem:[%s3 + $0x4] sm:$0xf]
    %v4224 = vld [vmem:[%s3 + $0x8] sm:$0xf]
    %v4225 = vld [vmem:[%s3 + $0xc] sm:$0xf]
    %v4226 = vld [vmem:[%s3 + $0x10] sm:$0xf]
    %v4227 = vld [vmem:[%s3 + $0x14] sm:$0xf]
    %v4228 = vld [vmem:[%s3 + $0x18] sm:$0xf]
    %v4229 = vld [vmem:[%s3 + $0x1c] sm:$0xf]
    %v4230 = vld [vmem:[%s3 + $0x20] sm:$0xf]
    %v4231 = vld [vmem:[%s3 + $0x24] sm:$0xf]
    %v4232 = vld [vmem:[%s3 + $0x28] sm:$0xf]
    %v4233 = vld [vmem:[%s3 + $0x2c] sm:$0xf]
    %v4234 = vld [vmem:[%s3 + $0x30] sm:$0xf]
    %v4235 = vld [vmem:[%s3 + $0x34] sm:$0xf]
    %v4236 = vld [vmem:[%s3 + $0x38] sm:$0xf]
    %v4237 = vld [vmem:[%s3 + $0x3c] sm:$0xf]
    %vm4270 = vcmask 1046528
    %v4271 = vrot.slane %v4174, 1
    %v4272 = vrot.slane %v4175, 1
    %v4273 = vsel %vm4270, %v4271, %v4272
    %v4274 = vrot.slane %v4176, 1
    %v4275 = vrot.slane %v4177, 1
    %v4276 = vsel %vm4270, %v4274, %v4275
    %v4277 = vrot.slane %v4178, 1
    %v4278 = vrot.slane %v4179, 1
    %v4279 = vsel %vm4270, %v4277, %v4278
    %v4280 = vrot.slane %v4180, 1
    %v4281 = vrot.slane %v4181, 1
    %v4282 = vsel %vm4270, %v4280, %v4281
    %v4283 = vrot.slane %v4182, 1
    %v4284 = vrot.slane %v4183, 1
    %v4285 = vsel %vm4270, %v4283, %v4284
    %v4286 = vrot.slane %v4184, 1
    %v4287 = vrot.slane %v4185, 1
    %v4288 = vsel %vm4270, %v4286, %v4287
    %v4289 = vrot.slane %v4186, 1
    %v4290 = vrot.slane %v4187, 1
    %v4291 = vsel %vm4270, %v4289, %v4290
    %v4292 = vrot.slane %v4188, 1
    %v4293 = vrot.slane %v4189, 1
    %v4294 = vsel %vm4270, %v4292, %v4293
    %v4295 = vrot.slane %v4194, 1
    %v4296 = vrot.slane %v4195, 1
    %v4297 = vsel %vm4270, %v4295, %v4296
    %v4298 = vrot.slane %v4196, 1
    %v4299 = vrot.slane %v4197, 1
    %v4300 = vsel %vm4270, %v4298, %v4299
    %v4301 = vrot.slane %v4198, 1
    %v4302 = vrot.slane %v4199, 1
    %v4303 = vsel %vm4270, %v4301, %v4302
    %v4304 = vrot.slane %v4200, 1
    %v4305 = vrot.slane %v4201, 1
    %v4306 = vsel %vm4270, %v4304, %v4305
    %v4307 = vrot.slane %v4202, 1
    %v4308 = vrot.slane %v4203, 1
    %v4309 = vsel %vm4270, %v4307, %v4308
    %v4310 = vrot.slane %v4204, 1
    %v4311 = vrot.slane %v4205, 1
    %v4312 = vsel %vm4270, %v4310, %v4311
    %v4313 = vrot.slane %v4206, 1
    %v4314 = vrot.slane %v4207, 1
    %v4315 = vsel %vm4270, %v4313, %v4314
    %v4316 = vrot.slane %v4208, 1
    %v4317 = vrot.slane %v4209, 1
    %v4318 = vsel %vm4270, %v4316, %v4317
    %v4335 = vpack.c.bf16 %v4276, %v4273
    %v4336 = vpack.c.bf16 %v4282, %v4279
    %v4337 = vpack.c.bf16 %v4288, %v4285
    %v4338 = vpack.c.bf16 %v4294, %v4291
    %v4339 = vpack.c.bf16 %v4300, %v4297
    %v4340 = vpack.c.bf16 %v4306, %v4303
    %v4341 = vpack.c.bf16 %v4312, %v4309
    %v4342 = vpack.c.bf16 %v4318, %v4315
    %s4343 = scalar_lea.vmem %s3, 64
    %v4344 = vld [vmem:[%s4343] sm:$0xf]
    %v4345 = vld [vmem:[%s4343 + $0x4] sm:$0xf]
    %v4346 = vld [vmem:[%s4343 + $0x8] sm:$0xf]
    %v4347 = vld [vmem:[%s4343 + $0xc] sm:$0xf]
    %v4348 = vld [vmem:[%s4343 + $0x10] sm:$0xf]
    %v4349 = vld [vmem:[%s4343 + $0x14] sm:$0xf]
    %v4350 = vld [vmem:[%s4343 + $0x18] sm:$0xf]
    %v4351 = vld [vmem:[%s4343 + $0x1c] sm:$0xf]
    %v4352 = vld [vmem:[%s4343 + $0x20] sm:$0xf]
    %v4353 = vld [vmem:[%s4343 + $0x24] sm:$0xf]
    %v4354 = vld [vmem:[%s4343 + $0x28] sm:$0xf]
    %v4355 = vld [vmem:[%s4343 + $0x2c] sm:$0xf]
    %v4356 = vld [vmem:[%s4343 + $0x30] sm:$0xf]
    %v4357 = vld [vmem:[%s4343 + $0x34] sm:$0xf]
    %v4358 = vld [vmem:[%s4343 + $0x38] sm:$0xf]
    %v4359 = vld [vmem:[%s4343 + $0x3c] sm:$0xf]
    %v4376 = vunpack.c.l.b16 %v4344
    %v4377 = vunpack.c.l.b16 %v4345
    %v4378 = vunpack.c.l.b16 %v4346
    %v4379 = vunpack.c.l.b16 %v4347
    %v4380 = vunpack.c.l.b16 %v4348
    %v4381 = vunpack.c.l.b16 %v4349
    %v4382 = vunpack.c.l.b16 %v4350
    %v4383 = vunpack.c.l.b16 %v4351
    %v4384 = vunpack.c.l.b16 %v4352
    %v4385 = vunpack.c.l.b16 %v4353
    %v4386 = vunpack.c.l.b16 %v4354
    %v4387 = vunpack.c.l.b16 %v4355
    %v4388 = vunpack.c.l.b16 %v4356
    %v4389 = vunpack.c.l.b16 %v4357
    %v4390 = vunpack.c.l.b16 %v4358
    %v4391 = vunpack.c.l.b16 %v4359
    %v4392 = vpack.c.b16 %v4377, %v4376
    %v4393 = vpack.c.b16 %v4379, %v4378
    %v4394 = vpack.c.b16 %v4381, %v4380
    %v4395 = vpack.c.b16 %v4383, %v4382
    %v4396 = vpack.c.b16 %v4385, %v4384
    %v4397 = vpack.c.b16 %v4387, %v4386
    %v4398 = vpack.c.b16 %v4389, %v4388
    %v4399 = vpack.c.b16 %v4391, %v4390
    %4408 = vmatprep.subr.bf16.mxu0 0
    %4409 = vmatpush1.bf16.msra.mxu0 %v4392
    %4410 = vmatprep.subr.bf16.mxu0 0
    %4411 = vmatpush1.bf16.msra.mxu0 %v4393
    %4412 = vmatprep.subr.bf16.mxu0 0
    %4413 = vmatpush1.bf16.msra.mxu0 %v4394
    %4414 = vmatprep.subr.bf16.mxu0 0
    %4415 = vmatpush1.bf16.msra.mxu0 %v4395
    %4416 = vmatprep.subr.bf16.mxu0 0
    %4417 = vmatpush1.bf16.msra.mxu0 %v4396
    %4418 = vmatprep.subr.bf16.mxu0 0
    %4419 = vmatpush1.bf16.msra.mxu0 %v4397
    %4420 = vmatprep.subr.bf16.mxu0 0
    %4421 = vmatpush1.bf16.msra.mxu0 %v4398
    %4422 = vmatprep.subr.bf16.mxu0 0
    %4423 = vmatpush1.bf16.msra.mxu0 %v4399
    %4424 = vmatprep.subr.bf16.mxu0 0
    %4425 = vmatpush1.bf16.msra.mxu0 0
    %4426 = vmatprep.subr.bf16.mxu0 0
    %4427 = vmatpush1.bf16.msra.mxu0 0
    %4428 = vmatprep.subr.bf16.mxu0 0
    %4429 = vmatpush1.bf16.msra.mxu0 0
    %4430 = vmatprep.subr.bf16.mxu0 0
    %4431 = vmatpush1.bf16.msra.mxu0 0
    %4432 = vmatprep.subr.bf16.mxu0 0
    %4433 = vmatpush1.bf16.msra.mxu0 0
    %4434 = vmatprep.subr.bf16.mxu0 0
    %4435 = vmatpush1.bf16.msra.mxu0 0
    %4436 = vmatprep.subr.bf16.mxu0 0
    %4437 = vmatpush1.bf16.msra.mxu0 0
    %4438 = vmatprep.subr.bf16.mxu0 0
    %4439 = vmatpush1.bf16.msra.mxu0 0
    %4440 = vmatprep.mubr.bf16.mxu0 0
    %4441 = vmatmul.mubr.bf16.gmra.mrb[0].mxu0 %v4335
    %v4442 = vpop.f32.mrb[0].mxu0
    %v4443 = vadd.f32 0.0, %v4442
    %v4444 = vpop.f32.mrb[0].mxu0
    %v4445 = vpop.f32.mrb[0].mxu0
    %v4446 = vadd.f32 0.0, %v4445
    %v4447 = vpop.f32.mrb[0].mxu0
    %4448 = vmatprep.mubr.bf16.mxu0 0
    %4449 = vmatmul.mubr.bf16.gmra.mrb[0].mxu0 %v4336
    %v4450 = vpop.f32.mrb[0].mxu0
    %v4451 = vadd.f32 0.0, %v4450
    %v4452 = vpop.f32.mrb[0].mxu0
    %v4453 = vpop.f32.mrb[0].mxu0
    %v4454 = vadd.f32 0.0, %v4453
    %v4455 = vpop.f32.mrb[0].mxu0
    %4456 = vmatprep.mubr.bf16.mxu0 0
    %4457 = vmatmul.mubr.bf16.gmra.mrb[0].mxu0 %v4337
    %v4458 = vpop.f32.mrb[0].mxu0
    %v4459 = vadd.f32 0.0, %v4458
    %v4460 = vpop.f32.mrb[0].mxu0
    %v4461 = vpop.f32.mrb[0].mxu0
    %v4462 = vadd.f32 0.0, %v4461
    %v4463 = vpop.f32.mrb[0].mxu0
    %4464 = vmatprep.mubr.bf16.mxu0 0
    %4465 = vmatmul.mubr.bf16.gmra.mrb[0].mxu0 %v4338
    %v4466 = vpop.f32.mrb[0].mxu0
    %v4467 = vadd.f32 0.0, %v4466
    %v4468 = vpop.f32.mrb[0].mxu0
    %v4469 = vpop.f32.mrb[0].mxu0
    %v4470 = vadd.f32 0.0, %v4469
    %v4471 = vpop.f32.mrb[0].mxu0
    %4472 = vmatprep.mubr.bf16.mxu0 0
    %4473 = vmatmul.mubr.bf16.gmra.mrb[0].mxu0 %v4339
    %v4474 = vpop.f32.mrb[0].mxu0
    %v4475 = vadd.f32 0.0, %v4474
    %v4476 = vpop.f32.mrb[0].mxu0
    %v4477 = vpop.f32.mrb[0].mxu0
    %v4478 = vadd.f32 0.0, %v4477
    %v4479 = vpop.f32.mrb[0].mxu0
    %4480 = vmatprep.mubr.bf16.mxu0 0
    %4481 = vmatmul.mubr.bf16.gmra.mrb[0].mxu0 %v4340
    %v4482 = vpop.f32.mrb[0].mxu0
    %v4483 = vadd.f32 0.0, %v4482
    %v4484 = vpop.f32.mrb[0].mxu0
    %v4485 = vpop.f32.mrb[0].mxu0
    %v4486 = vadd.f32 0.0, %v4485
    %v4487 = vpop.f32.mrb[0].mxu0
    %4488 = vmatprep.mubr.bf16.mxu0 0
    %4489 = vmatmul.mubr.bf16.gmra.mrb[0].mxu0 %v4341
    %v4490 = vpop.f32.mrb[0].mxu0
    %v4491 = vadd.f32 0.0, %v4490
    %v4492 = vpop.f32.mrb[0].mxu0
    %v4493 = vpop.f32.mrb[0].mxu0
    %v4494 = vadd.f32 0.0, %v4493
    %v4495 = vpop.f32.mrb[0].mxu0
    %4496 = vmatprep.mubr.bf16.mxu0 0
    %4497 = vmatmul.mubr.bf16.gmra.mrb[0].mxu0 %v4342
    %v4498 = vpop.f32.mrb[0].mxu0
    %v4499 = vadd.f32 0.0, %v4498
    %v4500 = vpop.f32.mrb[0].mxu0
    %v4501 = vpop.f32.mrb[0].mxu0
    %v4502 = vadd.f32 0.0, %v4501
    %v4503 = vpop.f32.mrb[0].mxu0
    %4504 = vdwg.mxu0
    %v4521 = vunpack.c.l.b16 %v4222
    %v4522 = vunpack.c.l.b16 %v4223
    %v4523 = vunpack.c.l.b16 %v4224
    %v4524 = vunpack.c.l.b16 %v4225
    %v4525 = vunpack.c.l.b16 %v4226
    %v4526 = vunpack.c.l.b16 %v4227
    %v4527 = vunpack.c.l.b16 %v4228
    %v4528 = vunpack.c.l.b16 %v4229
    %v4529 = vunpack.c.l.b16 %v4230
    %v4530 = vunpack.c.l.b16 %v4231
    %v4531 = vunpack.c.l.b16 %v4232
    %v4532 = vunpack.c.l.b16 %v4233
    %v4533 = vunpack.c.l.b16 %v4234
    %v4534 = vunpack.c.l.b16 %v4235
    %v4535 = vunpack.c.l.b16 %v4236
    %v4536 = vunpack.c.l.b16 %v4237
    %v4537 = vpack.c.b16 %v4522, %v4521
    %v4538 = vpack.c.b16 %v4524, %v4523
    %v4539 = vpack.c.b16 %v4526, %v4525
    %v4540 = vpack.c.b16 %v4528, %v4527
    %v4541 = vpack.c.b16 %v4530, %v4529
    %v4542 = vpack.c.b16 %v4532, %v4531
    %v4543 = vpack.c.b16 %v4534, %v4533
    %v4544 = vpack.c.b16 %v4536, %v4535
    %4553 = vmatprep.subr.bf16.mxu0 0
    %4554 = vmatpush1.bf16.msra.mxu0 %v4537
    %4555 = vmatprep.subr.bf16.mxu0 0
    %4556 = vmatpush1.bf16.msra.mxu0 %v4538
    %4557 = vmatprep.subr.bf16.mxu0 0
    %4558 = vmatpush1.bf16.msra.mxu0 %v4539
    %4559 = vmatprep.subr.bf16.mxu0 0
    %4560 = vmatpush1.bf16.msra.mxu0 %v4540
    %4561 = vmatprep.subr.bf16.mxu0 0
    %4562 = vmatpush1.bf16.msra.mxu0 %v4541
    %4563 = vmatprep.subr.bf16.mxu0 0
    %4564 = vmatpush1.bf16.msra.mxu0 %v4542
    %4565 = vmatprep.subr.bf16.mxu0 0
    %4566 = vmatpush1.bf16.msra.mxu0 %v4543
    %4567 = vmatprep.subr.bf16.mxu0 0
    %4568 = vmatpush1.bf16.msra.mxu0 %v4544
    %4569 = vmatprep.subr.bf16.mxu0 0
    %4570 = vmatpush1.bf16.msra.mxu0 0
    %4571 = vmatprep.subr.bf16.mxu0 0
    %4572 = vmatpush1.bf16.msra.mxu0 0
    %4573 = vmatprep.subr.bf16.mxu0 0
    %4574 = vmatpush1.bf16.msra.mxu0 0
    %4575 = vmatprep.subr.bf16.mxu0 0
    %4576 = vmatpush1.bf16.msra.mxu0 0
    %4577 = vmatprep.subr.bf16.mxu0 0
    %4578 = vmatpush1.bf16.msra.mxu0 0
    %4579 = vmatprep.subr.bf16.mxu0 0
    %4580 = vmatpush1.bf16.msra.mxu0 0
    %4581 = vmatprep.subr.bf16.mxu0 0
    %4582 = vmatpush1.bf16.msra.mxu0 0
    %4583 = vmatprep.subr.bf16.mxu0 0
    %4584 = vmatpush1.bf16.msra.mxu0 0
    %4585 = vmatprep.mubr.bf16.mxu0 0
    %4586 = vmatmul.mubr.bf16.gmra.mrb[0].mxu0 %v4214
    %v4587 = vpop.f32.mrb[0].mxu0
    %v4588 = vadd.f32 %v4443, %v4587
    %v4589 = vpop.f32.mrb[0].mxu0
    %v4590 = vpop.f32.mrb[0].mxu0
    %v4591 = vadd.f32 %v4446, %v4590
    %v4592 = vpop.f32.mrb[0].mxu0
    %4593 = vmatprep.mubr.bf16.mxu0 0
    %4594 = vmatmul.mubr.bf16.gmra.mrb[0].mxu0 %v4215
    %v4595 = vpop.f32.mrb[0].mxu0
    %v4596 = vadd.f32 %v4451, %v4595
    %v4597 = vpop.f32.mrb[0].mxu0
    %v4598 = vpop.f32.mrb[0].mxu0
    %v4599 = vadd.f32 %v4454, %v4598
    %v4600 = vpop.f32.mrb[0].mxu0
    %4601 = vmatprep.mubr.bf16.mxu0 0
    %4602 = vmatmul.mubr.bf16.gmra.mrb[0].mxu0 %v4216
    %v4603 = vpop.f32.mrb[0].mxu0
    %v4604 = vadd.f32 %v4459, %v4603
    %v4605 = vpop.f32.mrb[0].mxu0
    %v4606 = vpop.f32.mrb[0].mxu0
    %v4607 = vadd.f32 %v4462, %v4606
    %v4608 = vpop.f32.mrb[0].mxu0
    %4609 = vmatprep.mubr.bf16.mxu0 0
    %4610 = vmatmul.mubr.bf16.gmra.mrb[0].mxu0 %v4217
    %v4611 = vpop.f32.mrb[0].mxu0
    %v4612 = vadd.f32 %v4467, %v4611
    %v4613 = vpop.f32.mrb[0].mxu0
    %v4614 = vpop.f32.mrb[0].mxu0
    %v4615 = vadd.f32 %v4470, %v4614
    %v4616 = vpop.f32.mrb[0].mxu0
    %4617 = vmatprep.mubr.bf16.mxu0 0
    %4618 = vmatmul.mubr.bf16.gmra.mrb[0].mxu0 %v4218
    %v4619 = vpop.f32.mrb[0].mxu0
    %v4620 = vadd.f32 %v4475, %v4619
    %v4621 = vpop.f32.mrb[0].mxu0
    %v4622 = vpop.f32.mrb[0].mxu0
    %v4623 = vadd.f32 %v4478, %v4622
    %v4624 = vpop.f32.mrb[0].mxu0
    %4625 = vmatprep.mubr.bf16.mxu0 0
    %4626 = vmatmul.mubr.bf16.gmra.mrb[0].mxu0 %v4219
    %v4627 = vpop.f32.mrb[0].mxu0
    %v4628 = vadd.f32 %v4483, %v4627
    %v4629 = vpop.f32.mrb[0].mxu0
    %v4630 = vpop.f32.mrb[0].mxu0
    %v4631 = vadd.f32 %v4486, %v4630
    %v4632 = vpop.f32.mrb[0].mxu0
    %4633 = vmatprep.mubr.bf16.mxu0 0
    %4634 = vmatmul.mubr.bf16.gmra.mrb[0].mxu0 %v4220
    %v4635 = vpop.f32.mrb[0].mxu0
    %v4636 = vadd.f32 %v4491, %v4635
    %v4637 = vpop.f32.mrb[0].mxu0
    %v4638 = vpop.f32.mrb[0].mxu0
    %v4639 = vadd.f32 %v4494, %v4638
    %v4640 = vpop.f32.mrb[0].mxu0
    %4641 = vmatprep.mubr.bf16.mxu0 0
    %4642 = vmatmul.mubr.bf16.gmra.mrb[0].mxu0 %v4221
    %v4643 = vpop.f32.mrb[0].mxu0
    %v4644 = vadd.f32 %v4499, %v4643
    %v4645 = vpop.f32.mrb[0].mxu0
    %v4646 = vpop.f32.mrb[0].mxu0
    %v4647 = vadd.f32 %v4502, %v4646
    %v4648 = vpop.f32.mrb[0].mxu0
    %4649 = vdwg.mxu0
    %vm4650 = vcmask 1045504
    %v4651 = vrot.slane %v4174, 2
    %v4652 = vrot.slane %v4175, 2
    %v4653 = vsel %vm4650, %v4651, %v4652
    %v4654 = vrot.slane %v4176, 2
    %v4655 = vrot.slane %v4177, 2
    %v4656 = vsel %vm4650, %v4654, %v4655
    %v4657 = vrot.slane %v4178, 2
    %v4658 = vrot.slane %v4179, 2
    %v4659 = vsel %vm4650, %v4657, %v4658
    %v4660 = vrot.slane %v4180, 2
    %v4661 = vrot.slane %v4181, 2
    %v4662 = vsel %vm4650, %v4660, %v4661
    %v4663 = vrot.slane %v4182, 2
    %v4664 = vrot.slane %v4183, 2
    %v4665 = vsel %vm4650, %v4663, %v4664
    %v4666 = vrot.slane %v4184, 2
    %v4667 = vrot.slane %v4185, 2
    %v4668 = vsel %vm4650, %v4666, %v4667
    %v4669 = vrot.slane %v4186, 2
    %v4670 = vrot.slane %v4187, 2
    %v4671 = vsel %vm4650, %v4669, %v4670
    %v4672 = vrot.slane %v4188, 2
    %v4673 = vrot.slane %v4189, 2
    %v4674 = vsel %vm4650, %v4672, %v4673
    %v4675 = vrot.slane %v4194, 2
    %v4676 = vrot.slane %v4195, 2
    %v4677 = vsel %vm4650, %v4675, %v4676
    %v4678 = vrot.slane %v4196, 2
    %v4679 = vrot.slane %v4197, 2
    %v4680 = vsel %vm4650, %v4678, %v4679
    %v4681 = vrot.slane %v4198, 2
    %v4682 = vrot.slane %v4199, 2
    %v4683 = vsel %vm4650, %v4681, %v4682
    %v4684 = vrot.slane %v4200, 2
    %v4685 = vrot.slane %v4201, 2
    %v4686 = vsel %vm4650, %v4684, %v4685
    %v4687 = vrot.slane %v4202, 2
    %v4688 = vrot.slane %v4203, 2
    %v4689 = vsel %vm4650, %v4687, %v4688
    %v4690 = vrot.slane %v4204, 2
    %v4691 = vrot.slane %v4205, 2
    %v4692 = vsel %vm4650, %v4690, %v4691
    %v4693 = vrot.slane %v4206, 2
    %v4694 = vrot.slane %v4207, 2
    %v4695 = vsel %vm4650, %v4693, %v4694
    %v4696 = vrot.slane %v4208, 2
    %v4697 = vrot.slane %v4209, 2
    %v4698 = vsel %vm4650, %v4696, %v4697
    %v4715 = vpack.c.bf16 %v4656, %v4653
    %v4716 = vpack.c.bf16 %v4662, %v4659
    %v4717 = vpack.c.bf16 %v4668, %v4665
    %v4718 = vpack.c.bf16 %v4674, %v4671
    %v4719 = vpack.c.bf16 %v4680, %v4677
    %v4720 = vpack.c.bf16 %v4686, %v4683
    %v4721 = vpack.c.bf16 %v4692, %v4689
    %v4722 = vpack.c.bf16 %v4698, %v4695
    %s4723 = scalar_lea.vmem %s3, 128
    %v4724 = vld [vmem:[%s4723] sm:$0xf]
    %v4725 = vld [vmem:[%s4723 + $0x4] sm:$0xf]
    %v4726 = vld [vmem:[%s4723 + $0x8] sm:$0xf]
    %v4727 = vld [vmem:[%s4723 + $0xc] sm:$0xf]
    %v4728 = vld [vmem:[%s4723 + $0x10] sm:$0xf]
    %v4729 = vld [vmem:[%s4723 + $0x14] sm:$0xf]
    %v4730 = vld [vmem:[%s4723 + $0x18] sm:$0xf]
    %v4731 = vld [vmem:[%s4723 + $0x1c] sm:$0xf]
    %v4732 = vld [vmem:[%s4723 + $0x20] sm:$0xf]
    %v4733 = vld [vmem:[%s4723 + $0x24] sm:$0xf]
    %v4734 = vld [vmem:[%s4723 + $0x28] sm:$0xf]
    %v4735 = vld [vmem:[%s4723 + $0x2c] sm:$0xf]
    %v4736 = vld [vmem:[%s4723 + $0x30] sm:$0xf]
    %v4737 = vld [vmem:[%s4723 + $0x34] sm:$0xf]
    %v4738 = vld [vmem:[%s4723 + $0x38] sm:$0xf]
    %v4739 = vld [vmem:[%s4723 + $0x3c] sm:$0xf]
    %v4756 = vunpack.c.l.b16 %v4724
    %v4757 = vunpack.c.l.b16 %v4725
    %v4758 = vunpack.c.l.b16 %v4726
    %v4759 = vunpack.c.l.b16 %v4727
    %v4760 = vunpack.c.l.b16 %v4728
    %v4761 = vunpack.c.l.b16 %v4729
    %v4762 = vunpack.c.l.b16 %v4730
    %v4763 = vunpack.c.l.b16 %v4731
    %v4764 = vunpack.c.l.b16 %v4732
    %v4765 = vunpack.c.l.b16 %v4733
    %v4766 = vunpack.c.l.b16 %v4734
    %v4767 = vunpack.c.l.b16 %v4735
    %v4768 = vunpack.c.l.b16 %v4736
    %v4769 = vunpack.c.l.b16 %v4737
    %v4770 = vunpack.c.l.b16 %v4738
    %v4771 = vunpack.c.l.b16 %v4739
    %v4772 = vpack.c.b16 %v4757, %v4756
    %v4773 = vpack.c.b16 %v4759, %v4758
    %v4774 = vpack.c.b16 %v4761, %v4760
    %v4775 = vpack.c.b16 %v4763, %v4762
    %v4776 = vpack.c.b16 %v4765, %v4764
    %v4777 = vpack.c.b16 %v4767, %v4766
    %v4778 = vpack.c.b16 %v4769, %v4768
    %v4779 = vpack.c.b16 %v4771, %v4770
    %4788 = vmatprep.subr.bf16.mxu0 0
    %4789 = vmatpush1.bf16.msra.mxu0 %v4772
    %4790 = vmatprep.subr.bf16.mxu0 0
    %4791 = vmatpush1.bf16.msra.mxu0 %v4773
    %4792 = vmatprep.subr.bf16.mxu0 0
    %4793 = vmatpush1.bf16.msra.mxu0 %v4774
    %4794 = vmatprep.subr.bf16.mxu0 0
    %4795 = vmatpush1.bf16.msra.mxu0 %v4775
    %4796 = vmatprep.subr.bf16.mxu0 0
    %4797 = vmatpush1.bf16.msra.mxu0 %v4776
    %4798 = vmatprep.subr.bf16.mxu0 0
    %4799 = vmatpush1.bf16.msra.mxu0 %v4777
    %4800 = vmatprep.subr.bf16.mxu0 0
    %4801 = vmatpush1.bf16.msra.mxu0 %v4778
    %4802 = vmatprep.subr.bf16.mxu0 0
    %4803 = vmatpush1.bf16.msra.mxu0 %v4779
    %4804 = vmatprep.subr.bf16.mxu0 0
    %4805 = vmatpush1.bf16.msra.mxu0 0
    %4806 = vmatprep.subr.bf16.mxu0 0
    %4807 = vmatpush1.bf16.msra.mxu0 0
    %4808 = vmatprep.subr.bf16.mxu0 0
    %4809 = vmatpush1.bf16.msra.mxu0 0
    %4810 = vmatprep.subr.bf16.mxu0 0
    %4811 = vmatpush1.bf16.msra.mxu0 0
    %4812 = vmatprep.subr.bf16.mxu0 0
    %4813 = vmatpush1.bf16.msra.mxu0 0
    %4814 = vmatprep.subr.bf16.mxu0 0
    %4815 = vmatpush1.bf16.msra.mxu0 0
    %4816 = vmatprep.subr.bf16.mxu0 0
    %4817 = vmatpush1.bf16.msra.mxu0 0
    %4818 = vmatprep.subr.bf16.mxu0 0
    %4819 = vmatpush1.bf16.msra.mxu0 0
    %4820 = vmatprep.mubr.bf16.mxu0 0
    %4821 = vmatmul.mubr.bf16.gmra.mrb[0].mxu0 %v4715
    %v4822 = vpop.f32.mrb[0].mxu0
    %v4823 = vadd.f32 0.0, %v4822
    %v4824 = vpop.f32.mrb[0].mxu0
    %v4825 = vpop.f32.mrb[0].mxu0
    %v4826 = vadd.f32 0.0, %v4825
    %v4827 = vpop.f32.mrb[0].mxu0
    %4828 = vmatprep.mubr.bf16.mxu0 0
    %4829 = vmatmul.mubr.bf16.gmra.mrb[0].mxu0 %v4716
    %v4830 = vpop.f32.mrb[0].mxu0
    %v4831 = vadd.f32 0.0, %v4830
    %v4832 = vpop.f32.mrb[0].mxu0
    %v4833 = vpop.f32.mrb[0].mxu0
    %v4834 = vadd.f32 0.0, %v4833
    %v4835 = vpop.f32.mrb[0].mxu0
    %4836 = vmatprep.mubr.bf16.mxu0 0
    %4837 = vmatmul.mubr.bf16.gmra.mrb[0].mxu0 %v4717
    %v4838 = vpop.f32.mrb[0].mxu0
    %v4839 = vadd.f32 0.0, %v4838
    %v4840 = vpop.f32.mrb[0].mxu0
    %v4841 = vpop.f32.mrb[0].mxu0
    %v4842 = vadd.f32 0.0, %v4841
    %v4843 = vpop.f32.mrb[0].mxu0
    %4844 = vmatprep.mubr.bf16.mxu0 0
    %4845 = vmatmul.mubr.bf16.gmra.mrb[0].mxu0 %v4718
    %v4846 = vpop.f32.mrb[0].mxu0
    %v4847 = vadd.f32 0.0, %v4846
    %v4848 = vpop.f32.mrb[0].mxu0
    %v4849 = vpop.f32.mrb[0].mxu0
    %v4850 = vadd.f32 0.0, %v4849
    %v4851 = vpop.f32.mrb[0].mxu0
    %4852 = vmatprep.mubr.bf16.mxu0 0
    %4853 = vmatmul.mubr.bf16.gmra.mrb[0].mxu0 %v4719
    %v4854 = vpop.f32.mrb[0].mxu0
    %v4855 = vadd.f32 0.0, %v4854
    %v4856 = vpop.f32.mrb[0].mxu0
    %v4857 = vpop.f32.mrb[0].mxu0
    %v4858 = vadd.f32 0.0, %v4857
    %v4859 = vpop.f32.mrb[0].mxu0
    %4860 = vmatprep.mubr.bf16.mxu0 0
    %4861 = vmatmul.mubr.bf16.gmra.mrb[0].mxu0 %v4720
    %v4862 = vpop.f32.mrb[0].mxu0
    %v4863 = vadd.f32 0.0, %v4862
    %v4864 = vpop.f32.mrb[0].mxu0
    %v4865 = vpop.f32.mrb[0].mxu0
    %v4866 = vadd.f32 0.0, %v4865
    %v4867 = vpop.f32.mrb[0].mxu0
    %4868 = vmatprep.mubr.bf16.mxu0 0
    %4869 = vmatmul.mubr.bf16.gmra.mrb[0].mxu0 %v4721
    %v4870 = vpop.f32.mrb[0].mxu0
    %v4871 = vadd.f32 0.0, %v4870
    %v4872 = vpop.f32.mrb[0].mxu0
    %v4873 = vpop.f32.mrb[0].mxu0
    %v4874 = vadd.f32 0.0, %v4873
    %v4875 = vpop.f32.mrb[0].mxu0
    %4876 = vmatprep.mubr.bf16.mxu0 0
    %4877 = vmatmul.mubr.bf16.gmra.mrb[0].mxu0 %v4722
    %v4878 = vpop.f32.mrb[0].mxu0
    %v4879 = vadd.f32 0.0, %v4878
    %v4880 = vpop.f32.mrb[0].mxu0
    %v4881 = vpop.f32.mrb[0].mxu0
    %v4882 = vadd.f32 0.0, %v4881
    %v4883 = vpop.f32.mrb[0].mxu0
    %4884 = vdwg.mxu0
    %v4885 = vadd.f32 %v4588, %v4823
    %v4886 = vadd.f32 %v4591, %v4826
    %v4887 = vadd.f32 %v4596, %v4831
    %v4888 = vadd.f32 %v4599, %v4834
    %v4889 = vadd.f32 %v4604, %v4839
    %v4890 = vadd.f32 %v4607, %v4842
    %v4891 = vadd.f32 %v4612, %v4847
    %v4892 = vadd.f32 %v4615, %v4850
    %v4893 = vadd.f32 %v4620, %v4855
    %v4894 = vadd.f32 %v4623, %v4858
    %v4895 = vadd.f32 %v4628, %v4863
    %v4896 = vadd.f32 %v4631, %v4866
    %v4897 = vadd.f32 %v4636, %v4871
    %v4898 = vadd.f32 %v4639, %v4874
    %v4899 = vadd.f32 %v4644, %v4879
    %v4900 = vadd.f32 %v4647, %v4882
    %v4901 = vpack.c.bf16 %v4178, %v4176
    %v4902 = vpack.c.bf16 %v4182, %v4180
    %v4903 = vpack.c.bf16 %v4186, %v4184
    %v4904 = vpack.c.bf16 %v4190, %v4188
    %v4905 = vpack.c.bf16 %v4198, %v4196
    %v4906 = vpack.c.bf16 %v4202, %v4200
    %v4907 = vpack.c.bf16 %v4206, %v4204
    %v4908 = vpack.c.bf16 %v4210, %v4208
    %s4909 = scalar_lea.vmem %s3, 192
    %v4910 = vld [vmem:[%s4909] sm:$0xf]
    %v4911 = vld [vmem:[%s4909 + $0x4] sm:$0xf]
    %v4912 = vld [vmem:[%s4909 + $0x8] sm:$0xf]
    %v4913 = vld [vmem:[%s4909 + $0xc] sm:$0xf]
    %v4914 = vld [vmem:[%s4909 + $0x10] sm:$0xf]
    %v4915 = vld [vmem:[%s4909 + $0x14] sm:$0xf]
    %v4916 = vld [vmem:[%s4909 + $0x18] sm:$0xf]
    %v4917 = vld [vmem:[%s4909 + $0x1c] sm:$0xf]
    %v4918 = vld [vmem:[%s4909 + $0x20] sm:$0xf]
    %v4919 = vld [vmem:[%s4909 + $0x24] sm:$0xf]
    %v4920 = vld [vmem:[%s4909 + $0x28] sm:$0xf]
    %v4921 = vld [vmem:[%s4909 + $0x2c] sm:$0xf]
    %v4922 = vld [vmem:[%s4909 + $0x30] sm:$0xf]
    %v4923 = vld [vmem:[%s4909 + $0x34] sm:$0xf]
    %v4924 = vld [vmem:[%s4909 + $0x38] sm:$0xf]
    %v4925 = vld [vmem:[%s4909 + $0x3c] sm:$0xf]
    %v4942 = vunpack.c.l.b16 %v4910
    %v4943 = vunpack.c.l.b16 %v4911
    %v4944 = vunpack.c.l.b16 %v4912
    %v4945 = vunpack.c.l.b16 %v4913
    %v4946 = vunpack.c.l.b16 %v4914
    %v4947 = vunpack.c.l.b16 %v4915
    %v4948 = vunpack.c.l.b16 %v4916
    %v4949 = vunpack.c.l.b16 %v4917
    %v4950 = vunpack.c.l.b16 %v4918
    %v4951 = vunpack.c.l.b16 %v4919
    %v4952 = vunpack.c.l.b16 %v4920
    %v4953 = vunpack.c.l.b16 %v4921
    %v4954 = vunpack.c.l.b16 %v4922
    %v4955 = vunpack.c.l.b16 %v4923
    %v4956 = vunpack.c.l.b16 %v4924
    %v4957 = vunpack.c.l.b16 %v4925
    %v4958 = vpack.c.b16 %v4943, %v4942
    %v4959 = vpack.c.b16 %v4945, %v4944
    %v4960 = vpack.c.b16 %v4947, %v4946
    %v4961 = vpack.c.b16 %v4949, %v4948
    %v4962 = vpack.c.b16 %v4951, %v4950
    %v4963 = vpack.c.b16 %v4953, %v4952
    %v4964 = vpack.c.b16 %v4955, %v4954
    %v4965 = vpack.c.b16 %v4957, %v4956
    %4974 = vmatprep.subr.bf16.mxu0 0
    %4975 = vmatpush1.bf16.msra.mxu0 %v4958
    %4976 = vmatprep.subr.bf16.mxu0 0
    %4977 = vmatpush1.bf16.msra.mxu0 %v4959
    %4978 = vmatprep.subr.bf16.mxu0 0
    %4979 = vmatpush1.bf16.msra.mxu0 %v4960
    %4980 = vmatprep.subr.bf16.mxu0 0
    %4981 = vmatpush1.bf16.msra.mxu0 %v4961
    %4982 = vmatprep.subr.bf16.mxu0 0
    %4983 = vmatpush1.bf16.msra.mxu0 %v4962
    %4984 = vmatprep.subr.bf16.mxu0 0
    %4985 = vmatpush1.bf16.msra.mxu0 %v4963
    %4986 = vmatprep.subr.bf16.mxu0 0
    %4987 = vmatpush1.bf16.msra.mxu0 %v4964
    %4988 = vmatprep.subr.bf16.mxu0 0
    %4989 = vmatpush1.bf16.msra.mxu0 %v4965
    %4990 = vmatprep.subr.bf16.mxu0 0
    %4991 = vmatpush1.bf16.msra.mxu0 0
    %4992 = vmatprep.subr.bf16.mxu0 0
    %4993 = vmatpush1.bf16.msra.mxu0 0
    %4994 = vmatprep.subr.bf16.mxu0 0
    %4995 = vmatpush1.bf16.msra.mxu0 0
    %4996 = vmatprep.subr.bf16.mxu0 0
    %4997 = vmatpush1.bf16.msra.mxu0 0
    %4998 = vmatprep.subr.bf16.mxu0 0
    %4999 = vmatpush1.bf16.msra.mxu0 0
    %5000 = vmatprep.subr.bf16.mxu0 0
    %5001 = vmatpush1.bf16.msra.mxu0 0
    %5002 = vmatprep.subr.bf16.mxu0 0
    %5003 = vmatpush1.bf16.msra.mxu0 0
    %5004 = vmatprep.subr.bf16.mxu0 0
    %5005 = vmatpush1.bf16.msra.mxu0 0
    %5006 = vmatprep.mubr.bf16.mxu0 0
    %5007 = vmatmul.mubr.bf16.gmra.mrb[0].mxu0 %v4901
    %v5008 = vpop.f32.mrb[0].mxu0
    %v5009 = vadd.f32 0.0, %v5008
    %v5010 = vpop.f32.mrb[0].mxu0
    %v5011 = vpop.f32.mrb[0].mxu0
    %v5012 = vadd.f32 0.0, %v5011
    %v5013 = vpop.f32.mrb[0].mxu0
    %5014 = vmatprep.mubr.bf16.mxu0 0
    %5015 = vmatmul.mubr.bf16.gmra.mrb[0].mxu0 %v4902
    %v5016 = vpop.f32.mrb[0].mxu0
    %v5017 = vadd.f32 0.0, %v5016
    %v5018 = vpop.f32.mrb[0].mxu0
    %v5019 = vpop.f32.mrb[0].mxu0
    %v5020 = vadd.f32 0.0, %v5019
    %v5021 = vpop.f32.mrb[0].mxu0
    %5022 = vmatprep.mubr.bf16.mxu0 0
    %5023 = vmatmul.mubr.bf16.gmra.mrb[0].mxu0 %v4903
    %v5024 = vpop.f32.mrb[0].mxu0
    %v5025 = vadd.f32 0.0, %v5024
    %v5026 = vpop.f32.mrb[0].mxu0
    %v5027 = vpop.f32.mrb[0].mxu0
    %v5028 = vadd.f32 0.0, %v5027
    %v5029 = vpop.f32.mrb[0].mxu0
    %5030 = vmatprep.mubr.bf16.mxu0 0
    %5031 = vmatmul.mubr.bf16.gmra.mrb[0].mxu0 %v4904
    %v5032 = vpop.f32.mrb[0].mxu0
    %v5033 = vadd.f32 0.0, %v5032
    %v5034 = vpop.f32.mrb[0].mxu0
    %v5035 = vpop.f32.mrb[0].mxu0
    %v5036 = vadd.f32 0.0, %v5035
    %v5037 = vpop.f32.mrb[0].mxu0
    %5038 = vmatprep.mubr.bf16.mxu0 0
    %5039 = vmatmul.mubr.bf16.gmra.mrb[0].mxu0 %v4905
    %v5040 = vpop.f32.mrb[0].mxu0
    %v5041 = vadd.f32 0.0, %v5040
    %v5042 = vpop.f32.mrb[0].mxu0
    %v5043 = vpop.f32.mrb[0].mxu0
    %v5044 = vadd.f32 0.0, %v5043
    %v5045 = vpop.f32.mrb[0].mxu0
    %5046 = vmatprep.mubr.bf16.mxu0 0
    %5047 = vmatmul.mubr.bf16.gmra.mrb[0].mxu0 %v4906
    %v5048 = vpop.f32.mrb[0].mxu0
    %v5049 = vadd.f32 0.0, %v5048
    %v5050 = vpop.f32.mrb[0].mxu0
    %v5051 = vpop.f32.mrb[0].mxu0
    %v5052 = vadd.f32 0.0, %v5051
    %v5053 = vpop.f32.mrb[0].mxu0
    %5054 = vmatprep.mubr.bf16.mxu0 0
    %5055 = vmatmul.mubr.bf16.gmra.mrb[0].mxu0 %v4907
    %v5056 = vpop.f32.mrb[0].mxu0
    %v5057 = vadd.f32 0.0, %v5056
    %v5058 = vpop.f32.mrb[0].mxu0
    %v5059 = vpop.f32.mrb[0].mxu0
    %v5060 = vadd.f32 0.0, %v5059
    %v5061 = vpop.f32.mrb[0].mxu0
    %5062 = vmatprep.mubr.bf16.mxu0 0
    %5063 = vmatmul.mubr.bf16.gmra.mrb[0].mxu0 %v4908
    %v5064 = vpop.f32.mrb[0].mxu0
    %v5065 = vadd.f32 0.0, %v5064
    %v5066 = vpop.f32.mrb[0].mxu0
    %v5067 = vpop.f32.mrb[0].mxu0
    %v5068 = vadd.f32 0.0, %v5067
    %v5069 = vpop.f32.mrb[0].mxu0
    %5070 = vdwg.mxu0
    %v5071 = vadd.f32 %v4885, %v5009
    %v5072 = vadd.f32 %v4886, %v5012
    %v5073 = vadd.f32 %v4887, %v5017
    %v5074 = vadd.f32 %v4888, %v5020
    %v5075 = vadd.f32 %v4889, %v5025
    %v5076 = vadd.f32 %v4890, %v5028
    %v5077 = vadd.f32 %v4891, %v5033
    %v5078 = vadd.f32 %v4892, %v5036
    %v5079 = vadd.f32 %v4893, %v5041
    %v5080 = vadd.f32 %v4894, %v5044
    %v5081 = vadd.f32 %v4895, %v5049
    %v5082 = vadd.f32 %v4896, %v5052
    %v5083 = vadd.f32 %v4897, %v5057
    %v5084 = vadd.f32 %v4898, %v5060
    %v5085 = vadd.f32 %v4899, %v5065
    %v5086 = vadd.f32 %v4900, %v5068
    %v5091 = vrot.slane %v4190, 1
    %v5092 = vrot.slane %v4191, 1
    %v5093 = vsel %vm4270, %v5091, %v5092
    %v5094 = vrot.slane %v4210, 1
    %v5095 = vrot.slane %v4211, 1
    %v5096 = vsel %vm4270, %v5094, %v5095
    %v5099 = vpack.c.bf16 %v4279, %v4276
    %v5100 = vpack.c.bf16 %v4285, %v4282
    %v5101 = vpack.c.bf16 %v4291, %v4288
    %v5102 = vpack.c.bf16 %v5093, %v4294
    %v5103 = vpack.c.bf16 %v4303, %v4300
    %v5104 = vpack.c.bf16 %v4309, %v4306
    %v5105 = vpack.c.bf16 %v4315, %v4312
    %v5106 = vpack.c.bf16 %v5096, %v4318
    %s5107 = scalar_lea.vmem %s3, 256
    %v5108 = vld [vmem:[%s5107] sm:$0xf]
    %v5109 = vld [vmem:[%s5107 + $0x4] sm:$0xf]
    %v5110 = vld [vmem:[%s5107 + $0x8] sm:$0xf]
    %v5111 = vld [vmem:[%s5107 + $0xc] sm:$0xf]
    %v5112 = vld [vmem:[%s5107 + $0x10] sm:$0xf]
    %v5113 = vld [vmem:[%s5107 + $0x14] sm:$0xf]
    %v5114 = vld [vmem:[%s5107 + $0x18] sm:$0xf]
    %v5115 = vld [vmem:[%s5107 + $0x1c] sm:$0xf]
    %v5116 = vld [vmem:[%s5107 + $0x20] sm:$0xf]
    %v5117 = vld [vmem:[%s5107 + $0x24] sm:$0xf]
    %v5118 = vld [vmem:[%s5107 + $0x28] sm:$0xf]
    %v5119 = vld [vmem:[%s5107 + $0x2c] sm:$0xf]
    %v5120 = vld [vmem:[%s5107 + $0x30] sm:$0xf]
    %v5121 = vld [vmem:[%s5107 + $0x34] sm:$0xf]
    %v5122 = vld [vmem:[%s5107 + $0x38] sm:$0xf]
    %v5123 = vld [vmem:[%s5107 + $0x3c] sm:$0xf]
    %v5140 = vunpack.c.l.b16 %v5108
    %v5141 = vunpack.c.l.b16 %v5109
    %v5142 = vunpack.c.l.b16 %v5110
    %v5143 = vunpack.c.l.b16 %v5111
    %v5144 = vunpack.c.l.b16 %v5112
    %v5145 = vunpack.c.l.b16 %v5113
    %v5146 = vunpack.c.l.b16 %v5114
    %v5147 = vunpack.c.l.b16 %v5115
    %v5148 = vunpack.c.l.b16 %v5116
    %v5149 = vunpack.c.l.b16 %v5117
    %v5150 = vunpack.c.l.b16 %v5118
    %v5151 = vunpack.c.l.b16 %v5119
    %v5152 = vunpack.c.l.b16 %v5120
    %v5153 = vunpack.c.l.b16 %v5121
    %v5154 = vunpack.c.l.b16 %v5122
    %v5155 = vunpack.c.l.b16 %v5123
    %v5156 = vpack.c.b16 %v5141, %v5140
    %v5157 = vpack.c.b16 %v5143, %v5142
    %v5158 = vpack.c.b16 %v5145, %v5144
    %v5159 = vpack.c.b16 %v5147, %v5146
    %v5160 = vpack.c.b16 %v5149, %v5148
    %v5161 = vpack.c.b16 %v5151, %v5150
    %v5162 = vpack.c.b16 %v5153, %v5152
    %v5163 = vpack.c.b16 %v5155, %v5154
    %5172 = vmatprep.subr.bf16.mxu0 0
    %5173 = vmatpush1.bf16.msra.mxu0 %v5156
    %5174 = vmatprep.subr.bf16.mxu0 0
    %5175 = vmatpush1.bf16.msra.mxu0 %v5157
    %5176 = vmatprep.subr.bf16.mxu0 0
    %5177 = vmatpush1.bf16.msra.mxu0 %v5158
    %5178 = vmatprep.subr.bf16.mxu0 0
    %5179 = vmatpush1.bf16.msra.mxu0 %v5159
    %5180 = vmatprep.subr.bf16.mxu0 0
    %5181 = vmatpush1.bf16.msra.mxu0 %v5160
    %5182 = vmatprep.subr.bf16.mxu0 0
    %5183 = vmatpush1.bf16.msra.mxu0 %v5161
    %5184 = vmatprep.subr.bf16.mxu0 0
    %5185 = vmatpush1.bf16.msra.mxu0 %v5162
    %5186 = vmatprep.subr.bf16.mxu0 0
    %5187 = vmatpush1.bf16.msra.mxu0 %v5163
    %5188 = vmatprep.subr.bf16.mxu0 0
    %5189 = vmatpush1.bf16.msra.mxu0 0
    %5190 = vmatprep.subr.bf16.mxu0 0
    %5191 = vmatpush1.bf16.msra.mxu0 0
    %5192 = vmatprep.subr.bf16.mxu0 0
    %5193 = vmatpush1.bf16.msra.mxu0 0
    %5194 = vmatprep.subr.bf16.mxu0 0
    %5195 = vmatpush1.bf16.msra.mxu0 0
    %5196 = vmatprep.subr.bf16.mxu0 0
    %5197 = vmatpush1.bf16.msra.mxu0 0
    %5198 = vmatprep.subr.bf16.mxu0 0
    %5199 = vmatpush1.bf16.msra.mxu0 0
    %5200 = vmatprep.subr.bf16.mxu0 0
    %5201 = vmatpush1.bf16.msra.mxu0 0
    %5202 = vmatprep.subr.bf16.mxu0 0
    %5203 = vmatpush1.bf16.msra.mxu0 0
    %5204 = vmatprep.mubr.bf16.mxu0 0
    %5205 = vmatmul.mubr.bf16.gmra.mrb[0].mxu0 %v5099
    %v5206 = vpop.f32.mrb[0].mxu0
    %v5207 = vadd.f32 0.0, %v5206
    %v5208 = vpop.f32.mrb[0].mxu0
    %v5209 = vpop.f32.mrb[0].mxu0
    %v5210 = vadd.f32 0.0, %v5209
    %v5211 = vpop.f32.mrb[0].mxu0
    %5212 = vmatprep.mubr.bf16.mxu0 0
    %5213 = vmatmul.mubr.bf16.gmra.mrb[0].mxu0 %v5100
    %v5214 = vpop.f32.mrb[0].mxu0
    %v5215 = vadd.f32 0.0, %v5214
    %v5216 = vpop.f32.mrb[0].mxu0
    %v5217 = vpop.f32.mrb[0].mxu0
    %v5218 = vadd.f32 0.0, %v5217
    %v5219 = vpop.f32.mrb[0].mxu0
    %5220 = vmatprep.mubr.bf16.mxu0 0
    %5221 = vmatmul.mubr.bf16.gmra.mrb[0].mxu0 %v5101
    %v5222 = vpop.f32.mrb[0].mxu0
    %v5223 = vadd.f32 0.0, %v5222
    %v5224 = vpop.f32.mrb[0].mxu0
    %v5225 = vpop.f32.mrb[0].mxu0
    %v5226 = vadd.f32 0.0, %v5225
    %v5227 = vpop.f32.mrb[0].mxu0
    %5228 = vmatprep.mubr.bf16.mxu0 0
    %5229 = vmatmul.mubr.bf16.gmra.mrb[0].mxu0 %v5102
    %v5230 = vpop.f32.mrb[0].mxu0
    %v5231 = vadd.f32 0.0, %v5230
    %v5232 = vpop.f32.mrb[0].mxu0
    %v5233 = vpop.f32.mrb[0].mxu0
    %v5234 = vadd.f32 0.0, %v5233
    %v5235 = vpop.f32.mrb[0].mxu0
    %5236 = vmatprep.mubr.bf16.mxu0 0
    %5237 = vmatmul.mubr.bf16.gmra.mrb[0].mxu0 %v5103
    %v5238 = vpop.f32.mrb[0].mxu0
    %v5239 = vadd.f32 0.0, %v5238
    %v5240 = vpop.f32.mrb[0].mxu0
    %v5241 = vpop.f32.mrb[0].mxu0
    %v5242 = vadd.f32 0.0, %v5241
    %v5243 = vpop.f32.mrb[0].mxu0
    %5244 = vmatprep.mubr.bf16.mxu0 0
    %5245 = vmatmul.mubr.bf16.gmra.mrb[0].mxu0 %v5104
    %v5246 = vpop.f32.mrb[0].mxu0
    %v5247 = vadd.f32 0.0, %v5246
    %v5248 = vpop.f32.mrb[0].mxu0
    %v5249 = vpop.f32.mrb[0].mxu0
    %v5250 = vadd.f32 0.0, %v5249
    %v5251 = vpop.f32.mrb[0].mxu0
    %5252 = vmatprep.mubr.bf16.mxu0 0
    %5253 = vmatmul.mubr.bf16.gmra.mrb[0].mxu0 %v5105
    %v5254 = vpop.f32.mrb[0].mxu0
    %v5255 = vadd.f32 0.0, %v5254
    %v5256 = vpop.f32.mrb[0].mxu0
    %v5257 = vpop.f32.mrb[0].mxu0
    %v5258 = vadd.f32 0.0, %v5257
    %v5259 = vpop.f32.mrb[0].mxu0
    %5260 = vmatprep.mubr.bf16.mxu0 0
    %5261 = vmatmul.mubr.bf16.gmra.mrb[0].mxu0 %v5106
    %v5262 = vpop.f32.mrb[0].mxu0
    %v5263 = vadd.f32 0.0, %v5262
    %v5264 = vpop.f32.mrb[0].mxu0
    %v5265 = vpop.f32.mrb[0].mxu0
    %v5266 = vadd.f32 0.0, %v5265
    %v5267 = vpop.f32.mrb[0].mxu0
    %5268 = vdwg.mxu0
    %v5269 = vadd.f32 %v5071, %v5207
    %v5270 = vadd.f32 %v5072, %v5210
    %v5271 = vadd.f32 %v5073, %v5215
    %v5272 = vadd.f32 %v5074, %v5218
    %v5273 = vadd.f32 %v5075, %v5223
    %v5274 = vadd.f32 %v5076, %v5226
    %v5275 = vadd.f32 %v5077, %v5231
    %v5276 = vadd.f32 %v5078, %v5234
    %v5277 = vadd.f32 %v5079, %v5239
    %v5278 = vadd.f32 %v5080, %v5242
    %v5279 = vadd.f32 %v5081, %v5247
    %v5280 = vadd.f32 %v5082, %v5250
    %v5281 = vadd.f32 %v5083, %v5255
    %v5282 = vadd.f32 %v5084, %v5258
    %v5283 = vadd.f32 %v5085, %v5263
    %v5284 = vadd.f32 %v5086, %v5266
    %v5285 = vrot.slane %v4190, 2
    %v5286 = vrot.slane %v4191, 2
    %v5287 = vsel %vm4650, %v5285, %v5286
    %v5288 = vrot.slane %v4210, 2
    %v5289 = vrot.slane %v4211, 2
    %v5290 = vsel %vm4650, %v5288, %v5289
    %v5293 = vpack.c.bf16 %v4659, %v4656
    %v5294 = vpack.c.bf16 %v4665, %v4662
    %v5295 = vpack.c.bf16 %v4671, %v4668
    %v5296 = vpack.c.bf16 %v5287, %v4674
    %v5297 = vpack.c.bf16 %v4683, %v4680
    %v5298 = vpack.c.bf16 %v4689, %v4686
    %v5299 = vpack.c.bf16 %v4695, %v4692
    %v5300 = vpack.c.bf16 %v5290, %v4698
    %s5301 = scalar_lea.vmem %s3, 320
    %v5302 = vld [vmem:[%s5301] sm:$0xf]
    %v5303 = vld [vmem:[%s5301 + $0x4] sm:$0xf]
    %v5304 = vld [vmem:[%s5301 + $0x8] sm:$0xf]
    %v5305 = vld [vmem:[%s5301 + $0xc] sm:$0xf]
    %v5306 = vld [vmem:[%s5301 + $0x10] sm:$0xf]
    %v5307 = vld [vmem:[%s5301 + $0x14] sm:$0xf]
    %v5308 = vld [vmem:[%s5301 + $0x18] sm:$0xf]
    %v5309 = vld [vmem:[%s5301 + $0x1c] sm:$0xf]
    %v5310 = vld [vmem:[%s5301 + $0x20] sm:$0xf]
    %v5311 = vld [vmem:[%s5301 + $0x24] sm:$0xf]
    %v5312 = vld [vmem:[%s5301 + $0x28] sm:$0xf]
    %v5313 = vld [vmem:[%s5301 + $0x2c] sm:$0xf]
    %v5314 = vld [vmem:[%s5301 + $0x30] sm:$0xf]
    %v5315 = vld [vmem:[%s5301 + $0x34] sm:$0xf]
    %v5316 = vld [vmem:[%s5301 + $0x38] sm:$0xf]
    %v5317 = vld [vmem:[%s5301 + $0x3c] sm:$0xf]
    %v5334 = vunpack.c.l.b16 %v5302
    %v5335 = vunpack.c.l.b16 %v5303
    %v5336 = vunpack.c.l.b16 %v5304
    %v5337 = vunpack.c.l.b16 %v5305
    %v5338 = vunpack.c.l.b16 %v5306
    %v5339 = vunpack.c.l.b16 %v5307
    %v5340 = vunpack.c.l.b16 %v5308
    %v5341 = vunpack.c.l.b16 %v5309
    %v5342 = vunpack.c.l.b16 %v5310
    %v5343 = vunpack.c.l.b16 %v5311
    %v5344 = vunpack.c.l.b16 %v5312
    %v5345 = vunpack.c.l.b16 %v5313
    %v5346 = vunpack.c.l.b16 %v5314
    %v5347 = vunpack.c.l.b16 %v5315
    %v5348 = vunpack.c.l.b16 %v5316
    %v5349 = vunpack.c.l.b16 %v5317
    %v5350 = vpack.c.b16 %v5335, %v5334
    %v5351 = vpack.c.b16 %v5337, %v5336
    %v5352 = vpack.c.b16 %v5339, %v5338
    %v5353 = vpack.c.b16 %v5341, %v5340
    %v5354 = vpack.c.b16 %v5343, %v5342
    %v5355 = vpack.c.b16 %v5345, %v5344
    %v5356 = vpack.c.b16 %v5347, %v5346
    %v5357 = vpack.c.b16 %v5349, %v5348
    %5366 = vmatprep.subr.bf16.mxu0 0
    %5367 = vmatpush1.bf16.msra.mxu0 %v5350
    %5368 = vmatprep.subr.bf16.mxu0 0
    %5369 = vmatpush1.bf16.msra.mxu0 %v5351
    %5370 = vmatprep.subr.bf16.mxu0 0
    %5371 = vmatpush1.bf16.msra.mxu0 %v5352
    %5372 = vmatprep.subr.bf16.mxu0 0
    %5373 = vmatpush1.bf16.msra.mxu0 %v5353
    %5374 = vmatprep.subr.bf16.mxu0 0
    %5375 = vmatpush1.bf16.msra.mxu0 %v5354
    %5376 = vmatprep.subr.bf16.mxu0 0
    %5377 = vmatpush1.bf16.msra.mxu0 %v5355
    %5378 = vmatprep.subr.bf16.mxu0 0
    %5379 = vmatpush1.bf16.msra.mxu0 %v5356
    %5380 = vmatprep.subr.bf16.mxu0 0
    %5381 = vmatpush1.bf16.msra.mxu0 %v5357
    %5382 = vmatprep.subr.bf16.mxu0 0
    %5383 = vmatpush1.bf16.msra.mxu0 0
    %5384 = vmatprep.subr.bf16.mxu0 0
    %5385 = vmatpush1.bf16.msra.mxu0 0
    %5386 = vmatprep.subr.bf16.mxu0 0
    %5387 = vmatpush1.bf16.msra.mxu0 0
    %5388 = vmatprep.subr.bf16.mxu0 0
    %5389 = vmatpush1.bf16.msra.mxu0 0
    %5390 = vmatprep.subr.bf16.mxu0 0
    %5391 = vmatpush1.bf16.msra.mxu0 0
    %5392 = vmatprep.subr.bf16.mxu0 0
    %5393 = vmatpush1.bf16.msra.mxu0 0
    %5394 = vmatprep.subr.bf16.mxu0 0
    %5395 = vmatpush1.bf16.msra.mxu0 0
    %5396 = vmatprep.subr.bf16.mxu0 0
    %5397 = vmatpush1.bf16.msra.mxu0 0
    %5398 = vmatprep.mubr.bf16.mxu0 0
    %5399 = vmatmul.mubr.bf16.gmra.mrb[0].mxu0 %v5293
    %v5400 = vpop.f32.mrb[0].mxu0
    %v5401 = vadd.f32 0.0, %v5400
    %v5402 = vpop.f32.mrb[0].mxu0
    %v5403 = vpop.f32.mrb[0].mxu0
    %v5404 = vadd.f32 0.0, %v5403
    %v5405 = vpop.f32.mrb[0].mxu0
    %5406 = vmatprep.mubr.bf16.mxu0 0
    %5407 = vmatmul.mubr.bf16.gmra.mrb[0].mxu0 %v5294
    %v5408 = vpop.f32.mrb[0].mxu0
    %v5409 = vadd.f32 0.0, %v5408
    %v5410 = vpop.f32.mrb[0].mxu0
    %v5411 = vpop.f32.mrb[0].mxu0
    %v5412 = vadd.f32 0.0, %v5411
    %v5413 = vpop.f32.mrb[0].mxu0
    %5414 = vmatprep.mubr.bf16.mxu0 0
    %5415 = vmatmul.mubr.bf16.gmra.mrb[0].mxu0 %v5295
    %v5416 = vpop.f32.mrb[0].mxu0
    %v5417 = vadd.f32 0.0, %v5416
    %v5418 = vpop.f32.mrb[0].mxu0
    %v5419 = vpop.f32.mrb[0].mxu0
    %v5420 = vadd.f32 0.0, %v5419
    %v5421 = vpop.f32.mrb[0].mxu0
    %5422 = vmatprep.mubr.bf16.mxu0 0
    %5423 = vmatmul.mubr.bf16.gmra.mrb[0].mxu0 %v5296
    %v5424 = vpop.f32.mrb[0].mxu0
    %v5425 = vadd.f32 0.0, %v5424
    %v5426 = vpop.f32.mrb[0].mxu0
    %v5427 = vpop.f32.mrb[0].mxu0
    %v5428 = vadd.f32 0.0, %v5427
    %v5429 = vpop.f32.mrb[0].mxu0
    %5430 = vmatprep.mubr.bf16.mxu0 0
    %5431 = vmatmul.mubr.bf16.gmra.mrb[0].mxu0 %v5297
    %v5432 = vpop.f32.mrb[0].mxu0
    %v5433 = vadd.f32 0.0, %v5432
    %v5434 = vpop.f32.mrb[0].mxu0
    %v5435 = vpop.f32.mrb[0].mxu0
    %v5436 = vadd.f32 0.0, %v5435
    %v5437 = vpop.f32.mrb[0].mxu0
    %5438 = vmatprep.mubr.bf16.mxu0 0
    %5439 = vmatmul.mubr.bf16.gmra.mrb[0].mxu0 %v5298
    %v5440 = vpop.f32.mrb[0].mxu0
    %v5441 = vadd.f32 0.0, %v5440
    %v5442 = vpop.f32.mrb[0].mxu0
    %v5443 = vpop.f32.mrb[0].mxu0
    %v5444 = vadd.f32 0.0, %v5443
    %v5445 = vpop.f32.mrb[0].mxu0
    %5446 = vmatprep.mubr.bf16.mxu0 0
    %5447 = vmatmul.mubr.bf16.gmra.mrb[0].mxu0 %v5299
    %v5448 = vpop.f32.mrb[0].mxu0
    %v5449 = vadd.f32 0.0, %v5448
    %v5450 = vpop.f32.mrb[0].mxu0
    %v5451 = vpop.f32.mrb[0].mxu0
    %v5452 = vadd.f32 0.0, %v5451
    %v5453 = vpop.f32.mrb[0].mxu0
    %5454 = vmatprep.mubr.bf16.mxu0 0
    %5455 = vmatmul.mubr.bf16.gmra.mrb[0].mxu0 %v5300
    %v5456 = vpop.f32.mrb[0].mxu0
    %v5457 = vadd.f32 0.0, %v5456
    %v5458 = vpop.f32.mrb[0].mxu0
    %v5459 = vpop.f32.mrb[0].mxu0
    %v5460 = vadd.f32 0.0, %v5459
    %v5461 = vpop.f32.mrb[0].mxu0
    %5462 = vdwg.mxu0
    %v5463 = vadd.f32 %v5269, %v5401
    %v5464 = vadd.f32 %v5270, %v5404
    %v5465 = vadd.f32 %v5271, %v5409
    %v5466 = vadd.f32 %v5272, %v5412
    %v5467 = vadd.f32 %v5273, %v5417
    %v5468 = vadd.f32 %v5274, %v5420
    %v5469 = vadd.f32 %v5275, %v5425
    %v5470 = vadd.f32 %v5276, %v5428
    %v5471 = vadd.f32 %v5277, %v5433
    %v5472 = vadd.f32 %v5278, %v5436
    %v5473 = vadd.f32 %v5279, %v5441
    %v5474 = vadd.f32 %v5280, %v5444
    %v5475 = vadd.f32 %v5281, %v5449
    %v5476 = vadd.f32 %v5282, %v5452
    %v5477 = vadd.f32 %v5283, %v5457
    %v5478 = vadd.f32 %v5284, %v5460
    %v5479 = vpack.c.bf16 %v4192, %v4190
    %v5480 = vpack.c.bf16 %v4212, %v4210
    %s5481 = scalar_lea.vmem %s3, 384
    %v5482 = vld [vmem:[%s5481] sm:$0xf]
    %v5483 = vld [vmem:[%s5481 + $0x4] sm:$0xf]
    %v5484 = vld [vmem:[%s5481 + $0x8] sm:$0xf]
    %v5485 = vld [vmem:[%s5481 + $0xc] sm:$0xf]
    %v5486 = vld [vmem:[%s5481 + $0x10] sm:$0xf]
    %v5487 = vld [vmem:[%s5481 + $0x14] sm:$0xf]
    %v5488 = vld [vmem:[%s5481 + $0x18] sm:$0xf]
    %v5489 = vld [vmem:[%s5481 + $0x1c] sm:$0xf]
    %v5490 = vld [vmem:[%s5481 + $0x20] sm:$0xf]
    %v5491 = vld [vmem:[%s5481 + $0x24] sm:$0xf]
    %v5492 = vld [vmem:[%s5481 + $0x28] sm:$0xf]
    %v5493 = vld [vmem:[%s5481 + $0x2c] sm:$0xf]
    %v5494 = vld [vmem:[%s5481 + $0x30] sm:$0xf]
    %v5495 = vld [vmem:[%s5481 + $0x34] sm:$0xf]
    %v5496 = vld [vmem:[%s5481 + $0x38] sm:$0xf]
    %v5497 = vld [vmem:[%s5481 + $0x3c] sm:$0xf]
    %v5514 = vunpack.c.l.b16 %v5482
    %v5515 = vunpack.c.l.b16 %v5483
    %v5516 = vunpack.c.l.b16 %v5484
    %v5517 = vunpack.c.l.b16 %v5485
    %v5518 = vunpack.c.l.b16 %v5486
    %v5519 = vunpack.c.l.b16 %v5487
    %v5520 = vunpack.c.l.b16 %v5488
    %v5521 = vunpack.c.l.b16 %v5489
    %v5522 = vunpack.c.l.b16 %v5490
    %v5523 = vunpack.c.l.b16 %v5491
    %v5524 = vunpack.c.l.b16 %v5492
    %v5525 = vunpack.c.l.b16 %v5493
    %v5526 = vunpack.c.l.b16 %v5494
    %v5527 = vunpack.c.l.b16 %v5495
    %v5528 = vunpack.c.l.b16 %v5496
    %v5529 = vunpack.c.l.b16 %v5497
    %v5530 = vpack.c.b16 %v5515, %v5514
    %v5531 = vpack.c.b16 %v5517, %v5516
    %v5532 = vpack.c.b16 %v5519, %v5518
    %v5533 = vpack.c.b16 %v5521, %v5520
    %v5534 = vpack.c.b16 %v5523, %v5522
    %v5535 = vpack.c.b16 %v5525, %v5524
    %v5536 = vpack.c.b16 %v5527, %v5526
    %v5537 = vpack.c.b16 %v5529, %v5528
    %5546 = vmatprep.subr.bf16.mxu0 0
    %5547 = vmatpush1.bf16.msra.mxu0 %v5530
    %5548 = vmatprep.subr.bf16.mxu0 0
    %5549 = vmatpush1.bf16.msra.mxu0 %v5531
    %5550 = vmatprep.subr.bf16.mxu0 0
    %5551 = vmatpush1.bf16.msra.mxu0 %v5532
    %5552 = vmatprep.subr.bf16.mxu0 0
    %5553 = vmatpush1.bf16.msra.mxu0 %v5533
    %5554 = vmatprep.subr.bf16.mxu0 0
    %5555 = vmatpush1.bf16.msra.mxu0 %v5534
    %5556 = vmatprep.subr.bf16.mxu0 0
    %5557 = vmatpush1.bf16.msra.mxu0 %v5535
    %5558 = vmatprep.subr.bf16.mxu0 0
    %5559 = vmatpush1.bf16.msra.mxu0 %v5536
    %5560 = vmatprep.subr.bf16.mxu0 0
    %5561 = vmatpush1.bf16.msra.mxu0 %v5537
    %5562 = vmatprep.subr.bf16.mxu0 0
    %5563 = vmatpush1.bf16.msra.mxu0 0
    %5564 = vmatprep.subr.bf16.mxu0 0
    %5565 = vmatpush1.bf16.msra.mxu0 0
    %5566 = vmatprep.subr.bf16.mxu0 0
    %5567 = vmatpush1.bf16.msra.mxu0 0
    %5568 = vmatprep.subr.bf16.mxu0 0
    %5569 = vmatpush1.bf16.msra.mxu0 0
    %5570 = vmatprep.subr.bf16.mxu0 0
    %5571 = vmatpush1.bf16.msra.mxu0 0
    %5572 = vmatprep.subr.bf16.mxu0 0
    %5573 = vmatpush1.bf16.msra.mxu0 0
    %5574 = vmatprep.subr.bf16.mxu0 0
    %5575 = vmatpush1.bf16.msra.mxu0 0
    %5576 = vmatprep.subr.bf16.mxu0 0
    %5577 = vmatpush1.bf16.msra.mxu0 0
    %5578 = vmatprep.mubr.bf16.mxu0 0
    %5579 = vmatmul.mubr.bf16.gmra.mrb[0].mxu0 %v4215
    %v5580 = vpop.f32.mrb[0].mxu0
    %v5581 = vadd.f32 0.0, %v5580
    %v5582 = vpop.f32.mrb[0].mxu0
    %v5583 = vpop.f32.mrb[0].mxu0
    %v5584 = vadd.f32 0.0, %v5583
    %v5585 = vpop.f32.mrb[0].mxu0
    %5586 = vmatprep.mubr.bf16.mxu0 0
    %5587 = vmatmul.mubr.bf16.gmra.mrb[0].mxu0 %v4216
    %v5588 = vpop.f32.mrb[0].mxu0
    %v5589 = vadd.f32 0.0, %v5588
    %v5590 = vpop.f32.mrb[0].mxu0
    %v5591 = vpop.f32.mrb[0].mxu0
    %v5592 = vadd.f32 0.0, %v5591
    %v5593 = vpop.f32.mrb[0].mxu0
    %5594 = vmatprep.mubr.bf16.mxu0 0
    %5595 = vmatmul.mubr.bf16.gmra.mrb[0].mxu0 %v4217
    %v5596 = vpop.f32.mrb[0].mxu0
    %v5597 = vadd.f32 0.0, %v5596
    %v5598 = vpop.f32.mrb[0].mxu0
    %v5599 = vpop.f32.mrb[0].mxu0
    %v5600 = vadd.f32 0.0, %v5599
    %v5601 = vpop.f32.mrb[0].mxu0
    %5602 = vmatprep.mubr.bf16.mxu0 0
    %5603 = vmatmul.mubr.bf16.gmra.mrb[0].mxu0 %v5479
    %v5604 = vpop.f32.mrb[0].mxu0
    %v5605 = vadd.f32 0.0, %v5604
    %v5606 = vpop.f32.mrb[0].mxu0
    %v5607 = vpop.f32.mrb[0].mxu0
    %v5608 = vadd.f32 0.0, %v5607
    %v5609 = vpop.f32.mrb[0].mxu0
    %5610 = vmatprep.mubr.bf16.mxu0 0
    %5611 = vmatmul.mubr.bf16.gmra.mrb[0].mxu0 %v4219
    %v5612 = vpop.f32.mrb[0].mxu0
    %v5613 = vadd.f32 0.0, %v5612
    %v5614 = vpop.f32.mrb[0].mxu0
    %v5615 = vpop.f32.mrb[0].mxu0
    %v5616 = vadd.f32 0.0, %v5615
    %v5617 = vpop.f32.mrb[0].mxu0
    %5618 = vmatprep.mubr.bf16.mxu0 0
    %5619 = vmatmul.mubr.bf16.gmra.mrb[0].mxu0 %v4220
    %v5620 = vpop.f32.mrb[0].mxu0
    %v5621 = vadd.f32 0.0, %v5620
    %v5622 = vpop.f32.mrb[0].mxu0
    %v5623 = vpop.f32.mrb[0].mxu0
    %v5624 = vadd.f32 0.0, %v5623
    %v5625 = vpop.f32.mrb[0].mxu0
    %5626 = vmatprep.mubr.bf16.mxu0 0
    %5627 = vmatmul.mubr.bf16.gmra.mrb[0].mxu0 %v4221
    %v5628 = vpop.f32.mrb[0].mxu0
    %v5629 = vadd.f32 0.0, %v5628
    %v5630 = vpop.f32.mrb[0].mxu0
    %v5631 = vpop.f32.mrb[0].mxu0
    %v5632 = vadd.f32 0.0, %v5631
    %v5633 = vpop.f32.mrb[0].mxu0
    %5634 = vmatprep.mubr.bf16.mxu0 0
    %5635 = vmatmul.mubr.bf16.gmra.mrb[0].mxu0 %v5480
    %v5636 = vpop.f32.mrb[0].mxu0
    %v5637 = vadd.f32 0.0, %v5636
    %v5638 = vpop.f32.mrb[0].mxu0
    %v5639 = vpop.f32.mrb[0].mxu0
    %v5640 = vadd.f32 0.0, %v5639
    %v5641 = vpop.f32.mrb[0].mxu0
    %5642 = vdwg.mxu0
    %v5643 = vadd.f32 %v5463, %v5581
    %v5644 = vadd.f32 %v5464, %v5584
    %v5645 = vadd.f32 %v5465, %v5589
    %v5646 = vadd.f32 %v5466, %v5592
    %v5647 = vadd.f32 %v5467, %v5597
    %v5648 = vadd.f32 %v5468, %v5600
    %v5649 = vadd.f32 %v5469, %v5605
    %v5650 = vadd.f32 %v5470, %v5608
    %v5651 = vadd.f32 %v5471, %v5613
    %v5652 = vadd.f32 %v5472, %v5616
    %v5653 = vadd.f32 %v5473, %v5621
    %v5654 = vadd.f32 %v5474, %v5624
    %v5655 = vadd.f32 %v5475, %v5629
    %v5656 = vadd.f32 %v5476, %v5632
    %v5657 = vadd.f32 %v5477, %v5637
    %v5658 = vadd.f32 %v5478, %v5640
    %v5663 = vrot.slane %v4192, 1
    %v5664 = vrot.slane %v4193, 1
    %v5665 = vsel %vm4270, %v5663, %v5664
    %v5666 = vrot.slane %v4212, 1
    %v5667 = vrot.slane %v4213, 1
    %v5668 = vsel %vm4270, %v5666, %v5667
    %v5671 = vpack.c.bf16 %v5665, %v5093
    %v5672 = vpack.c.bf16 %v5668, %v5096
    %s5673 = scalar_lea.vmem %s3, 448
    %v5674 = vld [vmem:[%s5673] sm:$0xf]
    %v5675 = vld [vmem:[%s5673 + $0x4] sm:$0xf]
    %v5676 = vld [vmem:[%s5673 + $0x8] sm:$0xf]
    %v5677 = vld [vmem:[%s5673 + $0xc] sm:$0xf]
    %v5678 = vld [vmem:[%s5673 + $0x10] sm:$0xf]
    %v5679 = vld [vmem:[%s5673 + $0x14] sm:$0xf]
    %v5680 = vld [vmem:[%s5673 + $0x18] sm:$0xf]
    %v5681 = vld [vmem:[%s5673 + $0x1c] sm:$0xf]
    %v5682 = vld [vmem:[%s5673 + $0x20] sm:$0xf]
    %v5683 = vld [vmem:[%s5673 + $0x24] sm:$0xf]
    %v5684 = vld [vmem:[%s5673 + $0x28] sm:$0xf]
    %v5685 = vld [vmem:[%s5673 + $0x2c] sm:$0xf]
    %v5686 = vld [vmem:[%s5673 + $0x30] sm:$0xf]
    %v5687 = vld [vmem:[%s5673 + $0x34] sm:$0xf]
    %v5688 = vld [vmem:[%s5673 + $0x38] sm:$0xf]
    %v5689 = vld [vmem:[%s5673 + $0x3c] sm:$0xf]
    %v5706 = vunpack.c.l.b16 %v5674
    %v5707 = vunpack.c.l.b16 %v5675
    %v5708 = vunpack.c.l.b16 %v5676
    %v5709 = vunpack.c.l.b16 %v5677
    %v5710 = vunpack.c.l.b16 %v5678
    %v5711 = vunpack.c.l.b16 %v5679
    %v5712 = vunpack.c.l.b16 %v5680
    %v5713 = vunpack.c.l.b16 %v5681
    %v5714 = vunpack.c.l.b16 %v5682
    %v5715 = vunpack.c.l.b16 %v5683
    %v5716 = vunpack.c.l.b16 %v5684
    %v5717 = vunpack.c.l.b16 %v5685
    %v5718 = vunpack.c.l.b16 %v5686
    %v5719 = vunpack.c.l.b16 %v5687
    %v5720 = vunpack.c.l.b16 %v5688
    %v5721 = vunpack.c.l.b16 %v5689
    %v5722 = vpack.c.b16 %v5707, %v5706
    %v5723 = vpack.c.b16 %v5709, %v5708
    %v5724 = vpack.c.b16 %v5711, %v5710
    %v5725 = vpack.c.b16 %v5713, %v5712
    %v5726 = vpack.c.b16 %v5715, %v5714
    %v5727 = vpack.c.b16 %v5717, %v5716
    %v5728 = vpack.c.b16 %v5719, %v5718
    %v5729 = vpack.c.b16 %v5721, %v5720
    %5738 = vmatprep.subr.bf16.mxu0 0
    %5739 = vmatpush1.bf16.msra.mxu0 %v5722
    %5740 = vmatprep.subr.bf16.mxu0 0
    %5741 = vmatpush1.bf16.msra.mxu0 %v5723
    %5742 = vmatprep.subr.bf16.mxu0 0
    %5743 = vmatpush1.bf16.msra.mxu0 %v5724
    %5744 = vmatprep.subr.bf16.mxu0 0
    %5745 = vmatpush1.bf16.msra.mxu0 %v5725
    %5746 = vmatprep.subr.bf16.mxu0 0
    %5747 = vmatpush1.bf16.msra.mxu0 %v5726
    %5748 = vmatprep.subr.bf16.mxu0 0
    %5749 = vmatpush1.bf16.msra.mxu0 %v5727
    %5750 = vmatprep.subr.bf16.mxu0 0
    %5751 = vmatpush1.bf16.msra.mxu0 %v5728
    %5752 = vmatprep.subr.bf16.mxu0 0
    %5753 = vmatpush1.bf16.msra.mxu0 %v5729
    %5754 = vmatprep.subr.bf16.mxu0 0
    %5755 = vmatpush1.bf16.msra.mxu0 0
    %5756 = vmatprep.subr.bf16.mxu0 0
    %5757 = vmatpush1.bf16.msra.mxu0 0
    %5758 = vmatprep.subr.bf16.mxu0 0
    %5759 = vmatpush1.bf16.msra.mxu0 0
    %5760 = vmatprep.subr.bf16.mxu0 0
    %5761 = vmatpush1.bf16.msra.mxu0 0
    %5762 = vmatprep.subr.bf16.mxu0 0
    %5763 = vmatpush1.bf16.msra.mxu0 0
    %5764 = vmatprep.subr.bf16.mxu0 0
    %5765 = vmatpush1.bf16.msra.mxu0 0
    %5766 = vmatprep.subr.bf16.mxu0 0
    %5767 = vmatpush1.bf16.msra.mxu0 0
    %5768 = vmatprep.subr.bf16.mxu0 0
    %5769 = vmatpush1.bf16.msra.mxu0 0
    %5770 = vmatprep.mubr.bf16.mxu0 0
    %5771 = vmatmul.mubr.bf16.gmra.mrb[0].mxu0 %v4336
    %v5772 = vpop.f32.mrb[0].mxu0
    %v5773 = vadd.f32 0.0, %v5772
    %v5774 = vpop.f32.mrb[0].mxu0
    %v5775 = vpop.f32.mrb[0].mxu0
    %v5776 = vadd.f32 0.0, %v5775
    %v5777 = vpop.f32.mrb[0].mxu0
    %5778 = vmatprep.mubr.bf16.mxu0 0
    %5779 = vmatmul.mubr.bf16.gmra.mrb[0].mxu0 %v4337
    %v5780 = vpop.f32.mrb[0].mxu0
    %v5781 = vadd.f32 0.0, %v5780
    %v5782 = vpop.f32.mrb[0].mxu0
    %v5783 = vpop.f32.mrb[0].mxu0
    %v5784 = vadd.f32 0.0, %v5783
    %v5785 = vpop.f32.mrb[0].mxu0
    %5786 = vmatprep.mubr.bf16.mxu0 0
    %5787 = vmatmul.mubr.bf16.gmra.mrb[0].mxu0 %v4338
    %v5788 = vpop.f32.mrb[0].mxu0
    %v5789 = vadd.f32 0.0, %v5788
    %v5790 = vpop.f32.mrb[0].mxu0
    %v5791 = vpop.f32.mrb[0].mxu0
    %v5792 = vadd.f32 0.0, %v5791
    %v5793 = vpop.f32.mrb[0].mxu0
    %5794 = vmatprep.mubr.bf16.mxu0 0
    %5795 = vmatmul.mubr.bf16.gmra.mrb[0].mxu0 %v5671
    %v5796 = vpop.f32.mrb[0].mxu0
    %v5797 = vadd.f32 0.0, %v5796
    %v5798 = vpop.f32.mrb[0].mxu0
    %v5799 = vpop.f32.mrb[0].mxu0
    %v5800 = vadd.f32 0.0, %v5799
    %v5801 = vpop.f32.mrb[0].mxu0
    %5802 = vmatprep.mubr.bf16.mxu0 0
    %5803 = vmatmul.mubr.bf16.gmra.mrb[0].mxu0 %v4340
    %v5804 = vpop.f32.mrb[0].mxu0
    %v5805 = vadd.f32 0.0, %v5804
    %v5806 = vpop.f32.mrb[0].mxu0
    %v5807 = vpop.f32.mrb[0].mxu0
    %v5808 = vadd.f32 0.0, %v5807
    %v5809 = vpop.f32.mrb[0].mxu0
    %5810 = vmatprep.mubr.bf16.mxu0 0
    %5811 = vmatmul.mubr.bf16.gmra.mrb[0].mxu0 %v4341
    %v5812 = vpop.f32.mrb[0].mxu0
    %v5813 = vadd.f32 0.0, %v5812
    %v5814 = vpop.f32.mrb[0].mxu0
    %v5815 = vpop.f32.mrb[0].mxu0
    %v5816 = vadd.f32 0.0, %v5815
    %v5817 = vpop.f32.mrb[0].mxu0
    %5818 = vmatprep.mubr.bf16.mxu0 0
    %5819 = vmatmul.mubr.bf16.gmra.mrb[0].mxu0 %v4342
    %v5820 = vpop.f32.mrb[0].mxu0
    %v5821 = vadd.f32 0.0, %v5820
    %v5822 = vpop.f32.mrb[0].mxu0
    %v5823 = vpop.f32.mrb[0].mxu0
    %v5824 = vadd.f32 0.0, %v5823
    %v5825 = vpop.f32.mrb[0].mxu0
    %5826 = vmatprep.mubr.bf16.mxu0 0
    %5827 = vmatmul.mubr.bf16.gmra.mrb[0].mxu0 %v5672
    %v5828 = vpop.f32.mrb[0].mxu0
    %v5829 = vadd.f32 0.0, %v5828
    %v5830 = vpop.f32.mrb[0].mxu0
    %v5831 = vpop.f32.mrb[0].mxu0
    %v5832 = vadd.f32 0.0, %v5831
    %v5833 = vpop.f32.mrb[0].mxu0
    %5834 = vdwg.mxu0
    %v5835 = vadd.f32 %v5643, %v5773
    %v5836 = vadd.f32 %v5644, %v5776
    %v5837 = vadd.f32 %v5645, %v5781
    %v5838 = vadd.f32 %v5646, %v5784
    %v5839 = vadd.f32 %v5647, %v5789
    %v5840 = vadd.f32 %v5648, %v5792
    %v5841 = vadd.f32 %v5649, %v5797
    %v5842 = vadd.f32 %v5650, %v5800
    %v5843 = vadd.f32 %v5651, %v5805
    %v5844 = vadd.f32 %v5652, %v5808
    %v5845 = vadd.f32 %v5653, %v5813
    %v5846 = vadd.f32 %v5654, %v5816
    %v5847 = vadd.f32 %v5655, %v5821
    %v5848 = vadd.f32 %v5656, %v5824
    %v5849 = vadd.f32 %v5657, %v5829
    %v5850 = vadd.f32 %v5658, %v5832
    %v5851 = vrot.slane %v4192, 2
    %v5852 = vrot.slane %v4193, 2
    %v5853 = vsel %vm4650, %v5851, %v5852
    %v5854 = vrot.slane %v4212, 2
    %v5855 = vrot.slane %v4213, 2
    %v5856 = vsel %vm4650, %v5854, %v5855
    %v5859 = vpack.c.bf16 %v5853, %v5287
    %v5860 = vpack.c.bf16 %v5856, %v5290
    %s5861 = scalar_lea.vmem %s3, 512
    %v5862 = vld [vmem:[%s5861] sm:$0xf]
    %v5863 = vld [vmem:[%s5861 + $0x4] sm:$0xf]
    %v5864 = vld [vmem:[%s5861 + $0x8] sm:$0xf]
    %v5865 = vld [vmem:[%s5861 + $0xc] sm:$0xf]
    %v5866 = vld [vmem:[%s5861 + $0x10] sm:$0xf]
    %v5867 = vld [vmem:[%s5861 + $0x14] sm:$0xf]
    %v5868 = vld [vmem:[%s5861 + $0x18] sm:$0xf]
    %v5869 = vld [vmem:[%s5861 + $0x1c] sm:$0xf]
    %v5870 = vld [vmem:[%s5861 + $0x20] sm:$0xf]
    %v5871 = vld [vmem:[%s5861 + $0x24] sm:$0xf]
    %v5872 = vld [vmem:[%s5861 + $0x28] sm:$0xf]
    %v5873 = vld [vmem:[%s5861 + $0x2c] sm:$0xf]
    %v5874 = vld [vmem:[%s5861 + $0x30] sm:$0xf]
    %v5875 = vld [vmem:[%s5861 + $0x34] sm:$0xf]
    %v5876 = vld [vmem:[%s5861 + $0x38] sm:$0xf]
    %v5877 = vld [vmem:[%s5861 + $0x3c] sm:$0xf]
    %v5894 = vunpack.c.l.b16 %v5862
    %v5895 = vunpack.c.l.b16 %v5863
    %v5896 = vunpack.c.l.b16 %v5864
    %v5897 = vunpack.c.l.b16 %v5865
    %v5898 = vunpack.c.l.b16 %v5866
    %v5899 = vunpack.c.l.b16 %v5867
    %v5900 = vunpack.c.l.b16 %v5868
    %v5901 = vunpack.c.l.b16 %v5869
    %v5902 = vunpack.c.l.b16 %v5870
    %v5903 = vunpack.c.l.b16 %v5871
    %v5904 = vunpack.c.l.b16 %v5872
    %v5905 = vunpack.c.l.b16 %v5873
    %v5906 = vunpack.c.l.b16 %v5874
    %v5907 = vunpack.c.l.b16 %v5875
    %v5908 = vunpack.c.l.b16 %v5876
    %v5909 = vunpack.c.l.b16 %v5877
    %v5910 = vpack.c.b16 %v5895, %v5894
    %v5911 = vpack.c.b16 %v5897, %v5896
    %v5912 = vpack.c.b16 %v5899, %v5898
    %v5913 = vpack.c.b16 %v5901, %v5900
    %v5914 = vpack.c.b16 %v5903, %v5902
    %v5915 = vpack.c.b16 %v5905, %v5904
    %v5916 = vpack.c.b16 %v5907, %v5906
    %v5917 = vpack.c.b16 %v5909, %v5908
    %5926 = vmatprep.subr.bf16.mxu0 0
    %5927 = vmatpush1.bf16.msra.mxu0 %v5910
    %5928 = vmatprep.subr.bf16.mxu0 0
    %5929 = vmatpush1.bf16.msra.mxu0 %v5911
    %5930 = vmatprep.subr.bf16.mxu0 0
    %5931 = vmatpush1.bf16.msra.mxu0 %v5912
    %5932 = vmatprep.subr.bf16.mxu0 0
    %5933 = vmatpush1.bf16.msra.mxu0 %v5913
    %5934 = vmatprep.subr.bf16.mxu0 0
    %5935 = vmatpush1.bf16.msra.mxu0 %v5914
    %5936 = vmatprep.subr.bf16.mxu0 0
    %5937 = vmatpush1.bf16.msra.mxu0 %v5915
    %5938 = vmatprep.subr.bf16.mxu0 0
    %5939 = vmatpush1.bf16.msra.mxu0 %v5916
    %5940 = vmatprep.subr.bf16.mxu0 0
    %5941 = vmatpush1.bf16.msra.mxu0 %v5917
    %5942 = vmatprep.subr.bf16.mxu0 0
    %5943 = vmatpush1.bf16.msra.mxu0 0
    %5944 = vmatprep.subr.bf16.mxu0 0
    %5945 = vmatpush1.bf16.msra.mxu0 0
    %5946 = vmatprep.subr.bf16.mxu0 0
    %5947 = vmatpush1.bf16.msra.mxu0 0
    %5948 = vmatprep.subr.bf16.mxu0 0
    %5949 = vmatpush1.bf16.msra.mxu0 0
    %5950 = vmatprep.subr.bf16.mxu0 0
    %5951 = vmatpush1.bf16.msra.mxu0 0
    %5952 = vmatprep.subr.bf16.mxu0 0
    %5953 = vmatpush1.bf16.msra.mxu0 0
    %5954 = vmatprep.subr.bf16.mxu0 0
    %5955 = vmatpush1.bf16.msra.mxu0 0
    %5956 = vmatprep.subr.bf16.mxu0 0
    %5957 = vmatpush1.bf16.msra.mxu0 0
    %5958 = vmatprep.mubr.bf16.mxu0 0
    %5959 = vmatmul.mubr.bf16.gmra.mrb[0].mxu0 %v4716
    %v5960 = vpop.f32.mrb[0].mxu0
    %v5961 = vadd.f32 0.0, %v5960
    %v5962 = vpop.f32.mrb[0].mxu0
    %v5963 = vpop.f32.mrb[0].mxu0
    %v5964 = vadd.f32 0.0, %v5963
    %v5965 = vpop.f32.mrb[0].mxu0
    %5966 = vmatprep.mubr.bf16.mxu0 0
    %5967 = vmatmul.mubr.bf16.gmra.mrb[0].mxu0 %v4717
    %v5968 = vpop.f32.mrb[0].mxu0
    %v5969 = vadd.f32 0.0, %v5968
    %v5970 = vpop.f32.mrb[0].mxu0
    %v5971 = vpop.f32.mrb[0].mxu0
    %v5972 = vadd.f32 0.0, %v5971
    %v5973 = vpop.f32.mrb[0].mxu0
    %5974 = vmatprep.mubr.bf16.mxu0 0
    %5975 = vmatmul.mubr.bf16.gmra.mrb[0].mxu0 %v4718
    %v5976 = vpop.f32.mrb[0].mxu0
    %v5977 = vadd.f32 0.0, %v5976
    %v5978 = vpop.f32.mrb[0].mxu0
    %v5979 = vpop.f32.mrb[0].mxu0
    %v5980 = vadd.f32 0.0, %v5979
    %v5981 = vpop.f32.mrb[0].mxu0
    %5982 = vmatprep.mubr.bf16.mxu0 0
    %5983 = vmatmul.mubr.bf16.gmra.mrb[0].mxu0 %v5859
    %v5984 = vpop.f32.mrb[0].mxu0
    %v5985 = vadd.f32 0.0, %v5984
    %v5986 = vpop.f32.mrb[0].mxu0
    %v5987 = vpop.f32.mrb[0].mxu0
    %v5988 = vadd.f32 0.0, %v5987
    %v5989 = vpop.f32.mrb[0].mxu0
    %5990 = vmatprep.mubr.bf16.mxu0 0
    %5991 = vmatmul.mubr.bf16.gmra.mrb[0].mxu0 %v4720
    %v5992 = vpop.f32.mrb[0].mxu0
    %v5993 = vadd.f32 0.0, %v5992
    %v5994 = vpop.f32.mrb[0].mxu0
    %v5995 = vpop.f32.mrb[0].mxu0
    %v5996 = vadd.f32 0.0, %v5995
    %v5997 = vpop.f32.mrb[0].mxu0
    %5998 = vmatprep.mubr.bf16.mxu0 0
    %5999 = vmatmul.mubr.bf16.gmra.mrb[0].mxu0 %v4721
    %v6000 = vpop.f32.mrb[0].mxu0
    %v6001 = vadd.f32 0.0, %v6000
    %v6002 = vpop.f32.mrb[0].mxu0
    %v6003 = vpop.f32.mrb[0].mxu0
    %v6004 = vadd.f32 0.0, %v6003
    %v6005 = vpop.f32.mrb[0].mxu0
    %6006 = vmatprep.mubr.bf16.mxu0 0
    %6007 = vmatmul.mubr.bf16.gmra.mrb[0].mxu0 %v4722
    %v6008 = vpop.f32.mrb[0].mxu0
    %v6009 = vadd.f32 0.0, %v6008
    %v6010 = vpop.f32.mrb[0].mxu0
    %v6011 = vpop.f32.mrb[0].mxu0
    %v6012 = vadd.f32 0.0, %v6011
    %v6013 = vpop.f32.mrb[0].mxu0
    %6014 = vmatprep.mubr.bf16.mxu0 0
    %6015 = vmatmul.mubr.bf16.gmra.mrb[0].mxu0 %v5860
    %v6016 = vpop.f32.mrb[0].mxu0
    %v6017 = vadd.f32 0.0, %v6016
    %v6018 = vpop.f32.mrb[0].mxu0
    %v6019 = vpop.f32.mrb[0].mxu0
    %v6020 = vadd.f32 0.0, %v6019
    %v6021 = vpop.f32.mrb[0].mxu0
    %6022 = vdwg.mxu0
    %v6023 = vadd.f32 %v5835, %v5961
    %v6024 = vadd.f32 %v5836, %v5964
    %v6025 = vadd.f32 %v5837, %v5969
    %v6026 = vadd.f32 %v5838, %v5972
    %v6027 = vadd.f32 %v5839, %v5977
    %v6028 = vadd.f32 %v5840, %v5980
    %v6029 = vadd.f32 %v5841, %v5985
    %v6030 = vadd.f32 %v5842, %v5988
    %v6031 = vadd.f32 %v5843, %v5993
    %v6032 = vadd.f32 %v5844, %v5996
    %v6033 = vadd.f32 %v5845, %v6001
    %v6034 = vadd.f32 %v5846, %v6004
    %v6035 = vadd.f32 %v5847, %v6009
    %v6036 = vadd.f32 %v5848, %v6012
    %v6037 = vadd.f32 %v5849, %v6017
    %v6038 = vadd.f32 %v5850, %v6020
    %v6039 = vld [vmem:[%s4] sm:$0x1]
    %v6041 = vlaneseq
    %v6042 = vshrl.u32 %v6041, 7
    %v6043 = vsub.s32 0, %v6042
    %v6044 = vrot.slane %v6039, %v6043
    %v6046 = vadd.f32 %v6023, %v6044
    %v6047 = vadd.f32 %v6024, %v6044
    %v6048 = vadd.f32 %v6025, %v6044
    %v6049 = vadd.f32 %v6026, %v6044
    %v6050 = vadd.f32 %v6027, %v6044
    %v6051 = vadd.f32 %v6028, %v6044
    %v6052 = vadd.f32 %v6029, %v6044
    %v6053 = vadd.f32 %v6030, %v6044
    %v6054 = vadd.f32 %v6031, %v6044
    %v6055 = vadd.f32 %v6032, %v6044
    %v6056 = vadd.f32 %v6033, %v6044
    %v6057 = vadd.f32 %v6034, %v6044
    %v6058 = vadd.f32 %v6035, %v6044
    %v6059 = vadd.f32 %v6036, %v6044
    %v6060 = vadd.f32 %v6037, %v6044
    %v6061 = vadd.f32 %v6038, %v6044
    %v6062 = vmax.f32 %v6046, 0.0
    %v6063 = vmax.f32 %v6047, 0.0
    %v6064 = vmax.f32 %v6048, 0.0
    %v6065 = vmax.f32 %v6049, 0.0
    %v6066 = vmax.f32 %v6050, 0.0
    %v6067 = vmax.f32 %v6051, 0.0
    %v6068 = vmax.f32 %v6052, 0.0
    %v6069 = vmax.f32 %v6053, 0.0
    %v6070 = vmax.f32 %v6054, 0.0
    %v6071 = vmax.f32 %v6055, 0.0
    %v6072 = vmax.f32 %v6056, 0.0
    %v6073 = vmax.f32 %v6057, 0.0
    %v6074 = vmax.f32 %v6058, 0.0
    %v6075 = vmax.f32 %v6059, 0.0
    %v6076 = vmax.f32 %v6060, 0.0
    %v6077 = vmax.f32 %v6061, 0.0
    %v6094 = vcombine.high %v6062, %v6062
    %v6096 = vunpack.c.l.s4 1983009808
    %v6097 = vunpack.c.0.s8 %v6096
    %v6098 = vlaneseq
    %v6099 = vshrl.u32 %v6098, 7
    %v6100 = vsub.s32 %v6097, %v6099
    %v6101 = vrot.slane %v6062, %v6100
    %v6103 = vunpack.c.l.s4 1983009808
    %v6104 = vunpack.c.0.s8 %v6103
    %v6105 = vlaneseq
    %v6106 = vshrl.u32 %v6105, 7
    %v6107 = vsub.s32 %v6104, %v6106
    %v6108 = vrot.slane %v6094, %v6107
    %v6109 = vcombine.high %v6101, %v6101
    %v6110 = vcombine.high %v6108, %v6108
    %v6111 = vcombine.high %v6063, %v6063
    %v6113 = vunpack.c.l.s4 1983009808
    %v6114 = vunpack.c.0.s8 %v6113
    %v6115 = vlaneseq
    %v6116 = vshrl.u32 %v6115, 7
    %v6117 = vsub.s32 %v6114, %v6116
    %v6118 = vrot.slane %v6063, %v6117
    %v6120 = vunpack.c.l.s4 1983009808
    %v6121 = vunpack.c.0.s8 %v6120
    %v6122 = vlaneseq
    %v6123 = vshrl.u32 %v6122, 7
    %v6124 = vsub.s32 %v6121, %v6123
    %v6125 = vrot.slane %v6111, %v6124
    %v6126 = vcombine.high %v6118, %v6118
    %v6127 = vcombine.high %v6125, %v6125
    %v6128 = vcombine.high %v6064, %v6064
    %v6130 = vunpack.c.l.s4 1983009808
    %v6131 = vunpack.c.0.s8 %v6130
    %v6132 = vlaneseq
    %v6133 = vshrl.u32 %v6132, 7
    %v6134 = vsub.s32 %v6131, %v6133
    %v6135 = vrot.slane %v6064, %v6134
    %v6137 = vunpack.c.l.s4 1983009808
    %v6138 = vunpack.c.0.s8 %v6137
    %v6139 = vlaneseq
    %v6140 = vshrl.u32 %v6139, 7
    %v6141 = vsub.s32 %v6138, %v6140
    %v6142 = vrot.slane %v6128, %v6141
    %v6143 = vcombine.high %v6135, %v6135
    %v6144 = vcombine.high %v6142, %v6142
    %v6145 = vcombine.high %v6065, %v6065
    %v6147 = vunpack.c.l.s4 1983009808
    %v6148 = vunpack.c.0.s8 %v6147
    %v6149 = vlaneseq
    %v6150 = vshrl.u32 %v6149, 7
    %v6151 = vsub.s32 %v6148, %v6150
    %v6152 = vrot.slane %v6065, %v6151
    %v6154 = vunpack.c.l.s4 1983009808
    %v6155 = vunpack.c.0.s8 %v6154
    %v6156 = vlaneseq
    %v6157 = vshrl.u32 %v6156, 7
    %v6158 = vsub.s32 %v6155, %v6157
    %v6159 = vrot.slane %v6145, %v6158
    %v6160 = vcombine.high %v6152, %v6152
    %v6161 = vcombine.high %v6159, %v6159
    %v6162 = vcombine.high %v6066, %v6066
    %v6164 = vunpack.c.l.s4 1983009808
    %v6165 = vunpack.c.0.s8 %v6164
    %v6166 = vlaneseq
    %v6167 = vshrl.u32 %v6166, 7
    %v6168 = vsub.s32 %v6165, %v6167
    %v6169 = vrot.slane %v6066, %v6168
    %v6171 = vunpack.c.l.s4 1983009808
    %v6172 = vunpack.c.0.s8 %v6171
    %v6173 = vlaneseq
    %v6174 = vshrl.u32 %v6173, 7
    %v6175 = vsub.s32 %v6172, %v6174
    %v6176 = vrot.slane %v6162, %v6175
    %v6177 = vcombine.high %v6169, %v6169
    %v6178 = vcombine.high %v6176, %v6176
    %v6179 = vcombine.high %v6067, %v6067
    %v6181 = vunpack.c.l.s4 1983009808
    %v6182 = vunpack.c.0.s8 %v6181
    %v6183 = vlaneseq
    %v6184 = vshrl.u32 %v6183, 7
    %v6185 = vsub.s32 %v6182, %v6184
    %v6186 = vrot.slane %v6067, %v6185
    %v6188 = vunpack.c.l.s4 1983009808
    %v6189 = vunpack.c.0.s8 %v6188
    %v6190 = vlaneseq
    %v6191 = vshrl.u32 %v6190, 7
    %v6192 = vsub.s32 %v6189, %v6191
    %v6193 = vrot.slane %v6179, %v6192
    %v6194 = vcombine.high %v6186, %v6186
    %v6195 = vcombine.high %v6193, %v6193
    %v6196 = vcombine.high %v6068, %v6068
    %v6198 = vunpack.c.l.s4 1983009808
    %v6199 = vunpack.c.0.s8 %v6198
    %v6200 = vlaneseq
    %v6201 = vshrl.u32 %v6200, 7
    %v6202 = vsub.s32 %v6199, %v6201
    %v6203 = vrot.slane %v6068, %v6202
    %v6205 = vunpack.c.l.s4 1983009808
    %v6206 = vunpack.c.0.s8 %v6205
    %v6207 = vlaneseq
    %v6208 = vshrl.u32 %v6207, 7
    %v6209 = vsub.s32 %v6206, %v6208
    %v6210 = vrot.slane %v6196, %v6209
    %v6211 = vcombine.high %v6203, %v6203
    %v6212 = vcombine.high %v6210, %v6210
    %v6213 = vcombine.high %v6069, %v6069
    %v6215 = vunpack.c.l.s4 1983009808
    %v6216 = vunpack.c.0.s8 %v6215
    %v6217 = vlaneseq
    %v6218 = vshrl.u32 %v6217, 7
    %v6219 = vsub.s32 %v6216, %v6218
    %v6220 = vrot.slane %v6069, %v6219
    %v6222 = vunpack.c.l.s4 1983009808
    %v6223 = vunpack.c.0.s8 %v6222
    %v6224 = vlaneseq
    %v6225 = vshrl.u32 %v6224, 7
    %v6226 = vsub.s32 %v6223, %v6225
    %v6227 = vrot.slane %v6213, %v6226
    %v6228 = vcombine.high %v6220, %v6220
    %v6229 = vcombine.high %v6227, %v6227
    %v6230 = vcombine.high %v6070, %v6070
    %v6232 = vunpack.c.l.s4 1983009808
    %v6233 = vunpack.c.0.s8 %v6232
    %v6234 = vlaneseq
    %v6235 = vshrl.u32 %v6234, 7
    %v6236 = vsub.s32 %v6233, %v6235
    %v6237 = vrot.slane %v6070, %v6236
    %v6239 = vunpack.c.l.s4 1983009808
    %v6240 = vunpack.c.0.s8 %v6239
    %v6241 = vlaneseq
    %v6242 = vshrl.u32 %v6241, 7
    %v6243 = vsub.s32 %v6240, %v6242
    %v6244 = vrot.slane %v6230, %v6243
    %v6245 = vcombine.high %v6237, %v6237
    %v6246 = vcombine.high %v6244, %v6244
    %v6247 = vcombine.high %v6071, %v6071
    %v6249 = vunpack.c.l.s4 1983009808
    %v6250 = vunpack.c.0.s8 %v6249
    %v6251 = vlaneseq
    %v6252 = vshrl.u32 %v6251, 7
    %v6253 = vsub.s32 %v6250, %v6252
    %v6254 = vrot.slane %v6071, %v6253
    %v6256 = vunpack.c.l.s4 1983009808
    %v6257 = vunpack.c.0.s8 %v6256
    %v6258 = vlaneseq
    %v6259 = vshrl.u32 %v6258, 7
    %v6260 = vsub.s32 %v6257, %v6259
    %v6261 = vrot.slane %v6247, %v6260
    %v6262 = vcombine.high %v6254, %v6254
    %v6263 = vcombine.high %v6261, %v6261
    %v6264 = vcombine.high %v6072, %v6072
    %v6266 = vunpack.c.l.s4 1983009808
    %v6267 = vunpack.c.0.s8 %v6266
    %v6268 = vlaneseq
    %v6269 = vshrl.u32 %v6268, 7
    %v6270 = vsub.s32 %v6267, %v6269
    %v6271 = vrot.slane %v6072, %v6270
    %v6273 = vunpack.c.l.s4 1983009808
    %v6274 = vunpack.c.0.s8 %v6273
    %v6275 = vlaneseq
    %v6276 = vshrl.u32 %v6275, 7
    %v6277 = vsub.s32 %v6274, %v6276
    %v6278 = vrot.slane %v6264, %v6277
    %v6279 = vcombine.high %v6271, %v6271
    %v6280 = vcombine.high %v6278, %v6278
    %v6281 = vcombine.high %v6073, %v6073
    %v6283 = vunpack.c.l.s4 1983009808
    %v6284 = vunpack.c.0.s8 %v6283
    %v6285 = vlaneseq
    %v6286 = vshrl.u32 %v6285, 7
    %v6287 = vsub.s32 %v6284, %v6286
    %v6288 = vrot.slane %v6073, %v6287
    %v6290 = vunpack.c.l.s4 1983009808
    %v6291 = vunpack.c.0.s8 %v6290
    %v6292 = vlaneseq
    %v6293 = vshrl.u32 %v6292, 7
    %v6294 = vsub.s32 %v6291, %v6293
    %v6295 = vrot.slane %v6281, %v6294
    %v6296 = vcombine.high %v6288, %v6288
    %v6297 = vcombine.high %v6295, %v6295
    %v6298 = vcombine.high %v6074, %v6074
    %v6300 = vunpack.c.l.s4 1983009808
    %v6301 = vunpack.c.0.s8 %v6300
    %v6302 = vlaneseq
    %v6303 = vshrl.u32 %v6302, 7
    %v6304 = vsub.s32 %v6301, %v6303
    %v6305 = vrot.slane %v6074, %v6304
    %v6307 = vunpack.c.l.s4 1983009808
    %v6308 = vunpack.c.0.s8 %v6307
    %v6309 = vlaneseq
    %v6310 = vshrl.u32 %v6309, 7
    %v6311 = vsub.s32 %v6308, %v6310
    %v6312 = vrot.slane %v6298, %v6311
    %v6313 = vcombine.high %v6305, %v6305
    %v6314 = vcombine.high %v6312, %v6312
    %v6315 = vcombine.high %v6075, %v6075
    %v6317 = vunpack.c.l.s4 1983009808
    %v6318 = vunpack.c.0.s8 %v6317
    %v6319 = vlaneseq
    %v6320 = vshrl.u32 %v6319, 7
    %v6321 = vsub.s32 %v6318, %v6320
    %v6322 = vrot.slane %v6075, %v6321
    %v6324 = vunpack.c.l.s4 1983009808
    %v6325 = vunpack.c.0.s8 %v6324
    %v6326 = vlaneseq
    %v6327 = vshrl.u32 %v6326, 7
    %v6328 = vsub.s32 %v6325, %v6327
    %v6329 = vrot.slane %v6315, %v6328
    %v6330 = vcombine.high %v6322, %v6322
    %v6331 = vcombine.high %v6329, %v6329
    %v6332 = vcombine.high %v6076, %v6076
    %v6334 = vunpack.c.l.s4 1983009808
    %v6335 = vunpack.c.0.s8 %v6334
    %v6336 = vlaneseq
    %v6337 = vshrl.u32 %v6336, 7
    %v6338 = vsub.s32 %v6335, %v6337
    %v6339 = vrot.slane %v6076, %v6338
    %v6341 = vunpack.c.l.s4 1983009808
    %v6342 = vunpack.c.0.s8 %v6341
    %v6343 = vlaneseq
    %v6344 = vshrl.u32 %v6343, 7
    %v6345 = vsub.s32 %v6342, %v6344
    %v6346 = vrot.slane %v6332, %v6345
    %v6347 = vcombine.high %v6339, %v6339
    %v6348 = vcombine.high %v6346, %v6346
    %v6349 = vcombine.high %v6077, %v6077
    %v6351 = vunpack.c.l.s4 1983009808
    %v6352 = vunpack.c.0.s8 %v6351
    %v6353 = vlaneseq
    %v6354 = vshrl.u32 %v6353, 7
    %v6355 = vsub.s32 %v6352, %v6354
    %v6356 = vrot.slane %v6077, %v6355
    %v6358 = vunpack.c.l.s4 1983009808
    %v6359 = vunpack.c.0.s8 %v6358
    %v6360 = vlaneseq
    %v6361 = vshrl.u32 %v6360, 7
    %v6362 = vsub.s32 %v6359, %v6361
    %v6363 = vrot.slane %v6349, %v6362
    %v6364 = vcombine.high %v6356, %v6356
    %v6365 = vcombine.high %v6363, %v6363
    %v6430 = vrot.slane %v6101, 7
    %v6431 = vrot.slane %v6430, 2
    %v6432 = vrot.slane %v6109, 7
    %v6433 = vrot.slane %v6432, 2
    %v6434 = vrot.slane %v6108, 7
    %v6435 = vrot.slane %v6434, 2
    %v6436 = vrot.slane %v6110, 7
    %v6437 = vrot.slane %v6436, 2
    %v6438 = vrot.slane %v6118, 7
    %v6439 = vrot.slane %v6438, 2
    %v6440 = vrot.slane %v6126, 7
    %v6441 = vrot.slane %v6440, 2
    %v6442 = vrot.slane %v6125, 7
    %v6443 = vrot.slane %v6442, 2
    %v6444 = vrot.slane %v6127, 7
    %v6445 = vrot.slane %v6444, 2
    %v6446 = vrot.slane %v6135, 7
    %v6447 = vrot.slane %v6446, 2
    %v6448 = vrot.slane %v6143, 7
    %v6449 = vrot.slane %v6448, 2
    %v6450 = vrot.slane %v6142, 7
    %v6451 = vrot.slane %v6450, 2
    %v6452 = vrot.slane %v6144, 7
    %v6453 = vrot.slane %v6452, 2
    %v6454 = vrot.slane %v6152, 7
    %v6455 = vrot.slane %v6454, 2
    %v6456 = vrot.slane %v6160, 7
    %v6457 = vrot.slane %v6456, 2
    %v6458 = vrot.slane %v6159, 7
    %v6459 = vrot.slane %v6458, 2
    %v6460 = vrot.slane %v6161, 7
    %v6461 = vrot.slane %v6460, 2
    %v6462 = vrot.slane %v6169, 7
    %v6463 = vrot.slane %v6462, 2
    %v6464 = vrot.slane %v6177, 7
    %v6465 = vrot.slane %v6464, 2
    %v6466 = vrot.slane %v6176, 7
    %v6467 = vrot.slane %v6466, 2
    %v6468 = vrot.slane %v6178, 7
    %v6469 = vrot.slane %v6468, 2
    %v6470 = vrot.slane %v6186, 7
    %v6471 = vrot.slane %v6470, 2
    %v6472 = vrot.slane %v6194, 7
    %v6473 = vrot.slane %v6472, 2
    %v6474 = vrot.slane %v6193, 7
    %v6475 = vrot.slane %v6474, 2
    %v6476 = vrot.slane %v6195, 7
    %v6477 = vrot.slane %v6476, 2
    %v6478 = vrot.slane %v6203, 7
    %v6479 = vrot.slane %v6478, 2
    %v6480 = vrot.slane %v6211, 7
    %v6481 = vrot.slane %v6480, 2
    %v6482 = vrot.slane %v6210, 7
    %v6483 = vrot.slane %v6482, 2
    %v6484 = vrot.slane %v6212, 7
    %v6485 = vrot.slane %v6484, 2
    %v6486 = vrot.slane %v6220, 7
    %v6487 = vrot.slane %v6486, 2
    %v6488 = vrot.slane %v6228, 7
    %v6489 = vrot.slane %v6488, 2
    %v6490 = vrot.slane %v6227, 7
    %v6491 = vrot.slane %v6490, 2
    %v6492 = vrot.slane %v6229, 7
    %v6493 = vrot.slane %v6492, 2
    %v6494 = vrot.slane %v6237, 7
    %v6495 = vrot.slane %v6494, 2
    %v6496 = vrot.slane %v6245, 7
    %v6497 = vrot.slane %v6496, 2
    %v6498 = vrot.slane %v6244, 7
    %v6499 = vrot.slane %v6498, 2
    %v6500 = vrot.slane %v6246, 7
    %v6501 = vrot.slane %v6500, 2
    %v6502 = vrot.slane %v6254, 7
    %v6503 = vrot.slane %v6502, 2
    %v6504 = vrot.slane %v6262, 7
    %v6505 = vrot.slane %v6504, 2
    %v6506 = vrot.slane %v6261, 7
    %v6507 = vrot.slane %v6506, 2
    %v6508 = vrot.slane %v6263, 7
    %v6509 = vrot.slane %v6508, 2
    %v6510 = vrot.slane %v6271, 7
    %v6511 = vrot.slane %v6510, 2
    %v6512 = vrot.slane %v6279, 7
    %v6513 = vrot.slane %v6512, 2
    %v6514 = vrot.slane %v6278, 7
    %v6515 = vrot.slane %v6514, 2
    %v6516 = vrot.slane %v6280, 7
    %v6517 = vrot.slane %v6516, 2
    %v6518 = vrot.slane %v6288, 7
    %v6519 = vrot.slane %v6518, 2
    %v6520 = vrot.slane %v6296, 7
    %v6521 = vrot.slane %v6520, 2
    %v6522 = vrot.slane %v6295, 7
    %v6523 = vrot.slane %v6522, 2
    %v6524 = vrot.slane %v6297, 7
    %v6525 = vrot.slane %v6524, 2
    %v6526 = vrot.slane %v6305, 7
    %v6527 = vrot.slane %v6526, 2
    %v6528 = vrot.slane %v6313, 7
    %v6529 = vrot.slane %v6528, 2
    %v6530 = vrot.slane %v6312, 7
    %v6531 = vrot.slane %v6530, 2
    %v6532 = vrot.slane %v6314, 7
    %v6533 = vrot.slane %v6532, 2
    %v6534 = vrot.slane %v6322, 7
    %v6535 = vrot.slane %v6534, 2
    %v6536 = vrot.slane %v6330, 7
    %v6537 = vrot.slane %v6536, 2
    %v6538 = vrot.slane %v6329, 7
    %v6539 = vrot.slane %v6538, 2
    %v6540 = vrot.slane %v6331, 7
    %v6541 = vrot.slane %v6540, 2
    %v6542 = vrot.slane %v6339, 7
    %v6543 = vrot.slane %v6542, 2
    %v6544 = vrot.slane %v6347, 7
    %v6545 = vrot.slane %v6544, 2
    %v6546 = vrot.slane %v6346, 7
    %v6547 = vrot.slane %v6546, 2
    %v6548 = vrot.slane %v6348, 7
    %v6549 = vrot.slane %v6548, 2
    %v6550 = vrot.slane %v6356, 7
    %v6551 = vrot.slane %v6550, 2
    %v6552 = vrot.slane %v6364, 7
    %v6553 = vrot.slane %v6552, 2
    %v6554 = vrot.slane %v6363, 7
    %v6555 = vrot.slane %v6554, 2
    %v6556 = vrot.slane %v6365, 7
    %v6557 = vrot.slane %v6556, 2
    %v6622 = vmax.f32 %v6101, %v6431
    %v6623 = vmax.f32 %v6109, %v6433
    %v6624 = vmax.f32 %v6108, %v6435
    %v6625 = vmax.f32 %v6110, %v6437
    %v6626 = vmax.f32 %v6118, %v6439
    %v6627 = vmax.f32 %v6126, %v6441
    %v6628 = vmax.f32 %v6125, %v6443
    %v6629 = vmax.f32 %v6127, %v6445
    %v6630 = vmax.f32 %v6135, %v6447
    %v6631 = vmax.f32 %v6143, %v6449
    %v6632 = vmax.f32 %v6142, %v6451
    %v6633 = vmax.f32 %v6144, %v6453
    %v6634 = vmax.f32 %v6152, %v6455
    %v6635 = vmax.f32 %v6160, %v6457
    %v6636 = vmax.f32 %v6159, %v6459
    %v6637 = vmax.f32 %v6161, %v6461
    %v6638 = vmax.f32 %v6169, %v6463
    %v6639 = vmax.f32 %v6177, %v6465
    %v6640 = vmax.f32 %v6176, %v6467
    %v6641 = vmax.f32 %v6178, %v6469
    %v6642 = vmax.f32 %v6186, %v6471
    %v6643 = vmax.f32 %v6194, %v6473
    %v6644 = vmax.f32 %v6193, %v6475
    %v6645 = vmax.f32 %v6195, %v6477
    %v6646 = vmax.f32 %v6203, %v6479
    %v6647 = vmax.f32 %v6211, %v6481
    %v6648 = vmax.f32 %v6210, %v6483
    %v6649 = vmax.f32 %v6212, %v6485
    %v6650 = vmax.f32 %v6220, %v6487
    %v6651 = vmax.f32 %v6228, %v6489
    %v6652 = vmax.f32 %v6227, %v6491
    %v6653 = vmax.f32 %v6229, %v6493
    %v6654 = vmax.f32 %v6237, %v6495
    %v6655 = vmax.f32 %v6245, %v6497
    %v6656 = vmax.f32 %v6244, %v6499
    %v6657 = vmax.f32 %v6246, %v6501
    %v6658 = vmax.f32 %v6254, %v6503
    %v6659 = vmax.f32 %v6262, %v6505
    %v6660 = vmax.f32 %v6261, %v6507
    %v6661 = vmax.f32 %v6263, %v6509
    %v6662 = vmax.f32 %v6271, %v6511
    %v6663 = vmax.f32 %v6279, %v6513
    %v6664 = vmax.f32 %v6278, %v6515
    %v6665 = vmax.f32 %v6280, %v6517
    %v6666 = vmax.f32 %v6288, %v6519
    %v6667 = vmax.f32 %v6296, %v6521
    %v6668 = vmax.f32 %v6295, %v6523
    %v6669 = vmax.f32 %v6297, %v6525
    %v6670 = vmax.f32 %v6305, %v6527
    %v6671 = vmax.f32 %v6313, %v6529
    %v6672 = vmax.f32 %v6312, %v6531
    %v6673 = vmax.f32 %v6314, %v6533
    %v6674 = vmax.f32 %v6322, %v6535
    %v6675 = vmax.f32 %v6330, %v6537
    %v6676 = vmax.f32 %v6329, %v6539
    %v6677 = vmax.f32 %v6331, %v6541
    %v6678 = vmax.f32 %v6339, %v6543
    %v6679 = vmax.f32 %v6347, %v6545
    %v6680 = vmax.f32 %v6346, %v6547
    %v6681 = vmax.f32 %v6348, %v6549
    %v6682 = vmax.f32 %v6356, %v6551
    %v6683 = vmax.f32 %v6364, %v6553
    %v6684 = vmax.f32 %v6363, %v6555
    %v6685 = vmax.f32 %v6365, %v6557
    %v6686 = vmax.f32 %v6622, %v6626
    %v6687 = vmax.f32 %v6623, %v6627
    %v6688 = vmax.f32 %v6624, %v6628
    %v6689 = vmax.f32 %v6625, %v6629
    %v6690 = vmax.f32 %v6630, %v6634
    %v6691 = vmax.f32 %v6631, %v6635
    %v6692 = vmax.f32 %v6632, %v6636
    %v6693 = vmax.f32 %v6633, %v6637
    %v6694 = vmax.f32 %v6638, %v6642
    %v6695 = vmax.f32 %v6639, %v6643
    %v6696 = vmax.f32 %v6640, %v6644
    %v6697 = vmax.f32 %v6641, %v6645
    %v6698 = vmax.f32 %v6646, %v6650
    %v6699 = vmax.f32 %v6647, %v6651
    %v6700 = vmax.f32 %v6648, %v6652
    %v6701 = vmax.f32 %v6649, %v6653
    %v6702 = vmax.f32 %v6654, %v6658
    %v6703 = vmax.f32 %v6655, %v6659
    %v6704 = vmax.f32 %v6656, %v6660
    %v6705 = vmax.f32 %v6657, %v6661
    %v6706 = vmax.f32 %v6662, %v6666
    %v6707 = vmax.f32 %v6663, %v6667
    %v6708 = vmax.f32 %v6664, %v6668
    %v6709 = vmax.f32 %v6665, %v6669
    %v6710 = vmax.f32 %v6670, %v6674
    %v6711 = vmax.f32 %v6671, %v6675
    %v6712 = vmax.f32 %v6672, %v6676
    %v6713 = vmax.f32 %v6673, %v6677
    %v6714 = vmax.f32 %v6678, %v6682
    %v6715 = vmax.f32 %v6679, %v6683
    %v6716 = vmax.f32 %v6680, %v6684
    %v6717 = vmax.f32 %v6681, %v6685
    %6718 = vst [vmem:[#allocation3] sm:$0x3f] 0.0
    %6719 = vst [vmem:[#allocation3 + $0x30] sm:$0x3f] 0.0
    %s6720 = scalar_lea.vmem [#allocation3], 40
    %6721 = vst [vmem:[%s6720] sm:$0x3f] 0.0
    %6722 = vst [vmem:[%s6720 + $0x30] sm:$0x3f] 0.0
    %6723 = vst [vmem:[#allocation3] sm:$0x1] 0.0
    %6724 = vst [vmem:[#allocation3 + $0x8] sm:$0x1] 0.0
    %6725 = vst [vmem:[#allocation3 + $0x10] sm:$0x1] 0.0
    %6726 = vst [vmem:[#allocation3 + $0x18] sm:$0x1] 0.0
    %6727 = vst [vmem:[#allocation3 + $0x20] sm:$0x1] 0.0
    %6728 = vst [vmem:[#allocation3 + $0x28] sm:$0x1] 0.0
    %6729 = vst [vmem:[#allocation3 + $0x30] sm:$0x1] 0.0
    %6730 = vst [vmem:[#allocation3 + $0x38] sm:$0x1] 0.0
    %6731 = vst [vmem:[#allocation3 + $0x40] sm:$0x1] 0.0
    %6732 = vst [vmem:[#allocation3 + $0x48] sm:$0x1] 0.0
    %6733 = vst [vmem:[#allocation3 + $0x50] sm:$0x1] 0.0
    %6734 = vst [vmem:[#allocation3 + $0x58] sm:$0x1] 0.0
    %6735 = vst [vmem:[#allocation3 + $0x5] sm:$0x1] 0.0
    %6736 = vst [vmem:[#allocation3 + $0xd] sm:$0x1] 0.0
    %6737 = vst [vmem:[#allocation3 + $0x15] sm:$0x1] 0.0
    %6738 = vst [vmem:[#allocation3 + $0x1d] sm:$0x1] 0.0
    %6739 = vst [vmem:[#allocation3 + $0x25] sm:$0x1] 0.0
    %6740 = vst [vmem:[#allocation3 + $0x2d] sm:$0x1] 0.0
    %6741 = vst [vmem:[#allocation3 + $0x35] sm:$0x1] 0.0
    %6742 = vst [vmem:[#allocation3 + $0x3d] sm:$0x1] 0.0
    %6743 = vst [vmem:[#allocation3 + $0x45] sm:$0x1] 0.0
    %6744 = vst [vmem:[#allocation3 + $0x4d] sm:$0x1] 0.0
    %6745 = vst [vmem:[#allocation3 + $0x55] sm:$0x1] 0.0
    %6746 = vst [vmem:[#allocation3 + $0x5d] sm:$0x1] 0.0
    %v6779 = vlaneseq
    %v6780 = vshrl.u32 %v6779, 7
    %v6781 = vsub.s32 0, %v6780
    %v6782 = vrot.slane %v6686, %v6781
    %v6783 = vlaneseq
    %v6784 = vshrl.u32 %v6783, 7
    %v6785 = vsub.s32 0, %v6784
    %v6786 = vrot.slane %v6687, %v6785
    %v6787 = vlaneseq
    %v6788 = vshrl.u32 %v6787, 7
    %v6789 = vsub.s32 0, %v6788
    %v6790 = vrot.slane %v6688, %v6789
    %v6791 = vlaneseq
    %v6792 = vshrl.u32 %v6791, 7
    %v6793 = vsub.s32 0, %v6792
    %v6794 = vrot.slane %v6689, %v6793
    %v6795 = vlaneseq
    %v6796 = vshrl.u32 %v6795, 7
    %v6797 = vsub.s32 0, %v6796
    %v6798 = vrot.slane %v6690, %v6797
    %v6799 = vlaneseq
    %v6800 = vshrl.u32 %v6799, 7
    %v6801 = vsub.s32 0, %v6800
    %v6802 = vrot.slane %v6691, %v6801
    %v6803 = vlaneseq
    %v6804 = vshrl.u32 %v6803, 7
    %v6805 = vsub.s32 0, %v6804
    %v6806 = vrot.slane %v6692, %v6805
    %v6807 = vlaneseq
    %v6808 = vshrl.u32 %v6807, 7
    %v6809 = vsub.s32 0, %v6808
    %v6810 = vrot.slane %v6693, %v6809
    %v6811 = vlaneseq
    %v6812 = vshrl.u32 %v6811, 7
    %v6813 = vsub.s32 0, %v6812
    %v6814 = vrot.slane %v6694, %v6813
    %v6815 = vlaneseq
    %v6816 = vshrl.u32 %v6815, 7
    %v6817 = vsub.s32 0, %v6816
    %v6818 = vrot.slane %v6695, %v6817
    %v6819 = vlaneseq
    %v6820 = vshrl.u32 %v6819, 7
    %v6821 = vsub.s32 0, %v6820
    %v6822 = vrot.slane %v6696, %v6821
    %v6823 = vlaneseq
    %v6824 = vshrl.u32 %v6823, 7
    %v6825 = vsub.s32 0, %v6824
    %v6826 = vrot.slane %v6697, %v6825
    %v6827 = vlaneseq
    %v6828 = vshrl.u32 %v6827, 7
    %v6829 = vsub.s32 0, %v6828
    %v6830 = vrot.slane %v6698, %v6829
    %v6831 = vlaneseq
    %v6832 = vshrl.u32 %v6831, 7
    %v6833 = vsub.s32 0, %v6832
    %v6834 = vrot.slane %v6699, %v6833
    %v6835 = vlaneseq
    %v6836 = vshrl.u32 %v6835, 7
    %v6837 = vsub.s32 0, %v6836
    %v6838 = vrot.slane %v6700, %v6837
    %v6839 = vlaneseq
    %v6840 = vshrl.u32 %v6839, 7
    %v6841 = vsub.s32 0, %v6840
    %v6842 = vrot.slane %v6701, %v6841
    %v6843 = vlaneseq
    %v6844 = vshrl.u32 %v6843, 7
    %v6845 = vsub.s32 0, %v6844
    %v6846 = vrot.slane %v6702, %v6845
    %v6847 = vlaneseq
    %v6848 = vshrl.u32 %v6847, 7
    %v6849 = vsub.s32 0, %v6848
    %v6850 = vrot.slane %v6703, %v6849
    %v6851 = vlaneseq
    %v6852 = vshrl.u32 %v6851, 7
    %v6853 = vsub.s32 0, %v6852
    %v6854 = vrot.slane %v6704, %v6853
    %v6855 = vlaneseq
    %v6856 = vshrl.u32 %v6855, 7
    %v6857 = vsub.s32 0, %v6856
    %v6858 = vrot.slane %v6705, %v6857
    %v6859 = vlaneseq
    %v6860 = vshrl.u32 %v6859, 7
    %v6861 = vsub.s32 0, %v6860
    %v6862 = vrot.slane %v6706, %v6861
    %v6863 = vlaneseq
    %v6864 = vshrl.u32 %v6863, 7
    %v6865 = vsub.s32 0, %v6864
    %v6866 = vrot.slane %v6707, %v6865
    %v6867 = vlaneseq
    %v6868 = vshrl.u32 %v6867, 7
    %v6869 = vsub.s32 0, %v6868
    %v6870 = vrot.slane %v6708, %v6869
    %v6871 = vlaneseq
    %v6872 = vshrl.u32 %v6871, 7
    %v6873 = vsub.s32 0, %v6872
    %v6874 = vrot.slane %v6709, %v6873
    %v6875 = vlaneseq
    %v6876 = vshrl.u32 %v6875, 7
    %v6877 = vsub.s32 0, %v6876
    %v6878 = vrot.slane %v6710, %v6877
    %v6879 = vlaneseq
    %v6880 = vshrl.u32 %v6879, 7
    %v6881 = vsub.s32 0, %v6880
    %v6882 = vrot.slane %v6711, %v6881
    %v6883 = vlaneseq
    %v6884 = vshrl.u32 %v6883, 7
    %v6885 = vsub.s32 0, %v6884
    %v6886 = vrot.slane %v6712, %v6885
    %v6887 = vlaneseq
    %v6888 = vshrl.u32 %v6887, 7
    %v6889 = vsub.s32 0, %v6888
    %v6890 = vrot.slane %v6713, %v6889
    %v6891 = vlaneseq
    %v6892 = vshrl.u32 %v6891, 7
    %v6893 = vsub.s32 0, %v6892
    %v6894 = vrot.slane %v6714, %v6893
    %v6895 = vlaneseq
    %v6896 = vshrl.u32 %v6895, 7
    %v6897 = vsub.s32 0, %v6896
    %v6898 = vrot.slane %v6715, %v6897
    %v6899 = vlaneseq
    %v6900 = vshrl.u32 %v6899, 7
    %v6901 = vsub.s32 0, %v6900
    %v6902 = vrot.slane %v6716, %v6901
    %v6903 = vlaneseq
    %v6904 = vshrl.u32 %v6903, 7
    %v6905 = vsub.s32 0, %v6904
    %v6906 = vrot.slane %v6717, %v6905
    %v6907 = vsel %vm4022, %v6786, %v6782
    %v6908 = vsel %vm4024, %v6790, %v6907
    %v6909 = vsel %vm4026, %v6794, %v6908
    %v6910 = vsel %vm4022, %v6802, %v6798
    %v6911 = vsel %vm4024, %v6806, %v6910
    %v6912 = vsel %vm4026, %v6810, %v6911
    %v6913 = vsel %vm4022, %v6818, %v6814
    %v6914 = vsel %vm4024, %v6822, %v6913
    %v6915 = vsel %vm4026, %v6826, %v6914
    %v6916 = vsel %vm4022, %v6834, %v6830
    %v6917 = vsel %vm4024, %v6838, %v6916
    %v6918 = vsel %vm4026, %v6842, %v6917
    %v6919 = vsel %vm4022, %v6850, %v6846
    %v6920 = vsel %vm4024, %v6854, %v6919
    %v6921 = vsel %vm4026, %v6858, %v6920
    %v6922 = vsel %vm4022, %v6866, %v6862
    %v6923 = vsel %vm4024, %v6870, %v6922
    %v6924 = vsel %vm4026, %v6874, %v6923
    %v6925 = vsel %vm4022, %v6882, %v6878
    %v6926 = vsel %vm4024, %v6886, %v6925
    %v6927 = vsel %vm4026, %v6890, %v6926
    %v6928 = vsel %vm4022, %v6898, %v6894
    %v6929 = vsel %vm4024, %v6902, %v6928
    %v6930 = vsel %vm4026, %v6906, %v6929
    %s6939 = scalar_lea.vmem [#allocation3], 8
    %6940 = vst [vmem:[%s6939 + $0x1] sm:$0xf] %v6909
    %6941 = vst [vmem:[%s6939 + $0x9] sm:$0xf] %v6912
    %6942 = vst [vmem:[%s6939 + $0x11] sm:$0xf] %v6915
    %6943 = vst [vmem:[%s6939 + $0x19] sm:$0xf] %v6918
    %6944 = vst [vmem:[%s6939 + $0x31] sm:$0xf] %v6921
    %6945 = vst [vmem:[%s6939 + $0x39] sm:$0xf] %v6924
    %6946 = vst [vmem:[%s6939 + $0x41] sm:$0xf] %v6927
    %6947 = vst [vmem:[%s6939 + $0x49] sm:$0xf] %v6930
    %v6948 = vld [vmem:[#allocation3] sm:$0x3f]
    %v6949 = vld [vmem:[#allocation3 + $0x8] sm:$0x3f]
    %v6950 = vld [vmem:[#allocation3 + $0x10] sm:$0x3f]
    %v6951 = vld [vmem:[#allocation3 + $0x18] sm:$0x3f]
    %v6952 = vld [vmem:[#allocation3 + $0x20] sm:$0x3f]
    %v6953 = vld [vmem:[#allocation3 + $0x28] sm:$0x3f]
    %v6954 = vld [vmem:[#allocation3 + $0x30] sm:$0x3f]
    %v6955 = vld [vmem:[#allocation3 + $0x38] sm:$0x3f]
    %v6956 = vld [vmem:[#allocation3 + $0x40] sm:$0x3f]
    %v6957 = vld [vmem:[#allocation3 + $0x48] sm:$0x3f]
    %v6958 = vld [vmem:[#allocation3 + $0x50] sm:$0x3f]
    %v6959 = vld [vmem:[#allocation3 + $0x58] sm:$0x3f]
    %v6968 = vcombine.low %v6948, %v6949
    %v6969 = vcombine.low %v6950, %v6951
    %v6970 = vcombine.low %v6954, %v6955
    %v6971 = vcombine.low %v6956, %v6957
    %v6976 = vpack.c.bf16 %v6969, %v6968
    %v6977 = vpack.c.bf16 %v6971, %v6970
    %v6978 = vld [vmem:[#allocation5] sm:$0xf]
    %v6979 = vld [vmem:[#allocation5 + $0x4] sm:$0xf]
    %v6980 = vld [vmem:[#allocation5 + $0x8] sm:$0xf]
    %v6981 = vld [vmem:[#allocation5 + $0xc] sm:$0xf]
    %v6982 = vld [vmem:[#allocation5 + $0x10] sm:$0xf]
    %v6983 = vld [vmem:[#allocation5 + $0x14] sm:$0xf]
    %v6984 = vld [vmem:[#allocation5 + $0x18] sm:$0xf]
    %v6985 = vld [vmem:[#allocation5 + $0x1c] sm:$0xf]
    %v6986 = vld [vmem:[#allocation5 + $0x20] sm:$0xf]
    %v6987 = vld [vmem:[#allocation5 + $0x24] sm:$0xf]
    %v6988 = vld [vmem:[#allocation5 + $0x28] sm:$0xf]
    %v6989 = vld [vmem:[#allocation5 + $0x2c] sm:$0xf]
    %v6990 = vld [vmem:[#allocation5 + $0x30] sm:$0xf]
    %v6991 = vld [vmem:[#allocation5 + $0x34] sm:$0xf]
    %v6992 = vld [vmem:[#allocation5 + $0x38] sm:$0xf]
    %v6993 = vld [vmem:[#allocation5 + $0x3c] sm:$0xf]
    %v6994 = vcombine.high %v6948, %v6948
    %v6995 = vcombine.high %v6949, %v6949
    %v6996 = vcombine.high %v6950, %v6950
    %v6997 = vcombine.high %v6951, %v6951
    %v6998 = vcombine.high %v6954, %v6954
    %v6999 = vcombine.high %v6955, %v6955
    %v7000 = vcombine.high %v6956, %v6956
    %v7001 = vcombine.high %v6957, %v6957
    %vm7002 = vcmask 1042432
    %vm7003 = vcmask 1046532
    %vm7004 = vmor %vm7002, %vm7003
    %v7005 = vrot.slane %v6948, 5
    %v7006 = vrot.slane %v7005, 4
    %v7007 = vrot.slane %v6994, 5
    %v7008 = vsel %vm7004, %v7006, %v7007
    %v7009 = vrot.slane %v6949, 5
    %v7010 = vrot.slane %v7009, 4
    %v7011 = vrot.slane %v6995, 5
    %v7012 = vsel %vm7004, %v7010, %v7011
    %v7013 = vrot.slane %v6950, 5
    %v7014 = vrot.slane %v7013, 4
    %v7015 = vrot.slane %v6996, 5
    %v7016 = vsel %vm7004, %v7014, %v7015
    %v7017 = vrot.slane %v6951, 5
    %v7018 = vrot.slane %v7017, 4
    %v7019 = vrot.slane %v6997, 5
    %v7020 = vsel %vm7004, %v7018, %v7019
    %v7021 = vrot.slane %v6954, 5
    %v7022 = vrot.slane %v7021, 4
    %v7023 = vrot.slane %v6998, 5
    %v7024 = vsel %vm7004, %v7022, %v7023
    %v7025 = vrot.slane %v6955, 5
    %v7026 = vrot.slane %v7025, 4
    %v7027 = vrot.slane %v6999, 5
    %v7028 = vsel %vm7004, %v7026, %v7027
    %v7029 = vrot.slane %v6956, 5
    %v7030 = vrot.slane %v7029, 4
    %v7031 = vrot.slane %v7000, 5
    %v7032 = vsel %vm7004, %v7030, %v7031
    %v7033 = vrot.slane %v6957, 5
    %v7034 = vrot.slane %v7033, 4
    %v7035 = vrot.slane %v7001, 5
    %v7036 = vsel %vm7004, %v7034, %v7035
    %v7037 = vcombine.low %v7008, %v7012
    %v7038 = vcombine.low %v7016, %v7020
    %v7039 = vcombine.low %v7024, %v7028
    %v7040 = vcombine.low %v7032, %v7036
    %v7045 = vpack.c.bf16 %v7038, %v7037
    %v7046 = vpack.c.bf16 %v7040, %v7039
    %s7047 = scalar_lea.vmem [#allocation5], 64
    %v7048 = vld [vmem:[%s7047] sm:$0xf]
    %v7049 = vld [vmem:[%s7047 + $0x4] sm:$0xf]
    %v7050 = vld [vmem:[%s7047 + $0x8] sm:$0xf]
    %v7051 = vld [vmem:[%s7047 + $0xc] sm:$0xf]
    %v7052 = vld [vmem:[%s7047 + $0x10] sm:$0xf]
    %v7053 = vld [vmem:[%s7047 + $0x14] sm:$0xf]
    %v7054 = vld [vmem:[%s7047 + $0x18] sm:$0xf]
    %v7055 = vld [vmem:[%s7047 + $0x1c] sm:$0xf]
    %v7056 = vld [vmem:[%s7047 + $0x20] sm:$0xf]
    %v7057 = vld [vmem:[%s7047 + $0x24] sm:$0xf]
    %v7058 = vld [vmem:[%s7047 + $0x28] sm:$0xf]
    %v7059 = vld [vmem:[%s7047 + $0x2c] sm:$0xf]
    %v7060 = vld [vmem:[%s7047 + $0x30] sm:$0xf]
    %v7061 = vld [vmem:[%s7047 + $0x34] sm:$0xf]
    %v7062 = vld [vmem:[%s7047 + $0x38] sm:$0xf]
    %v7063 = vld [vmem:[%s7047 + $0x3c] sm:$0xf]
    %v7080 = vunpack.c.l.b16 %v7048
    %v7081 = vunpack.c.l.b16 %v7049
    %v7082 = vunpack.c.l.b16 %v7050
    %v7083 = vunpack.c.l.b16 %v7051
    %v7084 = vunpack.c.l.b16 %v7052
    %v7085 = vunpack.c.l.b16 %v7053
    %v7086 = vunpack.c.l.b16 %v7054
    %v7087 = vunpack.c.l.b16 %v7055
    %v7088 = vunpack.c.l.b16 %v7056
    %v7089 = vunpack.c.l.b16 %v7057
    %v7090 = vunpack.c.l.b16 %v7058
    %v7091 = vunpack.c.l.b16 %v7059
    %v7092 = vunpack.c.l.b16 %v7060
    %v7093 = vunpack.c.l.b16 %v7061
    %v7094 = vunpack.c.l.b16 %v7062
    %v7095 = vunpack.c.l.b16 %v7063
    %v7096 = vpack.c.b16 %v7081, %v7080
    %v7097 = vpack.c.b16 %v7083, %v7082
    %v7098 = vpack.c.b16 %v7085, %v7084
    %v7099 = vpack.c.b16 %v7087, %v7086
    %v7100 = vpack.c.b16 %v7089, %v7088
    %v7101 = vpack.c.b16 %v7091, %v7090
    %v7102 = vpack.c.b16 %v7093, %v7092
    %v7103 = vpack.c.b16 %v7095, %v7094
    %7112 = vmatprep.subr.bf16.mxu0 0
    %7113 = vmatpush1.bf16.msra.mxu0 %v7096
    %7114 = vmatprep.subr.bf16.mxu0 0
    %7115 = vmatpush1.bf16.msra.mxu0 %v7097
    %7116 = vmatprep.subr.bf16.mxu0 0
    %7117 = vmatpush1.bf16.msra.mxu0 %v7098
    %7118 = vmatprep.subr.bf16.mxu0 0
    %7119 = vmatpush1.bf16.msra.mxu0 %v7099
    %7120 = vmatprep.subr.bf16.mxu0 0
    %7121 = vmatpush1.bf16.msra.mxu0 %v7100
    %7122 = vmatprep.subr.bf16.mxu0 0
    %7123 = vmatpush1.bf16.msra.mxu0 %v7101
    %7124 = vmatprep.subr.bf16.mxu0 0
    %7125 = vmatpush1.bf16.msra.mxu0 %v7102
    %7126 = vmatprep.subr.bf16.mxu0 0
    %7127 = vmatpush1.bf16.msra.mxu0 %v7103
    %7128 = vmatprep.subr.bf16.mxu0 0
    %7129 = vmatpush1.bf16.msra.mxu0 0
    %7130 = vmatprep.subr.bf16.mxu0 0
    %7131 = vmatpush1.bf16.msra.mxu0 0
    %7132 = vmatprep.subr.bf16.mxu0 0
    %7133 = vmatpush1.bf16.msra.mxu0 0
    %7134 = vmatprep.subr.bf16.mxu0 0
    %7135 = vmatpush1.bf16.msra.mxu0 0
    %7136 = vmatprep.subr.bf16.mxu0 0
    %7137 = vmatpush1.bf16.msra.mxu0 0
    %7138 = vmatprep.subr.bf16.mxu0 0
    %7139 = vmatpush1.bf16.msra.mxu0 0
    %7140 = vmatprep.subr.bf16.mxu0 0
    %7141 = vmatpush1.bf16.msra.mxu0 0
    %7142 = vmatprep.subr.bf16.mxu0 0
    %7143 = vmatpush1.bf16.msra.mxu0 0
    %7144 = vmatprep.mubr.bf16.mxu0 0
    %7145 = vmatmul.mubr.bf16.gmra.mrb[0].mxu0 %v7045
    %v7146 = vpop.f32.mrb[0].mxu0
    %v7147 = vadd.f32 0.0, %v7146
    %v7148 = vpop.f32.mrb[0].mxu0
    %v7149 = vpop.f32.mrb[0].mxu0
    %v7150 = vadd.f32 0.0, %v7149
    %v7151 = vpop.f32.mrb[0].mxu0
    %7152 = vmatprep.mubr.bf16.mxu0 0
    %7153 = vmatmul.mubr.bf16.gmra.mrb[0].mxu0 %v7046
    %v7154 = vpop.f32.mrb[0].mxu0
    %v7155 = vadd.f32 0.0, %v7154
    %v7156 = vpop.f32.mrb[0].mxu0
    %v7157 = vpop.f32.mrb[0].mxu0
    %v7158 = vadd.f32 0.0, %v7157
    %v7159 = vpop.f32.mrb[0].mxu0
    %7160 = vdwg.mxu0
    %v7177 = vunpack.c.l.b16 %v6978
    %v7178 = vunpack.c.l.b16 %v6979
    %v7179 = vunpack.c.l.b16 %v6980
    %v7180 = vunpack.c.l.b16 %v6981
    %v7181 = vunpack.c.l.b16 %v6982
    %v7182 = vunpack.c.l.b16 %v6983
    %v7183 = vunpack.c.l.b16 %v6984
    %v7184 = vunpack.c.l.b16 %v6985
    %v7185 = vunpack.c.l.b16 %v6986
    %v7186 = vunpack.c.l.b16 %v6987
    %v7187 = vunpack.c.l.b16 %v6988
    %v7188 = vunpack.c.l.b16 %v6989
    %v7189 = vunpack.c.l.b16 %v6990
    %v7190 = vunpack.c.l.b16 %v6991
    %v7191 = vunpack.c.l.b16 %v6992
    %v7192 = vunpack.c.l.b16 %v6993
    %v7193 = vpack.c.b16 %v7178, %v7177
    %v7194 = vpack.c.b16 %v7180, %v7179
    %v7195 = vpack.c.b16 %v7182, %v7181
    %v7196 = vpack.c.b16 %v7184, %v7183
    %v7197 = vpack.c.b16 %v7186, %v7185
    %v7198 = vpack.c.b16 %v7188, %v7187
    %v7199 = vpack.c.b16 %v7190, %v7189
    %v7200 = vpack.c.b16 %v7192, %v7191
    %7209 = vmatprep.subr.bf16.mxu0 0
    %7210 = vmatpush1.bf16.msra.mxu0 %v7193
    %7211 = vmatprep.subr.bf16.mxu0 0
    %7212 = vmatpush1.bf16.msra.mxu0 %v7194
    %7213 = vmatprep.subr.bf16.mxu0 0
    %7214 = vmatpush1.bf16.msra.mxu0 %v7195
    %7215 = vmatprep.subr.bf16.mxu0 0
    %7216 = vmatpush1.bf16.msra.mxu0 %v7196
    %7217 = vmatprep.subr.bf16.mxu0 0
    %7218 = vmatpush1.bf16.msra.mxu0 %v7197
    %7219 = vmatprep.subr.bf16.mxu0 0
    %7220 = vmatpush1.bf16.msra.mxu0 %v7198
    %7221 = vmatprep.subr.bf16.mxu0 0
    %7222 = vmatpush1.bf16.msra.mxu0 %v7199
    %7223 = vmatprep.subr.bf16.mxu0 0
    %7224 = vmatpush1.bf16.msra.mxu0 %v7200
    %7225 = vmatprep.subr.bf16.mxu0 0
    %7226 = vmatpush1.bf16.msra.mxu0 0
    %7227 = vmatprep.subr.bf16.mxu0 0
    %7228 = vmatpush1.bf16.msra.mxu0 0
    %7229 = vmatprep.subr.bf16.mxu0 0
    %7230 = vmatpush1.bf16.msra.mxu0 0
    %7231 = vmatprep.subr.bf16.mxu0 0
    %7232 = vmatpush1.bf16.msra.mxu0 0
    %7233 = vmatprep.subr.bf16.mxu0 0
    %7234 = vmatpush1.bf16.msra.mxu0 0
    %7235 = vmatprep.subr.bf16.mxu0 0
    %7236 = vmatpush1.bf16.msra.mxu0 0
    %7237 = vmatprep.subr.bf16.mxu0 0
    %7238 = vmatpush1.bf16.msra.mxu0 0
    %7239 = vmatprep.subr.bf16.mxu0 0
    %7240 = vmatpush1.bf16.msra.mxu0 0
    %7241 = vmatprep.mubr.bf16.mxu0 0
    %7242 = vmatmul.mubr.bf16.gmra.mrb[0].mxu0 %v6976
    %v7243 = vpop.f32.mrb[0].mxu0
    %v7244 = vadd.f32 %v7147, %v7243
    %v7245 = vpop.f32.mrb[0].mxu0
    %v7246 = vpop.f32.mrb[0].mxu0
    %v7247 = vadd.f32 %v7150, %v7246
    %v7248 = vpop.f32.mrb[0].mxu0
    %7249 = vmatprep.mubr.bf16.mxu0 0
    %7250 = vmatmul.mubr.bf16.gmra.mrb[0].mxu0 %v6977
    %v7251 = vpop.f32.mrb[0].mxu0
    %v7252 = vadd.f32 %v7155, %v7251
    %v7253 = vpop.f32.mrb[0].mxu0
    %v7254 = vpop.f32.mrb[0].mxu0
    %v7255 = vadd.f32 %v7158, %v7254
    %v7256 = vpop.f32.mrb[0].mxu0
    %7257 = vdwg.mxu0
    %vm7258 = vcmask 1041408
    %vm7259 = vcmask 1045508
    %vm7260 = vmor %vm7258, %vm7259
    %v7261 = vrot.slane %v6948, 6
    %v7262 = vrot.slane %v7261, 4
    %v7263 = vrot.slane %v6994, 6
    %v7264 = vsel %vm7260, %v7262, %v7263
    %v7265 = vrot.slane %v6949, 6
    %v7266 = vrot.slane %v7265, 4
    %v7267 = vrot.slane %v6995, 6
    %v7268 = vsel %vm7260, %v7266, %v7267
    %v7269 = vrot.slane %v6950, 6
    %v7270 = vrot.slane %v7269, 4
    %v7271 = vrot.slane %v6996, 6
    %v7272 = vsel %vm7260, %v7270, %v7271
    %v7273 = vrot.slane %v6951, 6
    %v7274 = vrot.slane %v7273, 4
    %v7275 = vrot.slane %v6997, 6
    %v7276 = vsel %vm7260, %v7274, %v7275
    %v7277 = vrot.slane %v6954, 6
    %v7278 = vrot.slane %v7277, 4
    %v7279 = vrot.slane %v6998, 6
    %v7280 = vsel %vm7260, %v7278, %v7279
    %v7281 = vrot.slane %v6955, 6
    %v7282 = vrot.slane %v7281, 4
    %v7283 = vrot.slane %v6999, 6
    %v7284 = vsel %vm7260, %v7282, %v7283
    %v7285 = vrot.slane %v6956, 6
    %v7286 = vrot.slane %v7285, 4
    %v7287 = vrot.slane %v7000, 6
    %v7288 = vsel %vm7260, %v7286, %v7287
    %v7289 = vrot.slane %v6957, 6
    %v7290 = vrot.slane %v7289, 4
    %v7291 = vrot.slane %v7001, 6
    %v7292 = vsel %vm7260, %v7290, %v7291
    %v7293 = vcombine.low %v7264, %v7268
    %v7294 = vcombine.low %v7272, %v7276
    %v7295 = vcombine.low %v7280, %v7284
    %v7296 = vcombine.low %v7288, %v7292
    %v7301 = vpack.c.bf16 %v7294, %v7293
    %v7302 = vpack.c.bf16 %v7296, %v7295
    %s7303 = scalar_lea.vmem [#allocation5], 128
    %v7304 = vld [vmem:[%s7303] sm:$0xf]
    %v7305 = vld [vmem:[%s7303 + $0x4] sm:$0xf]
    %v7306 = vld [vmem:[%s7303 + $0x8] sm:$0xf]
    %v7307 = vld [vmem:[%s7303 + $0xc] sm:$0xf]
    %v7308 = vld [vmem:[%s7303 + $0x10] sm:$0xf]
    %v7309 = vld [vmem:[%s7303 + $0x14] sm:$0xf]
    %v7310 = vld [vmem:[%s7303 + $0x18] sm:$0xf]
    %v7311 = vld [vmem:[%s7303 + $0x1c] sm:$0xf]
    %v7312 = vld [vmem:[%s7303 + $0x20] sm:$0xf]
    %v7313 = vld [vmem:[%s7303 + $0x24] sm:$0xf]
    %v7314 = vld [vmem:[%s7303 + $0x28] sm:$0xf]
    %v7315 = vld [vmem:[%s7303 + $0x2c] sm:$0xf]
    %v7316 = vld [vmem:[%s7303 + $0x30] sm:$0xf]
    %v7317 = vld [vmem:[%s7303 + $0x34] sm:$0xf]
    %v7318 = vld [vmem:[%s7303 + $0x38] sm:$0xf]
    %v7319 = vld [vmem:[%s7303 + $0x3c] sm:$0xf]
    %v7336 = vunpack.c.l.b16 %v7304
    %v7337 = vunpack.c.l.b16 %v7305
    %v7338 = vunpack.c.l.b16 %v7306
    %v7339 = vunpack.c.l.b16 %v7307
    %v7340 = vunpack.c.l.b16 %v7308
    %v7341 = vunpack.c.l.b16 %v7309
    %v7342 = vunpack.c.l.b16 %v7310
    %v7343 = vunpack.c.l.b16 %v7311
    %v7344 = vunpack.c.l.b16 %v7312
    %v7345 = vunpack.c.l.b16 %v7313
    %v7346 = vunpack.c.l.b16 %v7314
    %v7347 = vunpack.c.l.b16 %v7315
    %v7348 = vunpack.c.l.b16 %v7316
    %v7349 = vunpack.c.l.b16 %v7317
    %v7350 = vunpack.c.l.b16 %v7318
    %v7351 = vunpack.c.l.b16 %v7319
    %v7352 = vpack.c.b16 %v7337, %v7336
    %v7353 = vpack.c.b16 %v7339, %v7338
    %v7354 = vpack.c.b16 %v7341, %v7340
    %v7355 = vpack.c.b16 %v7343, %v7342
    %v7356 = vpack.c.b16 %v7345, %v7344
    %v7357 = vpack.c.b16 %v7347, %v7346
    %v7358 = vpack.c.b16 %v7349, %v7348
    %v7359 = vpack.c.b16 %v7351, %v7350
    %7368 = vmatprep.subr.bf16.mxu0 0
    %7369 = vmatpush1.bf16.msra.mxu0 %v7352
    %7370 = vmatprep.subr.bf16.mxu0 0
    %7371 = vmatpush1.bf16.msra.mxu0 %v7353
    %7372 = vmatprep.subr.bf16.mxu0 0
    %7373 = vmatpush1.bf16.msra.mxu0 %v7354
    %7374 = vmatprep.subr.bf16.mxu0 0
    %7375 = vmatpush1.bf16.msra.mxu0 %v7355
    %7376 = vmatprep.subr.bf16.mxu0 0
    %7377 = vmatpush1.bf16.msra.mxu0 %v7356
    %7378 = vmatprep.subr.bf16.mxu0 0
    %7379 = vmatpush1.bf16.msra.mxu0 %v7357
    %7380 = vmatprep.subr.bf16.mxu0 0
    %7381 = vmatpush1.bf16.msra.mxu0 %v7358
    %7382 = vmatprep.subr.bf16.mxu0 0
    %7383 = vmatpush1.bf16.msra.mxu0 %v7359
    %7384 = vmatprep.subr.bf16.mxu0 0
    %7385 = vmatpush1.bf16.msra.mxu0 0
    %7386 = vmatprep.subr.bf16.mxu0 0
    %7387 = vmatpush1.bf16.msra.mxu0 0
    %7388 = vmatprep.subr.bf16.mxu0 0
    %7389 = vmatpush1.bf16.msra.mxu0 0
    %7390 = vmatprep.subr.bf16.mxu0 0
    %7391 = vmatpush1.bf16.msra.mxu0 0
    %7392 = vmatprep.subr.bf16.mxu0 0
    %7393 = vmatpush1.bf16.msra.mxu0 0
    %7394 = vmatprep.subr.bf16.mxu0 0
    %7395 = vmatpush1.bf16.msra.mxu0 0
    %7396 = vmatprep.subr.bf16.mxu0 0
    %7397 = vmatpush1.bf16.msra.mxu0 0
    %7398 = vmatprep.subr.bf16.mxu0 0
    %7399 = vmatpush1.bf16.msra.mxu0 0
    %7400 = vmatprep.mubr.bf16.mxu0 0
    %7401 = vmatmul.mubr.bf16.gmra.mrb[0].mxu0 %v7301
    %v7402 = vpop.f32.mrb[0].mxu0
    %v7403 = vadd.f32 0.0, %v7402
    %v7404 = vpop.f32.mrb[0].mxu0
    %v7405 = vpop.f32.mrb[0].mxu0
    %v7406 = vadd.f32 0.0, %v7405
    %v7407 = vpop.f32.mrb[0].mxu0
    %7408 = vmatprep.mubr.bf16.mxu0 0
    %7409 = vmatmul.mubr.bf16.gmra.mrb[0].mxu0 %v7302
    %v7410 = vpop.f32.mrb[0].mxu0
    %v7411 = vadd.f32 0.0, %v7410
    %v7412 = vpop.f32.mrb[0].mxu0
    %v7413 = vpop.f32.mrb[0].mxu0
    %v7414 = vadd.f32 0.0, %v7413
    %v7415 = vpop.f32.mrb[0].mxu0
    %7416 = vdwg.mxu0
    %v7417 = vadd.f32 %v7244, %v7403
    %v7418 = vadd.f32 %v7247, %v7406
    %v7419 = vadd.f32 %v7252, %v7411
    %v7420 = vadd.f32 %v7255, %v7414
    %v7423 = vcombine.low %v6949, %v6950
    %v7424 = vcombine.low %v6951, %v6952
    %v7425 = vcombine.low %v6955, %v6956
    %v7426 = vcombine.low %v6957, %v6958
    %v7431 = vpack.c.bf16 %v7424, %v7423
    %v7432 = vpack.c.bf16 %v7426, %v7425
    %s7433 = scalar_lea.vmem [#allocation5], 192
    %v7434 = vld [vmem:[%s7433] sm:$0xf]
    %v7435 = vld [vmem:[%s7433 + $0x4] sm:$0xf]
    %v7436 = vld [vmem:[%s7433 + $0x8] sm:$0xf]
    %v7437 = vld [vmem:[%s7433 + $0xc] sm:$0xf]
    %v7438 = vld [vmem:[%s7433 + $0x10] sm:$0xf]
    %v7439 = vld [vmem:[%s7433 + $0x14] sm:$0xf]
    %v7440 = vld [vmem:[%s7433 + $0x18] sm:$0xf]
    %v7441 = vld [vmem:[%s7433 + $0x1c] sm:$0xf]
    %v7442 = vld [vmem:[%s7433 + $0x20] sm:$0xf]
    %v7443 = vld [vmem:[%s7433 + $0x24] sm:$0xf]
    %v7444 = vld [vmem:[%s7433 + $0x28] sm:$0xf]
    %v7445 = vld [vmem:[%s7433 + $0x2c] sm:$0xf]
    %v7446 = vld [vmem:[%s7433 + $0x30] sm:$0xf]
    %v7447 = vld [vmem:[%s7433 + $0x34] sm:$0xf]
    %v7448 = vld [vmem:[%s7433 + $0x38] sm:$0xf]
    %v7449 = vld [vmem:[%s7433 + $0x3c] sm:$0xf]
    %v7466 = vunpack.c.l.b16 %v7434
    %v7467 = vunpack.c.l.b16 %v7435
    %v7468 = vunpack.c.l.b16 %v7436
    %v7469 = vunpack.c.l.b16 %v7437
    %v7470 = vunpack.c.l.b16 %v7438
    %v7471 = vunpack.c.l.b16 %v7439
    %v7472 = vunpack.c.l.b16 %v7440
    %v7473 = vunpack.c.l.b16 %v7441
    %v7474 = vunpack.c.l.b16 %v7442
    %v7475 = vunpack.c.l.b16 %v7443
    %v7476 = vunpack.c.l.b16 %v7444
    %v7477 = vunpack.c.l.b16 %v7445
    %v7478 = vunpack.c.l.b16 %v7446
    %v7479 = vunpack.c.l.b16 %v7447
    %v7480 = vunpack.c.l.b16 %v7448
    %v7481 = vunpack.c.l.b16 %v7449
    %v7482 = vpack.c.b16 %v7467, %v7466
    %v7483 = vpack.c.b16 %v7469, %v7468
    %v7484 = vpack.c.b16 %v7471, %v7470
    %v7485 = vpack.c.b16 %v7473, %v7472
    %v7486 = vpack.c.b16 %v7475, %v7474
    %v7487 = vpack.c.b16 %v7477, %v7476
    %v7488 = vpack.c.b16 %v7479, %v7478
    %v7489 = vpack.c.b16 %v7481, %v7480
    %7498 = vmatprep.subr.bf16.mxu0 0
    %7499 = vmatpush1.bf16.msra.mxu0 %v7482
    %7500 = vmatprep.subr.bf16.mxu0 0
    %7501 = vmatpush1.bf16.msra.mxu0 %v7483
    %7502 = vmatprep.subr.bf16.mxu0 0
    %7503 = vmatpush1.bf16.msra.mxu0 %v7484
    %7504 = vmatprep.subr.bf16.mxu0 0
    %7505 = vmatpush1.bf16.msra.mxu0 %v7485
    %7506 = vmatprep.subr.bf16.mxu0 0
    %7507 = vmatpush1.bf16.msra.mxu0 %v7486
    %7508 = vmatprep.subr.bf16.mxu0 0
    %7509 = vmatpush1.bf16.msra.mxu0 %v7487
    %7510 = vmatprep.subr.bf16.mxu0 0
    %7511 = vmatpush1.bf16.msra.mxu0 %v7488
    %7512 = vmatprep.subr.bf16.mxu0 0
    %7513 = vmatpush1.bf16.msra.mxu0 %v7489
    %7514 = vmatprep.subr.bf16.mxu0 0
    %7515 = vmatpush1.bf16.msra.mxu0 0
    %7516 = vmatprep.subr.bf16.mxu0 0
    %7517 = vmatpush1.bf16.msra.mxu0 0
    %7518 = vmatprep.subr.bf16.mxu0 0
    %7519 = vmatpush1.bf16.msra.mxu0 0
    %7520 = vmatprep.subr.bf16.mxu0 0
    %7521 = vmatpush1.bf16.msra.mxu0 0
    %7522 = vmatprep.subr.bf16.mxu0 0
    %7523 = vmatpush1.bf16.msra.mxu0 0
    %7524 = vmatprep.subr.bf16.mxu0 0
    %7525 = vmatpush1.bf16.msra.mxu0 0
    %7526 = vmatprep.subr.bf16.mxu0 0
    %7527 = vmatpush1.bf16.msra.mxu0 0
    %7528 = vmatprep.subr.bf16.mxu0 0
    %7529 = vmatpush1.bf16.msra.mxu0 0
    %7530 = vmatprep.mubr.bf16.mxu0 0
    %7531 = vmatmul.mubr.bf16.gmra.mrb[0].mxu0 %v7431
    %v7532 = vpop.f32.mrb[0].mxu0
    %v7533 = vadd.f32 0.0, %v7532
    %v7534 = vpop.f32.mrb[0].mxu0
    %v7535 = vpop.f32.mrb[0].mxu0
    %v7536 = vadd.f32 0.0, %v7535
    %v7537 = vpop.f32.mrb[0].mxu0
    %7538 = vmatprep.mubr.bf16.mxu0 0
    %7539 = vmatmul.mubr.bf16.gmra.mrb[0].mxu0 %v7432
    %v7540 = vpop.f32.mrb[0].mxu0
    %v7541 = vadd.f32 0.0, %v7540
    %v7542 = vpop.f32.mrb[0].mxu0
    %v7543 = vpop.f32.mrb[0].mxu0
    %v7544 = vadd.f32 0.0, %v7543
    %v7545 = vpop.f32.mrb[0].mxu0
    %7546 = vdwg.mxu0
    %v7547 = vadd.f32 %v7417, %v7533
    %v7548 = vadd.f32 %v7418, %v7536
    %v7549 = vadd.f32 %v7419, %v7541
    %v7550 = vadd.f32 %v7420, %v7544
    %v7551 = vcombine.high %v6952, %v6952
    %v7552 = vcombine.high %v6958, %v6958
    %v7553 = vrot.slane %v6952, 5
    %v7554 = vrot.slane %v7553, 4
    %v7555 = vrot.slane %v7551, 5
    %v7556 = vsel %vm7004, %v7554, %v7555
    %v7557 = vrot.slane %v6958, 5
    %v7558 = vrot.slane %v7557, 4
    %v7559 = vrot.slane %v7552, 5
    %v7560 = vsel %vm7004, %v7558, %v7559
    %v7561 = vcombine.low %v7012, %v7016
    %v7562 = vcombine.low %v7020, %v7556
    %v7563 = vcombine.low %v7028, %v7032
    %v7564 = vcombine.low %v7036, %v7560
    %v7569 = vpack.c.bf16 %v7562, %v7561
    %v7570 = vpack.c.bf16 %v7564, %v7563
    %s7571 = scalar_lea.vmem [#allocation5], 256
    %v7572 = vld [vmem:[%s7571] sm:$0xf]
    %v7573 = vld [vmem:[%s7571 + $0x4] sm:$0xf]
    %v7574 = vld [vmem:[%s7571 + $0x8] sm:$0xf]
    %v7575 = vld [vmem:[%s7571 + $0xc] sm:$0xf]
    %v7576 = vld [vmem:[%s7571 + $0x10] sm:$0xf]
    %v7577 = vld [vmem:[%s7571 + $0x14] sm:$0xf]
    %v7578 = vld [vmem:[%s7571 + $0x18] sm:$0xf]
    %v7579 = vld [vmem:[%s7571 + $0x1c] sm:$0xf]
    %v7580 = vld [vmem:[%s7571 + $0x20] sm:$0xf]
    %v7581 = vld [vmem:[%s7571 + $0x24] sm:$0xf]
    %v7582 = vld [vmem:[%s7571 + $0x28] sm:$0xf]
    %v7583 = vld [vmem:[%s7571 + $0x2c] sm:$0xf]
    %v7584 = vld [vmem:[%s7571 + $0x30] sm:$0xf]
    %v7585 = vld [vmem:[%s7571 + $0x34] sm:$0xf]
    %v7586 = vld [vmem:[%s7571 + $0x38] sm:$0xf]
    %v7587 = vld [vmem:[%s7571 + $0x3c] sm:$0xf]
    %v7604 = vunpack.c.l.b16 %v7572
    %v7605 = vunpack.c.l.b16 %v7573
    %v7606 = vunpack.c.l.b16 %v7574
    %v7607 = vunpack.c.l.b16 %v7575
    %v7608 = vunpack.c.l.b16 %v7576
    %v7609 = vunpack.c.l.b16 %v7577
    %v7610 = vunpack.c.l.b16 %v7578
    %v7611 = vunpack.c.l.b16 %v7579
    %v7612 = vunpack.c.l.b16 %v7580
    %v7613 = vunpack.c.l.b16 %v7581
    %v7614 = vunpack.c.l.b16 %v7582
    %v7615 = vunpack.c.l.b16 %v7583
    %v7616 = vunpack.c.l.b16 %v7584
    %v7617 = vunpack.c.l.b16 %v7585
    %v7618 = vunpack.c.l.b16 %v7586
    %v7619 = vunpack.c.l.b16 %v7587
    %v7620 = vpack.c.b16 %v7605, %v7604
    %v7621 = vpack.c.b16 %v7607, %v7606
    %v7622 = vpack.c.b16 %v7609, %v7608
    %v7623 = vpack.c.b16 %v7611, %v7610
    %v7624 = vpack.c.b16 %v7613, %v7612
    %v7625 = vpack.c.b16 %v7615, %v7614
    %v7626 = vpack.c.b16 %v7617, %v7616
    %v7627 = vpack.c.b16 %v7619, %v7618
    %7636 = vmatprep.subr.bf16.mxu0 0
    %7637 = vmatpush1.bf16.msra.mxu0 %v7620
    %7638 = vmatprep.subr.bf16.mxu0 0
    %7639 = vmatpush1.bf16.msra.mxu0 %v7621
    %7640 = vmatprep.subr.bf16.mxu0 0
    %7641 = vmatpush1.bf16.msra.mxu0 %v7622
    %7642 = vmatprep.subr.bf16.mxu0 0
    %7643 = vmatpush1.bf16.msra.mxu0 %v7623
    %7644 = vmatprep.subr.bf16.mxu0 0
    %7645 = vmatpush1.bf16.msra.mxu0 %v7624
    %7646 = vmatprep.subr.bf16.mxu0 0
    %7647 = vmatpush1.bf16.msra.mxu0 %v7625
    %7648 = vmatprep.subr.bf16.mxu0 0
    %7649 = vmatpush1.bf16.msra.mxu0 %v7626
    %7650 = vmatprep.subr.bf16.mxu0 0
    %7651 = vmatpush1.bf16.msra.mxu0 %v7627
    %7652 = vmatprep.subr.bf16.mxu0 0
    %7653 = vmatpush1.bf16.msra.mxu0 0
    %7654 = vmatprep.subr.bf16.mxu0 0
    %7655 = vmatpush1.bf16.msra.mxu0 0
    %7656 = vmatprep.subr.bf16.mxu0 0
    %7657 = vmatpush1.bf16.msra.mxu0 0
    %7658 = vmatprep.subr.bf16.mxu0 0
    %7659 = vmatpush1.bf16.msra.mxu0 0
    %7660 = vmatprep.subr.bf16.mxu0 0
    %7661 = vmatpush1.bf16.msra.mxu0 0
    %7662 = vmatprep.subr.bf16.mxu0 0
    %7663 = vmatpush1.bf16.msra.mxu0 0
    %7664 = vmatprep.subr.bf16.mxu0 0
    %7665 = vmatpush1.bf16.msra.mxu0 0
    %7666 = vmatprep.subr.bf16.mxu0 0
    %7667 = vmatpush1.bf16.msra.mxu0 0
    %7668 = vmatprep.mubr.bf16.mxu0 0
    %7669 = vmatmul.mubr.bf16.gmra.mrb[0].mxu0 %v7569
    %v7670 = vpop.f32.mrb[0].mxu0
    %v7671 = vadd.f32 0.0, %v7670
    %v7672 = vpop.f32.mrb[0].mxu0
    %v7673 = vpop.f32.mrb[0].mxu0
    %v7674 = vadd.f32 0.0, %v7673
    %v7675 = vpop.f32.mrb[0].mxu0
    %7676 = vmatprep.mubr.bf16.mxu0 0
    %7677 = vmatmul.mubr.bf16.gmra.mrb[0].mxu0 %v7570
    %v7678 = vpop.f32.mrb[0].mxu0
    %v7679 = vadd.f32 0.0, %v7678
    %v7680 = vpop.f32.mrb[0].mxu0
    %v7681 = vpop.f32.mrb[0].mxu0
    %v7682 = vadd.f32 0.0, %v7681
    %v7683 = vpop.f32.mrb[0].mxu0
    %7684 = vdwg.mxu0
    %v7685 = vadd.f32 %v7547, %v7671
    %v7686 = vadd.f32 %v7548, %v7674
    %v7687 = vadd.f32 %v7549, %v7679
    %v7688 = vadd.f32 %v7550, %v7682
    %v7689 = vrot.slane %v6952, 6
    %v7690 = vrot.slane %v7689, 4
    %v7691 = vrot.slane %v7551, 6
    %v7692 = vsel %vm7260, %v7690, %v7691
    %v7693 = vrot.slane %v6958, 6
    %v7694 = vrot.slane %v7693, 4
    %v7695 = vrot.slane %v7552, 6
    %v7696 = vsel %vm7260, %v7694, %v7695
    %v7697 = vcombine.low %v7268, %v7272
    %v7698 = vcombine.low %v7276, %v7692
    %v7699 = vcombine.low %v7284, %v7288
    %v7700 = vcombine.low %v7292, %v7696
    %v7705 = vpack.c.bf16 %v7698, %v7697
    %v7706 = vpack.c.bf16 %v7700, %v7699
    %s7707 = scalar_lea.vmem [#allocation5], 320
    %v7708 = vld [vmem:[%s7707] sm:$0xf]
    %v7709 = vld [vmem:[%s7707 + $0x4] sm:$0xf]
    %v7710 = vld [vmem:[%s7707 + $0x8] sm:$0xf]
    %v7711 = vld [vmem:[%s7707 + $0xc] sm:$0xf]
    %v7712 = vld [vmem:[%s7707 + $0x10] sm:$0xf]
    %v7713 = vld [vmem:[%s7707 + $0x14] sm:$0xf]
    %v7714 = vld [vmem:[%s7707 + $0x18] sm:$0xf]
    %v7715 = vld [vmem:[%s7707 + $0x1c] sm:$0xf]
    %v7716 = vld [vmem:[%s7707 + $0x20] sm:$0xf]
    %v7717 = vld [vmem:[%s7707 + $0x24] sm:$0xf]
    %v7718 = vld [vmem:[%s7707 + $0x28] sm:$0xf]
    %v7719 = vld [vmem:[%s7707 + $0x2c] sm:$0xf]
    %v7720 = vld [vmem:[%s7707 + $0x30] sm:$0xf]
    %v7721 = vld [vmem:[%s7707 + $0x34] sm:$0xf]
    %v7722 = vld [vmem:[%s7707 + $0x38] sm:$0xf]
    %v7723 = vld [vmem:[%s7707 + $0x3c] sm:$0xf]
    %v7740 = vunpack.c.l.b16 %v7708
    %v7741 = vunpack.c.l.b16 %v7709
    %v7742 = vunpack.c.l.b16 %v7710
    %v7743 = vunpack.c.l.b16 %v7711
    %v7744 = vunpack.c.l.b16 %v7712
    %v7745 = vunpack.c.l.b16 %v7713
    %v7746 = vunpack.c.l.b16 %v7714
    %v7747 = vunpack.c.l.b16 %v7715
    %v7748 = vunpack.c.l.b16 %v7716
    %v7749 = vunpack.c.l.b16 %v7717
    %v7750 = vunpack.c.l.b16 %v7718
    %v7751 = vunpack.c.l.b16 %v7719
    %v7752 = vunpack.c.l.b16 %v7720
    %v7753 = vunpack.c.l.b16 %v7721
    %v7754 = vunpack.c.l.b16 %v7722
    %v7755 = vunpack.c.l.b16 %v7723
    %v7756 = vpack.c.b16 %v7741, %v7740
    %v7757 = vpack.c.b16 %v7743, %v7742
    %v7758 = vpack.c.b16 %v7745, %v7744
    %v7759 = vpack.c.b16 %v7747, %v7746
    %v7760 = vpack.c.b16 %v7749, %v7748
    %v7761 = vpack.c.b16 %v7751, %v7750
    %v7762 = vpack.c.b16 %v7753, %v7752
    %v7763 = vpack.c.b16 %v7755, %v7754
    %7772 = vmatprep.subr.bf16.mxu0 0
    %7773 = vmatpush1.bf16.msra.mxu0 %v7756
    %7774 = vmatprep.subr.bf16.mxu0 0
    %7775 = vmatpush1.bf16.msra.mxu0 %v7757
    %7776 = vmatprep.subr.bf16.mxu0 0
    %7777 = vmatpush1.bf16.msra.mxu0 %v7758
    %7778 = vmatprep.subr.bf16.mxu0 0
    %7779 = vmatpush1.bf16.msra.mxu0 %v7759
    %7780 = vmatprep.subr.bf16.mxu0 0
    %7781 = vmatpush1.bf16.msra.mxu0 %v7760
    %7782 = vmatprep.subr.bf16.mxu0 0
    %7783 = vmatpush1.bf16.msra.mxu0 %v7761
    %7784 = vmatprep.subr.bf16.mxu0 0
    %7785 = vmatpush1.bf16.msra.mxu0 %v7762
    %7786 = vmatprep.subr.bf16.mxu0 0
    %7787 = vmatpush1.bf16.msra.mxu0 %v7763
    %7788 = vmatprep.subr.bf16.mxu0 0
    %7789 = vmatpush1.bf16.msra.mxu0 0
    %7790 = vmatprep.subr.bf16.mxu0 0
    %7791 = vmatpush1.bf16.msra.mxu0 0
    %7792 = vmatprep.subr.bf16.mxu0 0
    %7793 = vmatpush1.bf16.msra.mxu0 0
    %7794 = vmatprep.subr.bf16.mxu0 0
    %7795 = vmatpush1.bf16.msra.mxu0 0
    %7796 = vmatprep.subr.bf16.mxu0 0
    %7797 = vmatpush1.bf16.msra.mxu0 0
    %7798 = vmatprep.subr.bf16.mxu0 0
    %7799 = vmatpush1.bf16.msra.mxu0 0
    %7800 = vmatprep.subr.bf16.mxu0 0
    %7801 = vmatpush1.bf16.msra.mxu0 0
    %7802 = vmatprep.subr.bf16.mxu0 0
    %7803 = vmatpush1.bf16.msra.mxu0 0
    %7804 = vmatprep.mubr.bf16.mxu0 0
    %7805 = vmatmul.mubr.bf16.gmra.mrb[0].mxu0 %v7705
    %v7806 = vpop.f32.mrb[0].mxu0
    %v7807 = vadd.f32 0.0, %v7806
    %v7808 = vpop.f32.mrb[0].mxu0
    %v7809 = vpop.f32.mrb[0].mxu0
    %v7810 = vadd.f32 0.0, %v7809
    %v7811 = vpop.f32.mrb[0].mxu0
    %7812 = vmatprep.mubr.bf16.mxu0 0
    %7813 = vmatmul.mubr.bf16.gmra.mrb[0].mxu0 %v7706
    %v7814 = vpop.f32.mrb[0].mxu0
    %v7815 = vadd.f32 0.0, %v7814
    %v7816 = vpop.f32.mrb[0].mxu0
    %v7817 = vpop.f32.mrb[0].mxu0
    %v7818 = vadd.f32 0.0, %v7817
    %v7819 = vpop.f32.mrb[0].mxu0
    %7820 = vdwg.mxu0
    %v7821 = vadd.f32 %v7685, %v7807
    %v7822 = vadd.f32 %v7686, %v7810
    %v7823 = vadd.f32 %v7687, %v7815
    %v7824 = vadd.f32 %v7688, %v7818
    %v7827 = vcombine.low %v6952, %v6953
    %v7828 = vcombine.low %v6958, %v6959
    %v7831 = vpack.c.bf16 %v7827, %v6969
    %v7832 = vpack.c.bf16 %v7828, %v6971
    %s7833 = scalar_lea.vmem [#allocation5], 384
    %v7834 = vld [vmem:[%s7833] sm:$0xf]
    %v7835 = vld [vmem:[%s7833 + $0x4] sm:$0xf]
    %v7836 = vld [vmem:[%s7833 + $0x8] sm:$0xf]
    %v7837 = vld [vmem:[%s7833 + $0xc] sm:$0xf]
    %v7838 = vld [vmem:[%s7833 + $0x10] sm:$0xf]
    %v7839 = vld [vmem:[%s7833 + $0x14] sm:$0xf]
    %v7840 = vld [vmem:[%s7833 + $0x18] sm:$0xf]
    %v7841 = vld [vmem:[%s7833 + $0x1c] sm:$0xf]
    %v7842 = vld [vmem:[%s7833 + $0x20] sm:$0xf]
    %v7843 = vld [vmem:[%s7833 + $0x24] sm:$0xf]
    %v7844 = vld [vmem:[%s7833 + $0x28] sm:$0xf]
    %v7845 = vld [vmem:[%s7833 + $0x2c] sm:$0xf]
    %v7846 = vld [vmem:[%s7833 + $0x30] sm:$0xf]
    %v7847 = vld [vmem:[%s7833 + $0x34] sm:$0xf]
    %v7848 = vld [vmem:[%s7833 + $0x38] sm:$0xf]
    %v7849 = vld [vmem:[%s7833 + $0x3c] sm:$0xf]
    %v7866 = vunpack.c.l.b16 %v7834
    %v7867 = vunpack.c.l.b16 %v7835
    %v7868 = vunpack.c.l.b16 %v7836
    %v7869 = vunpack.c.l.b16 %v7837
    %v7870 = vunpack.c.l.b16 %v7838
    %v7871 = vunpack.c.l.b16 %v7839
    %v7872 = vunpack.c.l.b16 %v7840
    %v7873 = vunpack.c.l.b16 %v7841
    %v7874 = vunpack.c.l.b16 %v7842
    %v7875 = vunpack.c.l.b16 %v7843
    %v7876 = vunpack.c.l.b16 %v7844
    %v7877 = vunpack.c.l.b16 %v7845
    %v7878 = vunpack.c.l.b16 %v7846
    %v7879 = vunpack.c.l.b16 %v7847
    %v7880 = vunpack.c.l.b16 %v7848
    %v7881 = vunpack.c.l.b16 %v7849
    %v7882 = vpack.c.b16 %v7867, %v7866
    %v7883 = vpack.c.b16 %v7869, %v7868
    %v7884 = vpack.c.b16 %v7871, %v7870
    %v7885 = vpack.c.b16 %v7873, %v7872
    %v7886 = vpack.c.b16 %v7875, %v7874
    %v7887 = vpack.c.b16 %v7877, %v7876
    %v7888 = vpack.c.b16 %v7879, %v7878
    %v7889 = vpack.c.b16 %v7881, %v7880
    %7898 = vmatprep.subr.bf16.mxu0 0
    %7899 = vmatpush1.bf16.msra.mxu0 %v7882
    %7900 = vmatprep.subr.bf16.mxu0 0
    %7901 = vmatpush1.bf16.msra.mxu0 %v7883
    %7902 = vmatprep.subr.bf16.mxu0 0
    %7903 = vmatpush1.bf16.msra.mxu0 %v7884
    %7904 = vmatprep.subr.bf16.mxu0 0
    %7905 = vmatpush1.bf16.msra.mxu0 %v7885
    %7906 = vmatprep.subr.bf16.mxu0 0
    %7907 = vmatpush1.bf16.msra.mxu0 %v7886
    %7908 = vmatprep.subr.bf16.mxu0 0
    %7909 = vmatpush1.bf16.msra.mxu0 %v7887
    %7910 = vmatprep.subr.bf16.mxu0 0
    %7911 = vmatpush1.bf16.msra.mxu0 %v7888
    %7912 = vmatprep.subr.bf16.mxu0 0
    %7913 = vmatpush1.bf16.msra.mxu0 %v7889
    %7914 = vmatprep.subr.bf16.mxu0 0
    %7915 = vmatpush1.bf16.msra.mxu0 0
    %7916 = vmatprep.subr.bf16.mxu0 0
    %7917 = vmatpush1.bf16.msra.mxu0 0
    %7918 = vmatprep.subr.bf16.mxu0 0
    %7919 = vmatpush1.bf16.msra.mxu0 0
    %7920 = vmatprep.subr.bf16.mxu0 0
    %7921 = vmatpush1.bf16.msra.mxu0 0
    %7922 = vmatprep.subr.bf16.mxu0 0
    %7923 = vmatpush1.bf16.msra.mxu0 0
    %7924 = vmatprep.subr.bf16.mxu0 0
    %7925 = vmatpush1.bf16.msra.mxu0 0
    %7926 = vmatprep.subr.bf16.mxu0 0
    %7927 = vmatpush1.bf16.msra.mxu0 0
    %7928 = vmatprep.subr.bf16.mxu0 0
    %7929 = vmatpush1.bf16.msra.mxu0 0
    %7930 = vmatprep.mubr.bf16.mxu0 0
    %7931 = vmatmul.mubr.bf16.gmra.mrb[0].mxu0 %v7831
    %v7932 = vpop.f32.mrb[0].mxu0
    %v7933 = vadd.f32 0.0, %v7932
    %v7934 = vpop.f32.mrb[0].mxu0
    %v7935 = vpop.f32.mrb[0].mxu0
    %v7936 = vadd.f32 0.0, %v7935
    %v7937 = vpop.f32.mrb[0].mxu0
    %7938 = vmatprep.mubr.bf16.mxu0 0
    %7939 = vmatmul.mubr.bf16.gmra.mrb[0].mxu0 %v7832
    %v7940 = vpop.f32.mrb[0].mxu0
    %v7941 = vadd.f32 0.0, %v7940
    %v7942 = vpop.f32.mrb[0].mxu0
    %v7943 = vpop.f32.mrb[0].mxu0
    %v7944 = vadd.f32 0.0, %v7943
    %v7945 = vpop.f32.mrb[0].mxu0
    %7946 = vdwg.mxu0
    %v7947 = vadd.f32 %v7821, %v7933
    %v7948 = vadd.f32 %v7822, %v7936
    %v7949 = vadd.f32 %v7823, %v7941
    %v7950 = vadd.f32 %v7824, %v7944
    %v7951 = vcombine.high %v6953, %v6953
    %v7952 = vcombine.high %v6959, %v6959
    %v7953 = vrot.slane %v6953, 5
    %v7954 = vrot.slane %v7953, 4
    %v7955 = vrot.slane %v7951, 5
    %v7956 = vsel %vm7004, %v7954, %v7955
    %v7957 = vrot.slane %v6959, 5
    %v7958 = vrot.slane %v7957, 4
    %v7959 = vrot.slane %v7952, 5
    %v7960 = vsel %vm7004, %v7958, %v7959
    %v7961 = vcombine.low %v7556, %v7956
    %v7962 = vcombine.low %v7560, %v7960
    %v7965 = vpack.c.bf16 %v7961, %v7038
    %v7966 = vpack.c.bf16 %v7962, %v7040
    %s7967 = scalar_lea.vmem [#allocation5], 448
    %v7968 = vld [vmem:[%s7967] sm:$0xf]
    %v7969 = vld [vmem:[%s7967 + $0x4] sm:$0xf]
    %v7970 = vld [vmem:[%s7967 + $0x8] sm:$0xf]
    %v7971 = vld [vmem:[%s7967 + $0xc] sm:$0xf]
    %v7972 = vld [vmem:[%s7967 + $0x10] sm:$0xf]
    %v7973 = vld [vmem:[%s7967 + $0x14] sm:$0xf]
    %v7974 = vld [vmem:[%s7967 + $0x18] sm:$0xf]
    %v7975 = vld [vmem:[%s7967 + $0x1c] sm:$0xf]
    %v7976 = vld [vmem:[%s7967 + $0x20] sm:$0xf]
    %v7977 = vld [vmem:[%s7967 + $0x24] sm:$0xf]
    %v7978 = vld [vmem:[%s7967 + $0x28] sm:$0xf]
    %v7979 = vld [vmem:[%s7967 + $0x2c] sm:$0xf]
    %v7980 = vld [vmem:[%s7967 + $0x30] sm:$0xf]
    %v7981 = vld [vmem:[%s7967 + $0x34] sm:$0xf]
    %v7982 = vld [vmem:[%s7967 + $0x38] sm:$0xf]
    %v7983 = vld [vmem:[%s7967 + $0x3c] sm:$0xf]
    %v8000 = vunpack.c.l.b16 %v7968
    %v8001 = vunpack.c.l.b16 %v7969
    %v8002 = vunpack.c.l.b16 %v7970
    %v8003 = vunpack.c.l.b16 %v7971
    %v8004 = vunpack.c.l.b16 %v7972
    %v8005 = vunpack.c.l.b16 %v7973
    %v8006 = vunpack.c.l.b16 %v7974
    %v8007 = vunpack.c.l.b16 %v7975
    %v8008 = vunpack.c.l.b16 %v7976
    %v8009 = vunpack.c.l.b16 %v7977
    %v8010 = vunpack.c.l.b16 %v7978
    %v8011 = vunpack.c.l.b16 %v7979
    %v8012 = vunpack.c.l.b16 %v7980
    %v8013 = vunpack.c.l.b16 %v7981
    %v8014 = vunpack.c.l.b16 %v7982
    %v8015 = vunpack.c.l.b16 %v7983
    %v8016 = vpack.c.b16 %v8001, %v8000
    %v8017 = vpack.c.b16 %v8003, %v8002
    %v8018 = vpack.c.b16 %v8005, %v8004
    %v8019 = vpack.c.b16 %v8007, %v8006
    %v8020 = vpack.c.b16 %v8009, %v8008
    %v8021 = vpack.c.b16 %v8011, %v8010
    %v8022 = vpack.c.b16 %v8013, %v8012
    %v8023 = vpack.c.b16 %v8015, %v8014
    %8032 = vmatprep.subr.bf16.mxu0 0
    %8033 = vmatpush1.bf16.msra.mxu0 %v8016
    %8034 = vmatprep.subr.bf16.mxu0 0
    %8035 = vmatpush1.bf16.msra.mxu0 %v8017
    %8036 = vmatprep.subr.bf16.mxu0 0
    %8037 = vmatpush1.bf16.msra.mxu0 %v8018
    %8038 = vmatprep.subr.bf16.mxu0 0
    %8039 = vmatpush1.bf16.msra.mxu0 %v8019
    %8040 = vmatprep.subr.bf16.mxu0 0
    %8041 = vmatpush1.bf16.msra.mxu0 %v8020
    %8042 = vmatprep.subr.bf16.mxu0 0
    %8043 = vmatpush1.bf16.msra.mxu0 %v8021
    %8044 = vmatprep.subr.bf16.mxu0 0
    %8045 = vmatpush1.bf16.msra.mxu0 %v8022
    %8046 = vmatprep.subr.bf16.mxu0 0
    %8047 = vmatpush1.bf16.msra.mxu0 %v8023
    %8048 = vmatprep.subr.bf16.mxu0 0
    %8049 = vmatpush1.bf16.msra.mxu0 0
    %8050 = vmatprep.subr.bf16.mxu0 0
    %8051 = vmatpush1.bf16.msra.mxu0 0
    %8052 = vmatprep.subr.bf16.mxu0 0
    %8053 = vmatpush1.bf16.msra.mxu0 0
    %8054 = vmatprep.subr.bf16.mxu0 0
    %8055 = vmatpush1.bf16.msra.mxu0 0
    %8056 = vmatprep.subr.bf16.mxu0 0
    %8057 = vmatpush1.bf16.msra.mxu0 0
    %8058 = vmatprep.subr.bf16.mxu0 0
    %8059 = vmatpush1.bf16.msra.mxu0 0
    %8060 = vmatprep.subr.bf16.mxu0 0
    %8061 = vmatpush1.bf16.msra.mxu0 0
    %8062 = vmatprep.subr.bf16.mxu0 0
    %8063 = vmatpush1.bf16.msra.mxu0 0
    %8064 = vmatprep.mubr.bf16.mxu0 0
    %8065 = vmatmul.mubr.bf16.gmra.mrb[0].mxu0 %v7965
    %v8066 = vpop.f32.mrb[0].mxu0
    %v8067 = vadd.f32 0.0, %v8066
    %v8068 = vpop.f32.mrb[0].mxu0
    %v8069 = vpop.f32.mrb[0].mxu0
    %v8070 = vadd.f32 0.0, %v8069
    %v8071 = vpop.f32.mrb[0].mxu0
    %8072 = vmatprep.mubr.bf16.mxu0 0
    %8073 = vmatmul.mubr.bf16.gmra.mrb[0].mxu0 %v7966
    %v8074 = vpop.f32.mrb[0].mxu0
    %v8075 = vadd.f32 0.0, %v8074
    %v8076 = vpop.f32.mrb[0].mxu0
    %v8077 = vpop.f32.mrb[0].mxu0
    %v8078 = vadd.f32 0.0, %v8077
    %v8079 = vpop.f32.mrb[0].mxu0
    %8080 = vdwg.mxu0
    %v8081 = vadd.f32 %v7947, %v8067
    %v8082 = vadd.f32 %v7948, %v8070
    %v8083 = vadd.f32 %v7949, %v8075
    %v8084 = vadd.f32 %v7950, %v8078
    %v8085 = vrot.slane %v6953, 6
    %v8086 = vrot.slane %v8085, 4
    %v8087 = vrot.slane %v7951, 6
    %v8088 = vsel %vm7260, %v8086, %v8087
    %v8089 = vrot.slane %v6959, 6
    %v8090 = vrot.slane %v8089, 4
    %v8091 = vrot.slane %v7952, 6
    %v8092 = vsel %vm7260, %v8090, %v8091
    %v8093 = vcombine.low %v7692, %v8088
    %v8094 = vcombine.low %v7696, %v8092
    %v8097 = vpack.c.bf16 %v8093, %v7294
    %v8098 = vpack.c.bf16 %v8094, %v7296
    %s8099 = scalar_lea.vmem [#allocation5], 512
    %v8100 = vld [vmem:[%s8099] sm:$0xf]
    %v8101 = vld [vmem:[%s8099 + $0x4] sm:$0xf]
    %v8102 = vld [vmem:[%s8099 + $0x8] sm:$0xf]
    %v8103 = vld [vmem:[%s8099 + $0xc] sm:$0xf]
    %v8104 = vld [vmem:[%s8099 + $0x10] sm:$0xf]
    %v8105 = vld [vmem:[%s8099 + $0x14] sm:$0xf]
    %v8106 = vld [vmem:[%s8099 + $0x18] sm:$0xf]
    %v8107 = vld [vmem:[%s8099 + $0x1c] sm:$0xf]
    %v8108 = vld [vmem:[%s8099 + $0x20] sm:$0xf]
    %v8109 = vld [vmem:[%s8099 + $0x24] sm:$0xf]
    %v8110 = vld [vmem:[%s8099 + $0x28] sm:$0xf]
    %v8111 = vld [vmem:[%s8099 + $0x2c] sm:$0xf]
    %v8112 = vld [vmem:[%s8099 + $0x30] sm:$0xf]
    %v8113 = vld [vmem:[%s8099 + $0x34] sm:$0xf]
    %v8114 = vld [vmem:[%s8099 + $0x38] sm:$0xf]
    %v8115 = vld [vmem:[%s8099 + $0x3c] sm:$0xf]
    %v8132 = vunpack.c.l.b16 %v8100
    %v8133 = vunpack.c.l.b16 %v8101
    %v8134 = vunpack.c.l.b16 %v8102
    %v8135 = vunpack.c.l.b16 %v8103
    %v8136 = vunpack.c.l.b16 %v8104
    %v8137 = vunpack.c.l.b16 %v8105
    %v8138 = vunpack.c.l.b16 %v8106
    %v8139 = vunpack.c.l.b16 %v8107
    %v8140 = vunpack.c.l.b16 %v8108
    %v8141 = vunpack.c.l.b16 %v8109
    %v8142 = vunpack.c.l.b16 %v8110
    %v8143 = vunpack.c.l.b16 %v8111
    %v8144 = vunpack.c.l.b16 %v8112
    %v8145 = vunpack.c.l.b16 %v8113
    %v8146 = vunpack.c.l.b16 %v8114
    %v8147 = vunpack.c.l.b16 %v8115
    %v8148 = vpack.c.b16 %v8133, %v8132
    %v8149 = vpack.c.b16 %v8135, %v8134
    %v8150 = vpack.c.b16 %v8137, %v8136
    %v8151 = vpack.c.b16 %v8139, %v8138
    %v8152 = vpack.c.b16 %v8141, %v8140
    %v8153 = vpack.c.b16 %v8143, %v8142
    %v8154 = vpack.c.b16 %v8145, %v8144
    %v8155 = vpack.c.b16 %v8147, %v8146
    %8164 = vmatprep.subr.bf16.mxu0 0
    %8165 = vmatpush1.bf16.msra.mxu0 %v8148
    %8166 = vmatprep.subr.bf16.mxu0 0
    %8167 = vmatpush1.bf16.msra.mxu0 %v8149
    %8168 = vmatprep.subr.bf16.mxu0 0
    %8169 = vmatpush1.bf16.msra.mxu0 %v8150
    %8170 = vmatprep.subr.bf16.mxu0 0
    %8171 = vmatpush1.bf16.msra.mxu0 %v8151
    %8172 = vmatprep.subr.bf16.mxu0 0
    %8173 = vmatpush1.bf16.msra.mxu0 %v8152
    %8174 = vmatprep.subr.bf16.mxu0 0
    %8175 = vmatpush1.bf16.msra.mxu0 %v8153
    %8176 = vmatprep.subr.bf16.mxu0 0
    %8177 = vmatpush1.bf16.msra.mxu0 %v8154
    %8178 = vmatprep.subr.bf16.mxu0 0
    %8179 = vmatpush1.bf16.msra.mxu0 %v8155
    %8180 = vmatprep.subr.bf16.mxu0 0
    %8181 = vmatpush1.bf16.msra.mxu0 0
    %8182 = vmatprep.subr.bf16.mxu0 0
    %8183 = vmatpush1.bf16.msra.mxu0 0
    %8184 = vmatprep.subr.bf16.mxu0 0
    %8185 = vmatpush1.bf16.msra.mxu0 0
    %8186 = vmatprep.subr.bf16.mxu0 0
    %8187 = vmatpush1.bf16.msra.mxu0 0
    %8188 = vmatprep.subr.bf16.mxu0 0
    %8189 = vmatpush1.bf16.msra.mxu0 0
    %8190 = vmatprep.subr.bf16.mxu0 0
    %8191 = vmatpush1.bf16.msra.mxu0 0
    %8192 = vmatprep.subr.bf16.mxu0 0
    %8193 = vmatpush1.bf16.msra.mxu0 0
    %8194 = vmatprep.subr.bf16.mxu0 0
    %8195 = vmatpush1.bf16.msra.mxu0 0
    %8196 = vmatprep.mubr.bf16.mxu0 0
    %8197 = vmatmul.mubr.bf16.gmra.mrb[0].mxu0 %v8097
    %v8198 = vpop.f32.mrb[0].mxu0
    %v8199 = vadd.f32 0.0, %v8198
    %v8200 = vpop.f32.mrb[0].mxu0
    %v8201 = vpop.f32.mrb[0].mxu0
    %v8202 = vadd.f32 0.0, %v8201
    %v8203 = vpop.f32.mrb[0].mxu0
    %8204 = vmatprep.mubr.bf16.mxu0 0
    %8205 = vmatmul.mubr.bf16.gmra.mrb[0].mxu0 %v8098
    %v8206 = vpop.f32.mrb[0].mxu0
    %v8207 = vadd.f32 0.0, %v8206
    %v8208 = vpop.f32.mrb[0].mxu0
    %v8209 = vpop.f32.mrb[0].mxu0
    %v8210 = vadd.f32 0.0, %v8209
    %v8211 = vpop.f32.mrb[0].mxu0
    %8212 = vdwg.mxu0
    %v8213 = vadd.f32 %v8081, %v8199
    %v8214 = vadd.f32 %v8082, %v8202
    %v8215 = vadd.f32 %v8083, %v8207
    %v8216 = vadd.f32 %v8084, %v8210
    %v8217 = vld [vmem:[%s6] sm:$0x1]
    %v8219 = vlaneseq
    %v8220 = vshrl.u32 %v8219, 7
    %v8221 = vsub.s32 0, %v8220
    %v8222 = vrot.slane %v8217, %v8221
    %v8224 = vadd.f32 %v8213, %v8222
    %v8225 = vadd.f32 %v8214, %v8222
    %v8226 = vadd.f32 %v8215, %v8222
    %v8227 = vadd.f32 %v8216, %v8222
    %v8228 = vmax.f32 %v8224, 0.0
    %v8229 = vmax.f32 %v8225, 0.0
    %v8230 = vmax.f32 %v8226, 0.0
    %v8231 = vmax.f32 %v8227, 0.0
    %v8236 = vcombine.high %v8228, %v8228
    %v8238 = vunpack.c.l.s4 1983009808
    %v8239 = vunpack.c.0.s8 %v8238
    %v8240 = vlaneseq
    %v8241 = vshrl.u32 %v8240, 7
    %v8242 = vsub.s32 %v8239, %v8241
    %v8243 = vrot.slane %v8228, %v8242
    %v8245 = vunpack.c.l.s4 1983009808
    %v8246 = vunpack.c.0.s8 %v8245
    %v8247 = vlaneseq
    %v8248 = vshrl.u32 %v8247, 7
    %v8249 = vsub.s32 %v8246, %v8248
    %v8250 = vrot.slane %v8236, %v8249
    %v8251 = vcombine.high %v8243, %v8243
    %v8252 = vcombine.high %v8250, %v8250
    %v8253 = vcombine.high %v8229, %v8229
    %v8255 = vunpack.c.l.s4 1983009808
    %v8256 = vunpack.c.0.s8 %v8255
    %v8257 = vlaneseq
    %v8258 = vshrl.u32 %v8257, 7
    %v8259 = vsub.s32 %v8256, %v8258
    %v8260 = vrot.slane %v8229, %v8259
    %v8262 = vunpack.c.l.s4 1983009808
    %v8263 = vunpack.c.0.s8 %v8262
    %v8264 = vlaneseq
    %v8265 = vshrl.u32 %v8264, 7
    %v8266 = vsub.s32 %v8263, %v8265
    %v8267 = vrot.slane %v8253, %v8266
    %v8268 = vcombine.high %v8260, %v8260
    %v8269 = vcombine.high %v8267, %v8267
    %v8270 = vcombine.high %v8230, %v8230
    %v8272 = vunpack.c.l.s4 1983009808
    %v8273 = vunpack.c.0.s8 %v8272
    %v8274 = vlaneseq
    %v8275 = vshrl.u32 %v8274, 7
    %v8276 = vsub.s32 %v8273, %v8275
    %v8277 = vrot.slane %v8230, %v8276
    %v8279 = vunpack.c.l.s4 1983009808
    %v8280 = vunpack.c.0.s8 %v8279
    %v8281 = vlaneseq
    %v8282 = vshrl.u32 %v8281, 7
    %v8283 = vsub.s32 %v8280, %v8282
    %v8284 = vrot.slane %v8270, %v8283
    %v8285 = vcombine.high %v8277, %v8277
    %v8286 = vcombine.high %v8284, %v8284
    %v8287 = vcombine.high %v8231, %v8231
    %v8289 = vunpack.c.l.s4 1983009808
    %v8290 = vunpack.c.0.s8 %v8289
    %v8291 = vlaneseq
    %v8292 = vshrl.u32 %v8291, 7
    %v8293 = vsub.s32 %v8290, %v8292
    %v8294 = vrot.slane %v8231, %v8293
    %v8296 = vunpack.c.l.s4 1983009808
    %v8297 = vunpack.c.0.s8 %v8296
    %v8298 = vlaneseq
    %v8299 = vshrl.u32 %v8298, 7
    %v8300 = vsub.s32 %v8297, %v8299
    %v8301 = vrot.slane %v8287, %v8300
    %v8302 = vcombine.high %v8294, %v8294
    %v8303 = vcombine.high %v8301, %v8301
    %v8320 = vrot.slane %v8243, 7
    %v8321 = vrot.slane %v8320, 2
    %v8322 = vrot.slane %v8251, 7
    %v8323 = vrot.slane %v8322, 2
    %v8324 = vrot.slane %v8250, 7
    %v8325 = vrot.slane %v8324, 2
    %v8326 = vrot.slane %v8252, 7
    %v8327 = vrot.slane %v8326, 2
    %v8328 = vrot.slane %v8260, 7
    %v8329 = vrot.slane %v8328, 2
    %v8330 = vrot.slane %v8268, 7
    %v8331 = vrot.slane %v8330, 2
    %v8332 = vrot.slane %v8267, 7
    %v8333 = vrot.slane %v8332, 2
    %v8334 = vrot.slane %v8269, 7
    %v8335 = vrot.slane %v8334, 2
    %v8336 = vrot.slane %v8277, 7
    %v8337 = vrot.slane %v8336, 2
    %v8338 = vrot.slane %v8285, 7
    %v8339 = vrot.slane %v8338, 2
    %v8340 = vrot.slane %v8284, 7
    %v8341 = vrot.slane %v8340, 2
    %v8342 = vrot.slane %v8286, 7
    %v8343 = vrot.slane %v8342, 2
    %v8344 = vrot.slane %v8294, 7
    %v8345 = vrot.slane %v8344, 2
    %v8346 = vrot.slane %v8302, 7
    %v8347 = vrot.slane %v8346, 2
    %v8348 = vrot.slane %v8301, 7
    %v8349 = vrot.slane %v8348, 2
    %v8350 = vrot.slane %v8303, 7
    %v8351 = vrot.slane %v8350, 2
    %v8368 = vmax.f32 %v8243, %v8321
    %v8369 = vmax.f32 %v8251, %v8323
    %v8370 = vmax.f32 %v8250, %v8325
    %v8371 = vmax.f32 %v8252, %v8327
    %v8372 = vmax.f32 %v8260, %v8329
    %v8373 = vmax.f32 %v8268, %v8331
    %v8374 = vmax.f32 %v8267, %v8333
    %v8375 = vmax.f32 %v8269, %v8335
    %v8376 = vmax.f32 %v8277, %v8337
    %v8377 = vmax.f32 %v8285, %v8339
    %v8378 = vmax.f32 %v8284, %v8341
    %v8379 = vmax.f32 %v8286, %v8343
    %v8380 = vmax.f32 %v8294, %v8345
    %v8381 = vmax.f32 %v8302, %v8347
    %v8382 = vmax.f32 %v8301, %v8349
    %v8383 = vmax.f32 %v8303, %v8351
    %v8384 = vmax.f32 %v8368, %v8370
    %v8385 = vmax.f32 %v8369, %v8371
    %v8386 = vmax.f32 %v8372, %v8374
    %v8387 = vmax.f32 %v8373, %v8375
    %v8388 = vmax.f32 %v8376, %v8378
    %v8389 = vmax.f32 %v8377, %v8379
    %v8390 = vmax.f32 %v8380, %v8382
    %v8391 = vmax.f32 %v8381, %v8383
    %8392 = vst [vmem:[#allocation4] sm:$0xf] 0.0
    %8393 = vst [vmem:[#allocation4 + $0x10] sm:$0xf] 0.0
    %s8394 = scalar_lea.vmem [#allocation4], 12
    %8395 = vst [vmem:[%s8394] sm:$0xf] 0.0
    %8396 = vst [vmem:[%s8394 + $0x10] sm:$0xf] 0.0
    %8397 = vst [vmem:[#allocation4] sm:$0x1] 0.0
    %8398 = vst [vmem:[#allocation4 + $0x4] sm:$0x1] 0.0
    %8399 = vst [vmem:[#allocation4 + $0x8] sm:$0x1] 0.0
    %8400 = vst [vmem:[#allocation4 + $0xc] sm:$0x1] 0.0
    %8401 = vst [vmem:[#allocation4 + $0x10] sm:$0x1] 0.0
    %8402 = vst [vmem:[#allocation4 + $0x14] sm:$0x1] 0.0
    %8403 = vst [vmem:[#allocation4 + $0x18] sm:$0x1] 0.0
    %8404 = vst [vmem:[#allocation4 + $0x1c] sm:$0x1] 0.0
    %8405 = vst [vmem:[#allocation4 + $0x3] sm:$0x1] 0.0
    %8406 = vst [vmem:[#allocation4 + $0x7] sm:$0x1] 0.0
    %8407 = vst [vmem:[#allocation4 + $0xb] sm:$0x1] 0.0
    %8408 = vst [vmem:[#allocation4 + $0xf] sm:$0x1] 0.0
    %8409 = vst [vmem:[#allocation4 + $0x13] sm:$0x1] 0.0
    %8410 = vst [vmem:[#allocation4 + $0x17] sm:$0x1] 0.0
    %8411 = vst [vmem:[#allocation4 + $0x1b] sm:$0x1] 0.0
    %8412 = vst [vmem:[#allocation4 + $0x1f] sm:$0x1] 0.0
    %v8421 = vlaneseq
    %v8422 = vshrl.u32 %v8421, 7
    %v8423 = vsub.s32 0, %v8422
    %v8424 = vrot.slane %v8384, %v8423
    %v8425 = vlaneseq
    %v8426 = vshrl.u32 %v8425, 7
    %v8427 = vsub.s32 0, %v8426
    %v8428 = vrot.slane %v8385, %v8427
    %v8429 = vlaneseq
    %v8430 = vshrl.u32 %v8429, 7
    %v8431 = vsub.s32 0, %v8430
    %v8432 = vrot.slane %v8386, %v8431
    %v8433 = vlaneseq
    %v8434 = vshrl.u32 %v8433, 7
    %v8435 = vsub.s32 0, %v8434
    %v8436 = vrot.slane %v8387, %v8435
    %v8437 = vlaneseq
    %v8438 = vshrl.u32 %v8437, 7
    %v8439 = vsub.s32 0, %v8438
    %v8440 = vrot.slane %v8388, %v8439
    %v8441 = vlaneseq
    %v8442 = vshrl.u32 %v8441, 7
    %v8443 = vsub.s32 0, %v8442
    %v8444 = vrot.slane %v8389, %v8443
    %v8445 = vlaneseq
    %v8446 = vshrl.u32 %v8445, 7
    %v8447 = vsub.s32 0, %v8446
    %v8448 = vrot.slane %v8390, %v8447
    %v8449 = vlaneseq
    %v8450 = vshrl.u32 %v8449, 7
    %v8451 = vsub.s32 0, %v8450
    %v8452 = vrot.slane %v8391, %v8451
    %v8453 = vsel %vm4022, %v8428, %v8424
    %v8454 = vsel %vm4022, %v8436, %v8432
    %v8455 = vsel %vm4022, %v8444, %v8440
    %v8456 = vsel %vm4022, %v8452, %v8448
    %s8461 = scalar_lea.vmem [#allocation4], 4
    %8462 = vst [vmem:[%s8461 + $0x1] sm:$0x3] %v8453
    %8463 = vst [vmem:[%s8461 + $0x5] sm:$0x3] %v8454
    %8464 = vst [vmem:[%s8461 + $0x11] sm:$0x3] %v8455
    %8465 = vst [vmem:[%s8461 + $0x15] sm:$0x3] %v8456
    %v8466 = vld [vmem:[#allocation4] sm:$0xf]
    %v8467 = vld [vmem:[#allocation4 + $0x4] sm:$0xf]
    %v8468 = vld [vmem:[#allocation4 + $0x8] sm:$0xf]
    %v8469 = vld [vmem:[#allocation4 + $0xc] sm:$0xf]
    %v8470 = vld [vmem:[#allocation4 + $0x10] sm:$0xf]
    %v8471 = vld [vmem:[#allocation4 + $0x14] sm:$0xf]
    %v8472 = vld [vmem:[#allocation4 + $0x18] sm:$0xf]
    %v8473 = vld [vmem:[#allocation4 + $0x1c] sm:$0xf]
    %v8478 = vcombine.low %v8466, %v8467
    %v8479 = vcombine.low %v8470, %v8471
    %v8481 = vunpack.c.l.s4 1983009808
    %v8482 = vunpack.c.0.s8 %v8481
    %v8483 = vlaneseq
    %v8484 = vshrl.u32 %v8483, 7
    %v8485 = vsub.s32 %v8482, %v8484
    %v8486 = vrot.slane %v8478, %v8485
    %v8488 = vunpack.c.l.s4 1983009808
    %v8489 = vunpack.c.0.s8 %v8488
    %v8490 = vlaneseq
    %v8491 = vshrl.u32 %v8490, 7
    %v8492 = vsub.s32 %v8489, %v8491
    %v8493 = vrot.slane %v8479, %v8492
    %v8494 = vcombine.low %v8486, %v8493
    %v8496 = vpack.c.bf16 %v8494, %v8494
    %v8497 = vld [vmem:[%s7] sm:$0xff]
    %v8498 = vld [vmem:[%s7 + $0x8] sm:$0xff]
    %v8499 = vld [vmem:[%s7 + $0x10] sm:$0xff]
    %v8500 = vld [vmem:[%s7 + $0x18] sm:$0xff]
    %v8501 = vld [vmem:[%s7 + $0x20] sm:$0xff]
    %v8502 = vld [vmem:[%s7 + $0x28] sm:$0xff]
    %v8503 = vld [vmem:[%s7 + $0x30] sm:$0xff]
    %v8504 = vld [vmem:[%s7 + $0x38] sm:$0xff]
    %v8505 = vld [vmem:[%s7 + $0x40] sm:$0xff]
    %v8506 = vld [vmem:[%s7 + $0x48] sm:$0xff]
    %v8507 = vld [vmem:[%s7 + $0x50] sm:$0xff]
    %v8508 = vld [vmem:[%s7 + $0x58] sm:$0xff]
    %v8509 = vld [vmem:[%s7 + $0x60] sm:$0xff]
    %v8510 = vld [vmem:[%s7 + $0x68] sm:$0xff]
    %v8511 = vld [vmem:[%s7 + $0x70] sm:$0xff]
    %v8512 = vld [vmem:[%s7 + $0x78] sm:$0xff]
    %v8513 = vld [vmem:[%s7 + $0x80] sm:$0xff]
    %v8514 = vld [vmem:[%s7 + $0x88] sm:$0xff]
    %v8515 = vld [vmem:[%s7 + $0x90] sm:$0xff]
    %v8516 = vld [vmem:[%s7 + $0x98] sm:$0xff]
    %v8517 = vld [vmem:[%s7 + $0xa0] sm:$0xff]
    %v8518 = vld [vmem:[%s7 + $0xa8] sm:$0xff]
    %v8519 = vld [vmem:[%s7 + $0xb0] sm:$0xff]
    %v8520 = vld [vmem:[%s7 + $0xb8] sm:$0xff]
    %v8521 = vld [vmem:[%s7 + $0xc0] sm:$0xff]
    %v8522 = vld [vmem:[%s7 + $0xc8] sm:$0xff]
    %v8523 = vld [vmem:[%s7 + $0xd0] sm:$0xff]
    %v8524 = vld [vmem:[%s7 + $0xd8] sm:$0xff]
    %v8525 = vld [vmem:[%s7 + $0xe0] sm:$0xff]
    %v8526 = vld [vmem:[%s7 + $0xe8] sm:$0xff]
    %v8527 = vld [vmem:[%s7 + $0xf0] sm:$0xff]
    %v8528 = vld [vmem:[%s7 + $0xf8] sm:$0xff]
    %v8530 = vunpack.c.l.s4 1983009808
    %v8531 = vunpack.c.0.s8 %v8530
    %v8532 = vlaneseq
    %v8533 = vshrl.u32 %v8532, 7
    %v8534 = vsub.s32 %v8531, %v8533
    %v8535 = vrot.slane %v8466, %v8534
    %v8536 = vcombine.high %v8535, %v8535
    %v8538 = vunpack.c.l.s4 1983009808
    %v8539 = vunpack.c.0.s8 %v8538
    %v8540 = vlaneseq
    %v8541 = vshrl.u32 %v8540, 7
    %v8542 = vsub.s32 %v8539, %v8541
    %v8543 = vrot.slane %v8467, %v8542
    %v8544 = vcombine.high %v8543, %v8543
    %v8546 = vunpack.c.l.s4 1983009808
    %v8547 = vunpack.c.0.s8 %v8546
    %v8548 = vlaneseq
    %v8549 = vshrl.u32 %v8548, 7
    %v8550 = vsub.s32 %v8547, %v8549
    %v8551 = vrot.slane %v8470, %v8550
    %v8552 = vcombine.high %v8551, %v8551
    %v8554 = vunpack.c.l.s4 1983009808
    %v8555 = vunpack.c.0.s8 %v8554
    %v8556 = vlaneseq
    %v8557 = vshrl.u32 %v8556, 7
    %v8558 = vsub.s32 %v8555, %v8557
    %v8559 = vrot.slane %v8471, %v8558
    %v8560 = vcombine.high %v8559, %v8559
    %vm8561 = vcmask 1040384
    %vm8562 = vmor %vm8561, %vm4024
    %vm8563 = vmor %vm8562, %vm4028
    %vm8564 = vmor %vm8563, %vm4032
    %v8565 = vrot.slane %v8535, 7
    %v8566 = vrot.slane %v8565, 2
    %v8567 = vrot.slane %v8536, 7
    %v8568 = vsel %vm8564, %v8566, %v8567
    %v8569 = vrot.slane %v8543, 7
    %v8570 = vrot.slane %v8569, 2
    %v8571 = vrot.slane %v8544, 7
    %v8572 = vsel %vm8564, %v8570, %v8571
    %v8573 = vrot.slane %v8551, 7
    %v8574 = vrot.slane %v8573, 2
    %v8575 = vrot.slane %v8552, 7
    %v8576 = vsel %vm8564, %v8574, %v8575
    %v8577 = vrot.slane %v8559, 7
    %v8578 = vrot.slane %v8577, 2
    %v8579 = vrot.slane %v8560, 7
    %v8580 = vsel %vm8564, %v8578, %v8579
    %v8581 = vcombine.low %v8568, %v8572
    %v8582 = vcombine.low %v8576, %v8580
    %v8584 = vunpack.c.l.s4 1983009808
    %v8585 = vunpack.c.0.s8 %v8584
    %v8586 = vlaneseq
    %v8587 = vshrl.u32 %v8586, 7
    %v8588 = vsub.s32 %v8585, %v8587
    %v8589 = vrot.slane %v8581, %v8588
    %v8591 = vunpack.c.l.s4 1983009808
    %v8592 = vunpack.c.0.s8 %v8591
    %v8593 = vlaneseq
    %v8594 = vshrl.u32 %v8593, 7
    %v8595 = vsub.s32 %v8592, %v8594
    %v8596 = vrot.slane %v8582, %v8595
    %v8597 = vcombine.low %v8589, %v8596
    %v8599 = vpack.c.bf16 %v8597, %v8597
    %s8600 = scalar_lea.vmem %s7, 256
    %v8601 = vld [vmem:[%s8600] sm:$0xff]
    %v8602 = vld [vmem:[%s8600 + $0x8] sm:$0xff]
    %v8603 = vld [vmem:[%s8600 + $0x10] sm:$0xff]
    %v8604 = vld [vmem:[%s8600 + $0x18] sm:$0xff]
    %v8605 = vld [vmem:[%s8600 + $0x20] sm:$0xff]
    %v8606 = vld [vmem:[%s8600 + $0x28] sm:$0xff]
    %v8607 = vld [vmem:[%s8600 + $0x30] sm:$0xff]
    %v8608 = vld [vmem:[%s8600 + $0x38] sm:$0xff]
    %v8609 = vld [vmem:[%s8600 + $0x40] sm:$0xff]
    %v8610 = vld [vmem:[%s8600 + $0x48] sm:$0xff]
    %v8611 = vld [vmem:[%s8600 + $0x50] sm:$0xff]
    %v8612 = vld [vmem:[%s8600 + $0x58] sm:$0xff]
    %v8613 = vld [vmem:[%s8600 + $0x60] sm:$0xff]
    %v8614 = vld [vmem:[%s8600 + $0x68] sm:$0xff]
    %v8615 = vld [vmem:[%s8600 + $0x70] sm:$0xff]
    %v8616 = vld [vmem:[%s8600 + $0x78] sm:$0xff]
    %v8617 = vld [vmem:[%s8600 + $0x80] sm:$0xff]
    %v8618 = vld [vmem:[%s8600 + $0x88] sm:$0xff]
    %v8619 = vld [vmem:[%s8600 + $0x90] sm:$0xff]
    %v8620 = vld [vmem:[%s8600 + $0x98] sm:$0xff]
    %v8621 = vld [vmem:[%s8600 + $0xa0] sm:$0xff]
    %v8622 = vld [vmem:[%s8600 + $0xa8] sm:$0xff]
    %v8623 = vld [vmem:[%s8600 + $0xb0] sm:$0xff]
    %v8624 = vld [vmem:[%s8600 + $0xb8] sm:$0xff]
    %v8625 = vld [vmem:[%s8600 + $0xc0] sm:$0xff]
    %v8626 = vld [vmem:[%s8600 + $0xc8] sm:$0xff]
    %v8627 = vld [vmem:[%s8600 + $0xd0] sm:$0xff]
    %v8628 = vld [vmem:[%s8600 + $0xd8] sm:$0xff]
    %v8629 = vld [vmem:[%s8600 + $0xe0] sm:$0xff]
    %v8630 = vld [vmem:[%s8600 + $0xe8] sm:$0xff]
    %v8631 = vld [vmem:[%s8600 + $0xf0] sm:$0xff]
    %v8632 = vld [vmem:[%s8600 + $0xf8] sm:$0xff]
    %v8665 = vunpack.c.l.b16 %v8601
    %v8666 = vunpack.c.h.b16 %v8601
    %v8667 = vunpack.c.l.b16 %v8602
    %v8668 = vunpack.c.h.b16 %v8602
    %v8669 = vunpack.c.l.b16 %v8603
    %v8670 = vunpack.c.h.b16 %v8603
    %v8671 = vunpack.c.l.b16 %v8604
    %v8672 = vunpack.c.h.b16 %v8604
    %v8673 = vunpack.c.l.b16 %v8605
    %v8674 = vunpack.c.h.b16 %v8605
    %v8675 = vunpack.c.l.b16 %v8606
    %v8676 = vunpack.c.h.b16 %v8606
    %v8677 = vunpack.c.l.b16 %v8607
    %v8678 = vunpack.c.h.b16 %v8607
    %v8679 = vunpack.c.l.b16 %v8608
    %v8680 = vunpack.c.h.b16 %v8608
    %v8681 = vunpack.c.l.b16 %v8609
    %v8682 = vunpack.c.h.b16 %v8609
    %v8683 = vunpack.c.l.b16 %v8610
    %v8684 = vunpack.c.h.b16 %v8610
    %v8685 = vunpack.c.l.b16 %v8611
    %v8686 = vunpack.c.h.b16 %v8611
    %v8687 = vunpack.c.l.b16 %v8612
    %v8688 = vunpack.c.h.b16 %v8612
    %v8689 = vunpack.c.l.b16 %v8613
    %v8690 = vunpack.c.h.b16 %v8613
    %v8691 = vunpack.c.l.b16 %v8614
    %v8692 = vunpack.c.h.b16 %v8614
    %v8693 = vunpack.c.l.b16 %v8615
    %v8694 = vunpack.c.h.b16 %v8615
    %v8695 = vunpack.c.l.b16 %v8616
    %v8696 = vunpack.c.h.b16 %v8616
    %v8697 = vunpack.c.l.b16 %v8617
    %v8698 = vunpack.c.h.b16 %v8617
    %v8699 = vunpack.c.l.b16 %v8618
    %v8700 = vunpack.c.h.b16 %v8618
    %v8701 = vunpack.c.l.b16 %v8619
    %v8702 = vunpack.c.h.b16 %v8619
    %v8703 = vunpack.c.l.b16 %v8620
    %v8704 = vunpack.c.h.b16 %v8620
    %v8705 = vunpack.c.l.b16 %v8621
    %v8706 = vunpack.c.h.b16 %v8621
    %v8707 = vunpack.c.l.b16 %v8622
    %v8708 = vunpack.c.h.b16 %v8622
    %v8709 = vunpack.c.l.b16 %v8623
    %v8710 = vunpack.c.h.b16 %v8623
    %v8711 = vunpack.c.l.b16 %v8624
    %v8712 = vunpack.c.h.b16 %v8624
    %v8713 = vunpack.c.l.b16 %v8625
    %v8714 = vunpack.c.h.b16 %v8625
    %v8715 = vunpack.c.l.b16 %v8626
    %v8716 = vunpack.c.h.b16 %v8626
    %v8717 = vunpack.c.l.b16 %v8627
    %v8718 = vunpack.c.h.b16 %v8627
    %v8719 = vunpack.c.l.b16 %v8628
    %v8720 = vunpack.c.h.b16 %v8628
    %v8721 = vunpack.c.l.b16 %v8629
    %v8722 = vunpack.c.h.b16 %v8629
    %v8723 = vunpack.c.l.b16 %v8630
    %v8724 = vunpack.c.h.b16 %v8630
    %v8725 = vunpack.c.l.b16 %v8631
    %v8726 = vunpack.c.h.b16 %v8631
    %v8727 = vunpack.c.l.b16 %v8632
    %v8728 = vunpack.c.h.b16 %v8632
    %v8729 = vpack.c.b16 %v8669, %v8665
    %v8730 = vpack.c.b16 %v8670, %v8666
    %v8731 = vpack.c.b16 %v8671, %v8667
    %v8732 = vpack.c.b16 %v8672, %v8668
    %v8733 = vpack.c.b16 %v8677, %v8673
    %v8734 = vpack.c.b16 %v8678, %v8674
    %v8735 = vpack.c.b16 %v8679, %v8675
    %v8736 = vpack.c.b16 %v8680, %v8676
    %v8737 = vpack.c.b16 %v8685, %v8681
    %v8738 = vpack.c.b16 %v8686, %v8682
    %v8739 = vpack.c.b16 %v8687, %v8683
    %v8740 = vpack.c.b16 %v8688, %v8684
    %v8741 = vpack.c.b16 %v8693, %v8689
    %v8742 = vpack.c.b16 %v8694, %v8690
    %v8743 = vpack.c.b16 %v8695, %v8691
    %v8744 = vpack.c.b16 %v8696, %v8692
    %v8745 = vpack.c.b16 %v8701, %v8697
    %v8746 = vpack.c.b16 %v8702, %v8698
    %v8747 = vpack.c.b16 %v8703, %v8699
    %v8748 = vpack.c.b16 %v8704, %v8700
    %v8749 = vpack.c.b16 %v8709, %v8705
    %v8750 = vpack.c.b16 %v8710, %v8706
    %v8751 = vpack.c.b16 %v8711, %v8707
    %v8752 = vpack.c.b16 %v8712, %v8708
    %v8753 = vpack.c.b16 %v8717, %v8713
    %v8754 = vpack.c.b16 %v8718, %v8714
    %v8755 = vpack.c.b16 %v8719, %v8715
    %v8756 = vpack.c.b16 %v8720, %v8716
    %v8757 = vpack.c.b16 %v8725, %v8721
    %v8758 = vpack.c.b16 %v8726, %v8722
    %v8759 = vpack.c.b16 %v8727, %v8723
    %v8760 = vpack.c.b16 %v8728, %v8724
    %8793 = vmatprep.subr.bf16.mxu0 %v8730
    %8794 = vmatpush1.bf16.msra.mxu0 %v8729
    %8795 = vmatprep.subr.bf16.mxu0 %v8734
    %8796 = vmatpush1.bf16.msra.mxu0 %v8733
    %8797 = vmatprep.subr.bf16.mxu0 %v8738
    %8798 = vmatpush1.bf16.msra.mxu0 %v8737
    %8799 = vmatprep.subr.bf16.mxu0 %v8742
    %8800 = vmatpush1.bf16.msra.mxu0 %v8741
    %8801 = vmatprep.subr.bf16.mxu0 %v8746
    %8802 = vmatpush1.bf16.msra.mxu0 %v8745
    %8803 = vmatprep.subr.bf16.mxu0 %v8750
    %8804 = vmatpush1.bf16.msra.mxu0 %v8749
    %8805 = vmatprep.subr.bf16.mxu0 %v8754
    %8806 = vmatpush1.bf16.msra.mxu0 %v8753
    %8807 = vmatprep.subr.bf16.mxu0 %v8758
    %8808 = vmatpush1.bf16.msra.mxu0 %v8757
    %8809 = vmatprep.subr.bf16.mxu0 0
    %8810 = vmatpush1.bf16.msra.mxu0 0
    %8811 = vmatprep.subr.bf16.mxu0 0
    %8812 = vmatpush1.bf16.msra.mxu0 0
    %8813 = vmatprep.subr.bf16.mxu0 0
    %8814 = vmatpush1.bf16.msra.mxu0 0
    %8815 = vmatprep.subr.bf16.mxu0 0
    %8816 = vmatpush1.bf16.msra.mxu0 0
    %8817 = vmatprep.subr.bf16.mxu0 0
    %8818 = vmatpush1.bf16.msra.mxu0 0
    %8819 = vmatprep.subr.bf16.mxu0 0
    %8820 = vmatpush1.bf16.msra.mxu0 0
    %8821 = vmatprep.subr.bf16.mxu0 0
    %8822 = vmatpush1.bf16.msra.mxu0 0
    %8823 = vmatprep.subr.bf16.mxu0 0
    %8824 = vmatpush1.bf16.msra.mxu0 0
    %8825 = vmatprep.mubr.bf16.mxu0 0
    %8826 = vmatmul.mubr.bf16.gmra.mrb[0].mxu0 %v8599
    %v8827 = vpop.f32.mrb[0].mxu0
    %v8828 = vadd.f32 0.0, %v8827
    %v8829 = vpop.f32.mrb[0].mxu0
    %v8830 = vadd.f32 0.0, %v8829
    %v8831 = vpop.f32.mrb[0].mxu0
    %v8832 = vpop.f32.mrb[0].mxu0
    %8833 = vdwg.mxu0
    %8834 = vmatprep.subr.bf16.mxu0 %v8732
    %8835 = vmatpush1.bf16.msra.mxu0 %v8731
    %8836 = vmatprep.subr.bf16.mxu0 %v8736
    %8837 = vmatpush1.bf16.msra.mxu0 %v8735
    %8838 = vmatprep.subr.bf16.mxu0 %v8740
    %8839 = vmatpush1.bf16.msra.mxu0 %v8739
    %8840 = vmatprep.subr.bf16.mxu0 %v8744
    %8841 = vmatpush1.bf16.msra.mxu0 %v8743
    %8842 = vmatprep.subr.bf16.mxu0 %v8748
    %8843 = vmatpush1.bf16.msra.mxu0 %v8747
    %8844 = vmatprep.subr.bf16.mxu0 %v8752
    %8845 = vmatpush1.bf16.msra.mxu0 %v8751
    %8846 = vmatprep.subr.bf16.mxu0 %v8756
    %8847 = vmatpush1.bf16.msra.mxu0 %v8755
    %8848 = vmatprep.subr.bf16.mxu0 %v8760
    %8849 = vmatpush1.bf16.msra.mxu0 %v8759
    %8850 = vmatprep.subr.bf16.mxu0 0
    %8851 = vmatpush1.bf16.msra.mxu0 0
    %8852 = vmatprep.subr.bf16.mxu0 0
    %8853 = vmatpush1.bf16.msra.mxu0 0
    %8854 = vmatprep.subr.bf16.mxu0 0
    %8855 = vmatpush1.bf16.msra.mxu0 0
    %8856 = vmatprep.subr.bf16.mxu0 0
    %8857 = vmatpush1.bf16.msra.mxu0 0
    %8858 = vmatprep.subr.bf16.mxu0 0
    %8859 = vmatpush1.bf16.msra.mxu0 0
    %8860 = vmatprep.subr.bf16.mxu0 0
    %8861 = vmatpush1.bf16.msra.mxu0 0
    %8862 = vmatprep.subr.bf16.mxu0 0
    %8863 = vmatpush1.bf16.msra.mxu0 0
    %8864 = vmatprep.subr.bf16.mxu0 0
    %8865 = vmatpush1.bf16.msra.mxu0 0
    %8866 = vmatprep.mubr.bf16.mxu0 0
    %8867 = vmatmul.mubr.bf16.gmra.mrb[0].mxu0 %v8599
    %v8868 = vpop.f32.mrb[0].mxu0
    %v8869 = vadd.f32 0.0, %v8868
    %v8870 = vpop.f32.mrb[0].mxu0
    %v8871 = vadd.f32 0.0, %v8870
    %v8872 = vpop.f32.mrb[0].mxu0
    %v8873 = vpop.f32.mrb[0].mxu0
    %8874 = vdwg.mxu0
    %v8907 = vunpack.c.l.b16 %v8497
    %v8908 = vunpack.c.h.b16 %v8497
    %v8909 = vunpack.c.l.b16 %v8498
    %v8910 = vunpack.c.h.b16 %v8498
    %v8911 = vunpack.c.l.b16 %v8499
    %v8912 = vunpack.c.h.b16 %v8499
    %v8913 = vunpack.c.l.b16 %v8500
    %v8914 = vunpack.c.h.b16 %v8500
    %v8915 = vunpack.c.l.b16 %v8501
    %v8916 = vunpack.c.h.b16 %v8501
    %v8917 = vunpack.c.l.b16 %v8502
    %v8918 = vunpack.c.h.b16 %v8502
    %v8919 = vunpack.c.l.b16 %v8503
    %v8920 = vunpack.c.h.b16 %v8503
    %v8921 = vunpack.c.l.b16 %v8504
    %v8922 = vunpack.c.h.b16 %v8504
    %v8923 = vunpack.c.l.b16 %v8505
    %v8924 = vunpack.c.h.b16 %v8505
    %v8925 = vunpack.c.l.b16 %v8506
    %v8926 = vunpack.c.h.b16 %v8506
    %v8927 = vunpack.c.l.b16 %v8507
    %v8928 = vunpack.c.h.b16 %v8507
    %v8929 = vunpack.c.l.b16 %v8508
    %v8930 = vunpack.c.h.b16 %v8508
    %v8931 = vunpack.c.l.b16 %v8509
    %v8932 = vunpack.c.h.b16 %v8509
    %v8933 = vunpack.c.l.b16 %v8510
    %v8934 = vunpack.c.h.b16 %v8510
    %v8935 = vunpack.c.l.b16 %v8511
    %v8936 = vunpack.c.h.b16 %v8511
    %v8937 = vunpack.c.l.b16 %v8512
    %v8938 = vunpack.c.h.b16 %v8512
    %v8939 = vunpack.c.l.b16 %v8513
    %v8940 = vunpack.c.h.b16 %v8513
    %v8941 = vunpack.c.l.b16 %v8514
    %v8942 = vunpack.c.h.b16 %v8514
    %v8943 = vunpack.c.l.b16 %v8515
    %v8944 = vunpack.c.h.b16 %v8515
    %v8945 = vunpack.c.l.b16 %v8516
    %v8946 = vunpack.c.h.b16 %v8516
    %v8947 = vunpack.c.l.b16 %v8517
    %v8948 = vunpack.c.h.b16 %v8517
    %v8949 = vunpack.c.l.b16 %v8518
    %v8950 = vunpack.c.h.b16 %v8518
    %v8951 = vunpack.c.l.b16 %v8519
    %v8952 = vunpack.c.h.b16 %v8519
    %v8953 = vunpack.c.l.b16 %v8520
    %v8954 = vunpack.c.h.b16 %v8520
    %v8955 = vunpack.c.l.b16 %v8521
    %v8956 = vunpack.c.h.b16 %v8521
    %v8957 = vunpack.c.l.b16 %v8522
    %v8958 = vunpack.c.h.b16 %v8522
    %v8959 = vunpack.c.l.b16 %v8523
    %v8960 = vunpack.c.h.b16 %v8523
    %v8961 = vunpack.c.l.b16 %v8524
    %v8962 = vunpack.c.h.b16 %v8524
    %v8963 = vunpack.c.l.b16 %v8525
    %v8964 = vunpack.c.h.b16 %v8525
    %v8965 = vunpack.c.l.b16 %v8526
    %v8966 = vunpack.c.h.b16 %v8526
    %v8967 = vunpack.c.l.b16 %v8527
    %v8968 = vunpack.c.h.b16 %v8527
    %v8969 = vunpack.c.l.b16 %v8528
    %v8970 = vunpack.c.h.b16 %v8528
    %v8971 = vpack.c.b16 %v8911, %v8907
    %v8972 = vpack.c.b16 %v8912, %v8908
    %v8973 = vpack.c.b16 %v8913, %v8909
    %v8974 = vpack.c.b16 %v8914, %v8910
    %v8975 = vpack.c.b16 %v8919, %v8915
    %v8976 = vpack.c.b16 %v8920, %v8916
    %v8977 = vpack.c.b16 %v8921, %v8917
    %v8978 = vpack.c.b16 %v8922, %v8918
    %v8979 = vpack.c.b16 %v8927, %v8923
    %v8980 = vpack.c.b16 %v8928, %v8924
    %v8981 = vpack.c.b16 %v8929, %v8925
    %v8982 = vpack.c.b16 %v8930, %v8926
    %v8983 = vpack.c.b16 %v8935, %v8931
    %v8984 = vpack.c.b16 %v8936, %v8932
    %v8985 = vpack.c.b16 %v8937, %v8933
    %v8986 = vpack.c.b16 %v8938, %v8934
    %v8987 = vpack.c.b16 %v8943, %v8939
    %v8988 = vpack.c.b16 %v8944, %v8940
    %v8989 = vpack.c.b16 %v8945, %v8941
    %v8990 = vpack.c.b16 %v8946, %v8942
    %v8991 = vpack.c.b16 %v8951, %v8947
    %v8992 = vpack.c.b16 %v8952, %v8948
    %v8993 = vpack.c.b16 %v8953, %v8949
    %v8994 = vpack.c.b16 %v8954, %v8950
    %v8995 = vpack.c.b16 %v8959, %v8955
    %v8996 = vpack.c.b16 %v8960, %v8956
    %v8997 = vpack.c.b16 %v8961, %v8957
    %v8998 = vpack.c.b16 %v8962, %v8958
    %v8999 = vpack.c.b16 %v8967, %v8963
    %v9000 = vpack.c.b16 %v8968, %v8964
    %v9001 = vpack.c.b16 %v8969, %v8965
    %v9002 = vpack.c.b16 %v8970, %v8966
    %9035 = vmatprep.subr.bf16.mxu0 %v8972
    %9036 = vmatpush1.bf16.msra.mxu0 %v8971
    %9037 = vmatprep.subr.bf16.mxu0 %v8976
    %9038 = vmatpush1.bf16.msra.mxu0 %v8975
    %9039 = vmatprep.subr.bf16.mxu0 %v8980
    %9040 = vmatpush1.bf16.msra.mxu0 %v8979
    %9041 = vmatprep.subr.bf16.mxu0 %v8984
    %9042 = vmatpush1.bf16.msra.mxu0 %v8983
    %9043 = vmatprep.subr.bf16.mxu0 %v8988
    %9044 = vmatpush1.bf16.msra.mxu0 %v8987
    %9045 = vmatprep.subr.bf16.mxu0 %v8992
    %9046 = vmatpush1.bf16.msra.mxu0 %v8991
    %9047 = vmatprep.subr.bf16.mxu0 %v8996
    %9048 = vmatpush1.bf16.msra.mxu0 %v8995
    %9049 = vmatprep.subr.bf16.mxu0 %v9000
    %9050 = vmatpush1.bf16.msra.mxu0 %v8999
    %9051 = vmatprep.subr.bf16.mxu0 0
    %9052 = vmatpush1.bf16.msra.mxu0 0
    %9053 = vmatprep.subr.bf16.mxu0 0
    %9054 = vmatpush1.bf16.msra.mxu0 0
    %9055 = vmatprep.subr.bf16.mxu0 0
    %9056 = vmatpush1.bf16.msra.mxu0 0
    %9057 = vmatprep.subr.bf16.mxu0 0
    %9058 = vmatpush1.bf16.msra.mxu0 0
    %9059 = vmatprep.subr.bf16.mxu0 0
    %9060 = vmatpush1.bf16.msra.mxu0 0
    %9061 = vmatprep.subr.bf16.mxu0 0
    %9062 = vmatpush1.bf16.msra.mxu0 0
    %9063 = vmatprep.subr.bf16.mxu0 0
    %9064 = vmatpush1.bf16.msra.mxu0 0
    %9065 = vmatprep.subr.bf16.mxu0 0
    %9066 = vmatpush1.bf16.msra.mxu0 0
    %9067 = vmatprep.mubr.bf16.mxu0 0
    %9068 = vmatmul.mubr.bf16.gmra.mrb[0].mxu0 %v8496
    %v9069 = vpop.f32.mrb[0].mxu0
    %v9070 = vadd.f32 %v8828, %v9069
    %v9071 = vpop.f32.mrb[0].mxu0
    %v9072 = vadd.f32 %v8830, %v9071
    %v9073 = vpop.f32.mrb[0].mxu0
    %v9074 = vpop.f32.mrb[0].mxu0
    %9075 = vdwg.mxu0
    %9076 = vmatprep.subr.bf16.mxu0 %v8974
    %9077 = vmatpush1.bf16.msra.mxu0 %v8973
    %9078 = vmatprep.subr.bf16.mxu0 %v8978
    %9079 = vmatpush1.bf16.msra.mxu0 %v8977
    %9080 = vmatprep.subr.bf16.mxu0 %v8982
    %9081 = vmatpush1.bf16.msra.mxu0 %v8981
    %9082 = vmatprep.subr.bf16.mxu0 %v8986
    %9083 = vmatpush1.bf16.msra.mxu0 %v8985
    %9084 = vmatprep.subr.bf16.mxu0 %v8990
    %9085 = vmatpush1.bf16.msra.mxu0 %v8989
    %9086 = vmatprep.subr.bf16.mxu0 %v8994
    %9087 = vmatpush1.bf16.msra.mxu0 %v8993
    %9088 = vmatprep.subr.bf16.mxu0 %v8998
    %9089 = vmatpush1.bf16.msra.mxu0 %v8997
    %9090 = vmatprep.subr.bf16.mxu0 %v9002
    %9091 = vmatpush1.bf16.msra.mxu0 %v9001
    %9092 = vmatprep.subr.bf16.mxu0 0
    %9093 = vmatpush1.bf16.msra.mxu0 0
    %9094 = vmatprep.subr.bf16.mxu0 0
    %9095 = vmatpush1.bf16.msra.mxu0 0
    %9096 = vmatprep.subr.bf16.mxu0 0
    %9097 = vmatpush1.bf16.msra.mxu0 0
    %9098 = vmatprep.subr.bf16.mxu0 0
    %9099 = vmatpush1.bf16.msra.mxu0 0
    %9100 = vmatprep.subr.bf16.mxu0 0
    %9101 = vmatpush1.bf16.msra.mxu0 0
    %9102 = vmatprep.subr.bf16.mxu0 0
    %9103 = vmatpush1.bf16.msra.mxu0 0
    %9104 = vmatprep.subr.bf16.mxu0 0
    %9105 = vmatpush1.bf16.msra.mxu0 0
    %9106 = vmatprep.subr.bf16.mxu0 0
    %9107 = vmatpush1.bf16.msra.mxu0 0
    %9108 = vmatprep.mubr.bf16.mxu0 0
    %9109 = vmatmul.mubr.bf16.gmra.mrb[0].mxu0 %v8496
    %v9110 = vpop.f32.mrb[0].mxu0
    %v9111 = vadd.f32 %v8869, %v9110
    %v9112 = vpop.f32.mrb[0].mxu0
    %v9113 = vadd.f32 %v8871, %v9112
    %v9114 = vpop.f32.mrb[0].mxu0
    %v9115 = vpop.f32.mrb[0].mxu0
    %9116 = vdwg.mxu0
    %v9117 = vcombine.low %v8536, %v8544
    %v9118 = vcombine.low %v8552, %v8560
    %v9120 = vunpack.c.l.s4 1983009808
    %v9121 = vunpack.c.0.s8 %v9120
    %v9122 = vlaneseq
    %v9123 = vshrl.u32 %v9122, 7
    %v9124 = vsub.s32 %v9121, %v9123
    %v9125 = vrot.slane %v9117, %v9124
    %v9127 = vunpack.c.l.s4 1983009808
    %v9128 = vunpack.c.0.s8 %v9127
    %v9129 = vlaneseq
    %v9130 = vshrl.u32 %v9129, 7
    %v9131 = vsub.s32 %v9128, %v9130
    %v9132 = vrot.slane %v9118, %v9131
    %v9133 = vcombine.low %v9125, %v9132
    %v9135 = vpack.c.bf16 %v9133, %v9133
    %s9136 = scalar_lea.vmem %s7, 512
    %v9137 = vld [vmem:[%s9136] sm:$0xff]
    %v9138 = vld [vmem:[%s9136 + $0x8] sm:$0xff]
    %v9139 = vld [vmem:[%s9136 + $0x10] sm:$0xff]
    %v9140 = vld [vmem:[%s9136 + $0x18] sm:$0xff]
    %v9141 = vld [vmem:[%s9136 + $0x20] sm:$0xff]
    %v9142 = vld [vmem:[%s9136 + $0x28] sm:$0xff]
    %v9143 = vld [vmem:[%s9136 + $0x30] sm:$0xff]
    %v9144 = vld [vmem:[%s9136 + $0x38] sm:$0xff]
    %v9145 = vld [vmem:[%s9136 + $0x40] sm:$0xff]
    %v9146 = vld [vmem:[%s9136 + $0x48] sm:$0xff]
    %v9147 = vld [vmem:[%s9136 + $0x50] sm:$0xff]
    %v9148 = vld [vmem:[%s9136 + $0x58] sm:$0xff]
    %v9149 = vld [vmem:[%s9136 + $0x60] sm:$0xff]
    %v9150 = vld [vmem:[%s9136 + $0x68] sm:$0xff]
    %v9151 = vld [vmem:[%s9136 + $0x70] sm:$0xff]
    %v9152 = vld [vmem:[%s9136 + $0x78] sm:$0xff]
    %v9153 = vld [vmem:[%s9136 + $0x80] sm:$0xff]
    %v9154 = vld [vmem:[%s9136 + $0x88] sm:$0xff]
    %v9155 = vld [vmem:[%s9136 + $0x90] sm:$0xff]
    %v9156 = vld [vmem:[%s9136 + $0x98] sm:$0xff]
    %v9157 = vld [vmem:[%s9136 + $0xa0] sm:$0xff]
    %v9158 = vld [vmem:[%s9136 + $0xa8] sm:$0xff]
    %v9159 = vld [vmem:[%s9136 + $0xb0] sm:$0xff]
    %v9160 = vld [vmem:[%s9136 + $0xb8] sm:$0xff]
    %v9161 = vld [vmem:[%s9136 + $0xc0] sm:$0xff]
    %v9162 = vld [vmem:[%s9136 + $0xc8] sm:$0xff]
    %v9163 = vld [vmem:[%s9136 + $0xd0] sm:$0xff]
    %v9164 = vld [vmem:[%s9136 + $0xd8] sm:$0xff]
    %v9165 = vld [vmem:[%s9136 + $0xe0] sm:$0xff]
    %v9166 = vld [vmem:[%s9136 + $0xe8] sm:$0xff]
    %v9167 = vld [vmem:[%s9136 + $0xf0] sm:$0xff]
    %v9168 = vld [vmem:[%s9136 + $0xf8] sm:$0xff]
    %v9201 = vunpack.c.l.b16 %v9137
    %v9202 = vunpack.c.h.b16 %v9137
    %v9203 = vunpack.c.l.b16 %v9138
    %v9204 = vunpack.c.h.b16 %v9138
    %v9205 = vunpack.c.l.b16 %v9139
    %v9206 = vunpack.c.h.b16 %v9139
    %v9207 = vunpack.c.l.b16 %v9140
    %v9208 = vunpack.c.h.b16 %v9140
    %v9209 = vunpack.c.l.b16 %v9141
    %v9210 = vunpack.c.h.b16 %v9141
    %v9211 = vunpack.c.l.b16 %v9142
    %v9212 = vunpack.c.h.b16 %v9142
    %v9213 = vunpack.c.l.b16 %v9143
    %v9214 = vunpack.c.h.b16 %v9143
    %v9215 = vunpack.c.l.b16 %v9144
    %v9216 = vunpack.c.h.b16 %v9144
    %v9217 = vunpack.c.l.b16 %v9145
    %v9218 = vunpack.c.h.b16 %v9145
    %v9219 = vunpack.c.l.b16 %v9146
    %v9220 = vunpack.c.h.b16 %v9146
    %v9221 = vunpack.c.l.b16 %v9147
    %v9222 = vunpack.c.h.b16 %v9147
    %v9223 = vunpack.c.l.b16 %v9148
    %v9224 = vunpack.c.h.b16 %v9148
    %v9225 = vunpack.c.l.b16 %v9149
    %v9226 = vunpack.c.h.b16 %v9149
    %v9227 = vunpack.c.l.b16 %v9150
    %v9228 = vunpack.c.h.b16 %v9150
    %v9229 = vunpack.c.l.b16 %v9151
    %v9230 = vunpack.c.h.b16 %v9151
    %v9231 = vunpack.c.l.b16 %v9152
    %v9232 = vunpack.c.h.b16 %v9152
    %v9233 = vunpack.c.l.b16 %v9153
    %v9234 = vunpack.c.h.b16 %v9153
    %v9235 = vunpack.c.l.b16 %v9154
    %v9236 = vunpack.c.h.b16 %v9154
    %v9237 = vunpack.c.l.b16 %v9155
    %v9238 = vunpack.c.h.b16 %v9155
    %v9239 = vunpack.c.l.b16 %v9156
    %v9240 = vunpack.c.h.b16 %v9156
    %v9241 = vunpack.c.l.b16 %v9157
    %v9242 = vunpack.c.h.b16 %v9157
    %v9243 = vunpack.c.l.b16 %v9158
    %v9244 = vunpack.c.h.b16 %v9158
    %v9245 = vunpack.c.l.b16 %v9159
    %v9246 = vunpack.c.h.b16 %v9159
    %v9247 = vunpack.c.l.b16 %v9160
    %v9248 = vunpack.c.h.b16 %v9160
    %v9249 = vunpack.c.l.b16 %v9161
    %v9250 = vunpack.c.h.b16 %v9161
    %v9251 = vunpack.c.l.b16 %v9162
    %v9252 = vunpack.c.h.b16 %v9162
    %v9253 = vunpack.c.l.b16 %v9163
    %v9254 = vunpack.c.h.b16 %v9163
    %v9255 = vunpack.c.l.b16 %v9164
    %v9256 = vunpack.c.h.b16 %v9164
    %v9257 = vunpack.c.l.b16 %v9165
    %v9258 = vunpack.c.h.b16 %v9165
    %v9259 = vunpack.c.l.b16 %v9166
    %v9260 = vunpack.c.h.b16 %v9166
    %v9261 = vunpack.c.l.b16 %v9167
    %v9262 = vunpack.c.h.b16 %v9167
    %v9263 = vunpack.c.l.b16 %v9168
    %v9264 = vunpack.c.h.b16 %v9168
    %v9265 = vpack.c.b16 %v9205, %v9201
    %v9266 = vpack.c.b16 %v9206, %v9202
    %v9267 = vpack.c.b16 %v9207, %v9203
    %v9268 = vpack.c.b16 %v9208, %v9204
    %v9269 = vpack.c.b16 %v9213, %v9209
    %v9270 = vpack.c.b16 %v9214, %v9210
    %v9271 = vpack.c.b16 %v9215, %v9211
    %v9272 = vpack.c.b16 %v9216, %v9212
    %v9273 = vpack.c.b16 %v9221, %v9217
    %v9274 = vpack.c.b16 %v9222, %v9218
    %v9275 = vpack.c.b16 %v9223, %v9219
    %v9276 = vpack.c.b16 %v9224, %v9220
    %v9277 = vpack.c.b16 %v9229, %v9225
    %v9278 = vpack.c.b16 %v9230, %v9226
    %v9279 = vpack.c.b16 %v9231, %v9227
    %v9280 = vpack.c.b16 %v9232, %v9228
    %v9281 = vpack.c.b16 %v9237, %v9233
    %v9282 = vpack.c.b16 %v9238, %v9234
    %v9283 = vpack.c.b16 %v9239, %v9235
    %v9284 = vpack.c.b16 %v9240, %v9236
    %v9285 = vpack.c.b16 %v9245, %v9241
    %v9286 = vpack.c.b16 %v9246, %v9242
    %v9287 = vpack.c.b16 %v9247, %v9243
    %v9288 = vpack.c.b16 %v9248, %v9244
    %v9289 = vpack.c.b16 %v9253, %v9249
    %v9290 = vpack.c.b16 %v9254, %v9250
    %v9291 = vpack.c.b16 %v9255, %v9251
    %v9292 = vpack.c.b16 %v9256, %v9252
    %v9293 = vpack.c.b16 %v9261, %v9257
    %v9294 = vpack.c.b16 %v9262, %v9258
    %v9295 = vpack.c.b16 %v9263, %v9259
    %v9296 = vpack.c.b16 %v9264, %v9260
    %9329 = vmatprep.subr.bf16.mxu0 %v9266
    %9330 = vmatpush1.bf16.msra.mxu0 %v9265
    %9331 = vmatprep.subr.bf16.mxu0 %v9270
    %9332 = vmatpush1.bf16.msra.mxu0 %v9269
    %9333 = vmatprep.subr.bf16.mxu0 %v9274
    %9334 = vmatpush1.bf16.msra.mxu0 %v9273
    %9335 = vmatprep.subr.bf16.mxu0 %v9278
    %9336 = vmatpush1.bf16.msra.mxu0 %v9277
    %9337 = vmatprep.subr.bf16.mxu0 %v9282
    %9338 = vmatpush1.bf16.msra.mxu0 %v9281
    %9339 = vmatprep.subr.bf16.mxu0 %v9286
    %9340 = vmatpush1.bf16.msra.mxu0 %v9285
    %9341 = vmatprep.subr.bf16.mxu0 %v9290
    %9342 = vmatpush1.bf16.msra.mxu0 %v9289
    %9343 = vmatprep.subr.bf16.mxu0 %v9294
    %9344 = vmatpush1.bf16.msra.mxu0 %v9293
    %9345 = vmatprep.subr.bf16.mxu0 0
    %9346 = vmatpush1.bf16.msra.mxu0 0
    %9347 = vmatprep.subr.bf16.mxu0 0
    %9348 = vmatpush1.bf16.msra.mxu0 0
    %9349 = vmatprep.subr.bf16.mxu0 0
    %9350 = vmatpush1.bf16.msra.mxu0 0
    %9351 = vmatprep.subr.bf16.mxu0 0
    %9352 = vmatpush1.bf16.msra.mxu0 0
    %9353 = vmatprep.subr.bf16.mxu0 0
    %9354 = vmatpush1.bf16.msra.mxu0 0
    %9355 = vmatprep.subr.bf16.mxu0 0
    %9356 = vmatpush1.bf16.msra.mxu0 0
    %9357 = vmatprep.subr.bf16.mxu0 0
    %9358 = vmatpush1.bf16.msra.mxu0 0
    %9359 = vmatprep.subr.bf16.mxu0 0
    %9360 = vmatpush1.bf16.msra.mxu0 0
    %9361 = vmatprep.mubr.bf16.mxu0 0
    %9362 = vmatmul.mubr.bf16.gmra.mrb[0].mxu0 %v9135
    %v9363 = vpop.f32.mrb[0].mxu0
    %v9364 = vadd.f32 0.0, %v9363
    %v9365 = vpop.f32.mrb[0].mxu0
    %v9366 = vadd.f32 0.0, %v9365
    %v9367 = vpop.f32.mrb[0].mxu0
    %v9368 = vpop.f32.mrb[0].mxu0
    %9369 = vdwg.mxu0
    %9370 = vmatprep.subr.bf16.mxu0 %v9268
    %9371 = vmatpush1.bf16.msra.mxu0 %v9267
    %9372 = vmatprep.subr.bf16.mxu0 %v9272
    %9373 = vmatpush1.bf16.msra.mxu0 %v9271
    %9374 = vmatprep.subr.bf16.mxu0 %v9276
    %9375 = vmatpush1.bf16.msra.mxu0 %v9275
    %9376 = vmatprep.subr.bf16.mxu0 %v9280
    %9377 = vmatpush1.bf16.msra.mxu0 %v9279
    %9378 = vmatprep.subr.bf16.mxu0 %v9284
    %9379 = vmatpush1.bf16.msra.mxu0 %v9283
    %9380 = vmatprep.subr.bf16.mxu0 %v9288
    %9381 = vmatpush1.bf16.msra.mxu0 %v9287
    %9382 = vmatprep.subr.bf16.mxu0 %v9292
    %9383 = vmatpush1.bf16.msra.mxu0 %v9291
    %9384 = vmatprep.subr.bf16.mxu0 %v9296
    %9385 = vmatpush1.bf16.msra.mxu0 %v9295
    %9386 = vmatprep.subr.bf16.mxu0 0
    %9387 = vmatpush1.bf16.msra.mxu0 0
    %9388 = vmatprep.subr.bf16.mxu0 0
    %9389 = vmatpush1.bf16.msra.mxu0 0
    %9390 = vmatprep.subr.bf16.mxu0 0
    %9391 = vmatpush1.bf16.msra.mxu0 0
    %9392 = vmatprep.subr.bf16.mxu0 0
    %9393 = vmatpush1.bf16.msra.mxu0 0
    %9394 = vmatprep.subr.bf16.mxu0 0
    %9395 = vmatpush1.bf16.msra.mxu0 0
    %9396 = vmatprep.subr.bf16.mxu0 0
    %9397 = vmatpush1.bf16.msra.mxu0 0
    %9398 = vmatprep.subr.bf16.mxu0 0
    %9399 = vmatpush1.bf16.msra.mxu0 0
    %9400 = vmatprep.subr.bf16.mxu0 0
    %9401 = vmatpush1.bf16.msra.mxu0 0
    %9402 = vmatprep.mubr.bf16.mxu0 0
    %9403 = vmatmul.mubr.bf16.gmra.mrb[0].mxu0 %v9135
    %v9404 = vpop.f32.mrb[0].mxu0
    %v9405 = vadd.f32 0.0, %v9404
    %v9406 = vpop.f32.mrb[0].mxu0
    %v9407 = vadd.f32 0.0, %v9406
    %v9408 = vpop.f32.mrb[0].mxu0
    %v9409 = vpop.f32.mrb[0].mxu0
    %9410 = vdwg.mxu0
    %v9411 = vadd.f32 %v9070, %v9364
    %v9412 = vadd.f32 %v9072, %v9366
    %v9413 = vadd.f32 %v9111, %v9405
    %v9414 = vadd.f32 %v9113, %v9407
    %v9417 = vcombine.low %v8467, %v8468
    %v9418 = vcombine.low %v8471, %v8472
    %v9420 = vunpack.c.l.s4 1983009808
    %v9421 = vunpack.c.0.s8 %v9420
    %v9422 = vlaneseq
    %v9423 = vshrl.u32 %v9422, 7
    %v9424 = vsub.s32 %v9421, %v9423
    %v9425 = vrot.slane %v9417, %v9424
    %v9427 = vunpack.c.l.s4 1983009808
    %v9428 = vunpack.c.0.s8 %v9427
    %v9429 = vlaneseq
    %v9430 = vshrl.u32 %v9429, 7
    %v9431 = vsub.s32 %v9428, %v9430
    %v9432 = vrot.slane %v9418, %v9431
    %v9433 = vcombine.low %v9425, %v9432
    %v9435 = vpack.c.bf16 %v9433, %v9433
    %s9436 = scalar_lea.vmem %s7, 768
    %v9437 = vld [vmem:[%s9436] sm:$0xff]
    %v9438 = vld [vmem:[%s9436 + $0x8] sm:$0xff]
    %v9439 = vld [vmem:[%s9436 + $0x10] sm:$0xff]
    %v9440 = vld [vmem:[%s9436 + $0x18] sm:$0xff]
    %v9441 = vld [vmem:[%s9436 + $0x20] sm:$0xff]
    %v9442 = vld [vmem:[%s9436 + $0x28] sm:$0xff]
    %v9443 = vld [vmem:[%s9436 + $0x30] sm:$0xff]
    %v9444 = vld [vmem:[%s9436 + $0x38] sm:$0xff]
    %v9445 = vld [vmem:[%s9436 + $0x40] sm:$0xff]
    %v9446 = vld [vmem:[%s9436 + $0x48] sm:$0xff]
    %v9447 = vld [vmem:[%s9436 + $0x50] sm:$0xff]
    %v9448 = vld [vmem:[%s9436 + $0x58] sm:$0xff]
    %v9449 = vld [vmem:[%s9436 + $0x60] sm:$0xff]
    %v9450 = vld [vmem:[%s9436 + $0x68] sm:$0xff]
    %v9451 = vld [vmem:[%s9436 + $0x70] sm:$0xff]
    %v9452 = vld [vmem:[%s9436 + $0x78] sm:$0xff]
    %v9453 = vld [vmem:[%s9436 + $0x80] sm:$0xff]
    %v9454 = vld [vmem:[%s9436 + $0x88] sm:$0xff]
    %v9455 = vld [vmem:[%s9436 + $0x90] sm:$0xff]
    %v9456 = vld [vmem:[%s9436 + $0x98] sm:$0xff]
    %v9457 = vld [vmem:[%s9436 + $0xa0] sm:$0xff]
    %v9458 = vld [vmem:[%s9436 + $0xa8] sm:$0xff]
    %v9459 = vld [vmem:[%s9436 + $0xb0] sm:$0xff]
    %v9460 = vld [vmem:[%s9436 + $0xb8] sm:$0xff]
    %v9461 = vld [vmem:[%s9436 + $0xc0] sm:$0xff]
    %v9462 = vld [vmem:[%s9436 + $0xc8] sm:$0xff]
    %v9463 = vld [vmem:[%s9436 + $0xd0] sm:$0xff]
    %v9464 = vld [vmem:[%s9436 + $0xd8] sm:$0xff]
    %v9465 = vld [vmem:[%s9436 + $0xe0] sm:$0xff]
    %v9466 = vld [vmem:[%s9436 + $0xe8] sm:$0xff]
    %v9467 = vld [vmem:[%s9436 + $0xf0] sm:$0xff]
    %v9468 = vld [vmem:[%s9436 + $0xf8] sm:$0xff]
    %v9501 = vunpack.c.l.b16 %v9437
    %v9502 = vunpack.c.h.b16 %v9437
    %v9503 = vunpack.c.l.b16 %v9438
    %v9504 = vunpack.c.h.b16 %v9438
    %v9505 = vunpack.c.l.b16 %v9439
    %v9506 = vunpack.c.h.b16 %v9439
    %v9507 = vunpack.c.l.b16 %v9440
    %v9508 = vunpack.c.h.b16 %v9440
    %v9509 = vunpack.c.l.b16 %v9441
    %v9510 = vunpack.c.h.b16 %v9441
    %v9511 = vunpack.c.l.b16 %v9442
    %v9512 = vunpack.c.h.b16 %v9442
    %v9513 = vunpack.c.l.b16 %v9443
    %v9514 = vunpack.c.h.b16 %v9443
    %v9515 = vunpack.c.l.b16 %v9444
    %v9516 = vunpack.c.h.b16 %v9444
    %v9517 = vunpack.c.l.b16 %v9445
    %v9518 = vunpack.c.h.b16 %v9445
    %v9519 = vunpack.c.l.b16 %v9446
    %v9520 = vunpack.c.h.b16 %v9446
    %v9521 = vunpack.c.l.b16 %v9447
    %v9522 = vunpack.c.h.b16 %v9447
    %v9523 = vunpack.c.l.b16 %v9448
    %v9524 = vunpack.c.h.b16 %v9448
    %v9525 = vunpack.c.l.b16 %v9449
    %v9526 = vunpack.c.h.b16 %v9449
    %v9527 = vunpack.c.l.b16 %v9450
    %v9528 = vunpack.c.h.b16 %v9450
    %v9529 = vunpack.c.l.b16 %v9451
    %v9530 = vunpack.c.h.b16 %v9451
    %v9531 = vunpack.c.l.b16 %v9452
    %v9532 = vunpack.c.h.b16 %v9452
    %v9533 = vunpack.c.l.b16 %v9453
    %v9534 = vunpack.c.h.b16 %v9453
    %v9535 = vunpack.c.l.b16 %v9454
    %v9536 = vunpack.c.h.b16 %v9454
    %v9537 = vunpack.c.l.b16 %v9455
    %v9538 = vunpack.c.h.b16 %v9455
    %v9539 = vunpack.c.l.b16 %v9456
    %v9540 = vunpack.c.h.b16 %v9456
    %v9541 = vunpack.c.l.b16 %v9457
    %v9542 = vunpack.c.h.b16 %v9457
    %v9543 = vunpack.c.l.b16 %v9458
    %v9544 = vunpack.c.h.b16 %v9458
    %v9545 = vunpack.c.l.b16 %v9459
    %v9546 = vunpack.c.h.b16 %v9459
    %v9547 = vunpack.c.l.b16 %v9460
    %v9548 = vunpack.c.h.b16 %v9460
    %v9549 = vunpack.c.l.b16 %v9461
    %v9550 = vunpack.c.h.b16 %v9461
    %v9551 = vunpack.c.l.b16 %v9462
    %v9552 = vunpack.c.h.b16 %v9462
    %v9553 = vunpack.c.l.b16 %v9463
    %v9554 = vunpack.c.h.b16 %v9463
    %v9555 = vunpack.c.l.b16 %v9464
    %v9556 = vunpack.c.h.b16 %v9464
    %v9557 = vunpack.c.l.b16 %v9465
    %v9558 = vunpack.c.h.b16 %v9465
    %v9559 = vunpack.c.l.b16 %v9466
    %v9560 = vunpack.c.h.b16 %v9466
    %v9561 = vunpack.c.l.b16 %v9467
    %v9562 = vunpack.c.h.b16 %v9467
    %v9563 = vunpack.c.l.b16 %v9468
    %v9564 = vunpack.c.h.b16 %v9468
    %v9565 = vpack.c.b16 %v9505, %v9501
    %v9566 = vpack.c.b16 %v9506, %v9502
    %v9567 = vpack.c.b16 %v9507, %v9503
    %v9568 = vpack.c.b16 %v9508, %v9504
    %v9569 = vpack.c.b16 %v9513, %v9509
    %v9570 = vpack.c.b16 %v9514, %v9510
    %v9571 = vpack.c.b16 %v9515, %v9511
    %v9572 = vpack.c.b16 %v9516, %v9512
    %v9573 = vpack.c.b16 %v9521, %v9517
    %v9574 = vpack.c.b16 %v9522, %v9518
    %v9575 = vpack.c.b16 %v9523, %v9519
    %v9576 = vpack.c.b16 %v9524, %v9520
    %v9577 = vpack.c.b16 %v9529, %v9525
    %v9578 = vpack.c.b16 %v9530, %v9526
    %v9579 = vpack.c.b16 %v9531, %v9527
    %v9580 = vpack.c.b16 %v9532, %v9528
    %v9581 = vpack.c.b16 %v9537, %v9533
    %v9582 = vpack.c.b16 %v9538, %v9534
    %v9583 = vpack.c.b16 %v9539, %v9535
    %v9584 = vpack.c.b16 %v9540, %v9536
    %v9585 = vpack.c.b16 %v9545, %v9541
    %v9586 = vpack.c.b16 %v9546, %v9542
    %v9587 = vpack.c.b16 %v9547, %v9543
    %v9588 = vpack.c.b16 %v9548, %v9544
    %v9589 = vpack.c.b16 %v9553, %v9549
    %v9590 = vpack.c.b16 %v9554, %v9550
    %v9591 = vpack.c.b16 %v9555, %v9551
    %v9592 = vpack.c.b16 %v9556, %v9552
    %v9593 = vpack.c.b16 %v9561, %v9557
    %v9594 = vpack.c.b16 %v9562, %v9558
    %v9595 = vpack.c.b16 %v9563, %v9559
    %v9596 = vpack.c.b16 %v9564, %v9560
    %9629 = vmatprep.subr.bf16.mxu0 %v9566
    %9630 = vmatpush1.bf16.msra.mxu0 %v9565
    %9631 = vmatprep.subr.bf16.mxu0 %v9570
    %9632 = vmatpush1.bf16.msra.mxu0 %v9569
    %9633 = vmatprep.subr.bf16.mxu0 %v9574
    %9634 = vmatpush1.bf16.msra.mxu0 %v9573
    %9635 = vmatprep.subr.bf16.mxu0 %v9578
    %9636 = vmatpush1.bf16.msra.mxu0 %v9577
    %9637 = vmatprep.subr.bf16.mxu0 %v9582
    %9638 = vmatpush1.bf16.msra.mxu0 %v9581
    %9639 = vmatprep.subr.bf16.mxu0 %v9586
    %9640 = vmatpush1.bf16.msra.mxu0 %v9585
    %9641 = vmatprep.subr.bf16.mxu0 %v9590
    %9642 = vmatpush1.bf16.msra.mxu0 %v9589
    %9643 = vmatprep.subr.bf16.mxu0 %v9594
    %9644 = vmatpush1.bf16.msra.mxu0 %v9593
    %9645 = vmatprep.subr.bf16.mxu0 0
    %9646 = vmatpush1.bf16.msra.mxu0 0
    %9647 = vmatprep.subr.bf16.mxu0 0
    %9648 = vmatpush1.bf16.msra.mxu0 0
    %9649 = vmatprep.subr.bf16.mxu0 0
    %9650 = vmatpush1.bf16.msra.mxu0 0
    %9651 = vmatprep.subr.bf16.mxu0 0
    %9652 = vmatpush1.bf16.msra.mxu0 0
    %9653 = vmatprep.subr.bf16.mxu0 0
    %9654 = vmatpush1.bf16.msra.mxu0 0
    %9655 = vmatprep.subr.bf16.mxu0 0
    %9656 = vmatpush1.bf16.msra.mxu0 0
    %9657 = vmatprep.subr.bf16.mxu0 0
    %9658 = vmatpush1.bf16.msra.mxu0 0
    %9659 = vmatprep.subr.bf16.mxu0 0
    %9660 = vmatpush1.bf16.msra.mxu0 0
    %9661 = vmatprep.mubr.bf16.mxu0 0
    %9662 = vmatmul.mubr.bf16.gmra.mrb[0].mxu0 %v9435
    %v9663 = vpop.f32.mrb[0].mxu0
    %v9664 = vadd.f32 0.0, %v9663
    %v9665 = vpop.f32.mrb[0].mxu0
    %v9666 = vadd.f32 0.0, %v9665
    %v9667 = vpop.f32.mrb[0].mxu0
    %v9668 = vpop.f32.mrb[0].mxu0
    %9669 = vdwg.mxu0
    %9670 = vmatprep.subr.bf16.mxu0 %v9568
    %9671 = vmatpush1.bf16.msra.mxu0 %v9567
    %9672 = vmatprep.subr.bf16.mxu0 %v9572
    %9673 = vmatpush1.bf16.msra.mxu0 %v9571
    %9674 = vmatprep.subr.bf16.mxu0 %v9576
    %9675 = vmatpush1.bf16.msra.mxu0 %v9575
    %9676 = vmatprep.subr.bf16.mxu0 %v9580
    %9677 = vmatpush1.bf16.msra.mxu0 %v9579
    %9678 = vmatprep.subr.bf16.mxu0 %v9584
    %9679 = vmatpush1.bf16.msra.mxu0 %v9583
    %9680 = vmatprep.subr.bf16.mxu0 %v9588
    %9681 = vmatpush1.bf16.msra.mxu0 %v9587
    %9682 = vmatprep.subr.bf16.mxu0 %v9592
    %9683 = vmatpush1.bf16.msra.mxu0 %v9591
    %9684 = vmatprep.subr.bf16.mxu0 %v9596
    %9685 = vmatpush1.bf16.msra.mxu0 %v9595
    %9686 = vmatprep.subr.bf16.mxu0 0
    %9687 = vmatpush1.bf16.msra.mxu0 0
    %9688 = vmatprep.subr.bf16.mxu0 0
    %9689 = vmatpush1.bf16.msra.mxu0 0
    %9690 = vmatprep.subr.bf16.mxu0 0
    %9691 = vmatpush1.bf16.msra.mxu0 0
    %9692 = vmatprep.subr.bf16.mxu0 0
    %9693 = vmatpush1.bf16.msra.mxu0 0
    %9694 = vmatprep.subr.bf16.mxu0 0
    %9695 = vmatpush1.bf16.msra.mxu0 0
    %9696 = vmatprep.subr.bf16.mxu0 0
    %9697 = vmatpush1.bf16.msra.mxu0 0
    %9698 = vmatprep.subr.bf16.mxu0 0
    %9699 = vmatpush1.bf16.msra.mxu0 0
    %9700 = vmatprep.subr.bf16.mxu0 0
    %9701 = vmatpush1.bf16.msra.mxu0 0
    %9702 = vmatprep.mubr.bf16.mxu0 0
    %9703 = vmatmul.mubr.bf16.gmra.mrb[0].mxu0 %v9435
    %v9704 = vpop.f32.mrb[0].mxu0
    %v9705 = vadd.f32 0.0, %v9704
    %v9706 = vpop.f32.mrb[0].mxu0
    %v9707 = vadd.f32 0.0, %v9706
    %v9708 = vpop.f32.mrb[0].mxu0
    %v9709 = vpop.f32.mrb[0].mxu0
    %9710 = vdwg.mxu0
    %v9711 = vadd.f32 %v9411, %v9664
    %v9712 = vadd.f32 %v9412, %v9666
    %v9713 = vadd.f32 %v9413, %v9705
    %v9714 = vadd.f32 %v9414, %v9707
    %v9716 = vunpack.c.l.s4 1983009808
    %v9717 = vunpack.c.0.s8 %v9716
    %v9718 = vlaneseq
    %v9719 = vshrl.u32 %v9718, 7
    %v9720 = vsub.s32 %v9717, %v9719
    %v9721 = vrot.slane %v8468, %v9720
    %v9722 = vcombine.high %v9721, %v9721
    %v9724 = vunpack.c.l.s4 1983009808
    %v9725 = vunpack.c.0.s8 %v9724
    %v9726 = vlaneseq
    %v9727 = vshrl.u32 %v9726, 7
    %v9728 = vsub.s32 %v9725, %v9727
    %v9729 = vrot.slane %v8472, %v9728
    %v9730 = vcombine.high %v9729, %v9729
    %v9731 = vrot.slane %v9721, 7
    %v9732 = vrot.slane %v9731, 2
    %v9733 = vrot.slane %v9722, 7
    %v9734 = vsel %vm8564, %v9732, %v9733
    %v9735 = vrot.slane %v9729, 7
    %v9736 = vrot.slane %v9735, 2
    %v9737 = vrot.slane %v9730, 7
    %v9738 = vsel %vm8564, %v9736, %v9737
    %v9739 = vcombine.low %v8572, %v9734
    %v9740 = vcombine.low %v8580, %v9738
    %v9742 = vunpack.c.l.s4 1983009808
    %v9743 = vunpack.c.0.s8 %v9742
    %v9744 = vlaneseq
    %v9745 = vshrl.u32 %v9744, 7
    %v9746 = vsub.s32 %v9743, %v9745
    %v9747 = vrot.slane %v9739, %v9746
    %v9749 = vunpack.c.l.s4 1983009808
    %v9750 = vunpack.c.0.s8 %v9749
    %v9751 = vlaneseq
    %v9752 = vshrl.u32 %v9751, 7
    %v9753 = vsub.s32 %v9750, %v9752
    %v9754 = vrot.slane %v9740, %v9753
    %v9755 = vcombine.low %v9747, %v9754
    %v9757 = vpack.c.bf16 %v9755, %v9755
    %s9758 = scalar_lea.vmem %s7, 1024
    %v9759 = vld [vmem:[%s9758] sm:$0xff]
    %v9760 = vld [vmem:[%s9758 + $0x8] sm:$0xff]
    %v9761 = vld [vmem:[%s9758 + $0x10] sm:$0xff]
    %v9762 = vld [vmem:[%s9758 + $0x18] sm:$0xff]
    %v9763 = vld [vmem:[%s9758 + $0x20] sm:$0xff]
    %v9764 = vld [vmem:[%s9758 + $0x28] sm:$0xff]
    %v9765 = vld [vmem:[%s9758 + $0x30] sm:$0xff]
    %v9766 = vld [vmem:[%s9758 + $0x38] sm:$0xff]
    %v9767 = vld [vmem:[%s9758 + $0x40] sm:$0xff]
    %v9768 = vld [vmem:[%s9758 + $0x48] sm:$0xff]
    %v9769 = vld [vmem:[%s9758 + $0x50] sm:$0xff]
    %v9770 = vld [vmem:[%s9758 + $0x58] sm:$0xff]
    %v9771 = vld [vmem:[%s9758 + $0x60] sm:$0xff]
    %v9772 = vld [vmem:[%s9758 + $0x68] sm:$0xff]
    %v9773 = vld [vmem:[%s9758 + $0x70] sm:$0xff]
    %v9774 = vld [vmem:[%s9758 + $0x78] sm:$0xff]
    %v9775 = vld [vmem:[%s9758 + $0x80] sm:$0xff]
    %v9776 = vld [vmem:[%s9758 + $0x88] sm:$0xff]
    %v9777 = vld [vmem:[%s9758 + $0x90] sm:$0xff]
    %v9778 = vld [vmem:[%s9758 + $0x98] sm:$0xff]
    %v9779 = vld [vmem:[%s9758 + $0xa0] sm:$0xff]
    %v9780 = vld [vmem:[%s9758 + $0xa8] sm:$0xff]
    %v9781 = vld [vmem:[%s9758 + $0xb0] sm:$0xff]
    %v9782 = vld [vmem:[%s9758 + $0xb8] sm:$0xff]
    %v9783 = vld [vmem:[%s9758 + $0xc0] sm:$0xff]
    %v9784 = vld [vmem:[%s9758 + $0xc8] sm:$0xff]
    %v9785 = vld [vmem:[%s9758 + $0xd0] sm:$0xff]
    %v9786 = vld [vmem:[%s9758 + $0xd8] sm:$0xff]
    %v9787 = vld [vmem:[%s9758 + $0xe0] sm:$0xff]
    %v9788 = vld [vmem:[%s9758 + $0xe8] sm:$0xff]
    %v9789 = vld [vmem:[%s9758 + $0xf0] sm:$0xff]
    %v9790 = vld [vmem:[%s9758 + $0xf8] sm:$0xff]
    %v9823 = vunpack.c.l.b16 %v9759
    %v9824 = vunpack.c.h.b16 %v9759
    %v9825 = vunpack.c.l.b16 %v9760
    %v9826 = vunpack.c.h.b16 %v9760
    %v9827 = vunpack.c.l.b16 %v9761
    %v9828 = vunpack.c.h.b16 %v9761
    %v9829 = vunpack.c.l.b16 %v9762
    %v9830 = vunpack.c.h.b16 %v9762
    %v9831 = vunpack.c.l.b16 %v9763
    %v9832 = vunpack.c.h.b16 %v9763
    %v9833 = vunpack.c.l.b16 %v9764
    %v9834 = vunpack.c.h.b16 %v9764
    %v9835 = vunpack.c.l.b16 %v9765
    %v9836 = vunpack.c.h.b16 %v9765
    %v9837 = vunpack.c.l.b16 %v9766
    %v9838 = vunpack.c.h.b16 %v9766
    %v9839 = vunpack.c.l.b16 %v9767
    %v9840 = vunpack.c.h.b16 %v9767
    %v9841 = vunpack.c.l.b16 %v9768
    %v9842 = vunpack.c.h.b16 %v9768
    %v9843 = vunpack.c.l.b16 %v9769
    %v9844 = vunpack.c.h.b16 %v9769
    %v9845 = vunpack.c.l.b16 %v9770
    %v9846 = vunpack.c.h.b16 %v9770
    %v9847 = vunpack.c.l.b16 %v9771
    %v9848 = vunpack.c.h.b16 %v9771
    %v9849 = vunpack.c.l.b16 %v9772
    %v9850 = vunpack.c.h.b16 %v9772
    %v9851 = vunpack.c.l.b16 %v9773
    %v9852 = vunpack.c.h.b16 %v9773
    %v9853 = vunpack.c.l.b16 %v9774
    %v9854 = vunpack.c.h.b16 %v9774
    %v9855 = vunpack.c.l.b16 %v9775
    %v9856 = vunpack.c.h.b16 %v9775
    %v9857 = vunpack.c.l.b16 %v9776
    %v9858 = vunpack.c.h.b16 %v9776
    %v9859 = vunpack.c.l.b16 %v9777
    %v9860 = vunpack.c.h.b16 %v9777
    %v9861 = vunpack.c.l.b16 %v9778
    %v9862 = vunpack.c.h.b16 %v9778
    %v9863 = vunpack.c.l.b16 %v9779
    %v9864 = vunpack.c.h.b16 %v9779
    %v9865 = vunpack.c.l.b16 %v9780
    %v9866 = vunpack.c.h.b16 %v9780
    %v9867 = vunpack.c.l.b16 %v9781
    %v9868 = vunpack.c.h.b16 %v9781
    %v9869 = vunpack.c.l.b16 %v9782
    %v9870 = vunpack.c.h.b16 %v9782
    %v9871 = vunpack.c.l.b16 %v9783
    %v9872 = vunpack.c.h.b16 %v9783
    %v9873 = vunpack.c.l.b16 %v9784
    %v9874 = vunpack.c.h.b16 %v9784
    %v9875 = vunpack.c.l.b16 %v9785
    %v9876 = vunpack.c.h.b16 %v9785
    %v9877 = vunpack.c.l.b16 %v9786
    %v9878 = vunpack.c.h.b16 %v9786
    %v9879 = vunpack.c.l.b16 %v9787
    %v9880 = vunpack.c.h.b16 %v9787
    %v9881 = vunpack.c.l.b16 %v9788
    %v9882 = vunpack.c.h.b16 %v9788
    %v9883 = vunpack.c.l.b16 %v9789
    %v9884 = vunpack.c.h.b16 %v9789
    %v9885 = vunpack.c.l.b16 %v9790
    %v9886 = vunpack.c.h.b16 %v9790
    %v9887 = vpack.c.b16 %v9827, %v9823
    %v9888 = vpack.c.b16 %v9828, %v9824
    %v9889 = vpack.c.b16 %v9829, %v9825
    %v9890 = vpack.c.b16 %v9830, %v9826
    %v9891 = vpack.c.b16 %v9835, %v9831
    %v9892 = vpack.c.b16 %v9836, %v9832
    %v9893 = vpack.c.b16 %v9837, %v9833
    %v9894 = vpack.c.b16 %v9838, %v9834
    %v9895 = vpack.c.b16 %v9843, %v9839
    %v9896 = vpack.c.b16 %v9844, %v9840
    %v9897 = vpack.c.b16 %v9845, %v9841
    %v9898 = vpack.c.b16 %v9846, %v9842
    %v9899 = vpack.c.b16 %v9851, %v9847
    %v9900 = vpack.c.b16 %v9852, %v9848
    %v9901 = vpack.c.b16 %v9853, %v9849
    %v9902 = vpack.c.b16 %v9854, %v9850
    %v9903 = vpack.c.b16 %v9859, %v9855
    %v9904 = vpack.c.b16 %v9860, %v9856
    %v9905 = vpack.c.b16 %v9861, %v9857
    %v9906 = vpack.c.b16 %v9862, %v9858
    %v9907 = vpack.c.b16 %v9867, %v9863
    %v9908 = vpack.c.b16 %v9868, %v9864
    %v9909 = vpack.c.b16 %v9869, %v9865
    %v9910 = vpack.c.b16 %v9870, %v9866
    %v9911 = vpack.c.b16 %v9875, %v9871
    %v9912 = vpack.c.b16 %v9876, %v9872
    %v9913 = vpack.c.b16 %v9877, %v9873
    %v9914 = vpack.c.b16 %v9878, %v9874
    %v9915 = vpack.c.b16 %v9883, %v9879
    %v9916 = vpack.c.b16 %v9884, %v9880
    %v9917 = vpack.c.b16 %v9885, %v9881
    %v9918 = vpack.c.b16 %v9886, %v9882
    %9951 = vmatprep.subr.bf16.mxu0 %v9888
    %9952 = vmatpush1.bf16.msra.mxu0 %v9887
    %9953 = vmatprep.subr.bf16.mxu0 %v9892
    %9954 = vmatpush1.bf16.msra.mxu0 %v9891
    %9955 = vmatprep.subr.bf16.mxu0 %v9896
    %9956 = vmatpush1.bf16.msra.mxu0 %v9895
    %9957 = vmatprep.subr.bf16.mxu0 %v9900
    %9958 = vmatpush1.bf16.msra.mxu0 %v9899
    %9959 = vmatprep.subr.bf16.mxu0 %v9904
    %9960 = vmatpush1.bf16.msra.mxu0 %v9903
    %9961 = vmatprep.subr.bf16.mxu0 %v9908
    %9962 = vmatpush1.bf16.msra.mxu0 %v9907
    %9963 = vmatprep.subr.bf16.mxu0 %v9912
    %9964 = vmatpush1.bf16.msra.mxu0 %v9911
    %9965 = vmatprep.subr.bf16.mxu0 %v9916
    %9966 = vmatpush1.bf16.msra.mxu0 %v9915
    %9967 = vmatprep.subr.bf16.mxu0 0
    %9968 = vmatpush1.bf16.msra.mxu0 0
    %9969 = vmatprep.subr.bf16.mxu0 0
    %9970 = vmatpush1.bf16.msra.mxu0 0
    %9971 = vmatprep.subr.bf16.mxu0 0
    %9972 = vmatpush1.bf16.msra.mxu0 0
    %9973 = vmatprep.subr.bf16.mxu0 0
    %9974 = vmatpush1.bf16.msra.mxu0 0
    %9975 = vmatprep.subr.bf16.mxu0 0
    %9976 = vmatpush1.bf16.msra.mxu0 0
    %9977 = vmatprep.subr.bf16.mxu0 0
    %9978 = vmatpush1.bf16.msra.mxu0 0
    %9979 = vmatprep.subr.bf16.mxu0 0
    %9980 = vmatpush1.bf16.msra.mxu0 0
    %9981 = vmatprep.subr.bf16.mxu0 0
    %9982 = vmatpush1.bf16.msra.mxu0 0
    %9983 = vmatprep.mubr.bf16.mxu0 0
    %9984 = vmatmul.mubr.bf16.gmra.mrb[0].mxu0 %v9757
    %v9985 = vpop.f32.mrb[0].mxu0
    %v9986 = vadd.f32 0.0, %v9985
    %v9987 = vpop.f32.mrb[0].mxu0
    %v9988 = vadd.f32 0.0, %v9987
    %v9989 = vpop.f32.mrb[0].mxu0
    %v9990 = vpop.f32.mrb[0].mxu0
    %9991 = vdwg.mxu0
    %9992 = vmatprep.subr.bf16.mxu0 %v9890
    %9993 = vmatpush1.bf16.msra.mxu0 %v9889
    %9994 = vmatprep.subr.bf16.mxu0 %v9894
    %9995 = vmatpush1.bf16.msra.mxu0 %v9893
    %9996 = vmatprep.subr.bf16.mxu0 %v9898
    %9997 = vmatpush1.bf16.msra.mxu0 %v9897
    %9998 = vmatprep.subr.bf16.mxu0 %v9902
    %9999 = vmatpush1.bf16.msra.mxu0 %v9901
    %10000 = vmatprep.subr.bf16.mxu0 %v9906
    %10001 = vmatpush1.bf16.msra.mxu0 %v9905
    %10002 = vmatprep.subr.bf16.mxu0 %v9910
    %10003 = vmatpush1.bf16.msra.mxu0 %v9909
    %10004 = vmatprep.subr.bf16.mxu0 %v9914
    %10005 = vmatpush1.bf16.msra.mxu0 %v9913
    %10006 = vmatprep.subr.bf16.mxu0 %v9918
    %10007 = vmatpush1.bf16.msra.mxu0 %v9917
    %10008 = vmatprep.subr.bf16.mxu0 0
    %10009 = vmatpush1.bf16.msra.mxu0 0
    %10010 = vmatprep.subr.bf16.mxu0 0
    %10011 = vmatpush1.bf16.msra.mxu0 0
    %10012 = vmatprep.subr.bf16.mxu0 0
    %10013 = vmatpush1.bf16.msra.mxu0 0
    %10014 = vmatprep.subr.bf16.mxu0 0
    %10015 = vmatpush1.bf16.msra.mxu0 0
    %10016 = vmatprep.subr.bf16.mxu0 0
    %10017 = vmatpush1.bf16.msra.mxu0 0
    %10018 = vmatprep.subr.bf16.mxu0 0
    %10019 = vmatpush1.bf16.msra.mxu0 0
    %10020 = vmatprep.subr.bf16.mxu0 0
    %10021 = vmatpush1.bf16.msra.mxu0 0
    %10022 = vmatprep.subr.bf16.mxu0 0
    %10023 = vmatpush1.bf16.msra.mxu0 0
    %10024 = vmatprep.mubr.bf16.mxu0 0
    %10025 = vmatmul.mubr.bf16.gmra.mrb[0].mxu0 %v9757
    %v10026 = vpop.f32.mrb[0].mxu0
    %v10027 = vadd.f32 0.0, %v10026
    %v10028 = vpop.f32.mrb[0].mxu0
    %v10029 = vadd.f32 0.0, %v10028
    %v10030 = vpop.f32.mrb[0].mxu0
    %v10031 = vpop.f32.mrb[0].mxu0
    %10032 = vdwg.mxu0
    %v10033 = vadd.f32 %v9711, %v9986
    %v10034 = vadd.f32 %v9712, %v9988
    %v10035 = vadd.f32 %v9713, %v10027
    %v10036 = vadd.f32 %v9714, %v10029
    %v10037 = vcombine.low %v8544, %v9722
    %v10038 = vcombine.low %v8560, %v9730
    %v10040 = vunpack.c.l.s4 1983009808
    %v10041 = vunpack.c.0.s8 %v10040
    %v10042 = vlaneseq
    %v10043 = vshrl.u32 %v10042, 7
    %v10044 = vsub.s32 %v10041, %v10043
    %v10045 = vrot.slane %v10037, %v10044
    %v10047 = vunpack.c.l.s4 1983009808
    %v10048 = vunpack.c.0.s8 %v10047
    %v10049 = vlaneseq
    %v10050 = vshrl.u32 %v10049, 7
    %v10051 = vsub.s32 %v10048, %v10050
    %v10052 = vrot.slane %v10038, %v10051
    %v10053 = vcombine.low %v10045, %v10052
    %v10055 = vpack.c.bf16 %v10053, %v10053
    %s10056 = scalar_lea.vmem %s7, 1280
    %v10057 = vld [vmem:[%s10056] sm:$0xff]
    %v10058 = vld [vmem:[%s10056 + $0x8] sm:$0xff]
    %v10059 = vld [vmem:[%s10056 + $0x10] sm:$0xff]
    %v10060 = vld [vmem:[%s10056 + $0x18] sm:$0xff]
    %v10061 = vld [vmem:[%s10056 + $0x20] sm:$0xff]
    %v10062 = vld [vmem:[%s10056 + $0x28] sm:$0xff]
    %v10063 = vld [vmem:[%s10056 + $0x30] sm:$0xff]
    %v10064 = vld [vmem:[%s10056 + $0x38] sm:$0xff]
    %v10065 = vld [vmem:[%s10056 + $0x40] sm:$0xff]
    %v10066 = vld [vmem:[%s10056 + $0x48] sm:$0xff]
    %v10067 = vld [vmem:[%s10056 + $0x50] sm:$0xff]
    %v10068 = vld [vmem:[%s10056 + $0x58] sm:$0xff]
    %v10069 = vld [vmem:[%s10056 + $0x60] sm:$0xff]
    %v10070 = vld [vmem:[%s10056 + $0x68] sm:$0xff]
    %v10071 = vld [vmem:[%s10056 + $0x70] sm:$0xff]
    %v10072 = vld [vmem:[%s10056 + $0x78] sm:$0xff]
    %v10073 = vld [vmem:[%s10056 + $0x80] sm:$0xff]
    %v10074 = vld [vmem:[%s10056 + $0x88] sm:$0xff]
    %v10075 = vld [vmem:[%s10056 + $0x90] sm:$0xff]
    %v10076 = vld [vmem:[%s10056 + $0x98] sm:$0xff]
    %v10077 = vld [vmem:[%s10056 + $0xa0] sm:$0xff]
    %v10078 = vld [vmem:[%s10056 + $0xa8] sm:$0xff]
    %v10079 = vld [vmem:[%s10056 + $0xb0] sm:$0xff]
    %v10080 = vld [vmem:[%s10056 + $0xb8] sm:$0xff]
    %v10081 = vld [vmem:[%s10056 + $0xc0] sm:$0xff]
    %v10082 = vld [vmem:[%s10056 + $0xc8] sm:$0xff]
    %v10083 = vld [vmem:[%s10056 + $0xd0] sm:$0xff]
    %v10084 = vld [vmem:[%s10056 + $0xd8] sm:$0xff]
    %v10085 = vld [vmem:[%s10056 + $0xe0] sm:$0xff]
    %v10086 = vld [vmem:[%s10056 + $0xe8] sm:$0xff]
    %v10087 = vld [vmem:[%s10056 + $0xf0] sm:$0xff]
    %v10088 = vld [vmem:[%s10056 + $0xf8] sm:$0xff]
    %v10121 = vunpack.c.l.b16 %v10057
    %v10122 = vunpack.c.h.b16 %v10057
    %v10123 = vunpack.c.l.b16 %v10058
    %v10124 = vunpack.c.h.b16 %v10058
    %v10125 = vunpack.c.l.b16 %v10059
    %v10126 = vunpack.c.h.b16 %v10059
    %v10127 = vunpack.c.l.b16 %v10060
    %v10128 = vunpack.c.h.b16 %v10060
    %v10129 = vunpack.c.l.b16 %v10061
    %v10130 = vunpack.c.h.b16 %v10061
    %v10131 = vunpack.c.l.b16 %v10062
    %v10132 = vunpack.c.h.b16 %v10062
    %v10133 = vunpack.c.l.b16 %v10063
    %v10134 = vunpack.c.h.b16 %v10063
    %v10135 = vunpack.c.l.b16 %v10064
    %v10136 = vunpack.c.h.b16 %v10064
    %v10137 = vunpack.c.l.b16 %v10065
    %v10138 = vunpack.c.h.b16 %v10065
    %v10139 = vunpack.c.l.b16 %v10066
    %v10140 = vunpack.c.h.b16 %v10066
    %v10141 = vunpack.c.l.b16 %v10067
    %v10142 = vunpack.c.h.b16 %v10067
    %v10143 = vunpack.c.l.b16 %v10068
    %v10144 = vunpack.c.h.b16 %v10068
    %v10145 = vunpack.c.l.b16 %v10069
    %v10146 = vunpack.c.h.b16 %v10069
    %v10147 = vunpack.c.l.b16 %v10070
    %v10148 = vunpack.c.h.b16 %v10070
    %v10149 = vunpack.c.l.b16 %v10071
    %v10150 = vunpack.c.h.b16 %v10071
    %v10151 = vunpack.c.l.b16 %v10072
    %v10152 = vunpack.c.h.b16 %v10072
    %v10153 = vunpack.c.l.b16 %v10073
    %v10154 = vunpack.c.h.b16 %v10073
    %v10155 = vunpack.c.l.b16 %v10074
    %v10156 = vunpack.c.h.b16 %v10074
    %v10157 = vunpack.c.l.b16 %v10075
    %v10158 = vunpack.c.h.b16 %v10075
    %v10159 = vunpack.c.l.b16 %v10076
    %v10160 = vunpack.c.h.b16 %v10076
    %v10161 = vunpack.c.l.b16 %v10077
    %v10162 = vunpack.c.h.b16 %v10077
    %v10163 = vunpack.c.l.b16 %v10078
    %v10164 = vunpack.c.h.b16 %v10078
    %v10165 = vunpack.c.l.b16 %v10079
    %v10166 = vunpack.c.h.b16 %v10079
    %v10167 = vunpack.c.l.b16 %v10080
    %v10168 = vunpack.c.h.b16 %v10080
    %v10169 = vunpack.c.l.b16 %v10081
    %v10170 = vunpack.c.h.b16 %v10081
    %v10171 = vunpack.c.l.b16 %v10082
    %v10172 = vunpack.c.h.b16 %v10082
    %v10173 = vunpack.c.l.b16 %v10083
    %v10174 = vunpack.c.h.b16 %v10083
    %v10175 = vunpack.c.l.b16 %v10084
    %v10176 = vunpack.c.h.b16 %v10084
    %v10177 = vunpack.c.l.b16 %v10085
    %v10178 = vunpack.c.h.b16 %v10085
    %v10179 = vunpack.c.l.b16 %v10086
    %v10180 = vunpack.c.h.b16 %v10086
    %v10181 = vunpack.c.l.b16 %v10087
    %v10182 = vunpack.c.h.b16 %v10087
    %v10183 = vunpack.c.l.b16 %v10088
    %v10184 = vunpack.c.h.b16 %v10088
    %v10185 = vpack.c.b16 %v10125, %v10121
    %v10186 = vpack.c.b16 %v10126, %v10122
    %v10187 = vpack.c.b16 %v10127, %v10123
    %v10188 = vpack.c.b16 %v10128, %v10124
    %v10189 = vpack.c.b16 %v10133, %v10129
    %v10190 = vpack.c.b16 %v10134, %v10130
    %v10191 = vpack.c.b16 %v10135, %v10131
    %v10192 = vpack.c.b16 %v10136, %v10132
    %v10193 = vpack.c.b16 %v10141, %v10137
    %v10194 = vpack.c.b16 %v10142, %v10138
    %v10195 = vpack.c.b16 %v10143, %v10139
    %v10196 = vpack.c.b16 %v10144, %v10140
    %v10197 = vpack.c.b16 %v10149, %v10145
    %v10198 = vpack.c.b16 %v10150, %v10146
    %v10199 = vpack.c.b16 %v10151, %v10147
    %v10200 = vpack.c.b16 %v10152, %v10148
    %v10201 = vpack.c.b16 %v10157, %v10153
    %v10202 = vpack.c.b16 %v10158, %v10154
    %v10203 = vpack.c.b16 %v10159, %v10155
    %v10204 = vpack.c.b16 %v10160, %v10156
    %v10205 = vpack.c.b16 %v10165, %v10161
    %v10206 = vpack.c.b16 %v10166, %v10162
    %v10207 = vpack.c.b16 %v10167, %v10163
    %v10208 = vpack.c.b16 %v10168, %v10164
    %v10209 = vpack.c.b16 %v10173, %v10169
    %v10210 = vpack.c.b16 %v10174, %v10170
    %v10211 = vpack.c.b16 %v10175, %v10171
    %v10212 = vpack.c.b16 %v10176, %v10172
    %v10213 = vpack.c.b16 %v10181, %v10177
    %v10214 = vpack.c.b16 %v10182, %v10178
    %v10215 = vpack.c.b16 %v10183, %v10179
    %v10216 = vpack.c.b16 %v10184, %v10180
    %10249 = vmatprep.subr.bf16.mxu0 %v10186
    %10250 = vmatpush1.bf16.msra.mxu0 %v10185
    %10251 = vmatprep.subr.bf16.mxu0 %v10190
    %10252 = vmatpush1.bf16.msra.mxu0 %v10189
    %10253 = vmatprep.subr.bf16.mxu0 %v10194
    %10254 = vmatpush1.bf16.msra.mxu0 %v10193
    %10255 = vmatprep.subr.bf16.mxu0 %v10198
    %10256 = vmatpush1.bf16.msra.mxu0 %v10197
    %10257 = vmatprep.subr.bf16.mxu0 %v10202
    %10258 = vmatpush1.bf16.msra.mxu0 %v10201
    %10259 = vmatprep.subr.bf16.mxu0 %v10206
    %10260 = vmatpush1.bf16.msra.mxu0 %v10205
    %10261 = vmatprep.subr.bf16.mxu0 %v10210
    %10262 = vmatpush1.bf16.msra.mxu0 %v10209
    %10263 = vmatprep.subr.bf16.mxu0 %v10214
    %10264 = vmatpush1.bf16.msra.mxu0 %v10213
    %10265 = vmatprep.subr.bf16.mxu0 0
    %10266 = vmatpush1.bf16.msra.mxu0 0
    %10267 = vmatprep.subr.bf16.mxu0 0
    %10268 = vmatpush1.bf16.msra.mxu0 0
    %10269 = vmatprep.subr.bf16.mxu0 0
    %10270 = vmatpush1.bf16.msra.mxu0 0
    %10271 = vmatprep.subr.bf16.mxu0 0
    %10272 = vmatpush1.bf16.msra.mxu0 0
    %10273 = vmatprep.subr.bf16.mxu0 0
    %10274 = vmatpush1.bf16.msra.mxu0 0
    %10275 = vmatprep.subr.bf16.mxu0 0
    %10276 = vmatpush1.bf16.msra.mxu0 0
    %10277 = vmatprep.subr.bf16.mxu0 0
    %10278 = vmatpush1.bf16.msra.mxu0 0
    %10279 = vmatprep.subr.bf16.mxu0 0
    %10280 = vmatpush1.bf16.msra.mxu0 0
    %10281 = vmatprep.mubr.bf16.mxu0 0
    %10282 = vmatmul.mubr.bf16.gmra.mrb[0].mxu0 %v10055
    %v10283 = vpop.f32.mrb[0].mxu0
    %v10284 = vadd.f32 0.0, %v10283
    %v10285 = vpop.f32.mrb[0].mxu0
    %v10286 = vadd.f32 0.0, %v10285
    %v10287 = vpop.f32.mrb[0].mxu0
    %v10288 = vpop.f32.mrb[0].mxu0
    %10289 = vdwg.mxu0
    %10290 = vmatprep.subr.bf16.mxu0 %v10188
    %10291 = vmatpush1.bf16.msra.mxu0 %v10187
    %10292 = vmatprep.subr.bf16.mxu0 %v10192
    %10293 = vmatpush1.bf16.msra.mxu0 %v10191
    %10294 = vmatprep.subr.bf16.mxu0 %v10196
    %10295 = vmatpush1.bf16.msra.mxu0 %v10195
    %10296 = vmatprep.subr.bf16.mxu0 %v10200
    %10297 = vmatpush1.bf16.msra.mxu0 %v10199
    %10298 = vmatprep.subr.bf16.mxu0 %v10204
    %10299 = vmatpush1.bf16.msra.mxu0 %v10203
    %10300 = vmatprep.subr.bf16.mxu0 %v10208
    %10301 = vmatpush1.bf16.msra.mxu0 %v10207
    %10302 = vmatprep.subr.bf16.mxu0 %v10212
    %10303 = vmatpush1.bf16.msra.mxu0 %v10211
    %10304 = vmatprep.subr.bf16.mxu0 %v10216
    %10305 = vmatpush1.bf16.msra.mxu0 %v10215
    %10306 = vmatprep.subr.bf16.mxu0 0
    %10307 = vmatpush1.bf16.msra.mxu0 0
    %10308 = vmatprep.subr.bf16.mxu0 0
    %10309 = vmatpush1.bf16.msra.mxu0 0
    %10310 = vmatprep.subr.bf16.mxu0 0
    %10311 = vmatpush1.bf16.msra.mxu0 0
    %10312 = vmatprep.subr.bf16.mxu0 0
    %10313 = vmatpush1.bf16.msra.mxu0 0
    %10314 = vmatprep.subr.bf16.mxu0 0
    %10315 = vmatpush1.bf16.msra.mxu0 0
    %10316 = vmatprep.subr.bf16.mxu0 0
    %10317 = vmatpush1.bf16.msra.mxu0 0
    %10318 = vmatprep.subr.bf16.mxu0 0
    %10319 = vmatpush1.bf16.msra.mxu0 0
    %10320 = vmatprep.subr.bf16.mxu0 0
    %10321 = vmatpush1.bf16.msra.mxu0 0
    %10322 = vmatprep.mubr.bf16.mxu0 0
    %10323 = vmatmul.mubr.bf16.gmra.mrb[0].mxu0 %v10055
    %v10324 = vpop.f32.mrb[0].mxu0
    %v10325 = vadd.f32 0.0, %v10324
    %v10326 = vpop.f32.mrb[0].mxu0
    %v10327 = vadd.f32 0.0, %v10326
    %v10328 = vpop.f32.mrb[0].mxu0
    %v10329 = vpop.f32.mrb[0].mxu0
    %10330 = vdwg.mxu0
    %v10331 = vadd.f32 %v10033, %v10284
    %v10332 = vadd.f32 %v10034, %v10286
    %v10333 = vadd.f32 %v10035, %v10325
    %v10334 = vadd.f32 %v10036, %v10327
    %v10337 = vcombine.low %v8468, %v8469
    %v10338 = vcombine.low %v8472, %v8473
    %v10340 = vunpack.c.l.s4 1983009808
    %v10341 = vunpack.c.0.s8 %v10340
    %v10342 = vlaneseq
    %v10343 = vshrl.u32 %v10342, 7
    %v10344 = vsub.s32 %v10341, %v10343
    %v10345 = vrot.slane %v10337, %v10344
    %v10347 = vunpack.c.l.s4 1983009808
    %v10348 = vunpack.c.0.s8 %v10347
    %v10349 = vlaneseq
    %v10350 = vshrl.u32 %v10349, 7
    %v10351 = vsub.s32 %v10348, %v10350
    %v10352 = vrot.slane %v10338, %v10351
    %v10353 = vcombine.low %v10345, %v10352
    %v10355 = vpack.c.bf16 %v10353, %v10353
    %s10356 = scalar_lea.vmem %s7, 1536
    %v10357 = vld [vmem:[%s10356] sm:$0xff]
    %v10358 = vld [vmem:[%s10356 + $0x8] sm:$0xff]
    %v10359 = vld [vmem:[%s10356 + $0x10] sm:$0xff]
    %v10360 = vld [vmem:[%s10356 + $0x18] sm:$0xff]
    %v10361 = vld [vmem:[%s10356 + $0x20] sm:$0xff]
    %v10362 = vld [vmem:[%s10356 + $0x28] sm:$0xff]
    %v10363 = vld [vmem:[%s10356 + $0x30] sm:$0xff]
    %v10364 = vld [vmem:[%s10356 + $0x38] sm:$0xff]
    %v10365 = vld [vmem:[%s10356 + $0x40] sm:$0xff]
    %v10366 = vld [vmem:[%s10356 + $0x48] sm:$0xff]
    %v10367 = vld [vmem:[%s10356 + $0x50] sm:$0xff]
    %v10368 = vld [vmem:[%s10356 + $0x58] sm:$0xff]
    %v10369 = vld [vmem:[%s10356 + $0x60] sm:$0xff]
    %v10370 = vld [vmem:[%s10356 + $0x68] sm:$0xff]
    %v10371 = vld [vmem:[%s10356 + $0x70] sm:$0xff]
    %v10372 = vld [vmem:[%s10356 + $0x78] sm:$0xff]
    %v10373 = vld [vmem:[%s10356 + $0x80] sm:$0xff]
    %v10374 = vld [vmem:[%s10356 + $0x88] sm:$0xff]
    %v10375 = vld [vmem:[%s10356 + $0x90] sm:$0xff]
    %v10376 = vld [vmem:[%s10356 + $0x98] sm:$0xff]
    %v10377 = vld [vmem:[%s10356 + $0xa0] sm:$0xff]
    %v10378 = vld [vmem:[%s10356 + $0xa8] sm:$0xff]
    %v10379 = vld [vmem:[%s10356 + $0xb0] sm:$0xff]
    %v10380 = vld [vmem:[%s10356 + $0xb8] sm:$0xff]
    %v10381 = vld [vmem:[%s10356 + $0xc0] sm:$0xff]
    %v10382 = vld [vmem:[%s10356 + $0xc8] sm:$0xff]
    %v10383 = vld [vmem:[%s10356 + $0xd0] sm:$0xff]
    %v10384 = vld [vmem:[%s10356 + $0xd8] sm:$0xff]
    %v10385 = vld [vmem:[%s10356 + $0xe0] sm:$0xff]
    %v10386 = vld [vmem:[%s10356 + $0xe8] sm:$0xff]
    %v10387 = vld [vmem:[%s10356 + $0xf0] sm:$0xff]
    %v10388 = vld [vmem:[%s10356 + $0xf8] sm:$0xff]
    %v10421 = vunpack.c.l.b16 %v10357
    %v10422 = vunpack.c.h.b16 %v10357
    %v10423 = vunpack.c.l.b16 %v10358
    %v10424 = vunpack.c.h.b16 %v10358
    %v10425 = vunpack.c.l.b16 %v10359
    %v10426 = vunpack.c.h.b16 %v10359
    %v10427 = vunpack.c.l.b16 %v10360
    %v10428 = vunpack.c.h.b16 %v10360
    %v10429 = vunpack.c.l.b16 %v10361
    %v10430 = vunpack.c.h.b16 %v10361
    %v10431 = vunpack.c.l.b16 %v10362
    %v10432 = vunpack.c.h.b16 %v10362
    %v10433 = vunpack.c.l.b16 %v10363
    %v10434 = vunpack.c.h.b16 %v10363
    %v10435 = vunpack.c.l.b16 %v10364
    %v10436 = vunpack.c.h.b16 %v10364
    %v10437 = vunpack.c.l.b16 %v10365
    %v10438 = vunpack.c.h.b16 %v10365
    %v10439 = vunpack.c.l.b16 %v10366
    %v10440 = vunpack.c.h.b16 %v10366
    %v10441 = vunpack.c.l.b16 %v10367
    %v10442 = vunpack.c.h.b16 %v10367
    %v10443 = vunpack.c.l.b16 %v10368
    %v10444 = vunpack.c.h.b16 %v10368
    %v10445 = vunpack.c.l.b16 %v10369
    %v10446 = vunpack.c.h.b16 %v10369
    %v10447 = vunpack.c.l.b16 %v10370
    %v10448 = vunpack.c.h.b16 %v10370
    %v10449 = vunpack.c.l.b16 %v10371
    %v10450 = vunpack.c.h.b16 %v10371
    %v10451 = vunpack.c.l.b16 %v10372
    %v10452 = vunpack.c.h.b16 %v10372
    %v10453 = vunpack.c.l.b16 %v10373
    %v10454 = vunpack.c.h.b16 %v10373
    %v10455 = vunpack.c.l.b16 %v10374
    %v10456 = vunpack.c.h.b16 %v10374
    %v10457 = vunpack.c.l.b16 %v10375
    %v10458 = vunpack.c.h.b16 %v10375
    %v10459 = vunpack.c.l.b16 %v10376
    %v10460 = vunpack.c.h.b16 %v10376
    %v10461 = vunpack.c.l.b16 %v10377
    %v10462 = vunpack.c.h.b16 %v10377
    %v10463 = vunpack.c.l.b16 %v10378
    %v10464 = vunpack.c.h.b16 %v10378
    %v10465 = vunpack.c.l.b16 %v10379
    %v10466 = vunpack.c.h.b16 %v10379
    %v10467 = vunpack.c.l.b16 %v10380
    %v10468 = vunpack.c.h.b16 %v10380
    %v10469 = vunpack.c.l.b16 %v10381
    %v10470 = vunpack.c.h.b16 %v10381
    %v10471 = vunpack.c.l.b16 %v10382
    %v10472 = vunpack.c.h.b16 %v10382
    %v10473 = vunpack.c.l.b16 %v10383
    %v10474 = vunpack.c.h.b16 %v10383
    %v10475 = vunpack.c.l.b16 %v10384
    %v10476 = vunpack.c.h.b16 %v10384
    %v10477 = vunpack.c.l.b16 %v10385
    %v10478 = vunpack.c.h.b16 %v10385
    %v10479 = vunpack.c.l.b16 %v10386
    %v10480 = vunpack.c.h.b16 %v10386
    %v10481 = vunpack.c.l.b16 %v10387
    %v10482 = vunpack.c.h.b16 %v10387
    %v10483 = vunpack.c.l.b16 %v10388
    %v10484 = vunpack.c.h.b16 %v10388
    %v10485 = vpack.c.b16 %v10425, %v10421
    %v10486 = vpack.c.b16 %v10426, %v10422
    %v10487 = vpack.c.b16 %v10427, %v10423
    %v10488 = vpack.c.b16 %v10428, %v10424
    %v10489 = vpack.c.b16 %v10433, %v10429
    %v10490 = vpack.c.b16 %v10434, %v10430
    %v10491 = vpack.c.b16 %v10435, %v10431
    %v10492 = vpack.c.b16 %v10436, %v10432
    %v10493 = vpack.c.b16 %v10441, %v10437
    %v10494 = vpack.c.b16 %v10442, %v10438
    %v10495 = vpack.c.b16 %v10443, %v10439
    %v10496 = vpack.c.b16 %v10444, %v10440
    %v10497 = vpack.c.b16 %v10449, %v10445
    %v10498 = vpack.c.b16 %v10450, %v10446
    %v10499 = vpack.c.b16 %v10451, %v10447
    %v10500 = vpack.c.b16 %v10452, %v10448
    %v10501 = vpack.c.b16 %v10457, %v10453
    %v10502 = vpack.c.b16 %v10458, %v10454
    %v10503 = vpack.c.b16 %v10459, %v10455
    %v10504 = vpack.c.b16 %v10460, %v10456
    %v10505 = vpack.c.b16 %v10465, %v10461
    %v10506 = vpack.c.b16 %v10466, %v10462
    %v10507 = vpack.c.b16 %v10467, %v10463
    %v10508 = vpack.c.b16 %v10468, %v10464
    %v10509 = vpack.c.b16 %v10473, %v10469
    %v10510 = vpack.c.b16 %v10474, %v10470
    %v10511 = vpack.c.b16 %v10475, %v10471
    %v10512 = vpack.c.b16 %v10476, %v10472
    %v10513 = vpack.c.b16 %v10481, %v10477
    %v10514 = vpack.c.b16 %v10482, %v10478
    %v10515 = vpack.c.b16 %v10483, %v10479
    %v10516 = vpack.c.b16 %v10484, %v10480
    %10549 = vmatprep.subr.bf16.mxu0 %v10486
    %10550 = vmatpush1.bf16.msra.mxu0 %v10485
    %10551 = vmatprep.subr.bf16.mxu0 %v10490
    %10552 = vmatpush1.bf16.msra.mxu0 %v10489
    %10553 = vmatprep.subr.bf16.mxu0 %v10494
    %10554 = vmatpush1.bf16.msra.mxu0 %v10493
    %10555 = vmatprep.subr.bf16.mxu0 %v10498
    %10556 = vmatpush1.bf16.msra.mxu0 %v10497
    %10557 = vmatprep.subr.bf16.mxu0 %v10502
    %10558 = vmatpush1.bf16.msra.mxu0 %v10501
    %10559 = vmatprep.subr.bf16.mxu0 %v10506
    %10560 = vmatpush1.bf16.msra.mxu0 %v10505
    %10561 = vmatprep.subr.bf16.mxu0 %v10510
    %10562 = vmatpush1.bf16.msra.mxu0 %v10509
    %10563 = vmatprep.subr.bf16.mxu0 %v10514
    %10564 = vmatpush1.bf16.msra.mxu0 %v10513
    %10565 = vmatprep.subr.bf16.mxu0 0
    %10566 = vmatpush1.bf16.msra.mxu0 0
    %10567 = vmatprep.subr.bf16.mxu0 0
    %10568 = vmatpush1.bf16.msra.mxu0 0
    %10569 = vmatprep.subr.bf16.mxu0 0
    %10570 = vmatpush1.bf16.msra.mxu0 0
    %10571 = vmatprep.subr.bf16.mxu0 0
    %10572 = vmatpush1.bf16.msra.mxu0 0
    %10573 = vmatprep.subr.bf16.mxu0 0
    %10574 = vmatpush1.bf16.msra.mxu0 0
    %10575 = vmatprep.subr.bf16.mxu0 0
    %10576 = vmatpush1.bf16.msra.mxu0 0
    %10577 = vmatprep.subr.bf16.mxu0 0
    %10578 = vmatpush1.bf16.msra.mxu0 0
    %10579 = vmatprep.subr.bf16.mxu0 0
    %10580 = vmatpush1.bf16.msra.mxu0 0
    %10581 = vmatprep.mubr.bf16.mxu0 0
    %10582 = vmatmul.mubr.bf16.gmra.mrb[0].mxu0 %v10355
    %v10583 = vpop.f32.mrb[0].mxu0
    %v10584 = vadd.f32 0.0, %v10583
    %v10585 = vpop.f32.mrb[0].mxu0
    %v10586 = vadd.f32 0.0, %v10585
    %v10587 = vpop.f32.mrb[0].mxu0
    %v10588 = vpop.f32.mrb[0].mxu0
    %10589 = vdwg.mxu0
    %10590 = vmatprep.subr.bf16.mxu0 %v10488
    %10591 = vmatpush1.bf16.msra.mxu0 %v10487
    %10592 = vmatprep.subr.bf16.mxu0 %v10492
    %10593 = vmatpush1.bf16.msra.mxu0 %v10491
    %10594 = vmatprep.subr.bf16.mxu0 %v10496
    %10595 = vmatpush1.bf16.msra.mxu0 %v10495
    %10596 = vmatprep.subr.bf16.mxu0 %v10500
    %10597 = vmatpush1.bf16.msra.mxu0 %v10499
    %10598 = vmatprep.subr.bf16.mxu0 %v10504
    %10599 = vmatpush1.bf16.msra.mxu0 %v10503
    %10600 = vmatprep.subr.bf16.mxu0 %v10508
    %10601 = vmatpush1.bf16.msra.mxu0 %v10507
    %10602 = vmatprep.subr.bf16.mxu0 %v10512
    %10603 = vmatpush1.bf16.msra.mxu0 %v10511
    %10604 = vmatprep.subr.bf16.mxu0 %v10516
    %10605 = vmatpush1.bf16.msra.mxu0 %v10515
    %10606 = vmatprep.subr.bf16.mxu0 0
    %10607 = vmatpush1.bf16.msra.mxu0 0
    %10608 = vmatprep.subr.bf16.mxu0 0
    %10609 = vmatpush1.bf16.msra.mxu0 0
    %10610 = vmatprep.subr.bf16.mxu0 0
    %10611 = vmatpush1.bf16.msra.mxu0 0
    %10612 = vmatprep.subr.bf16.mxu0 0
    %10613 = vmatpush1.bf16.msra.mxu0 0
    %10614 = vmatprep.subr.bf16.mxu0 0
    %10615 = vmatpush1.bf16.msra.mxu0 0
    %10616 = vmatprep.subr.bf16.mxu0 0
    %10617 = vmatpush1.bf16.msra.mxu0 0
    %10618 = vmatprep.subr.bf16.mxu0 0
    %10619 = vmatpush1.bf16.msra.mxu0 0
    %10620 = vmatprep.subr.bf16.mxu0 0
    %10621 = vmatpush1.bf16.msra.mxu0 0
    %10622 = vmatprep.mubr.bf16.mxu0 0
    %10623 = vmatmul.mubr.bf16.gmra.mrb[0].mxu0 %v10355
    %v10624 = vpop.f32.mrb[0].mxu0
    %v10625 = vadd.f32 0.0, %v10624
    %v10626 = vpop.f32.mrb[0].mxu0
    %v10627 = vadd.f32 0.0, %v10626
    %v10628 = vpop.f32.mrb[0].mxu0
    %v10629 = vpop.f32.mrb[0].mxu0
    %10630 = vdwg.mxu0
    %v10631 = vadd.f32 %v10331, %v10584
    %v10632 = vadd.f32 %v10332, %v10586
    %v10633 = vadd.f32 %v10333, %v10625
    %v10634 = vadd.f32 %v10334, %v10627
    %v10636 = vunpack.c.l.s4 1983009808
    %v10637 = vunpack.c.0.s8 %v10636
    %v10638 = vlaneseq
    %v10639 = vshrl.u32 %v10638, 7
    %v10640 = vsub.s32 %v10637, %v10639
    %v10641 = vrot.slane %v8469, %v10640
    %v10642 = vcombine.high %v10641, %v10641
    %v10644 = vunpack.c.l.s4 1983009808
    %v10645 = vunpack.c.0.s8 %v10644
    %v10646 = vlaneseq
    %v10647 = vshrl.u32 %v10646, 7
    %v10648 = vsub.s32 %v10645, %v10647
    %v10649 = vrot.slane %v8473, %v10648
    %v10650 = vcombine.high %v10649, %v10649
    %v10651 = vrot.slane %v10641, 7
    %v10652 = vrot.slane %v10651, 2
    %v10653 = vrot.slane %v10642, 7
    %v10654 = vsel %vm8564, %v10652, %v10653
    %v10655 = vrot.slane %v10649, 7
    %v10656 = vrot.slane %v10655, 2
    %v10657 = vrot.slane %v10650, 7
    %v10658 = vsel %vm8564, %v10656, %v10657
    %v10659 = vcombine.low %v9734, %v10654
    %v10660 = vcombine.low %v9738, %v10658
    %v10662 = vunpack.c.l.s4 1983009808
    %v10663 = vunpack.c.0.s8 %v10662
    %v10664 = vlaneseq
    %v10665 = vshrl.u32 %v10664, 7
    %v10666 = vsub.s32 %v10663, %v10665
    %v10667 = vrot.slane %v10659, %v10666
    %v10669 = vunpack.c.l.s4 1983009808
    %v10670 = vunpack.c.0.s8 %v10669
    %v10671 = vlaneseq
    %v10672 = vshrl.u32 %v10671, 7
    %v10673 = vsub.s32 %v10670, %v10672
    %v10674 = vrot.slane %v10660, %v10673
    %v10675 = vcombine.low %v10667, %v10674
    %v10677 = vpack.c.bf16 %v10675, %v10675
    %s10678 = scalar_lea.vmem %s7, 1792
    %v10679 = vld [vmem:[%s10678] sm:$0xff]
    %v10680 = vld [vmem:[%s10678 + $0x8] sm:$0xff]
    %v10681 = vld [vmem:[%s10678 + $0x10] sm:$0xff]
    %v10682 = vld [vmem:[%s10678 + $0x18] sm:$0xff]
    %v10683 = vld [vmem:[%s10678 + $0x20] sm:$0xff]
    %v10684 = vld [vmem:[%s10678 + $0x28] sm:$0xff]
    %v10685 = vld [vmem:[%s10678 + $0x30] sm:$0xff]
    %v10686 = vld [vmem:[%s10678 + $0x38] sm:$0xff]
    %v10687 = vld [vmem:[%s10678 + $0x40] sm:$0xff]
    %v10688 = vld [vmem:[%s10678 + $0x48] sm:$0xff]
    %v10689 = vld [vmem:[%s10678 + $0x50] sm:$0xff]
    %v10690 = vld [vmem:[%s10678 + $0x58] sm:$0xff]
    %v10691 = vld [vmem:[%s10678 + $0x60] sm:$0xff]
    %v10692 = vld [vmem:[%s10678 + $0x68] sm:$0xff]
    %v10693 = vld [vmem:[%s10678 + $0x70] sm:$0xff]
    %v10694 = vld [vmem:[%s10678 + $0x78] sm:$0xff]
    %v10695 = vld [vmem:[%s10678 + $0x80] sm:$0xff]
    %v10696 = vld [vmem:[%s10678 + $0x88] sm:$0xff]
    %v10697 = vld [vmem:[%s10678 + $0x90] sm:$0xff]
    %v10698 = vld [vmem:[%s10678 + $0x98] sm:$0xff]
    %v10699 = vld [vmem:[%s10678 + $0xa0] sm:$0xff]
    %v10700 = vld [vmem:[%s10678 + $0xa8] sm:$0xff]
    %v10701 = vld [vmem:[%s10678 + $0xb0] sm:$0xff]
    %v10702 = vld [vmem:[%s10678 + $0xb8] sm:$0xff]
    %v10703 = vld [vmem:[%s10678 + $0xc0] sm:$0xff]
    %v10704 = vld [vmem:[%s10678 + $0xc8] sm:$0xff]
    %v10705 = vld [vmem:[%s10678 + $0xd0] sm:$0xff]
    %v10706 = vld [vmem:[%s10678 + $0xd8] sm:$0xff]
    %v10707 = vld [vmem:[%s10678 + $0xe0] sm:$0xff]
    %v10708 = vld [vmem:[%s10678 + $0xe8] sm:$0xff]
    %v10709 = vld [vmem:[%s10678 + $0xf0] sm:$0xff]
    %v10710 = vld [vmem:[%s10678 + $0xf8] sm:$0xff]
    %v10743 = vunpack.c.l.b16 %v10679
    %v10744 = vunpack.c.h.b16 %v10679
    %v10745 = vunpack.c.l.b16 %v10680
    %v10746 = vunpack.c.h.b16 %v10680
    %v10747 = vunpack.c.l.b16 %v10681
    %v10748 = vunpack.c.h.b16 %v10681
    %v10749 = vunpack.c.l.b16 %v10682
    %v10750 = vunpack.c.h.b16 %v10682
    %v10751 = vunpack.c.l.b16 %v10683
    %v10752 = vunpack.c.h.b16 %v10683
    %v10753 = vunpack.c.l.b16 %v10684
    %v10754 = vunpack.c.h.b16 %v10684
    %v10755 = vunpack.c.l.b16 %v10685
    %v10756 = vunpack.c.h.b16 %v10685
    %v10757 = vunpack.c.l.b16 %v10686
    %v10758 = vunpack.c.h.b16 %v10686
    %v10759 = vunpack.c.l.b16 %v10687
    %v10760 = vunpack.c.h.b16 %v10687
    %v10761 = vunpack.c.l.b16 %v10688
    %v10762 = vunpack.c.h.b16 %v10688
    %v10763 = vunpack.c.l.b16 %v10689
    %v10764 = vunpack.c.h.b16 %v10689
    %v10765 = vunpack.c.l.b16 %v10690
    %v10766 = vunpack.c.h.b16 %v10690
    %v10767 = vunpack.c.l.b16 %v10691
    %v10768 = vunpack.c.h.b16 %v10691
    %v10769 = vunpack.c.l.b16 %v10692
    %v10770 = vunpack.c.h.b16 %v10692
    %v10771 = vunpack.c.l.b16 %v10693
    %v10772 = vunpack.c.h.b16 %v10693
    %v10773 = vunpack.c.l.b16 %v10694
    %v10774 = vunpack.c.h.b16 %v10694
    %v10775 = vunpack.c.l.b16 %v10695
    %v10776 = vunpack.c.h.b16 %v10695
    %v10777 = vunpack.c.l.b16 %v10696
    %v10778 = vunpack.c.h.b16 %v10696
    %v10779 = vunpack.c.l.b16 %v10697
    %v10780 = vunpack.c.h.b16 %v10697
    %v10781 = vunpack.c.l.b16 %v10698
    %v10782 = vunpack.c.h.b16 %v10698
    %v10783 = vunpack.c.l.b16 %v10699
    %v10784 = vunpack.c.h.b16 %v10699
    %v10785 = vunpack.c.l.b16 %v10700
    %v10786 = vunpack.c.h.b16 %v10700
    %v10787 = vunpack.c.l.b16 %v10701
    %v10788 = vunpack.c.h.b16 %v10701
    %v10789 = vunpack.c.l.b16 %v10702
    %v10790 = vunpack.c.h.b16 %v10702
    %v10791 = vunpack.c.l.b16 %v10703
    %v10792 = vunpack.c.h.b16 %v10703
    %v10793 = vunpack.c.l.b16 %v10704
    %v10794 = vunpack.c.h.b16 %v10704
    %v10795 = vunpack.c.l.b16 %v10705
    %v10796 = vunpack.c.h.b16 %v10705
    %v10797 = vunpack.c.l.b16 %v10706
    %v10798 = vunpack.c.h.b16 %v10706
    %v10799 = vunpack.c.l.b16 %v10707
    %v10800 = vunpack.c.h.b16 %v10707
    %v10801 = vunpack.c.l.b16 %v10708
    %v10802 = vunpack.c.h.b16 %v10708
    %v10803 = vunpack.c.l.b16 %v10709
    %v10804 = vunpack.c.h.b16 %v10709
    %v10805 = vunpack.c.l.b16 %v10710
    %v10806 = vunpack.c.h.b16 %v10710
    %v10807 = vpack.c.b16 %v10747, %v10743
    %v10808 = vpack.c.b16 %v10748, %v10744
    %v10809 = vpack.c.b16 %v10749, %v10745
    %v10810 = vpack.c.b16 %v10750, %v10746
    %v10811 = vpack.c.b16 %v10755, %v10751
    %v10812 = vpack.c.b16 %v10756, %v10752
    %v10813 = vpack.c.b16 %v10757, %v10753
    %v10814 = vpack.c.b16 %v10758, %v10754
    %v10815 = vpack.c.b16 %v10763, %v10759
    %v10816 = vpack.c.b16 %v10764, %v10760
    %v10817 = vpack.c.b16 %v10765, %v10761
    %v10818 = vpack.c.b16 %v10766, %v10762
    %v10819 = vpack.c.b16 %v10771, %v10767
    %v10820 = vpack.c.b16 %v10772, %v10768
    %v10821 = vpack.c.b16 %v10773, %v10769
    %v10822 = vpack.c.b16 %v10774, %v10770
    %v10823 = vpack.c.b16 %v10779, %v10775
    %v10824 = vpack.c.b16 %v10780, %v10776
    %v10825 = vpack.c.b16 %v10781, %v10777
    %v10826 = vpack.c.b16 %v10782, %v10778
    %v10827 = vpack.c.b16 %v10787, %v10783
    %v10828 = vpack.c.b16 %v10788, %v10784
    %v10829 = vpack.c.b16 %v10789, %v10785
    %v10830 = vpack.c.b16 %v10790, %v10786
    %v10831 = vpack.c.b16 %v10795, %v10791
    %v10832 = vpack.c.b16 %v10796, %v10792
    %v10833 = vpack.c.b16 %v10797, %v10793
    %v10834 = vpack.c.b16 %v10798, %v10794
    %v10835 = vpack.c.b16 %v10803, %v10799
    %v10836 = vpack.c.b16 %v10804, %v10800
    %v10837 = vpack.c.b16 %v10805, %v10801
    %v10838 = vpack.c.b16 %v10806, %v10802
    %10871 = vmatprep.subr.bf16.mxu0 %v10808
    %10872 = vmatpush1.bf16.msra.mxu0 %v10807
    %10873 = vmatprep.subr.bf16.mxu0 %v10812
    %10874 = vmatpush1.bf16.msra.mxu0 %v10811
    %10875 = vmatprep.subr.bf16.mxu0 %v10816
    %10876 = vmatpush1.bf16.msra.mxu0 %v10815
    %10877 = vmatprep.subr.bf16.mxu0 %v10820
    %10878 = vmatpush1.bf16.msra.mxu0 %v10819
    %10879 = vmatprep.subr.bf16.mxu0 %v10824
    %10880 = vmatpush1.bf16.msra.mxu0 %v10823
    %10881 = vmatprep.subr.bf16.mxu0 %v10828
    %10882 = vmatpush1.bf16.msra.mxu0 %v10827
    %10883 = vmatprep.subr.bf16.mxu0 %v10832
    %10884 = vmatpush1.bf16.msra.mxu0 %v10831
    %10885 = vmatprep.subr.bf16.mxu0 %v10836
    %10886 = vmatpush1.bf16.msra.mxu0 %v10835
    %10887 = vmatprep.subr.bf16.mxu0 0
    %10888 = vmatpush1.bf16.msra.mxu0 0
    %10889 = vmatprep.subr.bf16.mxu0 0
    %10890 = vmatpush1.bf16.msra.mxu0 0
    %10891 = vmatprep.subr.bf16.mxu0 0
    %10892 = vmatpush1.bf16.msra.mxu0 0
    %10893 = vmatprep.subr.bf16.mxu0 0
    %10894 = vmatpush1.bf16.msra.mxu0 0
    %10895 = vmatprep.subr.bf16.mxu0 0
    %10896 = vmatpush1.bf16.msra.mxu0 0
    %10897 = vmatprep.subr.bf16.mxu0 0
    %10898 = vmatpush1.bf16.msra.mxu0 0
    %10899 = vmatprep.subr.bf16.mxu0 0
    %10900 = vmatpush1.bf16.msra.mxu0 0
    %10901 = vmatprep.subr.bf16.mxu0 0
    %10902 = vmatpush1.bf16.msra.mxu0 0
    %10903 = vmatprep.mubr.bf16.mxu0 0
    %10904 = vmatmul.mubr.bf16.gmra.mrb[0].mxu0 %v10677
    %v10905 = vpop.f32.mrb[0].mxu0
    %v10906 = vadd.f32 0.0, %v10905
    %v10907 = vpop.f32.mrb[0].mxu0
    %v10908 = vadd.f32 0.0, %v10907
    %v10909 = vpop.f32.mrb[0].mxu0
    %v10910 = vpop.f32.mrb[0].mxu0
    %10911 = vdwg.mxu0
    %10912 = vmatprep.subr.bf16.mxu0 %v10810
    %10913 = vmatpush1.bf16.msra.mxu0 %v10809
    %10914 = vmatprep.subr.bf16.mxu0 %v10814
    %10915 = vmatpush1.bf16.msra.mxu0 %v10813
    %10916 = vmatprep.subr.bf16.mxu0 %v10818
    %10917 = vmatpush1.bf16.msra.mxu0 %v10817
    %10918 = vmatprep.subr.bf16.mxu0 %v10822
    %10919 = vmatpush1.bf16.msra.mxu0 %v10821
    %10920 = vmatprep.subr.bf16.mxu0 %v10826
    %10921 = vmatpush1.bf16.msra.mxu0 %v10825
    %10922 = vmatprep.subr.bf16.mxu0 %v10830
    %10923 = vmatpush1.bf16.msra.mxu0 %v10829
    %10924 = vmatprep.subr.bf16.mxu0 %v10834
    %10925 = vmatpush1.bf16.msra.mxu0 %v10833
    %10926 = vmatprep.subr.bf16.mxu0 %v10838
    %10927 = vmatpush1.bf16.msra.mxu0 %v10837
    %10928 = vmatprep.subr.bf16.mxu0 0
    %10929 = vmatpush1.bf16.msra.mxu0 0
    %10930 = vmatprep.subr.bf16.mxu0 0
    %10931 = vmatpush1.bf16.msra.mxu0 0
    %10932 = vmatprep.subr.bf16.mxu0 0
    %10933 = vmatpush1.bf16.msra.mxu0 0
    %10934 = vmatprep.subr.bf16.mxu0 0
    %10935 = vmatpush1.bf16.msra.mxu0 0
    %10936 = vmatprep.subr.bf16.mxu0 0
    %10937 = vmatpush1.bf16.msra.mxu0 0
    %10938 = vmatprep.subr.bf16.mxu0 0
    %10939 = vmatpush1.bf16.msra.mxu0 0
    %10940 = vmatprep.subr.bf16.mxu0 0
    %10941 = vmatpush1.bf16.msra.mxu0 0
    %10942 = vmatprep.subr.bf16.mxu0 0
    %10943 = vmatpush1.bf16.msra.mxu0 0
    %10944 = vmatprep.mubr.bf16.mxu0 0
    %10945 = vmatmul.mubr.bf16.gmra.mrb[0].mxu0 %v10677
    %v10946 = vpop.f32.mrb[0].mxu0
    %v10947 = vadd.f32 0.0, %v10946
    %v10948 = vpop.f32.mrb[0].mxu0
    %v10949 = vadd.f32 0.0, %v10948
    %v10950 = vpop.f32.mrb[0].mxu0
    %v10951 = vpop.f32.mrb[0].mxu0
    %10952 = vdwg.mxu0
    %v10953 = vadd.f32 %v10631, %v10906
    %v10954 = vadd.f32 %v10632, %v10908
    %v10955 = vadd.f32 %v10633, %v10947
    %v10956 = vadd.f32 %v10634, %v10949
    %v10957 = vcombine.low %v9722, %v10642
    %v10958 = vcombine.low %v9730, %v10650
    %v10960 = vunpack.c.l.s4 1983009808
    %v10961 = vunpack.c.0.s8 %v10960
    %v10962 = vlaneseq
    %v10963 = vshrl.u32 %v10962, 7
    %v10964 = vsub.s32 %v10961, %v10963
    %v10965 = vrot.slane %v10957, %v10964
    %v10967 = vunpack.c.l.s4 1983009808
    %v10968 = vunpack.c.0.s8 %v10967
    %v10969 = vlaneseq
    %v10970 = vshrl.u32 %v10969, 7
    %v10971 = vsub.s32 %v10968, %v10970
    %v10972 = vrot.slane %v10958, %v10971
    %v10973 = vcombine.low %v10965, %v10972
    %v10975 = vpack.c.bf16 %v10973, %v10973
    %s10976 = scalar_lea.vmem %s7, 2048
    %v10977 = vld [vmem:[%s10976] sm:$0xff]
    %v10978 = vld [vmem:[%s10976 + $0x8] sm:$0xff]
    %v10979 = vld [vmem:[%s10976 + $0x10] sm:$0xff]
    %v10980 = vld [vmem:[%s10976 + $0x18] sm:$0xff]
    %v10981 = vld [vmem:[%s10976 + $0x20] sm:$0xff]
    %v10982 = vld [vmem:[%s10976 + $0x28] sm:$0xff]
    %v10983 = vld [vmem:[%s10976 + $0x30] sm:$0xff]
    %v10984 = vld [vmem:[%s10976 + $0x38] sm:$0xff]
    %v10985 = vld [vmem:[%s10976 + $0x40] sm:$0xff]
    %v10986 = vld [vmem:[%s10976 + $0x48] sm:$0xff]
    %v10987 = vld [vmem:[%s10976 + $0x50] sm:$0xff]
    %v10988 = vld [vmem:[%s10976 + $0x58] sm:$0xff]
    %v10989 = vld [vmem:[%s10976 + $0x60] sm:$0xff]
    %v10990 = vld [vmem:[%s10976 + $0x68] sm:$0xff]
    %v10991 = vld [vmem:[%s10976 + $0x70] sm:$0xff]
    %v10992 = vld [vmem:[%s10976 + $0x78] sm:$0xff]
    %v10993 = vld [vmem:[%s10976 + $0x80] sm:$0xff]
    %v10994 = vld [vmem:[%s10976 + $0x88] sm:$0xff]
    %v10995 = vld [vmem:[%s10976 + $0x90] sm:$0xff]
    %v10996 = vld [vmem:[%s10976 + $0x98] sm:$0xff]
    %v10997 = vld [vmem:[%s10976 + $0xa0] sm:$0xff]
    %v10998 = vld [vmem:[%s10976 + $0xa8] sm:$0xff]
    %v10999 = vld [vmem:[%s10976 + $0xb0] sm:$0xff]
    %v11000 = vld [vmem:[%s10976 + $0xb8] sm:$0xff]
    %v11001 = vld [vmem:[%s10976 + $0xc0] sm:$0xff]
    %v11002 = vld [vmem:[%s10976 + $0xc8] sm:$0xff]
    %v11003 = vld [vmem:[%s10976 + $0xd0] sm:$0xff]
    %v11004 = vld [vmem:[%s10976 + $0xd8] sm:$0xff]
    %v11005 = vld [vmem:[%s10976 + $0xe0] sm:$0xff]
    %v11006 = vld [vmem:[%s10976 + $0xe8] sm:$0xff]
    %v11007 = vld [vmem:[%s10976 + $0xf0] sm:$0xff]
    %v11008 = vld [vmem:[%s10976 + $0xf8] sm:$0xff]
    %v11041 = vunpack.c.l.b16 %v10977
    %v11042 = vunpack.c.h.b16 %v10977
    %v11043 = vunpack.c.l.b16 %v10978
    %v11044 = vunpack.c.h.b16 %v10978
    %v11045 = vunpack.c.l.b16 %v10979
    %v11046 = vunpack.c.h.b16 %v10979
    %v11047 = vunpack.c.l.b16 %v10980
    %v11048 = vunpack.c.h.b16 %v10980
    %v11049 = vunpack.c.l.b16 %v10981
    %v11050 = vunpack.c.h.b16 %v10981
    %v11051 = vunpack.c.l.b16 %v10982
    %v11052 = vunpack.c.h.b16 %v10982
    %v11053 = vunpack.c.l.b16 %v10983
    %v11054 = vunpack.c.h.b16 %v10983
    %v11055 = vunpack.c.l.b16 %v10984
    %v11056 = vunpack.c.h.b16 %v10984
    %v11057 = vunpack.c.l.b16 %v10985
    %v11058 = vunpack.c.h.b16 %v10985
    %v11059 = vunpack.c.l.b16 %v10986
    %v11060 = vunpack.c.h.b16 %v10986
    %v11061 = vunpack.c.l.b16 %v10987
    %v11062 = vunpack.c.h.b16 %v10987
    %v11063 = vunpack.c.l.b16 %v10988
    %v11064 = vunpack.c.h.b16 %v10988
    %v11065 = vunpack.c.l.b16 %v10989
    %v11066 = vunpack.c.h.b16 %v10989
    %v11067 = vunpack.c.l.b16 %v10990
    %v11068 = vunpack.c.h.b16 %v10990
    %v11069 = vunpack.c.l.b16 %v10991
    %v11070 = vunpack.c.h.b16 %v10991
    %v11071 = vunpack.c.l.b16 %v10992
    %v11072 = vunpack.c.h.b16 %v10992
    %v11073 = vunpack.c.l.b16 %v10993
    %v11074 = vunpack.c.h.b16 %v10993
    %v11075 = vunpack.c.l.b16 %v10994
    %v11076 = vunpack.c.h.b16 %v10994
    %v11077 = vunpack.c.l.b16 %v10995
    %v11078 = vunpack.c.h.b16 %v10995
    %v11079 = vunpack.c.l.b16 %v10996
    %v11080 = vunpack.c.h.b16 %v10996
    %v11081 = vunpack.c.l.b16 %v10997
    %v11082 = vunpack.c.h.b16 %v10997
    %v11083 = vunpack.c.l.b16 %v10998
    %v11084 = vunpack.c.h.b16 %v10998
    %v11085 = vunpack.c.l.b16 %v10999
    %v11086 = vunpack.c.h.b16 %v10999
    %v11087 = vunpack.c.l.b16 %v11000
    %v11088 = vunpack.c.h.b16 %v11000
    %v11089 = vunpack.c.l.b16 %v11001
    %v11090 = vunpack.c.h.b16 %v11001
    %v11091 = vunpack.c.l.b16 %v11002
    %v11092 = vunpack.c.h.b16 %v11002
    %v11093 = vunpack.c.l.b16 %v11003
    %v11094 = vunpack.c.h.b16 %v11003
    %v11095 = vunpack.c.l.b16 %v11004
    %v11096 = vunpack.c.h.b16 %v11004
    %v11097 = vunpack.c.l.b16 %v11005
    %v11098 = vunpack.c.h.b16 %v11005
    %v11099 = vunpack.c.l.b16 %v11006
    %v11100 = vunpack.c.h.b16 %v11006
    %v11101 = vunpack.c.l.b16 %v11007
    %v11102 = vunpack.c.h.b16 %v11007
    %v11103 = vunpack.c.l.b16 %v11008
    %v11104 = vunpack.c.h.b16 %v11008
    %v11105 = vpack.c.b16 %v11045, %v11041
    %v11106 = vpack.c.b16 %v11046, %v11042
    %v11107 = vpack.c.b16 %v11047, %v11043
    %v11108 = vpack.c.b16 %v11048, %v11044
    %v11109 = vpack.c.b16 %v11053, %v11049
    %v11110 = vpack.c.b16 %v11054, %v11050
    %v11111 = vpack.c.b16 %v11055, %v11051
    %v11112 = vpack.c.b16 %v11056, %v11052
    %v11113 = vpack.c.b16 %v11061, %v11057
    %v11114 = vpack.c.b16 %v11062, %v11058
    %v11115 = vpack.c.b16 %v11063, %v11059
    %v11116 = vpack.c.b16 %v11064, %v11060
    %v11117 = vpack.c.b16 %v11069, %v11065
    %v11118 = vpack.c.b16 %v11070, %v11066
    %v11119 = vpack.c.b16 %v11071, %v11067
    %v11120 = vpack.c.b16 %v11072, %v11068
    %v11121 = vpack.c.b16 %v11077, %v11073
    %v11122 = vpack.c.b16 %v11078, %v11074
    %v11123 = vpack.c.b16 %v11079, %v11075
    %v11124 = vpack.c.b16 %v11080, %v11076
    %v11125 = vpack.c.b16 %v11085, %v11081
    %v11126 = vpack.c.b16 %v11086, %v11082
    %v11127 = vpack.c.b16 %v11087, %v11083
    %v11128 = vpack.c.b16 %v11088, %v11084
    %v11129 = vpack.c.b16 %v11093, %v11089
    %v11130 = vpack.c.b16 %v11094, %v11090
    %v11131 = vpack.c.b16 %v11095, %v11091
    %v11132 = vpack.c.b16 %v11096, %v11092
    %v11133 = vpack.c.b16 %v11101, %v11097
    %v11134 = vpack.c.b16 %v11102, %v11098
    %v11135 = vpack.c.b16 %v11103, %v11099
    %v11136 = vpack.c.b16 %v11104, %v11100
    %11169 = vmatprep.subr.bf16.mxu0 %v11106
    %11170 = vmatpush1.bf16.msra.mxu0 %v11105
    %11171 = vmatprep.subr.bf16.mxu0 %v11110
    %11172 = vmatpush1.bf16.msra.mxu0 %v11109
    %11173 = vmatprep.subr.bf16.mxu0 %v11114
    %11174 = vmatpush1.bf16.msra.mxu0 %v11113
    %11175 = vmatprep.subr.bf16.mxu0 %v11118
    %11176 = vmatpush1.bf16.msra.mxu0 %v11117
    %11177 = vmatprep.subr.bf16.mxu0 %v11122
    %11178 = vmatpush1.bf16.msra.mxu0 %v11121
    %11179 = vmatprep.subr.bf16.mxu0 %v11126
    %11180 = vmatpush1.bf16.msra.mxu0 %v11125
    %11181 = vmatprep.subr.bf16.mxu0 %v11130
    %11182 = vmatpush1.bf16.msra.mxu0 %v11129
    %11183 = vmatprep.subr.bf16.mxu0 %v11134
    %11184 = vmatpush1.bf16.msra.mxu0 %v11133
    %11185 = vmatprep.subr.bf16.mxu0 0
    %11186 = vmatpush1.bf16.msra.mxu0 0
    %11187 = vmatprep.subr.bf16.mxu0 0
    %11188 = vmatpush1.bf16.msra.mxu0 0
    %11189 = vmatprep.subr.bf16.mxu0 0
    %11190 = vmatpush1.bf16.msra.mxu0 0
    %11191 = vmatprep.subr.bf16.mxu0 0
    %11192 = vmatpush1.bf16.msra.mxu0 0
    %11193 = vmatprep.subr.bf16.mxu0 0
    %11194 = vmatpush1.bf16.msra.mxu0 0
    %11195 = vmatprep.subr.bf16.mxu0 0
    %11196 = vmatpush1.bf16.msra.mxu0 0
    %11197 = vmatprep.subr.bf16.mxu0 0
    %11198 = vmatpush1.bf16.msra.mxu0 0
    %11199 = vmatprep.subr.bf16.mxu0 0
    %11200 = vmatpush1.bf16.msra.mxu0 0
    %11201 = vmatprep.mubr.bf16.mxu0 0
    %11202 = vmatmul.mubr.bf16.gmra.mrb[0].mxu0 %v10975
    %v11203 = vpop.f32.mrb[0].mxu0
    %v11204 = vadd.f32 0.0, %v11203
    %v11205 = vpop.f32.mrb[0].mxu0
    %v11206 = vadd.f32 0.0, %v11205
    %v11207 = vpop.f32.mrb[0].mxu0
    %v11208 = vpop.f32.mrb[0].mxu0
    %11209 = vdwg.mxu0
    %11210 = vmatprep.subr.bf16.mxu0 %v11108
    %11211 = vmatpush1.bf16.msra.mxu0 %v11107
    %11212 = vmatprep.subr.bf16.mxu0 %v11112
    %11213 = vmatpush1.bf16.msra.mxu0 %v11111
    %11214 = vmatprep.subr.bf16.mxu0 %v11116
    %11215 = vmatpush1.bf16.msra.mxu0 %v11115
    %11216 = vmatprep.subr.bf16.mxu0 %v11120
    %11217 = vmatpush1.bf16.msra.mxu0 %v11119
    %11218 = vmatprep.subr.bf16.mxu0 %v11124
    %11219 = vmatpush1.bf16.msra.mxu0 %v11123
    %11220 = vmatprep.subr.bf16.mxu0 %v11128
    %11221 = vmatpush1.bf16.msra.mxu0 %v11127
    %11222 = vmatprep.subr.bf16.mxu0 %v11132
    %11223 = vmatpush1.bf16.msra.mxu0 %v11131
    %11224 = vmatprep.subr.bf16.mxu0 %v11136
    %11225 = vmatpush1.bf16.msra.mxu0 %v11135
    %11226 = vmatprep.subr.bf16.mxu0 0
    %11227 = vmatpush1.bf16.msra.mxu0 0
    %11228 = vmatprep.subr.bf16.mxu0 0
    %11229 = vmatpush1.bf16.msra.mxu0 0
    %11230 = vmatprep.subr.bf16.mxu0 0
    %11231 = vmatpush1.bf16.msra.mxu0 0
    %11232 = vmatprep.subr.bf16.mxu0 0
    %11233 = vmatpush1.bf16.msra.mxu0 0
    %11234 = vmatprep.subr.bf16.mxu0 0
    %11235 = vmatpush1.bf16.msra.mxu0 0
    %11236 = vmatprep.subr.bf16.mxu0 0
    %11237 = vmatpush1.bf16.msra.mxu0 0
    %11238 = vmatprep.subr.bf16.mxu0 0
    %11239 = vmatpush1.bf16.msra.mxu0 0
    %11240 = vmatprep.subr.bf16.mxu0 0
    %11241 = vmatpush1.bf16.msra.mxu0 0
    %11242 = vmatprep.mubr.bf16.mxu0 0
    %11243 = vmatmul.mubr.bf16.gmra.mrb[0].mxu0 %v10975
    %v11244 = vpop.f32.mrb[0].mxu0
    %v11245 = vadd.f32 0.0, %v11244
    %v11246 = vpop.f32.mrb[0].mxu0
    %v11247 = vadd.f32 0.0, %v11246
    %v11248 = vpop.f32.mrb[0].mxu0
    %v11249 = vpop.f32.mrb[0].mxu0
    %11250 = vdwg.mxu0
    %v11251 = vadd.f32 %v10953, %v11204
    %v11252 = vadd.f32 %v10954, %v11206
    %v11253 = vadd.f32 %v10955, %v11245
    %v11254 = vadd.f32 %v10956, %v11247
    %v11255 = vld [vmem:[%s8] sm:$0xf]
    %v11257 = vlaneseq
    %v11258 = vshrl.u32 %v11257, 7
    %v11259 = vsub.s32 0, %v11258
    %v11260 = vrot.slane %v11255, %v11259
    %v11261 = vlaneseq
    %v11262 = vshrl.u32 %v11261, 7
    %v11263 = vsub.s32 1, %v11262
    %v11264 = vrot.slane %v11255, %v11263
    %v11265 = vlaneseq
    %v11266 = vshrl.u32 %v11265, 7
    %v11267 = vsub.s32 2, %v11266
    %v11268 = vrot.slane %v11255, %v11267
    %v11269 = vlaneseq
    %v11270 = vshrl.u32 %v11269, 7
    %v11271 = vsub.s32 3, %v11270
    %v11272 = vrot.slane %v11255, %v11271
    %v11277 = vadd.f32 %v11251, %v11260
    %v11278 = vadd.f32 %v11252, %v11264
    %v11279 = vadd.f32 %v11253, %v11268
    %v11280 = vadd.f32 %v11254, %v11272
    %v11281 = vmax.f32 %v11277, 0.0
    %v11282 = vmax.f32 %v11278, 0.0
    %v11283 = vmax.f32 %v11279, 0.0
    %v11284 = vmax.f32 %v11280, 0.0
    %v11289 = vcombine.low %v11281, %v11282
    %v11290 = vcombine.high %v11281, %v11282
    %v11291 = vcombine.low %v11283, %v11284
    %v11292 = vcombine.high %v11283, %v11284
    %v11294 = vunpack.c.l.s4 1983009808
    %v11295 = vunpack.c.0.s8 %v11294
    %v11296 = vlaneseq
    %v11297 = vshrl.u32 %v11296, 7
    %v11298 = vsub.s32 %v11295, %v11297
    %v11299 = vrot.slane %v11289, %v11298
    %v11301 = vunpack.c.l.s4 1983009808
    %v11302 = vunpack.c.0.s8 %v11301
    %v11303 = vlaneseq
    %v11304 = vshrl.u32 %v11303, 7
    %v11305 = vsub.s32 %v11302, %v11304
    %v11306 = vrot.slane %v11290, %v11305
    %v11308 = vunpack.c.l.s4 1983009808
    %v11309 = vunpack.c.0.s8 %v11308
    %v11310 = vlaneseq
    %v11311 = vshrl.u32 %v11310, 7
    %v11312 = vsub.s32 %v11309, %v11311
    %v11313 = vrot.slane %v11291, %v11312
    %v11315 = vunpack.c.l.s4 1983009808
    %v11316 = vunpack.c.0.s8 %v11315
    %v11317 = vlaneseq
    %v11318 = vshrl.u32 %v11317, 7
    %v11319 = vsub.s32 %v11316, %v11318
    %v11320 = vrot.slane %v11292, %v11319
    %v11321 = vcombine.low %v11299, %v11313
    %v11322 = vcombine.high %v11299, %v11313
    %v11323 = vcombine.low %v11306, %v11320
    %v11324 = vcombine.high %v11306, %v11320
    %v11329 = vrot.slane %v11321, 7
    %v11330 = vrot.slane %v11329, 2
    %v11331 = vrot.slane %v11322, 7
    %v11332 = vrot.slane %v11331, 2
    %v11333 = vrot.slane %v11323, 7
    %v11334 = vrot.slane %v11333, 2
    %v11335 = vrot.slane %v11324, 7
    %v11336 = vrot.slane %v11335, 2
    %v11341 = vmax.f32 %v11321, %v11330
    %v11342 = vmax.f32 %v11322, %v11332
    %v11343 = vmax.f32 %v11323, %v11334
    %v11344 = vmax.f32 %v11324, %v11336
    %v11345 = vmax.f32 %v11341, %v11342
    %v11346 = vmax.f32 %v11343, %v11344
    %v11349 = vlaneseq
    %v11350 = vshrl.u32 %v11349, 7
    %v11351 = vsub.s32 0, %v11350
    %v11352 = vrot.slane %v11345, %v11351
    %v11353 = vlaneseq
    %v11354 = vshrl.u32 %v11353, 7
    %v11355 = vsub.s32 2, %v11354
    %v11356 = vrot.slane %v11345, %v11355
    %v11357 = vlaneseq
    %v11358 = vshrl.u32 %v11357, 7
    %v11359 = vsub.s32 4, %v11358
    %v11360 = vrot.slane %v11345, %v11359
    %v11361 = vlaneseq
    %v11362 = vshrl.u32 %v11361, 7
    %v11363 = vsub.s32 6, %v11362
    %v11364 = vrot.slane %v11345, %v11363
    %v11365 = vlaneseq
    %v11366 = vshrl.u32 %v11365, 7
    %v11367 = vsub.s32 0, %v11366
    %v11368 = vrot.slane %v11346, %v11367
    %v11369 = vlaneseq
    %v11370 = vshrl.u32 %v11369, 7
    %v11371 = vsub.s32 2, %v11370
    %v11372 = vrot.slane %v11346, %v11371
    %v11373 = vlaneseq
    %v11374 = vshrl.u32 %v11373, 7
    %v11375 = vsub.s32 4, %v11374
    %v11376 = vrot.slane %v11346, %v11375
    %v11377 = vlaneseq
    %v11378 = vshrl.u32 %v11377, 7
    %v11379 = vsub.s32 6, %v11378
    %v11380 = vrot.slane %v11346, %v11379
    %v11389 = vpack.c.bf16 %v11352, %v11352
    %v11390 = vpack.c.bf16 %v11356, %v11356
    %v11391 = vpack.c.bf16 %v11360, %v11360
    %v11392 = vpack.c.bf16 %v11364, %v11364
    %v11393 = vpack.c.bf16 %v11368, %v11368
    %v11394 = vpack.c.bf16 %v11372, %v11372
    %v11395 = vpack.c.bf16 %v11376, %v11376
    %v11396 = vpack.c.bf16 %v11380, %v11380
    %v11397 = vld [vmem:[#allocation8] sm:$0xff]
    %v11398 = vld [vmem:[#allocation8 + $0x8] sm:$0xff]
    %v11399 = vld [vmem:[#allocation8 + $0x10] sm:$0xff]
    %v11400 = vld [vmem:[#allocation8 + $0x18] sm:$0xff]
    %v11401 = vld [vmem:[#allocation8 + $0x20] sm:$0xff]
    %v11402 = vld [vmem:[#allocation8 + $0x28] sm:$0xff]
    %v11403 = vld [vmem:[#allocation8 + $0x30] sm:$0xff]
    %v11404 = vld [vmem:[#allocation8 + $0x38] sm:$0xff]
    %v11405 = vld [vmem:[#allocation8 + $0x40] sm:$0xff]
    %v11406 = vld [vmem:[#allocation8 + $0x48] sm:$0xff]
    %v11407 = vld [vmem:[#allocation8 + $0x50] sm:$0xff]
    %v11408 = vld [vmem:[#allocation8 + $0x58] sm:$0xff]
    %v11409 = vld [vmem:[#allocation8 + $0x60] sm:$0xff]
    %v11410 = vld [vmem:[#allocation8 + $0x68] sm:$0xff]
    %v11411 = vld [vmem:[#allocation8 + $0x70] sm:$0xff]
    %v11412 = vld [vmem:[#allocation8 + $0x78] sm:$0xff]
    %v11413 = vld [vmem:[#allocation8 + $0x80] sm:$0xff]
    %v11414 = vld [vmem:[#allocation8 + $0x88] sm:$0xff]
    %v11415 = vld [vmem:[#allocation8 + $0x90] sm:$0xff]
    %v11416 = vld [vmem:[#allocation8 + $0x98] sm:$0xff]
    %v11417 = vld [vmem:[#allocation8 + $0xa0] sm:$0xff]
    %v11418 = vld [vmem:[#allocation8 + $0xa8] sm:$0xff]
    %v11419 = vld [vmem:[#allocation8 + $0xb0] sm:$0xff]
    %v11420 = vld [vmem:[#allocation8 + $0xb8] sm:$0xff]
    %v11421 = vld [vmem:[#allocation8 + $0xc0] sm:$0xff]
    %v11422 = vld [vmem:[#allocation8 + $0xc8] sm:$0xff]
    %v11423 = vld [vmem:[#allocation8 + $0xd0] sm:$0xff]
    %v11424 = vld [vmem:[#allocation8 + $0xd8] sm:$0xff]
    %v11425 = vld [vmem:[#allocation8 + $0xe0] sm:$0xff]
    %v11426 = vld [vmem:[#allocation8 + $0xe8] sm:$0xff]
    %v11427 = vld [vmem:[#allocation8 + $0xf0] sm:$0xff]
    %v11428 = vld [vmem:[#allocation8 + $0xf8] sm:$0xff]
    %v11429 = vld [vmem:[#allocation8 + $0x100] sm:$0xff]
    %v11430 = vld [vmem:[#allocation8 + $0x108] sm:$0xff]
    %v11431 = vld [vmem:[#allocation8 + $0x110] sm:$0xff]
    %v11432 = vld [vmem:[#allocation8 + $0x118] sm:$0xff]
    %v11433 = vld [vmem:[#allocation8 + $0x120] sm:$0xff]
    %v11434 = vld [vmem:[#allocation8 + $0x128] sm:$0xff]
    %v11435 = vld [vmem:[#allocation8 + $0x130] sm:$0xff]
    %v11436 = vld [vmem:[#allocation8 + $0x138] sm:$0xff]
    %v11437 = vld [vmem:[#allocation8 + $0x140] sm:$0xff]
    %v11438 = vld [vmem:[#allocation8 + $0x148] sm:$0xff]
    %v11439 = vld [vmem:[#allocation8 + $0x150] sm:$0xff]
    %v11440 = vld [vmem:[#allocation8 + $0x158] sm:$0xff]
    %v11441 = vld [vmem:[#allocation8 + $0x160] sm:$0xff]
    %v11442 = vld [vmem:[#allocation8 + $0x168] sm:$0xff]
    %v11443 = vld [vmem:[#allocation8 + $0x170] sm:$0xff]
    %v11444 = vld [vmem:[#allocation8 + $0x178] sm:$0xff]
    %v11445 = vld [vmem:[#allocation8 + $0x180] sm:$0xff]
    %v11446 = vld [vmem:[#allocation8 + $0x188] sm:$0xff]
    %v11447 = vld [vmem:[#allocation8 + $0x190] sm:$0xff]
    %v11448 = vld [vmem:[#allocation8 + $0x198] sm:$0xff]
    %v11449 = vld [vmem:[#allocation8 + $0x1a0] sm:$0xff]
    %v11450 = vld [vmem:[#allocation8 + $0x1a8] sm:$0xff]
    %v11451 = vld [vmem:[#allocation8 + $0x1b0] sm:$0xff]
    %v11452 = vld [vmem:[#allocation8 + $0x1b8] sm:$0xff]
    %v11453 = vld [vmem:[#allocation8 + $0x1c0] sm:$0xff]
    %v11454 = vld [vmem:[#allocation8 + $0x1c8] sm:$0xff]
    %v11455 = vld [vmem:[#allocation8 + $0x1d0] sm:$0xff]
    %v11456 = vld [vmem:[#allocation8 + $0x1d8] sm:$0xff]
    %v11457 = vld [vmem:[#allocation8 + $0x1e0] sm:$0xff]
    %v11458 = vld [vmem:[#allocation8 + $0x1e8] sm:$0xff]
    %v11459 = vld [vmem:[#allocation8 + $0x1f0] sm:$0xff]
    %v11460 = vld [vmem:[#allocation8 + $0x1f8] sm:$0xff]
    %v11461 = vld [vmem:[#allocation8 + $0x200] sm:$0xff]
    %v11462 = vld [vmem:[#allocation8 + $0x208] sm:$0xff]
    %v11463 = vld [vmem:[#allocation8 + $0x210] sm:$0xff]
    %v11464 = vld [vmem:[#allocation8 + $0x218] sm:$0xff]
    %v11465 = vld [vmem:[#allocation8 + $0x220] sm:$0xff]
    %v11466 = vld [vmem:[#allocation8 + $0x228] sm:$0xff]
    %v11467 = vld [vmem:[#allocation8 + $0x230] sm:$0xff]
    %v11468 = vld [vmem:[#allocation8 + $0x238] sm:$0xff]
    %v11469 = vld [vmem:[#allocation8 + $0x240] sm:$0xff]
    %v11470 = vld [vmem:[#allocation8 + $0x248] sm:$0xff]
    %v11471 = vld [vmem:[#allocation8 + $0x250] sm:$0xff]
    %v11472 = vld [vmem:[#allocation8 + $0x258] sm:$0xff]
    %v11473 = vld [vmem:[#allocation8 + $0x260] sm:$0xff]
    %v11474 = vld [vmem:[#allocation8 + $0x268] sm:$0xff]
    %v11475 = vld [vmem:[#allocation8 + $0x270] sm:$0xff]
    %v11476 = vld [vmem:[#allocation8 + $0x278] sm:$0xff]
    %v11477 = vld [vmem:[#allocation8 + $0x280] sm:$0xff]
    %v11478 = vld [vmem:[#allocation8 + $0x288] sm:$0xff]
    %v11479 = vld [vmem:[#allocation8 + $0x290] sm:$0xff]
    %v11480 = vld [vmem:[#allocation8 + $0x298] sm:$0xff]
    %v11481 = vld [vmem:[#allocation8 + $0x2a0] sm:$0xff]
    %v11482 = vld [vmem:[#allocation8 + $0x2a8] sm:$0xff]
    %v11483 = vld [vmem:[#allocation8 + $0x2b0] sm:$0xff]
    %v11484 = vld [vmem:[#allocation8 + $0x2b8] sm:$0xff]
    %v11485 = vld [vmem:[#allocation8 + $0x2c0] sm:$0xff]
    %v11486 = vld [vmem:[#allocation8 + $0x2c8] sm:$0xff]
    %v11487 = vld [vmem:[#allocation8 + $0x2d0] sm:$0xff]
    %v11488 = vld [vmem:[#allocation8 + $0x2d8] sm:$0xff]
    %v11489 = vld [vmem:[#allocation8 + $0x2e0] sm:$0xff]
    %v11490 = vld [vmem:[#allocation8 + $0x2e8] sm:$0xff]
    %v11491 = vld [vmem:[#allocation8 + $0x2f0] sm:$0xff]
    %v11492 = vld [vmem:[#allocation8 + $0x2f8] sm:$0xff]
    %v11493 = vld [vmem:[#allocation8 + $0x300] sm:$0xff]
    %v11494 = vld [vmem:[#allocation8 + $0x308] sm:$0xff]
    %v11495 = vld [vmem:[#allocation8 + $0x310] sm:$0xff]
    %v11496 = vld [vmem:[#allocation8 + $0x318] sm:$0xff]
    %v11497 = vld [vmem:[#allocation8 + $0x320] sm:$0xff]
    %v11498 = vld [vmem:[#allocation8 + $0x328] sm:$0xff]
    %v11499 = vld [vmem:[#allocation8 + $0x330] sm:$0xff]
    %v11500 = vld [vmem:[#allocation8 + $0x338] sm:$0xff]
    %v11501 = vld [vmem:[#allocation8 + $0x340] sm:$0xff]
    %v11502 = vld [vmem:[#allocation8 + $0x348] sm:$0xff]
    %v11503 = vld [vmem:[#allocation8 + $0x350] sm:$0xff]
    %v11504 = vld [vmem:[#allocation8 + $0x358] sm:$0xff]
    %v11505 = vld [vmem:[#allocation8 + $0x360] sm:$0xff]
    %v11506 = vld [vmem:[#allocation8 + $0x368] sm:$0xff]
    %v11507 = vld [vmem:[#allocation8 + $0x370] sm:$0xff]
    %v11508 = vld [vmem:[#allocation8 + $0x378] sm:$0xff]
    %v11509 = vld [vmem:[#allocation8 + $0x380] sm:$0xff]
    %v11510 = vld [vmem:[#allocation8 + $0x388] sm:$0xff]
    %v11511 = vld [vmem:[#allocation8 + $0x390] sm:$0xff]
    %v11512 = vld [vmem:[#allocation8 + $0x398] sm:$0xff]
    %v11513 = vld [vmem:[#allocation8 + $0x3a0] sm:$0xff]
    %v11514 = vld [vmem:[#allocation8 + $0x3a8] sm:$0xff]
    %v11515 = vld [vmem:[#allocation8 + $0x3b0] sm:$0xff]
    %v11516 = vld [vmem:[#allocation8 + $0x3b8] sm:$0xff]
    %v11517 = vld [vmem:[#allocation8 + $0x3c0] sm:$0xff]
    %v11518 = vld [vmem:[#allocation8 + $0x3c8] sm:$0xff]
    %v11519 = vld [vmem:[#allocation8 + $0x3d0] sm:$0xff]
    %v11520 = vld [vmem:[#allocation8 + $0x3d8] sm:$0xff]
    %v11521 = vld [vmem:[#allocation8 + $0x3e0] sm:$0xff]
    %v11522 = vld [vmem:[#allocation8 + $0x3e8] sm:$0xff]
    %v11523 = vld [vmem:[#allocation8 + $0x3f0] sm:$0xff]
    %v11524 = vld [vmem:[#allocation8 + $0x3f8] sm:$0xff]
    %v11525 = vld [vmem:[%s10] sm:$0xf]
    %v11527 = vlaneseq
    %v11528 = vshrl.u32 %v11527, 7
    %v11529 = vsub.s32 0, %v11528
    %v11530 = vrot.slane %v11525, %v11529
    %v11531 = vlaneseq
    %v11532 = vshrl.u32 %v11531, 7
    %v11533 = vsub.s32 1, %v11532
    %v11534 = vrot.slane %v11525, %v11533
    %v11535 = vlaneseq
    %v11536 = vshrl.u32 %v11535, 7
    %v11537 = vsub.s32 2, %v11536
    %v11538 = vrot.slane %v11525, %v11537
    %v11539 = vlaneseq
    %v11540 = vshrl.u32 %v11539, 7
    %v11541 = vsub.s32 3, %v11540
    %v11542 = vrot.slane %v11525, %v11541
    %v11555 = vunpack.c.l.b16 %v11389
    %v11556 = vunpack.c.l.b16 %v11390
    %v11557 = vunpack.c.l.b16 %v11391
    %v11558 = vunpack.c.l.b16 %v11392
    %v11559 = vunpack.c.l.b16 %v11393
    %v11560 = vunpack.c.l.b16 %v11394
    %v11561 = vunpack.c.l.b16 %v11395
    %v11562 = vunpack.c.l.b16 %v11396
    %v11563 = vrot.slane %v11559, 7
    %v11564 = vsel %vm4022, %v11563, %v11555
    %v11565 = vrot.slane %v11560, 7
    %v11566 = vsel %vm4022, %v11565, %v11556
    %v11567 = vrot.slane %v11561, 7
    %v11568 = vsel %vm4022, %v11567, %v11557
    %v11569 = vrot.slane %v11562, 7
    %v11570 = vsel %vm4022, %v11569, %v11558
    %v11571 = vpack.c.b16 %v11564, %v11564
    %v11572 = vpack.c.b16 %v11566, %v11566
    %v11573 = vpack.c.b16 %v11568, %v11568
    %v11574 = vpack.c.b16 %v11570, %v11570
    %v11707 = vunpack.c.l.b16 %v11397
    %v11708 = vunpack.c.h.b16 %v11397
    %v11709 = vunpack.c.l.b16 %v11398
    %v11710 = vunpack.c.h.b16 %v11398
    %v11711 = vunpack.c.l.b16 %v11399
    %v11712 = vunpack.c.h.b16 %v11399
    %v11713 = vunpack.c.l.b16 %v11400
    %v11714 = vunpack.c.h.b16 %v11400
    %v11715 = vunpack.c.l.b16 %v11401
    %v11716 = vunpack.c.h.b16 %v11401
    %v11717 = vunpack.c.l.b16 %v11402
    %v11718 = vunpack.c.h.b16 %v11402
    %v11719 = vunpack.c.l.b16 %v11403
    %v11720 = vunpack.c.h.b16 %v11403
    %v11721 = vunpack.c.l.b16 %v11404
    %v11722 = vunpack.c.h.b16 %v11404
    %v11723 = vunpack.c.l.b16 %v11405
    %v11724 = vunpack.c.h.b16 %v11405
    %v11725 = vunpack.c.l.b16 %v11406
    %v11726 = vunpack.c.h.b16 %v11406
    %v11727 = vunpack.c.l.b16 %v11407
    %v11728 = vunpack.c.h.b16 %v11407
    %v11729 = vunpack.c.l.b16 %v11408
    %v11730 = vunpack.c.h.b16 %v11408
    %v11731 = vunpack.c.l.b16 %v11409
    %v11732 = vunpack.c.h.b16 %v11409
    %v11733 = vunpack.c.l.b16 %v11410
    %v11734 = vunpack.c.h.b16 %v11410
    %v11735 = vunpack.c.l.b16 %v11411
    %v11736 = vunpack.c.h.b16 %v11411
    %v11737 = vunpack.c.l.b16 %v11412
    %v11738 = vunpack.c.h.b16 %v11412
    %v11739 = vunpack.c.l.b16 %v11413
    %v11740 = vunpack.c.h.b16 %v11413
    %v11741 = vunpack.c.l.b16 %v11414
    %v11742 = vunpack.c.h.b16 %v11414
    %v11743 = vunpack.c.l.b16 %v11415
    %v11744 = vunpack.c.h.b16 %v11415
    %v11745 = vunpack.c.l.b16 %v11416
    %v11746 = vunpack.c.h.b16 %v11416
    %v11747 = vunpack.c.l.b16 %v11417
    %v11748 = vunpack.c.h.b16 %v11417
    %v11749 = vunpack.c.l.b16 %v11418
    %v11750 = vunpack.c.h.b16 %v11418
    %v11751 = vunpack.c.l.b16 %v11419
    %v11752 = vunpack.c.h.b16 %v11419
    %v11753 = vunpack.c.l.b16 %v11420
    %v11754 = vunpack.c.h.b16 %v11420
    %v11755 = vunpack.c.l.b16 %v11421
    %v11756 = vunpack.c.h.b16 %v11421
    %v11757 = vunpack.c.l.b16 %v11422
    %v11758 = vunpack.c.h.b16 %v11422
    %v11759 = vunpack.c.l.b16 %v11423
    %v11760 = vunpack.c.h.b16 %v11423
    %v11761 = vunpack.c.l.b16 %v11424
    %v11762 = vunpack.c.h.b16 %v11424
    %v11763 = vunpack.c.l.b16 %v11425
    %v11764 = vunpack.c.h.b16 %v11425
    %v11765 = vunpack.c.l.b16 %v11426
    %v11766 = vunpack.c.h.b16 %v11426
    %v11767 = vunpack.c.l.b16 %v11427
    %v11768 = vunpack.c.h.b16 %v11427
    %v11769 = vunpack.c.l.b16 %v11428
    %v11770 = vunpack.c.h.b16 %v11428
    %v11771 = vunpack.c.l.b16 %v11429
    %v11772 = vunpack.c.h.b16 %v11429
    %v11773 = vunpack.c.l.b16 %v11430
    %v11774 = vunpack.c.h.b16 %v11430
    %v11775 = vunpack.c.l.b16 %v11431
    %v11776 = vunpack.c.h.b16 %v11431
    %v11777 = vunpack.c.l.b16 %v11432
    %v11778 = vunpack.c.h.b16 %v11432
    %v11779 = vunpack.c.l.b16 %v11433
    %v11780 = vunpack.c.h.b16 %v11433
    %v11781 = vunpack.c.l.b16 %v11434
    %v11782 = vunpack.c.h.b16 %v11434
    %v11783 = vunpack.c.l.b16 %v11435
    %v11784 = vunpack.c.h.b16 %v11435
    %v11785 = vunpack.c.l.b16 %v11436
    %v11786 = vunpack.c.h.b16 %v11436
    %v11787 = vunpack.c.l.b16 %v11437
    %v11788 = vunpack.c.h.b16 %v11437
    %v11789 = vunpack.c.l.b16 %v11438
    %v11790 = vunpack.c.h.b16 %v11438
    %v11791 = vunpack.c.l.b16 %v11439
    %v11792 = vunpack.c.h.b16 %v11439
    %v11793 = vunpack.c.l.b16 %v11440
    %v11794 = vunpack.c.h.b16 %v11440
    %v11795 = vunpack.c.l.b16 %v11441
    %v11796 = vunpack.c.h.b16 %v11441
    %v11797 = vunpack.c.l.b16 %v11442
    %v11798 = vunpack.c.h.b16 %v11442
    %v11799 = vunpack.c.l.b16 %v11443
    %v11800 = vunpack.c.h.b16 %v11443
    %v11801 = vunpack.c.l.b16 %v11444
    %v11802 = vunpack.c.h.b16 %v11444
    %v11803 = vunpack.c.l.b16 %v11445
    %v11804 = vunpack.c.h.b16 %v11445
    %v11805 = vunpack.c.l.b16 %v11446
    %v11806 = vunpack.c.h.b16 %v11446
    %v11807 = vunpack.c.l.b16 %v11447
    %v11808 = vunpack.c.h.b16 %v11447
    %v11809 = vunpack.c.l.b16 %v11448
    %v11810 = vunpack.c.h.b16 %v11448
    %v11811 = vunpack.c.l.b16 %v11449
    %v11812 = vunpack.c.h.b16 %v11449
    %v11813 = vunpack.c.l.b16 %v11450
    %v11814 = vunpack.c.h.b16 %v11450
    %v11815 = vunpack.c.l.b16 %v11451
    %v11816 = vunpack.c.h.b16 %v11451
    %v11817 = vunpack.c.l.b16 %v11452
    %v11818 = vunpack.c.h.b16 %v11452
    %v11819 = vunpack.c.l.b16 %v11453
    %v11820 = vunpack.c.h.b16 %v11453
    %v11821 = vunpack.c.l.b16 %v11454
    %v11822 = vunpack.c.h.b16 %v11454
    %v11823 = vunpack.c.l.b16 %v11455
    %v11824 = vunpack.c.h.b16 %v11455
    %v11825 = vunpack.c.l.b16 %v11456
    %v11826 = vunpack.c.h.b16 %v11456
    %v11827 = vunpack.c.l.b16 %v11457
    %v11828 = vunpack.c.h.b16 %v11457
    %v11829 = vunpack.c.l.b16 %v11458
    %v11830 = vunpack.c.h.b16 %v11458
    %v11831 = vunpack.c.l.b16 %v11459
    %v11832 = vunpack.c.h.b16 %v11459
    %v11833 = vunpack.c.l.b16 %v11460
    %v11834 = vunpack.c.h.b16 %v11460
    %v11835 = vunpack.c.l.b16 %v11461
    %v11836 = vunpack.c.h.b16 %v11461
    %v11837 = vunpack.c.l.b16 %v11462
    %v11838 = vunpack.c.h.b16 %v11462
    %v11839 = vunpack.c.l.b16 %v11463
    %v11840 = vunpack.c.h.b16 %v11463
    %v11841 = vunpack.c.l.b16 %v11464
    %v11842 = vunpack.c.h.b16 %v11464
    %v11843 = vunpack.c.l.b16 %v11465
    %v11844 = vunpack.c.h.b16 %v11465
    %v11845 = vunpack.c.l.b16 %v11466
    %v11846 = vunpack.c.h.b16 %v11466
    %v11847 = vunpack.c.l.b16 %v11467
    %v11848 = vunpack.c.h.b16 %v11467
    %v11849 = vunpack.c.l.b16 %v11468
    %v11850 = vunpack.c.h.b16 %v11468
    %v11851 = vunpack.c.l.b16 %v11469
    %v11852 = vunpack.c.h.b16 %v11469
    %v11853 = vunpack.c.l.b16 %v11470
    %v11854 = vunpack.c.h.b16 %v11470
    %v11855 = vunpack.c.l.b16 %v11471
    %v11856 = vunpack.c.h.b16 %v11471
    %v11857 = vunpack.c.l.b16 %v11472
    %v11858 = vunpack.c.h.b16 %v11472
    %v11859 = vunpack.c.l.b16 %v11473
    %v11860 = vunpack.c.h.b16 %v11473
    %v11861 = vunpack.c.l.b16 %v11474
    %v11862 = vunpack.c.h.b16 %v11474
    %v11863 = vunpack.c.l.b16 %v11475
    %v11864 = vunpack.c.h.b16 %v11475
    %v11865 = vunpack.c.l.b16 %v11476
    %v11866 = vunpack.c.h.b16 %v11476
    %v11867 = vunpack.c.l.b16 %v11477
    %v11868 = vunpack.c.h.b16 %v11477
    %v11869 = vunpack.c.l.b16 %v11478
    %v11870 = vunpack.c.h.b16 %v11478
    %v11871 = vunpack.c.l.b16 %v11479
    %v11872 = vunpack.c.h.b16 %v11479
    %v11873 = vunpack.c.l.b16 %v11480
    %v11874 = vunpack.c.h.b16 %v11480
    %v11875 = vunpack.c.l.b16 %v11481
    %v11876 = vunpack.c.h.b16 %v11481
    %v11877 = vunpack.c.l.b16 %v11482
    %v11878 = vunpack.c.h.b16 %v11482
    %v11879 = vunpack.c.l.b16 %v11483
    %v11880 = vunpack.c.h.b16 %v11483
    %v11881 = vunpack.c.l.b16 %v11484
    %v11882 = vunpack.c.h.b16 %v11484
    %v11883 = vunpack.c.l.b16 %v11485
    %v11884 = vunpack.c.h.b16 %v11485
    %v11885 = vunpack.c.l.b16 %v11486
    %v11886 = vunpack.c.h.b16 %v11486
    %v11887 = vunpack.c.l.b16 %v11487
    %v11888 = vunpack.c.h.b16 %v11487
    %v11889 = vunpack.c.l.b16 %v11488
    %v11890 = vunpack.c.h.b16 %v11488
    %v11891 = vunpack.c.l.b16 %v11489
    %v11892 = vunpack.c.h.b16 %v11489
    %v11893 = vunpack.c.l.b16 %v11490
    %v11894 = vunpack.c.h.b16 %v11490
    %v11895 = vunpack.c.l.b16 %v11491
    %v11896 = vunpack.c.h.b16 %v11491
    %v11897 = vunpack.c.l.b16 %v11492
    %v11898 = vunpack.c.h.b16 %v11492
    %v11899 = vunpack.c.l.b16 %v11493
    %v11900 = vunpack.c.h.b16 %v11493
    %v11901 = vunpack.c.l.b16 %v11494
    %v11902 = vunpack.c.h.b16 %v11494
    %v11903 = vunpack.c.l.b16 %v11495
    %v11904 = vunpack.c.h.b16 %v11495
    %v11905 = vunpack.c.l.b16 %v11496
    %v11906 = vunpack.c.h.b16 %v11496
    %v11907 = vunpack.c.l.b16 %v11497
    %v11908 = vunpack.c.h.b16 %v11497
    %v11909 = vunpack.c.l.b16 %v11498
    %v11910 = vunpack.c.h.b16 %v11498
    %v11911 = vunpack.c.l.b16 %v11499
    %v11912 = vunpack.c.h.b16 %v11499
    %v11913 = vunpack.c.l.b16 %v11500
    %v11914 = vunpack.c.h.b16 %v11500
    %v11915 = vunpack.c.l.b16 %v11501
    %v11916 = vunpack.c.h.b16 %v11501
    %v11917 = vunpack.c.l.b16 %v11502
    %v11918 = vunpack.c.h.b16 %v11502
    %v11919 = vunpack.c.l.b16 %v11503
    %v11920 = vunpack.c.h.b16 %v11503
    %v11921 = vunpack.c.l.b16 %v11504
    %v11922 = vunpack.c.h.b16 %v11504
    %v11923 = vunpack.c.l.b16 %v11505
    %v11924 = vunpack.c.h.b16 %v11505
    %v11925 = vunpack.c.l.b16 %v11506
    %v11926 = vunpack.c.h.b16 %v11506
    %v11927 = vunpack.c.l.b16 %v11507
    %v11928 = vunpack.c.h.b16 %v11507
    %v11929 = vunpack.c.l.b16 %v11508
    %v11930 = vunpack.c.h.b16 %v11508
    %v11931 = vunpack.c.l.b16 %v11509
    %v11932 = vunpack.c.h.b16 %v11509
    %v11933 = vunpack.c.l.b16 %v11510
    %v11934 = vunpack.c.h.b16 %v11510
    %v11935 = vunpack.c.l.b16 %v11511
    %v11936 = vunpack.c.h.b16 %v11511
    %v11937 = vunpack.c.l.b16 %v11512
    %v11938 = vunpack.c.h.b16 %v11512
    %v11939 = vunpack.c.l.b16 %v11513
    %v11940 = vunpack.c.h.b16 %v11513
    %v11941 = vunpack.c.l.b16 %v11514
    %v11942 = vunpack.c.h.b16 %v11514
    %v11943 = vunpack.c.l.b16 %v11515
    %v11944 = vunpack.c.h.b16 %v11515
    %v11945 = vunpack.c.l.b16 %v11516
    %v11946 = vunpack.c.h.b16 %v11516
    %v11947 = vunpack.c.l.b16 %v11517
    %v11948 = vunpack.c.h.b16 %v11517
    %v11949 = vunpack.c.l.b16 %v11518
    %v11950 = vunpack.c.h.b16 %v11518
    %v11951 = vunpack.c.l.b16 %v11519
    %v11952 = vunpack.c.h.b16 %v11519
    %v11953 = vunpack.c.l.b16 %v11520
    %v11954 = vunpack.c.h.b16 %v11520
    %v11955 = vunpack.c.l.b16 %v11521
    %v11956 = vunpack.c.h.b16 %v11521
    %v11957 = vunpack.c.l.b16 %v11522
    %v11958 = vunpack.c.h.b16 %v11522
    %v11959 = vunpack.c.l.b16 %v11523
    %v11960 = vunpack.c.h.b16 %v11523
    %v11961 = vunpack.c.l.b16 %v11524
    %v11962 = vunpack.c.h.b16 %v11524
    %v11963 = vpack.c.b16 %v11711, %v11707
    %v11964 = vpack.c.b16 %v11712, %v11708
    %v11965 = vpack.c.b16 %v11713, %v11709
    %v11966 = vpack.c.b16 %v11714, %v11710
    %v11967 = vpack.c.b16 %v11719, %v11715
    %v11968 = vpack.c.b16 %v11720, %v11716
    %v11969 = vpack.c.b16 %v11721, %v11717
    %v11970 = vpack.c.b16 %v11722, %v11718
    %v11971 = vpack.c.b16 %v11727, %v11723
    %v11972 = vpack.c.b16 %v11728, %v11724
    %v11973 = vpack.c.b16 %v11729, %v11725
    %v11974 = vpack.c.b16 %v11730, %v11726
    %v11975 = vpack.c.b16 %v11735, %v11731
    %v11976 = vpack.c.b16 %v11736, %v11732
    %v11977 = vpack.c.b16 %v11737, %v11733
    %v11978 = vpack.c.b16 %v11738, %v11734
    %v11979 = vpack.c.b16 %v11743, %v11739
    %v11980 = vpack.c.b16 %v11744, %v11740
    %v11981 = vpack.c.b16 %v11745, %v11741
    %v11982 = vpack.c.b16 %v11746, %v11742
    %v11983 = vpack.c.b16 %v11751, %v11747
    %v11984 = vpack.c.b16 %v11752, %v11748
    %v11985 = vpack.c.b16 %v11753, %v11749
    %v11986 = vpack.c.b16 %v11754, %v11750
    %v11987 = vpack.c.b16 %v11759, %v11755
    %v11988 = vpack.c.b16 %v11760, %v11756
    %v11989 = vpack.c.b16 %v11761, %v11757
    %v11990 = vpack.c.b16 %v11762, %v11758
    %v11991 = vpack.c.b16 %v11767, %v11763
    %v11992 = vpack.c.b16 %v11768, %v11764
    %v11993 = vpack.c.b16 %v11769, %v11765
    %v11994 = vpack.c.b16 %v11770, %v11766
    %v11995 = vpack.c.b16 %v11775, %v11771
    %v11996 = vpack.c.b16 %v11776, %v11772
    %v11997 = vpack.c.b16 %v11777, %v11773
    %v11998 = vpack.c.b16 %v11778, %v11774
    %v11999 = vpack.c.b16 %v11783, %v11779
    %v12000 = vpack.c.b16 %v11784, %v11780
    %v12001 = vpack.c.b16 %v11785, %v11781
    %v12002 = vpack.c.b16 %v11786, %v11782
    %v12003 = vpack.c.b16 %v11791, %v11787
    %v12004 = vpack.c.b16 %v11792, %v11788
    %v12005 = vpack.c.b16 %v11793, %v11789
    %v12006 = vpack.c.b16 %v11794, %v11790
    %v12007 = vpack.c.b16 %v11799, %v11795
    %v12008 = vpack.c.b16 %v11800, %v11796
    %v12009 = vpack.c.b16 %v11801, %v11797
    %v12010 = vpack.c.b16 %v11802, %v11798
    %v12011 = vpack.c.b16 %v11807, %v11803
    %v12012 = vpack.c.b16 %v11808, %v11804
    %v12013 = vpack.c.b16 %v11809, %v11805
    %v12014 = vpack.c.b16 %v11810, %v11806
    %v12015 = vpack.c.b16 %v11815, %v11811
    %v12016 = vpack.c.b16 %v11816, %v11812
    %v12017 = vpack.c.b16 %v11817, %v11813
    %v12018 = vpack.c.b16 %v11818, %v11814
    %v12019 = vpack.c.b16 %v11823, %v11819
    %v12020 = vpack.c.b16 %v11824, %v11820
    %v12021 = vpack.c.b16 %v11825, %v11821
    %v12022 = vpack.c.b16 %v11826, %v11822
    %v12023 = vpack.c.b16 %v11831, %v11827
    %v12024 = vpack.c.b16 %v11832, %v11828
    %v12025 = vpack.c.b16 %v11833, %v11829
    %v12026 = vpack.c.b16 %v11834, %v11830
    %v12027 = vpack.c.b16 %v11839, %v11835
    %v12028 = vpack.c.b16 %v11840, %v11836
    %v12029 = vpack.c.b16 %v11841, %v11837
    %v12030 = vpack.c.b16 %v11842, %v11838
    %v12031 = vpack.c.b16 %v11847, %v11843
    %v12032 = vpack.c.b16 %v11848, %v11844
    %v12033 = vpack.c.b16 %v11849, %v11845
    %v12034 = vpack.c.b16 %v11850, %v11846
    %v12035 = vpack.c.b16 %v11855, %v11851
    %v12036 = vpack.c.b16 %v11856, %v11852
    %v12037 = vpack.c.b16 %v11857, %v11853
    %v12038 = vpack.c.b16 %v11858, %v11854
    %v12039 = vpack.c.b16 %v11863, %v11859
    %v12040 = vpack.c.b16 %v11864, %v11860
    %v12041 = vpack.c.b16 %v11865, %v11861
    %v12042 = vpack.c.b16 %v11866, %v11862
    %v12043 = vpack.c.b16 %v11871, %v11867
    %v12044 = vpack.c.b16 %v11872, %v11868
    %v12045 = vpack.c.b16 %v11873, %v11869
    %v12046 = vpack.c.b16 %v11874, %v11870
    %v12047 = vpack.c.b16 %v11879, %v11875
    %v12048 = vpack.c.b16 %v11880, %v11876
    %v12049 = vpack.c.b16 %v11881, %v11877
    %v12050 = vpack.c.b16 %v11882, %v11878
    %v12051 = vpack.c.b16 %v11887, %v11883
    %v12052 = vpack.c.b16 %v11888, %v11884
    %v12053 = vpack.c.b16 %v11889, %v11885
    %v12054 = vpack.c.b16 %v11890, %v11886
    %v12055 = vpack.c.b16 %v11895, %v11891
    %v12056 = vpack.c.b16 %v11896, %v11892
    %v12057 = vpack.c.b16 %v11897, %v11893
    %v12058 = vpack.c.b16 %v11898, %v11894
    %v12059 = vpack.c.b16 %v11903, %v11899
    %v12060 = vpack.c.b16 %v11904, %v11900
    %v12061 = vpack.c.b16 %v11905, %v11901
    %v12062 = vpack.c.b16 %v11906, %v11902
    %v12063 = vpack.c.b16 %v11911, %v11907
    %v12064 = vpack.c.b16 %v11912, %v11908
    %v12065 = vpack.c.b16 %v11913, %v11909
    %v12066 = vpack.c.b16 %v11914, %v11910
    %v12067 = vpack.c.b16 %v11919, %v11915
    %v12068 = vpack.c.b16 %v11920, %v11916
    %v12069 = vpack.c.b16 %v11921, %v11917
    %v12070 = vpack.c.b16 %v11922, %v11918
    %v12071 = vpack.c.b16 %v11927, %v11923
    %v12072 = vpack.c.b16 %v11928, %v11924
    %v12073 = vpack.c.b16 %v11929, %v11925
    %v12074 = vpack.c.b16 %v11930, %v11926
    %v12075 = vpack.c.b16 %v11935, %v11931
    %v12076 = vpack.c.b16 %v11936, %v11932
    %v12077 = vpack.c.b16 %v11937, %v11933
    %v12078 = vpack.c.b16 %v11938, %v11934
    %v12079 = vpack.c.b16 %v11943, %v11939
    %v12080 = vpack.c.b16 %v11944, %v11940
    %v12081 = vpack.c.b16 %v11945, %v11941
    %v12082 = vpack.c.b16 %v11946, %v11942
    %v12083 = vpack.c.b16 %v11951, %v11947
    %v12084 = vpack.c.b16 %v11952, %v11948
    %v12085 = vpack.c.b16 %v11953, %v11949
    %v12086 = vpack.c.b16 %v11954, %v11950
    %v12087 = vpack.c.b16 %v11959, %v11955
    %v12088 = vpack.c.b16 %v11960, %v11956
    %v12089 = vpack.c.b16 %v11961, %v11957
    %v12090 = vpack.c.b16 %v11962, %v11958
    %12219 = vmatprep.subr.bf16.mxu0 %v11964
    %12220 = vmatpush1.bf16.msra.mxu0 %v11963
    %12221 = vmatprep.subr.bf16.mxu0 %v11968
    %12222 = vmatpush1.bf16.msra.mxu0 %v11967
    %12223 = vmatprep.subr.bf16.mxu0 %v11972
    %12224 = vmatpush1.bf16.msra.mxu0 %v11971
    %12225 = vmatprep.subr.bf16.mxu0 %v11976
    %12226 = vmatpush1.bf16.msra.mxu0 %v11975
    %12227 = vmatprep.subr.bf16.mxu0 %v11980
    %12228 = vmatpush1.bf16.msra.mxu0 %v11979
    %12229 = vmatprep.subr.bf16.mxu0 %v11984
    %12230 = vmatpush1.bf16.msra.mxu0 %v11983
    %12231 = vmatprep.subr.bf16.mxu0 %v11988
    %12232 = vmatpush1.bf16.msra.mxu0 %v11987
    %12233 = vmatprep.subr.bf16.mxu0 %v11992
    %12234 = vmatpush1.bf16.msra.mxu0 %v11991
    %12235 = vmatprep.subr.bf16.mxu0 %v11996
    %12236 = vmatpush1.bf16.msra.mxu0 %v11995
    %12237 = vmatprep.subr.bf16.mxu0 %v12000
    %12238 = vmatpush1.bf16.msra.mxu0 %v11999
    %12239 = vmatprep.subr.bf16.mxu0 %v12004
    %12240 = vmatpush1.bf16.msra.mxu0 %v12003
    %12241 = vmatprep.subr.bf16.mxu0 %v12008
    %12242 = vmatpush1.bf16.msra.mxu0 %v12007
    %12243 = vmatprep.subr.bf16.mxu0 %v12012
    %12244 = vmatpush1.bf16.msra.mxu0 %v12011
    %12245 = vmatprep.subr.bf16.mxu0 %v12016
    %12246 = vmatpush1.bf16.msra.mxu0 %v12015
    %12247 = vmatprep.subr.bf16.mxu0 %v12020
    %12248 = vmatpush1.bf16.msra.mxu0 %v12019
    %12249 = vmatprep.subr.bf16.mxu0 %v12024
    %12250 = vmatpush1.bf16.msra.mxu0 %v12023
    %12251 = vmatprep.mubr.bf16.mxu0 %v11572
    %12252 = vmatmul.mubr.bf16.gmra.mrb[0].mxu0 %v11571
    %v12253 = vpop.f32.mrb[0].mxu0
    %v12254 = vadd.f32 %v11530, %v12253
    %v12255 = vpop.f32.mrb[0].mxu0
    %v12256 = vadd.f32 %v11534, %v12255
    %v12257 = vpop.f32.mrb[0].mxu0
    %v12258 = vpop.f32.mrb[0].mxu0
    %12259 = vdwg.mxu0
    %12260 = vmatprep.subr.bf16.mxu0 %v12028
    %12261 = vmatpush1.bf16.msra.mxu0 %v12027
    %12262 = vmatprep.subr.bf16.mxu0 %v12032
    %12263 = vmatpush1.bf16.msra.mxu0 %v12031
    %12264 = vmatprep.subr.bf16.mxu0 %v12036
    %12265 = vmatpush1.bf16.msra.mxu0 %v12035
    %12266 = vmatprep.subr.bf16.mxu0 %v12040
    %12267 = vmatpush1.bf16.msra.mxu0 %v12039
    %12268 = vmatprep.subr.bf16.mxu0 %v12044
    %12269 = vmatpush1.bf16.msra.mxu0 %v12043
    %12270 = vmatprep.subr.bf16.mxu0 %v12048
    %12271 = vmatpush1.bf16.msra.mxu0 %v12047
    %12272 = vmatprep.subr.bf16.mxu0 %v12052
    %12273 = vmatpush1.bf16.msra.mxu0 %v12051
    %12274 = vmatprep.subr.bf16.mxu0 %v12056
    %12275 = vmatpush1.bf16.msra.mxu0 %v12055
    %12276 = vmatprep.subr.bf16.mxu0 %v12060
    %12277 = vmatpush1.bf16.msra.mxu0 %v12059
    %12278 = vmatprep.subr.bf16.mxu0 %v12064
    %12279 = vmatpush1.bf16.msra.mxu0 %v12063
    %12280 = vmatprep.subr.bf16.mxu0 %v12068
    %12281 = vmatpush1.bf16.msra.mxu0 %v12067
    %12282 = vmatprep.subr.bf16.mxu0 %v12072
    %12283 = vmatpush1.bf16.msra.mxu0 %v12071
    %12284 = vmatprep.subr.bf16.mxu0 %v12076
    %12285 = vmatpush1.bf16.msra.mxu0 %v12075
    %12286 = vmatprep.subr.bf16.mxu0 %v12080
    %12287 = vmatpush1.bf16.msra.mxu0 %v12079
    %12288 = vmatprep.subr.bf16.mxu0 %v12084
    %12289 = vmatpush1.bf16.msra.mxu0 %v12083
    %12290 = vmatprep.subr.bf16.mxu0 %v12088
    %12291 = vmatpush1.bf16.msra.mxu0 %v12087
    %12292 = vmatprep.mubr.bf16.mxu0 %v11574
    %12293 = vmatmul.mubr.bf16.gmra.mrb[0].mxu0 %v11573
    %v12294 = vpop.f32.mrb[0].mxu0
    %v12295 = vadd.f32 %v12254, %v12294
    %v12296 = vpop.f32.mrb[0].mxu0
    %v12297 = vadd.f32 %v12256, %v12296
    %v12298 = vpop.f32.mrb[0].mxu0
    %v12299 = vpop.f32.mrb[0].mxu0
    %12300 = vdwg.mxu0
    %12301 = vmatprep.subr.bf16.mxu0 %v11966
    %12302 = vmatpush1.bf16.msra.mxu0 %v11965
    %12303 = vmatprep.subr.bf16.mxu0 %v11970
    %12304 = vmatpush1.bf16.msra.mxu0 %v11969
    %12305 = vmatprep.subr.bf16.mxu0 %v11974
    %12306 = vmatpush1.bf16.msra.mxu0 %v11973
    %12307 = vmatprep.subr.bf16.mxu0 %v11978
    %12308 = vmatpush1.bf16.msra.mxu0 %v11977
    %12309 = vmatprep.subr.bf16.mxu0 %v11982
    %12310 = vmatpush1.bf16.msra.mxu0 %v11981
    %12311 = vmatprep.subr.bf16.mxu0 %v11986
    %12312 = vmatpush1.bf16.msra.mxu0 %v11985
    %12313 = vmatprep.subr.bf16.mxu0 %v11990
    %12314 = vmatpush1.bf16.msra.mxu0 %v11989
    %12315 = vmatprep.subr.bf16.mxu0 %v11994
    %12316 = vmatpush1.bf16.msra.mxu0 %v11993
    %12317 = vmatprep.subr.bf16.mxu0 %v11998
    %12318 = vmatpush1.bf16.msra.mxu0 %v11997
    %12319 = vmatprep.subr.bf16.mxu0 %v12002
    %12320 = vmatpush1.bf16.msra.mxu0 %v12001
    %12321 = vmatprep.subr.bf16.mxu0 %v12006
    %12322 = vmatpush1.bf16.msra.mxu0 %v12005
    %12323 = vmatprep.subr.bf16.mxu0 %v12010
    %12324 = vmatpush1.bf16.msra.mxu0 %v12009
    %12325 = vmatprep.subr.bf16.mxu0 %v12014
    %12326 = vmatpush1.bf16.msra.mxu0 %v12013
    %12327 = vmatprep.subr.bf16.mxu0 %v12018
    %12328 = vmatpush1.bf16.msra.mxu0 %v12017
    %12329 = vmatprep.subr.bf16.mxu0 %v12022
    %12330 = vmatpush1.bf16.msra.mxu0 %v12021
    %12331 = vmatprep.subr.bf16.mxu0 %v12026
    %12332 = vmatpush1.bf16.msra.mxu0 %v12025
    %12333 = vmatprep.mubr.bf16.mxu0 %v11572
    %12334 = vmatmul.mubr.bf16.gmra.mrb[0].mxu0 %v11571
    %v12335 = vpop.f32.mrb[0].mxu0
    %v12336 = vadd.f32 %v11538, %v12335
    %v12337 = vpop.f32.mrb[0].mxu0
    %v12338 = vadd.f32 %v11542, %v12337
    %v12339 = vpop.f32.mrb[0].mxu0
    %v12340 = vpop.f32.mrb[0].mxu0
    %12341 = vdwg.mxu0
    %12342 = vmatprep.subr.bf16.mxu0 %v12030
    %12343 = vmatpush1.bf16.msra.mxu0 %v12029
    %12344 = vmatprep.subr.bf16.mxu0 %v12034
    %12345 = vmatpush1.bf16.msra.mxu0 %v12033
    %12346 = vmatprep.subr.bf16.mxu0 %v12038
    %12347 = vmatpush1.bf16.msra.mxu0 %v12037
    %12348 = vmatprep.subr.bf16.mxu0 %v12042
    %12349 = vmatpush1.bf16.msra.mxu0 %v12041
    %12350 = vmatprep.subr.bf16.mxu0 %v12046
    %12351 = vmatpush1.bf16.msra.mxu0 %v12045
    %12352 = vmatprep.subr.bf16.mxu0 %v12050
    %12353 = vmatpush1.bf16.msra.mxu0 %v12049
    %12354 = vmatprep.subr.bf16.mxu0 %v12054
    %12355 = vmatpush1.bf16.msra.mxu0 %v12053
    %12356 = vmatprep.subr.bf16.mxu0 %v12058
    %12357 = vmatpush1.bf16.msra.mxu0 %v12057
    %12358 = vmatprep.subr.bf16.mxu0 %v12062
    %12359 = vmatpush1.bf16.msra.mxu0 %v12061
    %12360 = vmatprep.subr.bf16.mxu0 %v12066
    %12361 = vmatpush1.bf16.msra.mxu0 %v12065
    %12362 = vmatprep.subr.bf16.mxu0 %v12070
    %12363 = vmatpush1.bf16.msra.mxu0 %v12069
    %12364 = vmatprep.subr.bf16.mxu0 %v12074
    %12365 = vmatpush1.bf16.msra.mxu0 %v12073
    %12366 = vmatprep.subr.bf16.mxu0 %v12078
    %12367 = vmatpush1.bf16.msra.mxu0 %v12077
    %12368 = vmatprep.subr.bf16.mxu0 %v12082
    %12369 = vmatpush1.bf16.msra.mxu0 %v12081
    %12370 = vmatprep.subr.bf16.mxu0 %v12086
    %12371 = vmatpush1.bf16.msra.mxu0 %v12085
    %12372 = vmatprep.subr.bf16.mxu0 %v12090
    %12373 = vmatpush1.bf16.msra.mxu0 %v12089
    %12374 = vmatprep.mubr.bf16.mxu0 %v11574
    %12375 = vmatmul.mubr.bf16.gmra.mrb[0].mxu0 %v11573
    %v12376 = vpop.f32.mrb[0].mxu0
    %v12377 = vadd.f32 %v12336, %v12376
    %v12378 = vpop.f32.mrb[0].mxu0
    %v12379 = vadd.f32 %v12338, %v12378
    %v12380 = vpop.f32.mrb[0].mxu0
    %v12381 = vpop.f32.mrb[0].mxu0
    %12382 = vdwg.mxu0
    %v12383 = vmax.f32 %v12295, 0.0
    %v12384 = vmax.f32 %v12297, 0.0
    %v12385 = vmax.f32 %v12377, 0.0
    %v12386 = vmax.f32 %v12379, 0.0
    %v12387 = vpack.c.bf16 %v12383, %v12383
    %v12388 = vpack.c.bf16 %v12384, %v12384
    %v12389 = vpack.c.bf16 %v12385, %v12385
    %v12390 = vpack.c.bf16 %v12386, %v12386
    %v12391 = vld [vmem:[#allocation10] sm:$0xff]
    %v12392 = vld [vmem:[#allocation10 + $0x8] sm:$0xff]
    %v12393 = vld [vmem:[#allocation10 + $0x10] sm:$0xff]
    %v12394 = vld [vmem:[#allocation10 + $0x18] sm:$0xff]
    %v12395 = vld [vmem:[#allocation10 + $0x20] sm:$0xff]
    %v12396 = vld [vmem:[#allocation10 + $0x28] sm:$0xff]
    %v12397 = vld [vmem:[#allocation10 + $0x30] sm:$0xff]
    %v12398 = vld [vmem:[#allocation10 + $0x38] sm:$0xff]
    %v12399 = vld [vmem:[#allocation10 + $0x40] sm:$0xff]
    %v12400 = vld [vmem:[#allocation10 + $0x48] sm:$0xff]
    %v12401 = vld [vmem:[#allocation10 + $0x50] sm:$0xff]
    %v12402 = vld [vmem:[#allocation10 + $0x58] sm:$0xff]
    %v12403 = vld [vmem:[#allocation10 + $0x60] sm:$0xff]
    %v12404 = vld [vmem:[#allocation10 + $0x68] sm:$0xff]
    %v12405 = vld [vmem:[#allocation10 + $0x70] sm:$0xff]
    %v12406 = vld [vmem:[#allocation10 + $0x78] sm:$0xff]
    %v12407 = vld [vmem:[#allocation10 + $0x80] sm:$0xff]
    %v12408 = vld [vmem:[#allocation10 + $0x88] sm:$0xff]
    %v12409 = vld [vmem:[#allocation10 + $0x90] sm:$0xff]
    %v12410 = vld [vmem:[#allocation10 + $0x98] sm:$0xff]
    %v12411 = vld [vmem:[#allocation10 + $0xa0] sm:$0xff]
    %v12412 = vld [vmem:[#allocation10 + $0xa8] sm:$0xff]
    %v12413 = vld [vmem:[#allocation10 + $0xb0] sm:$0xff]
    %v12414 = vld [vmem:[#allocation10 + $0xb8] sm:$0xff]
    %v12415 = vld [vmem:[#allocation10 + $0xc0] sm:$0xff]
    %v12416 = vld [vmem:[#allocation10 + $0xc8] sm:$0xff]
    %v12417 = vld [vmem:[#allocation10 + $0xd0] sm:$0xff]
    %v12418 = vld [vmem:[#allocation10 + $0xd8] sm:$0xff]
    %v12419 = vld [vmem:[#allocation10 + $0xe0] sm:$0xff]
    %v12420 = vld [vmem:[#allocation10 + $0xe8] sm:$0xff]
    %v12421 = vld [vmem:[#allocation10 + $0xf0] sm:$0xff]
    %v12422 = vld [vmem:[#allocation10 + $0xf8] sm:$0xff]
    %v12423 = vld [vmem:[#allocation10 + $0x100] sm:$0xff]
    %v12424 = vld [vmem:[#allocation10 + $0x108] sm:$0xff]
    %v12425 = vld [vmem:[#allocation10 + $0x110] sm:$0xff]
    %v12426 = vld [vmem:[#allocation10 + $0x118] sm:$0xff]
    %v12427 = vld [vmem:[#allocation10 + $0x120] sm:$0xff]
    %v12428 = vld [vmem:[#allocation10 + $0x128] sm:$0xff]
    %v12429 = vld [vmem:[#allocation10 + $0x130] sm:$0xff]
    %v12430 = vld [vmem:[#allocation10 + $0x138] sm:$0xff]
    %v12431 = vld [vmem:[#allocation10 + $0x140] sm:$0xff]
    %v12432 = vld [vmem:[#allocation10 + $0x148] sm:$0xff]
    %v12433 = vld [vmem:[#allocation10 + $0x150] sm:$0xff]
    %v12434 = vld [vmem:[#allocation10 + $0x158] sm:$0xff]
    %v12435 = vld [vmem:[#allocation10 + $0x160] sm:$0xff]
    %v12436 = vld [vmem:[#allocation10 + $0x168] sm:$0xff]
    %v12437 = vld [vmem:[#allocation10 + $0x170] sm:$0xff]
    %v12438 = vld [vmem:[#allocation10 + $0x178] sm:$0xff]
    %v12439 = vld [vmem:[#allocation10 + $0x180] sm:$0xff]
    %v12440 = vld [vmem:[#allocation10 + $0x188] sm:$0xff]
    %v12441 = vld [vmem:[#allocation10 + $0x190] sm:$0xff]
    %v12442 = vld [vmem:[#allocation10 + $0x198] sm:$0xff]
    %v12443 = vld [vmem:[#allocation10 + $0x1a0] sm:$0xff]
    %v12444 = vld [vmem:[#allocation10 + $0x1a8] sm:$0xff]
    %v12445 = vld [vmem:[#allocation10 + $0x1b0] sm:$0xff]
    %v12446 = vld [vmem:[#allocation10 + $0x1b8] sm:$0xff]
    %v12447 = vld [vmem:[#allocation10 + $0x1c0] sm:$0xff]
    %v12448 = vld [vmem:[#allocation10 + $0x1c8] sm:$0xff]
    %v12449 = vld [vmem:[#allocation10 + $0x1d0] sm:$0xff]
    %v12450 = vld [vmem:[#allocation10 + $0x1d8] sm:$0xff]
    %v12451 = vld [vmem:[#allocation10 + $0x1e0] sm:$0xff]
    %v12452 = vld [vmem:[#allocation10 + $0x1e8] sm:$0xff]
    %v12453 = vld [vmem:[#allocation10 + $0x1f0] sm:$0xff]
    %v12454 = vld [vmem:[#allocation10 + $0x1f8] sm:$0xff]
    %v12455 = vld [vmem:[#allocation10 + $0x200] sm:$0xff]
    %v12456 = vld [vmem:[#allocation10 + $0x208] sm:$0xff]
    %v12457 = vld [vmem:[#allocation10 + $0x210] sm:$0xff]
    %v12458 = vld [vmem:[#allocation10 + $0x218] sm:$0xff]
    %v12459 = vld [vmem:[#allocation10 + $0x220] sm:$0xff]
    %v12460 = vld [vmem:[#allocation10 + $0x228] sm:$0xff]
    %v12461 = vld [vmem:[#allocation10 + $0x230] sm:$0xff]
    %v12462 = vld [vmem:[#allocation10 + $0x238] sm:$0xff]
    %v12463 = vld [vmem:[#allocation10 + $0x240] sm:$0xff]
    %v12464 = vld [vmem:[#allocation10 + $0x248] sm:$0xff]
    %v12465 = vld [vmem:[#allocation10 + $0x250] sm:$0xff]
    %v12466 = vld [vmem:[#allocation10 + $0x258] sm:$0xff]
    %v12467 = vld [vmem:[#allocation10 + $0x260] sm:$0xff]
    %v12468 = vld [vmem:[#allocation10 + $0x268] sm:$0xff]
    %v12469 = vld [vmem:[#allocation10 + $0x270] sm:$0xff]
    %v12470 = vld [vmem:[#allocation10 + $0x278] sm:$0xff]
    %v12471 = vld [vmem:[#allocation10 + $0x280] sm:$0xff]
    %v12472 = vld [vmem:[#allocation10 + $0x288] sm:$0xff]
    %v12473 = vld [vmem:[#allocation10 + $0x290] sm:$0xff]
    %v12474 = vld [vmem:[#allocation10 + $0x298] sm:$0xff]
    %v12475 = vld [vmem:[#allocation10 + $0x2a0] sm:$0xff]
    %v12476 = vld [vmem:[#allocation10 + $0x2a8] sm:$0xff]
    %v12477 = vld [vmem:[#allocation10 + $0x2b0] sm:$0xff]
    %v12478 = vld [vmem:[#allocation10 + $0x2b8] sm:$0xff]
    %v12479 = vld [vmem:[#allocation10 + $0x2c0] sm:$0xff]
    %v12480 = vld [vmem:[#allocation10 + $0x2c8] sm:$0xff]
    %v12481 = vld [vmem:[#allocation10 + $0x2d0] sm:$0xff]
    %v12482 = vld [vmem:[#allocation10 + $0x2d8] sm:$0xff]
    %v12483 = vld [vmem:[#allocation10 + $0x2e0] sm:$0xff]
    %v12484 = vld [vmem:[#allocation10 + $0x2e8] sm:$0xff]
    %v12485 = vld [vmem:[#allocation10 + $0x2f0] sm:$0xff]
    %v12486 = vld [vmem:[#allocation10 + $0x2f8] sm:$0xff]
    %v12487 = vld [vmem:[#allocation10 + $0x300] sm:$0xff]
    %v12488 = vld [vmem:[#allocation10 + $0x308] sm:$0xff]
    %v12489 = vld [vmem:[#allocation10 + $0x310] sm:$0xff]
    %v12490 = vld [vmem:[#allocation10 + $0x318] sm:$0xff]
    %v12491 = vld [vmem:[#allocation10 + $0x320] sm:$0xff]
    %v12492 = vld [vmem:[#allocation10 + $0x328] sm:$0xff]
    %v12493 = vld [vmem:[#allocation10 + $0x330] sm:$0xff]
    %v12494 = vld [vmem:[#allocation10 + $0x338] sm:$0xff]
    %v12495 = vld [vmem:[#allocation10 + $0x340] sm:$0xff]
    %v12496 = vld [vmem:[#allocation10 + $0x348] sm:$0xff]
    %v12497 = vld [vmem:[#allocation10 + $0x350] sm:$0xff]
    %v12498 = vld [vmem:[#allocation10 + $0x358] sm:$0xff]
    %v12499 = vld [vmem:[#allocation10 + $0x360] sm:$0xff]
    %v12500 = vld [vmem:[#allocation10 + $0x368] sm:$0xff]
    %v12501 = vld [vmem:[#allocation10 + $0x370] sm:$0xff]
    %v12502 = vld [vmem:[#allocation10 + $0x378] sm:$0xff]
    %v12503 = vld [vmem:[#allocation10 + $0x380] sm:$0xff]
    %v12504 = vld [vmem:[#allocation10 + $0x388] sm:$0xff]
    %v12505 = vld [vmem:[#allocation10 + $0x390] sm:$0xff]
    %v12506 = vld [vmem:[#allocation10 + $0x398] sm:$0xff]
    %v12507 = vld [vmem:[#allocation10 + $0x3a0] sm:$0xff]
    %v12508 = vld [vmem:[#allocation10 + $0x3a8] sm:$0xff]
    %v12509 = vld [vmem:[#allocation10 + $0x3b0] sm:$0xff]
    %v12510 = vld [vmem:[#allocation10 + $0x3b8] sm:$0xff]
    %v12511 = vld [vmem:[#allocation10 + $0x3c0] sm:$0xff]
    %v12512 = vld [vmem:[#allocation10 + $0x3c8] sm:$0xff]
    %v12513 = vld [vmem:[#allocation10 + $0x3d0] sm:$0xff]
    %v12514 = vld [vmem:[#allocation10 + $0x3d8] sm:$0xff]
    %v12515 = vld [vmem:[#allocation10 + $0x3e0] sm:$0xff]
    %v12516 = vld [vmem:[#allocation10 + $0x3e8] sm:$0xff]
    %v12517 = vld [vmem:[#allocation10 + $0x3f0] sm:$0xff]
    %v12518 = vld [vmem:[#allocation10 + $0x3f8] sm:$0xff]
    %v12519 = vld [vmem:[%s12] sm:$0xf]
    %v12521 = vlaneseq
    %v12522 = vshrl.u32 %v12521, 7
    %v12523 = vsub.s32 0, %v12522
    %v12524 = vrot.slane %v12519, %v12523
    %v12525 = vlaneseq
    %v12526 = vshrl.u32 %v12525, 7
    %v12527 = vsub.s32 1, %v12526
    %v12528 = vrot.slane %v12519, %v12527
    %v12529 = vlaneseq
    %v12530 = vshrl.u32 %v12529, 7
    %v12531 = vsub.s32 2, %v12530
    %v12532 = vrot.slane %v12519, %v12531
    %v12533 = vlaneseq
    %v12534 = vshrl.u32 %v12533, 7
    %v12535 = vsub.s32 3, %v12534
    %v12536 = vrot.slane %v12519, %v12535
    %v12669 = vunpack.c.l.b16 %v12391
    %v12670 = vunpack.c.h.b16 %v12391
    %v12671 = vunpack.c.l.b16 %v12392
    %v12672 = vunpack.c.h.b16 %v12392
    %v12673 = vunpack.c.l.b16 %v12393
    %v12674 = vunpack.c.h.b16 %v12393
    %v12675 = vunpack.c.l.b16 %v12394
    %v12676 = vunpack.c.h.b16 %v12394
    %v12677 = vunpack.c.l.b16 %v12395
    %v12678 = vunpack.c.h.b16 %v12395
    %v12679 = vunpack.c.l.b16 %v12396
    %v12680 = vunpack.c.h.b16 %v12396
    %v12681 = vunpack.c.l.b16 %v12397
    %v12682 = vunpack.c.h.b16 %v12397
    %v12683 = vunpack.c.l.b16 %v12398
    %v12684 = vunpack.c.h.b16 %v12398
    %v12685 = vunpack.c.l.b16 %v12399
    %v12686 = vunpack.c.h.b16 %v12399
    %v12687 = vunpack.c.l.b16 %v12400
    %v12688 = vunpack.c.h.b16 %v12400
    %v12689 = vunpack.c.l.b16 %v12401
    %v12690 = vunpack.c.h.b16 %v12401
    %v12691 = vunpack.c.l.b16 %v12402
    %v12692 = vunpack.c.h.b16 %v12402
    %v12693 = vunpack.c.l.b16 %v12403
    %v12694 = vunpack.c.h.b16 %v12403
    %v12695 = vunpack.c.l.b16 %v12404
    %v12696 = vunpack.c.h.b16 %v12404
    %v12697 = vunpack.c.l.b16 %v12405
    %v12698 = vunpack.c.h.b16 %v12405
    %v12699 = vunpack.c.l.b16 %v12406
    %v12700 = vunpack.c.h.b16 %v12406
    %v12701 = vunpack.c.l.b16 %v12407
    %v12702 = vunpack.c.h.b16 %v12407
    %v12703 = vunpack.c.l.b16 %v12408
    %v12704 = vunpack.c.h.b16 %v12408
    %v12705 = vunpack.c.l.b16 %v12409
    %v12706 = vunpack.c.h.b16 %v12409
    %v12707 = vunpack.c.l.b16 %v12410
    %v12708 = vunpack.c.h.b16 %v12410
    %v12709 = vunpack.c.l.b16 %v12411
    %v12710 = vunpack.c.h.b16 %v12411
    %v12711 = vunpack.c.l.b16 %v12412
    %v12712 = vunpack.c.h.b16 %v12412
    %v12713 = vunpack.c.l.b16 %v12413
    %v12714 = vunpack.c.h.b16 %v12413
    %v12715 = vunpack.c.l.b16 %v12414
    %v12716 = vunpack.c.h.b16 %v12414
    %v12717 = vunpack.c.l.b16 %v12415
    %v12718 = vunpack.c.h.b16 %v12415
    %v12719 = vunpack.c.l.b16 %v12416
    %v12720 = vunpack.c.h.b16 %v12416
    %v12721 = vunpack.c.l.b16 %v12417
    %v12722 = vunpack.c.h.b16 %v12417
    %v12723 = vunpack.c.l.b16 %v12418
    %v12724 = vunpack.c.h.b16 %v12418
    %v12725 = vunpack.c.l.b16 %v12419
    %v12726 = vunpack.c.h.b16 %v12419
    %v12727 = vunpack.c.l.b16 %v12420
    %v12728 = vunpack.c.h.b16 %v12420
    %v12729 = vunpack.c.l.b16 %v12421
    %v12730 = vunpack.c.h.b16 %v12421
    %v12731 = vunpack.c.l.b16 %v12422
    %v12732 = vunpack.c.h.b16 %v12422
    %v12733 = vunpack.c.l.b16 %v12423
    %v12734 = vunpack.c.h.b16 %v12423
    %v12735 = vunpack.c.l.b16 %v12424
    %v12736 = vunpack.c.h.b16 %v12424
    %v12737 = vunpack.c.l.b16 %v12425
    %v12738 = vunpack.c.h.b16 %v12425
    %v12739 = vunpack.c.l.b16 %v12426
    %v12740 = vunpack.c.h.b16 %v12426
    %v12741 = vunpack.c.l.b16 %v12427
    %v12742 = vunpack.c.h.b16 %v12427
    %v12743 = vunpack.c.l.b16 %v12428
    %v12744 = vunpack.c.h.b16 %v12428
    %v12745 = vunpack.c.l.b16 %v12429
    %v12746 = vunpack.c.h.b16 %v12429
    %v12747 = vunpack.c.l.b16 %v12430
    %v12748 = vunpack.c.h.b16 %v12430
    %v12749 = vunpack.c.l.b16 %v12431
    %v12750 = vunpack.c.h.b16 %v12431
    %v12751 = vunpack.c.l.b16 %v12432
    %v12752 = vunpack.c.h.b16 %v12432
    %v12753 = vunpack.c.l.b16 %v12433
    %v12754 = vunpack.c.h.b16 %v12433
    %v12755 = vunpack.c.l.b16 %v12434
    %v12756 = vunpack.c.h.b16 %v12434
    %v12757 = vunpack.c.l.b16 %v12435
    %v12758 = vunpack.c.h.b16 %v12435
    %v12759 = vunpack.c.l.b16 %v12436
    %v12760 = vunpack.c.h.b16 %v12436
    %v12761 = vunpack.c.l.b16 %v12437
    %v12762 = vunpack.c.h.b16 %v12437
    %v12763 = vunpack.c.l.b16 %v12438
    %v12764 = vunpack.c.h.b16 %v12438
    %v12765 = vunpack.c.l.b16 %v12439
    %v12766 = vunpack.c.h.b16 %v12439
    %v12767 = vunpack.c.l.b16 %v12440
    %v12768 = vunpack.c.h.b16 %v12440
    %v12769 = vunpack.c.l.b16 %v12441
    %v12770 = vunpack.c.h.b16 %v12441
    %v12771 = vunpack.c.l.b16 %v12442
    %v12772 = vunpack.c.h.b16 %v12442
    %v12773 = vunpack.c.l.b16 %v12443
    %v12774 = vunpack.c.h.b16 %v12443
    %v12775 = vunpack.c.l.b16 %v12444
    %v12776 = vunpack.c.h.b16 %v12444
    %v12777 = vunpack.c.l.b16 %v12445
    %v12778 = vunpack.c.h.b16 %v12445
    %v12779 = vunpack.c.l.b16 %v12446
    %v12780 = vunpack.c.h.b16 %v12446
    %v12781 = vunpack.c.l.b16 %v12447
    %v12782 = vunpack.c.h.b16 %v12447
    %v12783 = vunpack.c.l.b16 %v12448
    %v12784 = vunpack.c.h.b16 %v12448
    %v12785 = vunpack.c.l.b16 %v12449
    %v12786 = vunpack.c.h.b16 %v12449
    %v12787 = vunpack.c.l.b16 %v12450
    %v12788 = vunpack.c.h.b16 %v12450
    %v12789 = vunpack.c.l.b16 %v12451
    %v12790 = vunpack.c.h.b16 %v12451
    %v12791 = vunpack.c.l.b16 %v12452
    %v12792 = vunpack.c.h.b16 %v12452
    %v12793 = vunpack.c.l.b16 %v12453
    %v12794 = vunpack.c.h.b16 %v12453
    %v12795 = vunpack.c.l.b16 %v12454
    %v12796 = vunpack.c.h.b16 %v12454
    %v12797 = vunpack.c.l.b16 %v12455
    %v12798 = vunpack.c.h.b16 %v12455
    %v12799 = vunpack.c.l.b16 %v12456
    %v12800 = vunpack.c.h.b16 %v12456
    %v12801 = vunpack.c.l.b16 %v12457
    %v12802 = vunpack.c.h.b16 %v12457
    %v12803 = vunpack.c.l.b16 %v12458
    %v12804 = vunpack.c.h.b16 %v12458
    %v12805 = vunpack.c.l.b16 %v12459
    %v12806 = vunpack.c.h.b16 %v12459
    %v12807 = vunpack.c.l.b16 %v12460
    %v12808 = vunpack.c.h.b16 %v12460
    %v12809 = vunpack.c.l.b16 %v12461
    %v12810 = vunpack.c.h.b16 %v12461
    %v12811 = vunpack.c.l.b16 %v12462
    %v12812 = vunpack.c.h.b16 %v12462
    %v12813 = vunpack.c.l.b16 %v12463
    %v12814 = vunpack.c.h.b16 %v12463
    %v12815 = vunpack.c.l.b16 %v12464
    %v12816 = vunpack.c.h.b16 %v12464
    %v12817 = vunpack.c.l.b16 %v12465
    %v12818 = vunpack.c.h.b16 %v12465
    %v12819 = vunpack.c.l.b16 %v12466
    %v12820 = vunpack.c.h.b16 %v12466
    %v12821 = vunpack.c.l.b16 %v12467
    %v12822 = vunpack.c.h.b16 %v12467
    %v12823 = vunpack.c.l.b16 %v12468
    %v12824 = vunpack.c.h.b16 %v12468
    %v12825 = vunpack.c.l.b16 %v12469
    %v12826 = vunpack.c.h.b16 %v12469
    %v12827 = vunpack.c.l.b16 %v12470
    %v12828 = vunpack.c.h.b16 %v12470
    %v12829 = vunpack.c.l.b16 %v12471
    %v12830 = vunpack.c.h.b16 %v12471
    %v12831 = vunpack.c.l.b16 %v12472
    %v12832 = vunpack.c.h.b16 %v12472
    %v12833 = vunpack.c.l.b16 %v12473
    %v12834 = vunpack.c.h.b16 %v12473
    %v12835 = vunpack.c.l.b16 %v12474
    %v12836 = vunpack.c.h.b16 %v12474
    %v12837 = vunpack.c.l.b16 %v12475
    %v12838 = vunpack.c.h.b16 %v12475
    %v12839 = vunpack.c.l.b16 %v12476
    %v12840 = vunpack.c.h.b16 %v12476
    %v12841 = vunpack.c.l.b16 %v12477
    %v12842 = vunpack.c.h.b16 %v12477
    %v12843 = vunpack.c.l.b16 %v12478
    %v12844 = vunpack.c.h.b16 %v12478
    %v12845 = vunpack.c.l.b16 %v12479
    %v12846 = vunpack.c.h.b16 %v12479
    %v12847 = vunpack.c.l.b16 %v12480
    %v12848 = vunpack.c.h.b16 %v12480
    %v12849 = vunpack.c.l.b16 %v12481
    %v12850 = vunpack.c.h.b16 %v12481
    %v12851 = vunpack.c.l.b16 %v12482
    %v12852 = vunpack.c.h.b16 %v12482
    %v12853 = vunpack.c.l.b16 %v12483
    %v12854 = vunpack.c.h.b16 %v12483
    %v12855 = vunpack.c.l.b16 %v12484
    %v12856 = vunpack.c.h.b16 %v12484
    %v12857 = vunpack.c.l.b16 %v12485
    %v12858 = vunpack.c.h.b16 %v12485
    %v12859 = vunpack.c.l.b16 %v12486
    %v12860 = vunpack.c.h.b16 %v12486
    %v12861 = vunpack.c.l.b16 %v12487
    %v12862 = vunpack.c.h.b16 %v12487
    %v12863 = vunpack.c.l.b16 %v12488
    %v12864 = vunpack.c.h.b16 %v12488
    %v12865 = vunpack.c.l.b16 %v12489
    %v12866 = vunpack.c.h.b16 %v12489
    %v12867 = vunpack.c.l.b16 %v12490
    %v12868 = vunpack.c.h.b16 %v12490
    %v12869 = vunpack.c.l.b16 %v12491
    %v12870 = vunpack.c.h.b16 %v12491
    %v12871 = vunpack.c.l.b16 %v12492
    %v12872 = vunpack.c.h.b16 %v12492
    %v12873 = vunpack.c.l.b16 %v12493
    %v12874 = vunpack.c.h.b16 %v12493
    %v12875 = vunpack.c.l.b16 %v12494
    %v12876 = vunpack.c.h.b16 %v12494
    %v12877 = vunpack.c.l.b16 %v12495
    %v12878 = vunpack.c.h.b16 %v12495
    %v12879 = vunpack.c.l.b16 %v12496
    %v12880 = vunpack.c.h.b16 %v12496
    %v12881 = vunpack.c.l.b16 %v12497
    %v12882 = vunpack.c.h.b16 %v12497
    %v12883 = vunpack.c.l.b16 %v12498
    %v12884 = vunpack.c.h.b16 %v12498
    %v12885 = vunpack.c.l.b16 %v12499
    %v12886 = vunpack.c.h.b16 %v12499
    %v12887 = vunpack.c.l.b16 %v12500
    %v12888 = vunpack.c.h.b16 %v12500
    %v12889 = vunpack.c.l.b16 %v12501
    %v12890 = vunpack.c.h.b16 %v12501
    %v12891 = vunpack.c.l.b16 %v12502
    %v12892 = vunpack.c.h.b16 %v12502
    %v12893 = vunpack.c.l.b16 %v12503
    %v12894 = vunpack.c.h.b16 %v12503
    %v12895 = vunpack.c.l.b16 %v12504
    %v12896 = vunpack.c.h.b16 %v12504
    %v12897 = vunpack.c.l.b16 %v12505
    %v12898 = vunpack.c.h.b16 %v12505
    %v12899 = vunpack.c.l.b16 %v12506
    %v12900 = vunpack.c.h.b16 %v12506
    %v12901 = vunpack.c.l.b16 %v12507
    %v12902 = vunpack.c.h.b16 %v12507
    %v12903 = vunpack.c.l.b16 %v12508
    %v12904 = vunpack.c.h.b16 %v12508
    %v12905 = vunpack.c.l.b16 %v12509
    %v12906 = vunpack.c.h.b16 %v12509
    %v12907 = vunpack.c.l.b16 %v12510
    %v12908 = vunpack.c.h.b16 %v12510
    %v12909 = vunpack.c.l.b16 %v12511
    %v12910 = vunpack.c.h.b16 %v12511
    %v12911 = vunpack.c.l.b16 %v12512
    %v12912 = vunpack.c.h.b16 %v12512
    %v12913 = vunpack.c.l.b16 %v12513
    %v12914 = vunpack.c.h.b16 %v12513
    %v12915 = vunpack.c.l.b16 %v12514
    %v12916 = vunpack.c.h.b16 %v12514
    %v12917 = vunpack.c.l.b16 %v12515
    %v12918 = vunpack.c.h.b16 %v12515
    %v12919 = vunpack.c.l.b16 %v12516
    %v12920 = vunpack.c.h.b16 %v12516
    %v12921 = vunpack.c.l.b16 %v12517
    %v12922 = vunpack.c.h.b16 %v12517
    %v12923 = vunpack.c.l.b16 %v12518
    %v12924 = vunpack.c.h.b16 %v12518
    %v12925 = vpack.c.b16 %v12673, %v12669
    %v12926 = vpack.c.b16 %v12674, %v12670
    %v12927 = vpack.c.b16 %v12675, %v12671
    %v12928 = vpack.c.b16 %v12676, %v12672
    %v12929 = vpack.c.b16 %v12681, %v12677
    %v12930 = vpack.c.b16 %v12682, %v12678
    %v12931 = vpack.c.b16 %v12683, %v12679
    %v12932 = vpack.c.b16 %v12684, %v12680
    %v12933 = vpack.c.b16 %v12689, %v12685
    %v12934 = vpack.c.b16 %v12690, %v12686
    %v12935 = vpack.c.b16 %v12691, %v12687
    %v12936 = vpack.c.b16 %v12692, %v12688
    %v12937 = vpack.c.b16 %v12697, %v12693
    %v12938 = vpack.c.b16 %v12698, %v12694
    %v12939 = vpack.c.b16 %v12699, %v12695
    %v12940 = vpack.c.b16 %v12700, %v12696
    %v12941 = vpack.c.b16 %v12705, %v12701
    %v12942 = vpack.c.b16 %v12706, %v12702
    %v12943 = vpack.c.b16 %v12707, %v12703
    %v12944 = vpack.c.b16 %v12708, %v12704
    %v12945 = vpack.c.b16 %v12713, %v12709
    %v12946 = vpack.c.b16 %v12714, %v12710
    %v12947 = vpack.c.b16 %v12715, %v12711
    %v12948 = vpack.c.b16 %v12716, %v12712
    %v12949 = vpack.c.b16 %v12721, %v12717
    %v12950 = vpack.c.b16 %v12722, %v12718
    %v12951 = vpack.c.b16 %v12723, %v12719
    %v12952 = vpack.c.b16 %v12724, %v12720
    %v12953 = vpack.c.b16 %v12729, %v12725
    %v12954 = vpack.c.b16 %v12730, %v12726
    %v12955 = vpack.c.b16 %v12731, %v12727
    %v12956 = vpack.c.b16 %v12732, %v12728
    %v12957 = vpack.c.b16 %v12737, %v12733
    %v12958 = vpack.c.b16 %v12738, %v12734
    %v12959 = vpack.c.b16 %v12739, %v12735
    %v12960 = vpack.c.b16 %v12740, %v12736
    %v12961 = vpack.c.b16 %v12745, %v12741
    %v12962 = vpack.c.b16 %v12746, %v12742
    %v12963 = vpack.c.b16 %v12747, %v12743
    %v12964 = vpack.c.b16 %v12748, %v12744
    %v12965 = vpack.c.b16 %v12753, %v12749
    %v12966 = vpack.c.b16 %v12754, %v12750
    %v12967 = vpack.c.b16 %v12755, %v12751
    %v12968 = vpack.c.b16 %v12756, %v12752
    %v12969 = vpack.c.b16 %v12761, %v12757
    %v12970 = vpack.c.b16 %v12762, %v12758
    %v12971 = vpack.c.b16 %v12763, %v12759
    %v12972 = vpack.c.b16 %v12764, %v12760
    %v12973 = vpack.c.b16 %v12769, %v12765
    %v12974 = vpack.c.b16 %v12770, %v12766
    %v12975 = vpack.c.b16 %v12771, %v12767
    %v12976 = vpack.c.b16 %v12772, %v12768
    %v12977 = vpack.c.b16 %v12777, %v12773
    %v12978 = vpack.c.b16 %v12778, %v12774
    %v12979 = vpack.c.b16 %v12779, %v12775
    %v12980 = vpack.c.b16 %v12780, %v12776
    %v12981 = vpack.c.b16 %v12785, %v12781
    %v12982 = vpack.c.b16 %v12786, %v12782
    %v12983 = vpack.c.b16 %v12787, %v12783
    %v12984 = vpack.c.b16 %v12788, %v12784
    %v12985 = vpack.c.b16 %v12793, %v12789
    %v12986 = vpack.c.b16 %v12794, %v12790
    %v12987 = vpack.c.b16 %v12795, %v12791
    %v12988 = vpack.c.b16 %v12796, %v12792
    %v12989 = vpack.c.b16 %v12801, %v12797
    %v12990 = vpack.c.b16 %v12802, %v12798
    %v12991 = vpack.c.b16 %v12803, %v12799
    %v12992 = vpack.c.b16 %v12804, %v12800
    %v12993 = vpack.c.b16 %v12809, %v12805
    %v12994 = vpack.c.b16 %v12810, %v12806
    %v12995 = vpack.c.b16 %v12811, %v12807
    %v12996 = vpack.c.b16 %v12812, %v12808
    %v12997 = vpack.c.b16 %v12817, %v12813
    %v12998 = vpack.c.b16 %v12818, %v12814
    %v12999 = vpack.c.b16 %v12819, %v12815
    %v13000 = vpack.c.b16 %v12820, %v12816
    %v13001 = vpack.c.b16 %v12825, %v12821
    %v13002 = vpack.c.b16 %v12826, %v12822
    %v13003 = vpack.c.b16 %v12827, %v12823
    %v13004 = vpack.c.b16 %v12828, %v12824
    %v13005 = vpack.c.b16 %v12833, %v12829
    %v13006 = vpack.c.b16 %v12834, %v12830
    %v13007 = vpack.c.b16 %v12835, %v12831
    %v13008 = vpack.c.b16 %v12836, %v12832
    %v13009 = vpack.c.b16 %v12841, %v12837
    %v13010 = vpack.c.b16 %v12842, %v12838
    %v13011 = vpack.c.b16 %v12843, %v12839
    %v13012 = vpack.c.b16 %v12844, %v12840
    %v13013 = vpack.c.b16 %v12849, %v12845
    %v13014 = vpack.c.b16 %v12850, %v12846
    %v13015 = vpack.c.b16 %v12851, %v12847
    %v13016 = vpack.c.b16 %v12852, %v12848
    %v13017 = vpack.c.b16 %v12857, %v12853
    %v13018 = vpack.c.b16 %v12858, %v12854
    %v13019 = vpack.c.b16 %v12859, %v12855
    %v13020 = vpack.c.b16 %v12860, %v12856
    %v13021 = vpack.c.b16 %v12865, %v12861
    %v13022 = vpack.c.b16 %v12866, %v12862
    %v13023 = vpack.c.b16 %v12867, %v12863
    %v13024 = vpack.c.b16 %v12868, %v12864
    %v13025 = vpack.c.b16 %v12873, %v12869
    %v13026 = vpack.c.b16 %v12874, %v12870
    %v13027 = vpack.c.b16 %v12875, %v12871
    %v13028 = vpack.c.b16 %v12876, %v12872
    %v13029 = vpack.c.b16 %v12881, %v12877
    %v13030 = vpack.c.b16 %v12882, %v12878
    %v13031 = vpack.c.b16 %v12883, %v12879
    %v13032 = vpack.c.b16 %v12884, %v12880
    %v13033 = vpack.c.b16 %v12889, %v12885
    %v13034 = vpack.c.b16 %v12890, %v12886
    %v13035 = vpack.c.b16 %v12891, %v12887
    %v13036 = vpack.c.b16 %v12892, %v12888
    %v13037 = vpack.c.b16 %v12897, %v12893
    %v13038 = vpack.c.b16 %v12898, %v12894
    %v13039 = vpack.c.b16 %v12899, %v12895
    %v13040 = vpack.c.b16 %v12900, %v12896
    %v13041 = vpack.c.b16 %v12905, %v12901
    %v13042 = vpack.c.b16 %v12906, %v12902
    %v13043 = vpack.c.b16 %v12907, %v12903
    %v13044 = vpack.c.b16 %v12908, %v12904
    %v13045 = vpack.c.b16 %v12913, %v12909
    %v13046 = vpack.c.b16 %v12914, %v12910
    %v13047 = vpack.c.b16 %v12915, %v12911
    %v13048 = vpack.c.b16 %v12916, %v12912
    %v13049 = vpack.c.b16 %v12921, %v12917
    %v13050 = vpack.c.b16 %v12922, %v12918
    %v13051 = vpack.c.b16 %v12923, %v12919
    %v13052 = vpack.c.b16 %v12924, %v12920
    %13181 = vmatprep.subr.bf16.mxu0 %v12926
    %13182 = vmatpush1.bf16.msra.mxu0 %v12925
    %13183 = vmatprep.subr.bf16.mxu0 %v12930
    %13184 = vmatpush1.bf16.msra.mxu0 %v12929
    %13185 = vmatprep.subr.bf16.mxu0 %v12934
    %13186 = vmatpush1.bf16.msra.mxu0 %v12933
    %13187 = vmatprep.subr.bf16.mxu0 %v12938
    %13188 = vmatpush1.bf16.msra.mxu0 %v12937
    %13189 = vmatprep.subr.bf16.mxu0 %v12942
    %13190 = vmatpush1.bf16.msra.mxu0 %v12941
    %13191 = vmatprep.subr.bf16.mxu0 %v12946
    %13192 = vmatpush1.bf16.msra.mxu0 %v12945
    %13193 = vmatprep.subr.bf16.mxu0 %v12950
    %13194 = vmatpush1.bf16.msra.mxu0 %v12949
    %13195 = vmatprep.subr.bf16.mxu0 %v12954
    %13196 = vmatpush1.bf16.msra.mxu0 %v12953
    %13197 = vmatprep.subr.bf16.mxu0 %v12958
    %13198 = vmatpush1.bf16.msra.mxu0 %v12957
    %13199 = vmatprep.subr.bf16.mxu0 %v12962
    %13200 = vmatpush1.bf16.msra.mxu0 %v12961
    %13201 = vmatprep.subr.bf16.mxu0 %v12966
    %13202 = vmatpush1.bf16.msra.mxu0 %v12965
    %13203 = vmatprep.subr.bf16.mxu0 %v12970
    %13204 = vmatpush1.bf16.msra.mxu0 %v12969
    %13205 = vmatprep.subr.bf16.mxu0 %v12974
    %13206 = vmatpush1.bf16.msra.mxu0 %v12973
    %13207 = vmatprep.subr.bf16.mxu0 %v12978
    %13208 = vmatpush1.bf16.msra.mxu0 %v12977
    %13209 = vmatprep.subr.bf16.mxu0 %v12982
    %13210 = vmatpush1.bf16.msra.mxu0 %v12981
    %13211 = vmatprep.subr.bf16.mxu0 %v12986
    %13212 = vmatpush1.bf16.msra.mxu0 %v12985
    %13213 = vmatprep.mubr.bf16.mxu0 %v12388
    %13214 = vmatmul.mubr.bf16.gmra.mrb[0].mxu0 %v12387
    %v13215 = vpop.f32.mrb[0].mxu0
    %v13216 = vadd.f32 %v12524, %v13215
    %v13217 = vpop.f32.mrb[0].mxu0
    %v13218 = vadd.f32 %v12528, %v13217
    %v13219 = vpop.f32.mrb[0].mxu0
    %v13220 = vpop.f32.mrb[0].mxu0
    %13221 = vdwg.mxu0
    %13222 = vmatprep.subr.bf16.mxu0 %v12990
    %13223 = vmatpush1.bf16.msra.mxu0 %v12989
    %13224 = vmatprep.subr.bf16.mxu0 %v12994
    %13225 = vmatpush1.bf16.msra.mxu0 %v12993
    %13226 = vmatprep.subr.bf16.mxu0 %v12998
    %13227 = vmatpush1.bf16.msra.mxu0 %v12997
    %13228 = vmatprep.subr.bf16.mxu0 %v13002
    %13229 = vmatpush1.bf16.msra.mxu0 %v13001
    %13230 = vmatprep.subr.bf16.mxu0 %v13006
    %13231 = vmatpush1.bf16.msra.mxu0 %v13005
    %13232 = vmatprep.subr.bf16.mxu0 %v13010
    %13233 = vmatpush1.bf16.msra.mxu0 %v13009
    %13234 = vmatprep.subr.bf16.mxu0 %v13014
    %13235 = vmatpush1.bf16.msra.mxu0 %v13013
    %13236 = vmatprep.subr.bf16.mxu0 %v13018
    %13237 = vmatpush1.bf16.msra.mxu0 %v13017
    %13238 = vmatprep.subr.bf16.mxu0 %v13022
    %13239 = vmatpush1.bf16.msra.mxu0 %v13021
    %13240 = vmatprep.subr.bf16.mxu0 %v13026
    %13241 = vmatpush1.bf16.msra.mxu0 %v13025
    %13242 = vmatprep.subr.bf16.mxu0 %v13030
    %13243 = vmatpush1.bf16.msra.mxu0 %v13029
    %13244 = vmatprep.subr.bf16.mxu0 %v13034
    %13245 = vmatpush1.bf16.msra.mxu0 %v13033
    %13246 = vmatprep.subr.bf16.mxu0 %v13038
    %13247 = vmatpush1.bf16.msra.mxu0 %v13037
    %13248 = vmatprep.subr.bf16.mxu0 %v13042
    %13249 = vmatpush1.bf16.msra.mxu0 %v13041
    %13250 = vmatprep.subr.bf16.mxu0 %v13046
    %13251 = vmatpush1.bf16.msra.mxu0 %v13045
    %13252 = vmatprep.subr.bf16.mxu0 %v13050
    %13253 = vmatpush1.bf16.msra.mxu0 %v13049
    %13254 = vmatprep.mubr.bf16.mxu0 %v12390
    %13255 = vmatmul.mubr.bf16.gmra.mrb[0].mxu0 %v12389
    %v13256 = vpop.f32.mrb[0].mxu0
    %v13257 = vadd.f32 %v13216, %v13256
    %v13258 = vpop.f32.mrb[0].mxu0
    %v13259 = vadd.f32 %v13218, %v13258
    %v13260 = vpop.f32.mrb[0].mxu0
    %v13261 = vpop.f32.mrb[0].mxu0
    %13262 = vdwg.mxu0
    %13263 = vmatprep.subr.bf16.mxu0 %v12928
    %13264 = vmatpush1.bf16.msra.mxu0 %v12927
    %13265 = vmatprep.subr.bf16.mxu0 %v12932
    %13266 = vmatpush1.bf16.msra.mxu0 %v12931
    %13267 = vmatprep.subr.bf16.mxu0 %v12936
    %13268 = vmatpush1.bf16.msra.mxu0 %v12935
    %13269 = vmatprep.subr.bf16.mxu0 %v12940
    %13270 = vmatpush1.bf16.msra.mxu0 %v12939
    %13271 = vmatprep.subr.bf16.mxu0 %v12944
    %13272 = vmatpush1.bf16.msra.mxu0 %v12943
    %13273 = vmatprep.subr.bf16.mxu0 %v12948
    %13274 = vmatpush1.bf16.msra.mxu0 %v12947
    %13275 = vmatprep.subr.bf16.mxu0 %v12952
    %13276 = vmatpush1.bf16.msra.mxu0 %v12951
    %13277 = vmatprep.subr.bf16.mxu0 %v12956
    %13278 = vmatpush1.bf16.msra.mxu0 %v12955
    %13279 = vmatprep.subr.bf16.mxu0 %v12960
    %13280 = vmatpush1.bf16.msra.mxu0 %v12959
    %13281 = vmatprep.subr.bf16.mxu0 %v12964
    %13282 = vmatpush1.bf16.msra.mxu0 %v12963
    %13283 = vmatprep.subr.bf16.mxu0 %v12968
    %13284 = vmatpush1.bf16.msra.mxu0 %v12967
    %13285 = vmatprep.subr.bf16.mxu0 %v12972
    %13286 = vmatpush1.bf16.msra.mxu0 %v12971
    %13287 = vmatprep.subr.bf16.mxu0 %v12976
    %13288 = vmatpush1.bf16.msra.mxu0 %v12975
    %13289 = vmatprep.subr.bf16.mxu0 %v12980
    %13290 = vmatpush1.bf16.msra.mxu0 %v12979
    %13291 = vmatprep.subr.bf16.mxu0 %v12984
    %13292 = vmatpush1.bf16.msra.mxu0 %v12983
    %13293 = vmatprep.subr.bf16.mxu0 %v12988
    %13294 = vmatpush1.bf16.msra.mxu0 %v12987
    %13295 = vmatprep.mubr.bf16.mxu0 %v12388
    %13296 = vmatmul.mubr.bf16.gmra.mrb[0].mxu0 %v12387
    %v13297 = vpop.f32.mrb[0].mxu0
    %v13298 = vadd.f32 %v12532, %v13297
    %v13299 = vpop.f32.mrb[0].mxu0
    %v13300 = vadd.f32 %v12536, %v13299
    %v13301 = vpop.f32.mrb[0].mxu0
    %v13302 = vpop.f32.mrb[0].mxu0
    %13303 = vdwg.mxu0
    %13304 = vmatprep.subr.bf16.mxu0 %v12992
    %13305 = vmatpush1.bf16.msra.mxu0 %v12991
    %13306 = vmatprep.subr.bf16.mxu0 %v12996
    %13307 = vmatpush1.bf16.msra.mxu0 %v12995
    %13308 = vmatprep.subr.bf16.mxu0 %v13000
    %13309 = vmatpush1.bf16.msra.mxu0 %v12999
    %13310 = vmatprep.subr.bf16.mxu0 %v13004
    %13311 = vmatpush1.bf16.msra.mxu0 %v13003
    %13312 = vmatprep.subr.bf16.mxu0 %v13008
    %13313 = vmatpush1.bf16.msra.mxu0 %v13007
    %13314 = vmatprep.subr.bf16.mxu0 %v13012
    %13315 = vmatpush1.bf16.msra.mxu0 %v13011
    %13316 = vmatprep.subr.bf16.mxu0 %v13016
    %13317 = vmatpush1.bf16.msra.mxu0 %v13015
    %13318 = vmatprep.subr.bf16.mxu0 %v13020
    %13319 = vmatpush1.bf16.msra.mxu0 %v13019
    %13320 = vmatprep.subr.bf16.mxu0 %v13024
    %13321 = vmatpush1.bf16.msra.mxu0 %v13023
    %13322 = vmatprep.subr.bf16.mxu0 %v13028
    %13323 = vmatpush1.bf16.msra.mxu0 %v13027
    %13324 = vmatprep.subr.bf16.mxu0 %v13032
    %13325 = vmatpush1.bf16.msra.mxu0 %v13031
    %13326 = vmatprep.subr.bf16.mxu0 %v13036
    %13327 = vmatpush1.bf16.msra.mxu0 %v13035
    %13328 = vmatprep.subr.bf16.mxu0 %v13040
    %13329 = vmatpush1.bf16.msra.mxu0 %v13039
    %13330 = vmatprep.subr.bf16.mxu0 %v13044
    %13331 = vmatpush1.bf16.msra.mxu0 %v13043
    %13332 = vmatprep.subr.bf16.mxu0 %v13048
    %13333 = vmatpush1.bf16.msra.mxu0 %v13047
    %13334 = vmatprep.subr.bf16.mxu0 %v13052
    %13335 = vmatpush1.bf16.msra.mxu0 %v13051
    %13336 = vmatprep.mubr.bf16.mxu0 %v12390
    %13337 = vmatmul.mubr.bf16.gmra.mrb[0].mxu0 %v12389
    %v13338 = vpop.f32.mrb[0].mxu0
    %v13339 = vadd.f32 %v13298, %v13338
    %v13340 = vpop.f32.mrb[0].mxu0
    %v13341 = vadd.f32 %v13300, %v13340
    %v13342 = vpop.f32.mrb[0].mxu0
    %v13343 = vpop.f32.mrb[0].mxu0
    %13344 = vdwg.mxu0
    %v13345 = vmax.f32 %v13257, 0.0
    %v13346 = vmax.f32 %v13259, 0.0
    %v13347 = vmax.f32 %v13339, 0.0
    %v13348 = vmax.f32 %v13341, 0.0
    %v13349 = vpack.c.bf16 %v13345, %v13345
    %v13350 = vpack.c.bf16 %v13346, %v13346
    %v13351 = vpack.c.bf16 %v13347, %v13347
    %v13352 = vpack.c.bf16 %v13348, %v13348
    %v13353 = vld [vmem:[%s13] sm:$0xf]
    %v13354 = vld [vmem:[%s13 + $0x4] sm:$0xf]
    %v13355 = vld [vmem:[%s13 + $0x8] sm:$0xf]
    %v13356 = vld [vmem:[%s13 + $0xc] sm:$0xf]
    %v13357 = vld [vmem:[%s13 + $0x10] sm:$0xf]
    %v13358 = vld [vmem:[%s13 + $0x14] sm:$0xf]
    %v13359 = vld [vmem:[%s13 + $0x18] sm:$0xf]
    %v13360 = vld [vmem:[%s13 + $0x1c] sm:$0xf]
    %v13361 = vld [vmem:[%s13 + $0x20] sm:$0xf]
    %v13362 = vld [vmem:[%s13 + $0x24] sm:$0xf]
    %v13363 = vld [vmem:[%s13 + $0x28] sm:$0xf]
    %v13364 = vld [vmem:[%s13 + $0x2c] sm:$0xf]
    %v13365 = vld [vmem:[%s13 + $0x30] sm:$0xf]
    %v13366 = vld [vmem:[%s13 + $0x34] sm:$0xf]
    %v13367 = vld [vmem:[%s13 + $0x38] sm:$0xf]
    %v13368 = vld [vmem:[%s13 + $0x3c] sm:$0xf]
    %v13369 = vld [vmem:[%s13 + $0x40] sm:$0xf]
    %v13370 = vld [vmem:[%s13 + $0x44] sm:$0xf]
    %v13371 = vld [vmem:[%s13 + $0x48] sm:$0xf]
    %v13372 = vld [vmem:[%s13 + $0x4c] sm:$0xf]
    %v13373 = vld [vmem:[%s13 + $0x50] sm:$0xf]
    %v13374 = vld [vmem:[%s13 + $0x54] sm:$0xf]
    %v13375 = vld [vmem:[%s13 + $0x58] sm:$0xf]
    %v13376 = vld [vmem:[%s13 + $0x5c] sm:$0xf]
    %v13377 = vld [vmem:[%s13 + $0x60] sm:$0xf]
    %v13378 = vld [vmem:[%s13 + $0x64] sm:$0xf]
    %v13379 = vld [vmem:[%s13 + $0x68] sm:$0xf]
    %v13380 = vld [vmem:[%s13 + $0x6c] sm:$0xf]
    %v13381 = vld [vmem:[%s13 + $0x70] sm:$0xf]
    %v13382 = vld [vmem:[%s13 + $0x74] sm:$0xf]
    %v13383 = vld [vmem:[%s13 + $0x78] sm:$0xf]
    %v13384 = vld [vmem:[%s13 + $0x7c] sm:$0xf]
    %v13385 = vld [vmem:[%s13 + $0x80] sm:$0xf]
    %v13386 = vld [vmem:[%s13 + $0x84] sm:$0xf]
    %v13387 = vld [vmem:[%s13 + $0x88] sm:$0xf]
    %v13388 = vld [vmem:[%s13 + $0x8c] sm:$0xf]
    %v13389 = vld [vmem:[%s13 + $0x90] sm:$0xf]
    %v13390 = vld [vmem:[%s13 + $0x94] sm:$0xf]
    %v13391 = vld [vmem:[%s13 + $0x98] sm:$0xf]
    %v13392 = vld [vmem:[%s13 + $0x9c] sm:$0xf]
    %v13393 = vld [vmem:[%s13 + $0xa0] sm:$0xf]
    %v13394 = vld [vmem:[%s13 + $0xa4] sm:$0xf]
    %v13395 = vld [vmem:[%s13 + $0xa8] sm:$0xf]
    %v13396 = vld [vmem:[%s13 + $0xac] sm:$0xf]
    %v13397 = vld [vmem:[%s13 + $0xb0] sm:$0xf]
    %v13398 = vld [vmem:[%s13 + $0xb4] sm:$0xf]
    %v13399 = vld [vmem:[%s13 + $0xb8] sm:$0xf]
    %v13400 = vld [vmem:[%s13 + $0xbc] sm:$0xf]
    %v13401 = vld [vmem:[%s13 + $0xc0] sm:$0xf]
    %v13402 = vld [vmem:[%s13 + $0xc4] sm:$0xf]
    %v13403 = vld [vmem:[%s13 + $0xc8] sm:$0xf]
    %v13404 = vld [vmem:[%s13 + $0xcc] sm:$0xf]
    %v13405 = vld [vmem:[%s13 + $0xd0] sm:$0xf]
    %v13406 = vld [vmem:[%s13 + $0xd4] sm:$0xf]
    %v13407 = vld [vmem:[%s13 + $0xd8] sm:$0xf]
    %v13408 = vld [vmem:[%s13 + $0xdc] sm:$0xf]
    %v13409 = vld [vmem:[%s13 + $0xe0] sm:$0xf]
    %v13410 = vld [vmem:[%s13 + $0xe4] sm:$0xf]
    %v13411 = vld [vmem:[%s13 + $0xe8] sm:$0xf]
    %v13412 = vld [vmem:[%s13 + $0xec] sm:$0xf]
    %v13413 = vld [vmem:[%s13 + $0xf0] sm:$0xf]
    %v13414 = vld [vmem:[%s13 + $0xf4] sm:$0xf]
    %v13415 = vld [vmem:[%s13 + $0xf8] sm:$0xf]
    %v13416 = vld [vmem:[%s13 + $0xfc] sm:$0xf]
    %v13417 = vld [vmem:[%s14] sm:$0x1]
    %v13419 = vlaneseq
    %v13420 = vshrl.u32 %v13419, 7
    %v13421 = vsub.s32 0, %v13420
    %v13422 = vrot.slane %v13417, %v13421
    %v13488 = vunpack.c.l.b16 %v13353
    %v13489 = vunpack.c.l.b16 %v13354
    %v13490 = vunpack.c.l.b16 %v13355
    %v13491 = vunpack.c.l.b16 %v13356
    %v13492 = vunpack.c.l.b16 %v13357
    %v13493 = vunpack.c.l.b16 %v13358
    %v13494 = vunpack.c.l.b16 %v13359
    %v13495 = vunpack.c.l.b16 %v13360
    %v13496 = vunpack.c.l.b16 %v13361
    %v13497 = vunpack.c.l.b16 %v13362
    %v13498 = vunpack.c.l.b16 %v13363
    %v13499 = vunpack.c.l.b16 %v13364
    %v13500 = vunpack.c.l.b16 %v13365
    %v13501 = vunpack.c.l.b16 %v13366
    %v13502 = vunpack.c.l.b16 %v13367
    %v13503 = vunpack.c.l.b16 %v13368
    %v13504 = vunpack.c.l.b16 %v13369
    %v13505 = vunpack.c.l.b16 %v13370
    %v13506 = vunpack.c.l.b16 %v13371
    %v13507 = vunpack.c.l.b16 %v13372
    %v13508 = vunpack.c.l.b16 %v13373
    %v13509 = vunpack.c.l.b16 %v13374
    %v13510 = vunpack.c.l.b16 %v13375
    %v13511 = vunpack.c.l.b16 %v13376
    %v13512 = vunpack.c.l.b16 %v13377
    %v13513 = vunpack.c.l.b16 %v13378
    %v13514 = vunpack.c.l.b16 %v13379
    %v13515 = vunpack.c.l.b16 %v13380
    %v13516 = vunpack.c.l.b16 %v13381
    %v13517 = vunpack.c.l.b16 %v13382
    %v13518 = vunpack.c.l.b16 %v13383
    %v13519 = vunpack.c.l.b16 %v13384
    %v13520 = vunpack.c.l.b16 %v13385
    %v13521 = vunpack.c.l.b16 %v13386
    %v13522 = vunpack.c.l.b16 %v13387
    %v13523 = vunpack.c.l.b16 %v13388
    %v13524 = vunpack.c.l.b16 %v13389
    %v13525 = vunpack.c.l.b16 %v13390
    %v13526 = vunpack.c.l.b16 %v13391
    %v13527 = vunpack.c.l.b16 %v13392
    %v13528 = vunpack.c.l.b16 %v13393
    %v13529 = vunpack.c.l.b16 %v13394
    %v13530 = vunpack.c.l.b16 %v13395
    %v13531 = vunpack.c.l.b16 %v13396
    %v13532 = vunpack.c.l.b16 %v13397
    %v13533 = vunpack.c.l.b16 %v13398
    %v13534 = vunpack.c.l.b16 %v13399
    %v13535 = vunpack.c.l.b16 %v13400
    %v13536 = vunpack.c.l.b16 %v13401
    %v13537 = vunpack.c.l.b16 %v13402
    %v13538 = vunpack.c.l.b16 %v13403
    %v13539 = vunpack.c.l.b16 %v13404
    %v13540 = vunpack.c.l.b16 %v13405
    %v13541 = vunpack.c.l.b16 %v13406
    %v13542 = vunpack.c.l.b16 %v13407
    %v13543 = vunpack.c.l.b16 %v13408
    %v13544 = vunpack.c.l.b16 %v13409
    %v13545 = vunpack.c.l.b16 %v13410
    %v13546 = vunpack.c.l.b16 %v13411
    %v13547 = vunpack.c.l.b16 %v13412
    %v13548 = vunpack.c.l.b16 %v13413
    %v13549 = vunpack.c.l.b16 %v13414
    %v13550 = vunpack.c.l.b16 %v13415
    %v13551 = vunpack.c.l.b16 %v13416
    %v13552 = vpack.c.b16 %v13489, %v13488
    %v13553 = vpack.c.b16 %v13491, %v13490
    %v13554 = vpack.c.b16 %v13493, %v13492
    %v13555 = vpack.c.b16 %v13495, %v13494
    %v13556 = vpack.c.b16 %v13497, %v13496
    %v13557 = vpack.c.b16 %v13499, %v13498
    %v13558 = vpack.c.b16 %v13501, %v13500
    %v13559 = vpack.c.b16 %v13503, %v13502
    %v13560 = vpack.c.b16 %v13505, %v13504
    %v13561 = vpack.c.b16 %v13507, %v13506
    %v13562 = vpack.c.b16 %v13509, %v13508
    %v13563 = vpack.c.b16 %v13511, %v13510
    %v13564 = vpack.c.b16 %v13513, %v13512
    %v13565 = vpack.c.b16 %v13515, %v13514
    %v13566 = vpack.c.b16 %v13517, %v13516
    %v13567 = vpack.c.b16 %v13519, %v13518
    %v13568 = vpack.c.b16 %v13521, %v13520
    %v13569 = vpack.c.b16 %v13523, %v13522
    %v13570 = vpack.c.b16 %v13525, %v13524
    %v13571 = vpack.c.b16 %v13527, %v13526
    %v13572 = vpack.c.b16 %v13529, %v13528
    %v13573 = vpack.c.b16 %v13531, %v13530
    %v13574 = vpack.c.b16 %v13533, %v13532
    %v13575 = vpack.c.b16 %v13535, %v13534
    %v13576 = vpack.c.b16 %v13537, %v13536
    %v13577 = vpack.c.b16 %v13539, %v13538
    %v13578 = vpack.c.b16 %v13541, %v13540
    %v13579 = vpack.c.b16 %v13543, %v13542
    %v13580 = vpack.c.b16 %v13545, %v13544
    %v13581 = vpack.c.b16 %v13547, %v13546
    %v13582 = vpack.c.b16 %v13549, %v13548
    %v13583 = vpack.c.b16 %v13551, %v13550
    %13616 = vmatprep.subr.bf16.mxu0 0
    %13617 = vmatpush1.bf16.msra.mxu0 %v13552
    %13618 = vmatprep.subr.bf16.mxu0 0
    %13619 = vmatpush1.bf16.msra.mxu0 %v13553
    %13620 = vmatprep.subr.bf16.mxu0 0
    %13621 = vmatpush1.bf16.msra.mxu0 %v13554
    %13622 = vmatprep.subr.bf16.mxu0 0
    %13623 = vmatpush1.bf16.msra.mxu0 %v13555
    %13624 = vmatprep.subr.bf16.mxu0 0
    %13625 = vmatpush1.bf16.msra.mxu0 %v13556
    %13626 = vmatprep.subr.bf16.mxu0 0
    %13627 = vmatpush1.bf16.msra.mxu0 %v13557
    %13628 = vmatprep.subr.bf16.mxu0 0
    %13629 = vmatpush1.bf16.msra.mxu0 %v13558
    %13630 = vmatprep.subr.bf16.mxu0 0
    %13631 = vmatpush1.bf16.msra.mxu0 %v13559
    %13632 = vmatprep.subr.bf16.mxu0 0
    %13633 = vmatpush1.bf16.msra.mxu0 %v13560
    %13634 = vmatprep.subr.bf16.mxu0 0
    %13635 = vmatpush1.bf16.msra.mxu0 %v13561
    %13636 = vmatprep.subr.bf16.mxu0 0
    %13637 = vmatpush1.bf16.msra.mxu0 %v13562
    %13638 = vmatprep.subr.bf16.mxu0 0
    %13639 = vmatpush1.bf16.msra.mxu0 %v13563
    %13640 = vmatprep.subr.bf16.mxu0 0
    %13641 = vmatpush1.bf16.msra.mxu0 %v13564
    %13642 = vmatprep.subr.bf16.mxu0 0
    %13643 = vmatpush1.bf16.msra.mxu0 %v13565
    %13644 = vmatprep.subr.bf16.mxu0 0
    %13645 = vmatpush1.bf16.msra.mxu0 %v13566
    %13646 = vmatprep.subr.bf16.mxu0 0
    %13647 = vmatpush1.bf16.msra.mxu0 %v13567
    %13648 = vmatprep.mubr.bf16.mxu0 %v13350
    %13649 = vmatmul.mubr.bf16.gmra.mrb[0].mxu0 %v13349
    %v13650 = vpop.f32.mrb[0].mxu0
    %v13651 = vadd.f32 %v13422, %v13650
    %v13652 = vpop.f32.mrb[0].mxu0
    %v13653 = vpop.f32.mrb[0].mxu0
    %v13654 = vpop.f32.mrb[0].mxu0
    %13655 = vdwg.mxu0
    %13656 = vmatprep.subr.bf16.mxu0 0
    %13657 = vmatpush1.bf16.msra.mxu0 %v13568
    %13658 = vmatprep.subr.bf16.mxu0 0
    %13659 = vmatpush1.bf16.msra.mxu0 %v13569
    %13660 = vmatprep.subr.bf16.mxu0 0
    %13661 = vmatpush1.bf16.msra.mxu0 %v13570
    %13662 = vmatprep.subr.bf16.mxu0 0
    %13663 = vmatpush1.bf16.msra.mxu0 %v13571
    %13664 = vmatprep.subr.bf16.mxu0 0
    %13665 = vmatpush1.bf16.msra.mxu0 %v13572
    %13666 = vmatprep.subr.bf16.mxu0 0
    %13667 = vmatpush1.bf16.msra.mxu0 %v13573
    %13668 = vmatprep.subr.bf16.mxu0 0
    %13669 = vmatpush1.bf16.msra.mxu0 %v13574
    %13670 = vmatprep.subr.bf16.mxu0 0
    %13671 = vmatpush1.bf16.msra.mxu0 %v13575
    %13672 = vmatprep.subr.bf16.mxu0 0
    %13673 = vmatpush1.bf16.msra.mxu0 %v13576
    %13674 = vmatprep.subr.bf16.mxu0 0
    %13675 = vmatpush1.bf16.msra.mxu0 %v13577
    %13676 = vmatprep.subr.bf16.mxu0 0
    %13677 = vmatpush1.bf16.msra.mxu0 %v13578
    %13678 = vmatprep.subr.bf16.mxu0 0
    %13679 = vmatpush1.bf16.msra.mxu0 %v13579
    %13680 = vmatprep.subr.bf16.mxu0 0
    %13681 = vmatpush1.bf16.msra.mxu0 %v13580
    %13682 = vmatprep.subr.bf16.mxu0 0
    %13683 = vmatpush1.bf16.msra.mxu0 %v13581
    %13684 = vmatprep.subr.bf16.mxu0 0
    %13685 = vmatpush1.bf16.msra.mxu0 %v13582
    %13686 = vmatprep.subr.bf16.mxu0 0
    %13687 = vmatpush1.bf16.msra.mxu0 %v13583
    %13688 = vmatprep.mubr.bf16.mxu0 %v13352
    %13689 = vmatmul.mubr.bf16.gmra.mrb[0].mxu0 %v13351
    %v13690 = vpop.f32.mrb[0].mxu0
    %v13691 = vadd.f32 %v13651, %v13690
    %v13692 = vpop.f32.mrb[0].mxu0
    %v13693 = vpop.f32.mrb[0].mxu0
    %v13694 = vpop.f32.mrb[0].mxu0
    %13695 = vdwg.mxu0
    %13696 = vst [vmem:[#allocation11] sm:$0x3] %v13691
    // Predicated region
    $region74: #{vgg_forward.1} parent=1 // pred_check
      _
    $region75: #{vgg_forward.1} parent=1 // pred_check_branch
      %13698 = sbr.rel (0) target = $region77
    $region76: #{vgg_forward.1} parent=1 // pred_region
      %s13700 = ssub.s32 32, 32
      %13701 = vsyncadd [#allocation7], %s13700
      %s13703 = sshll.u32 [#allocation11], 4
      %s13704 = int_to_ptr.vmem [resolvable:$true] %s13703
      %13706 = dma.vmem_to_hbm [thread:$0]  %s13704, 32, %s15, [#allocation7]
    $region77: #{vgg_forward.1} parent=1 // pred_fallthru
      _
    // Predicated region
    $region78: #{vgg_forward.1} parent=1 // pred_check
      _
    $region79: #{vgg_forward.1} parent=1 // pred_check_branch
      %13708 = sbr.rel (0) target = $region81
    $region80: #{vgg_forward.1} parent=1 // pred_region
      %13709 = dma.done [#allocation7], 32
    $region81: #{vgg_forward.1} parent=1 // pred_fallthru
      _
    %13710 = vsyncpa [#allocation6], 1
    %13711 = vsyncpa [#allocation9], 1
    %13712 = vsyncpa [#allocation7], 1

</llo_original>
